<compile_context>
chip_gen: v5e
topology: v5e:2x2
jax: 0.10.0
libtpu: 0.0.40
codegen_flags: <defaults>
</compile_context>

<pallas_src>
import functools
import math

import jax
import jax.numpy as jnp
from jax.experimental import pallas as pl
from jax.experimental.pallas import tpu as pltpu


# ---------------------------------------------------------------------------
# Attention residual block:  x + to_out(attn(LN(x)))
# ---------------------------------------------------------------------------
def _attn_kernel(x_ref, lnw_ref, lnb_ref, wqkv_ref, wout_ref, o_ref,
                 *, heads, dim_head, scale):
    x = x_ref[0].astype(jnp.float32)                       # (N, D)

    # LayerNorm (eps=1e-5, biased variance) in f32.
    mu = jnp.mean(x, axis=-1, keepdims=True)
    xc = x - mu
    var = jnp.mean(xc * xc, axis=-1, keepdims=True)
    xn = xc * jax.lax.rsqrt(var + 1e-5)
    xn = xn * lnw_ref[...] + lnb_ref[...]                  # (1,D) broadcast

    # Fused QKV projection (single big MXU matmul).
    wqkv = wqkv_ref[...]                                   # (D, 3*inner)
    qkv = jnp.dot(xn, wqkv, preferred_element_type=jnp.float32)  # (N, 3*inner)
    wout = wout_ref[...]                                   # (inner, D)

    inner = heads * dim_head
    n_rows, d_model = x.shape
    acc = jnp.zeros((n_rows, d_model), jnp.float32)

    # Static per-head loop; slices are lane-aligned (dim_head multiple of 128).
    for h in range(heads):
        lo = h * dim_head
        qh = qkv[:, lo:lo + dim_head]
        kh = qkv[:, inner + lo:inner + lo + dim_head]
        vh = qkv[:, 2 * inner + lo:2 * inner + lo + dim_head]

        # scores = q @ k^T * scale   (contract the head dim of both operands)
        s = jax.lax.dot_general(qh, kh, (((1,), (1,)), ((), ())),
                                preferred_element_type=jnp.float32) * scale
        # numerically stable softmax (one exp pass per element)
        m = jnp.max(s, axis=-1, keepdims=True)
        p = jnp.exp(s - m)
        l = jnp.sum(p, axis=-1, keepdims=True)
        attn = p / l

        oh = jnp.dot(attn, vh, preferred_element_type=jnp.float32)     # (N, dh)
        # out-projection accumulated per head (avoids a concatenate)
        acc = acc + jnp.dot(oh, wout[lo:lo + dim_head, :],
                            preferred_element_type=jnp.float32)        # (N, D)

    o_ref[0] = (x + acc).astype(o_ref.dtype)               # residual add


def attention_block(x, lnw, lnb, wqkv, wout, *, heads, dim_head):
    B, N, D = x.shape
    inner = heads * dim_head
    scale = dim_head ** -0.5

    flops = (2 * B * N * D * 3 * inner            # qkv projection
             + 4 * B * heads * N * N * dim_head   # scores + attn @ v
             + 2 * B * N * inner * D)             # output projection
    cost = pl.CostEstimate(
        flops=flops,
        transcendentals=B * heads * N * N,
        bytes_accessed=(2 * B * N * D + D * 3 * inner + inner * D + 2 * D) * 4,
    )

    kernel = functools.partial(_attn_kernel, heads=heads, dim_head=dim_head,
                               scale=scale)
    return pl.pallas_call(
        kernel,
        out_shape=jax.ShapeDtypeStruct((B, N, D), x.dtype),
        grid_spec=pltpu.PrefetchScalarGridSpec(
            num_scalar_prefetch=0,
            grid=(B,),
            in_specs=[
                pl.BlockSpec((1, N, D), lambda b: (b, 0, 0)),
                pl.BlockSpec((1, D), lambda b: (0, 0)),
                pl.BlockSpec((1, D), lambda b: (0, 0)),
                pl.BlockSpec((D, 3 * inner), lambda b: (0, 0)),
                pl.BlockSpec((inner, D), lambda b: (0, 0)),
            ],
            out_specs=pl.BlockSpec((1, N, D), lambda b: (b, 0, 0)),
        ),
        compiler_params=pltpu.CompilerParams(
            dimension_semantics=("parallel",)),
        input_output_aliases={0: 0},
        cost_estimate=cost,
    )(x, lnw, lnb, wqkv, wout)


# ---------------------------------------------------------------------------
# FeedForward residual block:  x + W2 @ GELU(W1 @ LN(x) + b1) + b2
# ---------------------------------------------------------------------------
def _ffn_kernel(x_ref, lnw_ref, lnb_ref, w1_ref, b1_ref, w2_ref, b2_ref, o_ref):
    x = x_ref[0].astype(jnp.float32)                       # (tn, D)

    mu = jnp.mean(x, axis=-1, keepdims=True)
    xc = x - mu
    var = jnp.mean(xc * xc, axis=-1, keepdims=True)
    xn = xc * jax.lax.rsqrt(var + 1e-5)
    xn = xn * lnw_ref[...] + lnb_ref[...]

    h = jnp.dot(xn, w1_ref[...], preferred_element_type=jnp.float32) + b1_ref[...]
    # GELU (tanh approximation); dropout layers are identity in eval mode.
    c = 0.7978845608028654  # sqrt(2/pi)
    hg = 0.5 * h * (1.0 + jnp.tanh(c * (h + 0.044715 * h * h * h)))
    h2 = jnp.dot(hg, w2_ref[...], preferred_element_type=jnp.float32) + b2_ref[...]

    o_ref[0] = (x + h2).astype(o_ref.dtype)                # residual add


def ffn_block(x, lnw, lnb, w1, b1, w2, b2, *, row_tile=128):
    B, N, D = x.shape
    Dh = w1.shape[1]
    tn = row_tile if (N % row_tile == 0) else N            # token-axis tile

    cost = pl.CostEstimate(
        flops=4 * B * N * D * Dh,
        transcendentals=B * N * Dh,
        bytes_accessed=(2 * B * N * D + 2 * D * Dh + Dh + 3 * D) * 4,
    )

    return pl.pallas_call(
        _ffn_kernel,
        out_shape=jax.ShapeDtypeStruct((B, N, D), x.dtype),
        grid_spec=pltpu.PrefetchScalarGridSpec(
            num_scalar_prefetch=0,
            grid=(B, N // tn),
            in_specs=[
                pl.BlockSpec((1, tn, D), lambda b, i: (b, i, 0)),
                pl.BlockSpec((1, D), lambda b, i: (0, 0)),
                pl.BlockSpec((1, D), lambda b, i: (0, 0)),
                pl.BlockSpec((D, Dh), lambda b, i: (0, 0)),
                pl.BlockSpec((1, Dh), lambda b, i: (0, 0)),
                pl.BlockSpec((Dh, D), lambda b, i: (0, 0)),
                pl.BlockSpec((1, D), lambda b, i: (0, 0)),
            ],
            out_specs=pl.BlockSpec((1, tn, D), lambda b, i: (b, i, 0)),
        ),
        compiler_params=pltpu.CompilerParams(
            dimension_semantics=("parallel", "parallel")),
        input_output_aliases={0: 0},
        cost_estimate=cost,
    )(x, lnw, lnb, w1, b1, w2, b2)


# ---------------------------------------------------------------------------
# Full Transformer forward (depth layers of attn + ff, each with residual)
# ---------------------------------------------------------------------------
def transformer_forward(x, params, *, heads, dim_head):
    for layer in params:
        a = layer["attn"]
        x = attention_block(x, a["lnw"], a["lnb"], a["wqkv"], a["wout"],
                            heads=heads, dim_head=dim_head)
        f = layer["ffn"]
        x = ffn_block(x, f["lnw"], f["lnb"], f["w1"], f["b1"], f["w2"], f["b2"])
    return x


# ---------------------------------------------------------------------------
# Pure-JAX reference (mirrors the PyTorch forward in eval mode)
# ---------------------------------------------------------------------------
def _layer_norm_ref(x, w, b, eps=1e-5):
    mu = jnp.mean(x, axis=-1, keepdims=True)
    xc = x - mu
    var = jnp.mean(xc * xc, axis=-1, keepdims=True)
    return xc * jax.lax.rsqrt(var + eps) * w + b


def _gelu_tanh(x):
    c = 0.7978845608028654
    return 0.5 * x * (1.0 + jnp.tanh(c * (x + 0.044715 * x ** 3)))


def transformer_ref(x, params, *, heads, dim_head):
    B, N, D = x.shape
    inner = heads * dim_head
    scale = dim_head ** -0.5
    for layer in params:
        a = layer["attn"]
        xn = _layer_norm_ref(x, a["lnw"], a["lnb"])
        qkv = xn @ a["wqkv"]
        q, k, v = jnp.split(qkv, 3, axis=-1)
        def sh(t):
            return t.reshape(B, N, heads, dim_head).transpose(0, 2, 1, 3)
        q, k, v = sh(q), sh(k), sh(v)
        s = jnp.einsum("bhnd,bhmd->bhnm", q, k) * scale
        p = jax.nn.softmax(s, axis=-1)
        o = jnp.einsum("bhnm,bhmd->bhnd", p, v)
        o = o.transpose(0, 2, 1, 3).reshape(B, N, inner)
        x = x + o @ a["wout"]

        f = layer["ffn"]
        xn = _layer_norm_ref(x, f["lnw"], f["lnb"])
        h = _gelu_tanh(xn @ f["w1"] + f["b1"])
        x = x + (h @ f["w2"] + f["b2"])
    return x


# ---------------------------------------------------------------------------
# Parameter construction (deterministic)
# ---------------------------------------------------------------------------
def init_params(key, depth, dim, heads, dim_head, mlp_dim):
    inner = heads * dim_head
    params = []
    for _ in range(depth):
        key, k1, k2, k3, k4, k5, k6 = jax.random.split(key, 7)
        attn = dict(
            lnw=jnp.ones((1, dim), jnp.float32),
            lnb=jnp.zeros((1, dim), jnp.float32),
            wqkv=jax.random.normal(k1, (dim, 3 * inner), jnp.float32)
            / math.sqrt(dim),
            wout=jax.random.normal(k2, (inner, dim), jnp.float32)
            / math.sqrt(inner),
        )
        ffn = dict(
            lnw=jnp.ones((1, dim), jnp.float32),
            lnb=jnp.zeros((1, dim), jnp.float32),
            w1=jax.random.normal(k3, (dim, mlp_dim), jnp.float32)
            / math.sqrt(dim),
            b1=jax.random.normal(k4, (1, mlp_dim), jnp.float32) * 0.01,
            w2=jax.random.normal(k5, (mlp_dim, dim), jnp.float32)
            / math.sqrt(mlp_dim),
            b2=jax.random.normal(k6, (1, dim), jnp.float32) * 0.01,
        )
        params.append(dict(attn=attn, ffn=ffn))
    return params


if __name__ == "__main__":
    # Small but lane-dense hyperparameters (dim, dim_head, mlp_dim, N all
    # multiples of 128 / 8 so every store is unmasked).
    dim = 128
    depth = 2
    heads = 2
    dim_head = 128
    mlp_dim = 256
    batch = 2
    n_tokens = 128

    key = jax.random.PRNGKey(0)
    kx, kp = jax.random.split(key)
    x = jax.random.normal(kx, (batch, n_tokens, dim), dtype=jnp.float32)
    params = init_params(kp, depth, dim, heads, dim_head, mlp_dim)

    fwd = jax.jit(functools.partial(transformer_forward,
                                    heads=heads, dim_head=dim_head))
    out = jax.block_until_ready(fwd(x, params))

    ref = transformer_ref(x, params, heads=heads, dim_head=dim_head)
    assert out.shape == x.shape and out.dtype == x.dtype
    max_err = float(jnp.max(jnp.abs(out - ref)))
    # Tolerance accounts for MXU reduced-precision (bf16-pass) f32 matmuls.
    assert jnp.allclose(out, ref, atol=2e-2, rtol=2e-2), (
        f"mismatch vs reference (max abs err {max_err})")

    print("KERNEL_OK")
</pallas_src>

<mosaic_0001>
module attributes {stable_mosaic.version = 11 : i64} {
  func.func @_attn_kernel(%arg0: i32, %arg1: memref<1x128x128xf32, #tpu.memory_space<vmem>>, %arg2: memref<1x128xf32, #tpu.memory_space<vmem>>, %arg3: memref<1x128xf32, #tpu.memory_space<vmem>>, %arg4: memref<128x768xf32, #tpu.memory_space<vmem>>, %arg5: memref<256x128xf32, #tpu.memory_space<vmem>>, %arg6: memref<1x128x128xf32, #tpu.memory_space<vmem>>) attributes {dimension_semantics = [#tpu.dimension_semantics<parallel>], iteration_bounds = array<i64: 2>, scalar_prefetch = 0 : i64, scratch_operands = 0 : i64, tpu.core_type = #tpu.core_type<tc>, window_params = [{transform_indices = @transform_0, window_bounds = array<i64: 1, 128, 128>}, {pipeline_mode = #tpu.pipeline_mode<synchronous>, transform_indices = @transform_1, window_bounds = array<i64: 1, 128>}, {pipeline_mode = #tpu.pipeline_mode<synchronous>, transform_indices = @transform_2, window_bounds = array<i64: 1, 128>}, {pipeline_mode = #tpu.pipeline_mode<synchronous>, transform_indices = @transform_3, window_bounds = array<i64: 128, 768>}, {pipeline_mode = #tpu.pipeline_mode<synchronous>, transform_indices = @transform_4, window_bounds = array<i64: 256, 128>}, {transform_indices = @transform_5, window_bounds = array<i64: 1, 128, 128>}]} {
    %c0 = arith.constant 0 : index
    %c0_0 = arith.constant 0 : index
    %c0_1 = arith.constant 0 : index
    %0 = vector.load %arg1[%c0, %c0_0, %c0_1] : memref<1x128x128xf32, #tpu.memory_space<vmem>>, vector<1x128x128xf32>
    %1 = vector.shape_cast %0 : vector<1x128x128xf32> to vector<128x128xf32>
    %cst = arith.constant dense<0.000000e+00> : vector<128xf32>
    %2 = vector.multi_reduction <add>, %1, %cst [1] : vector<128x128xf32> to vector<128xf32>
    %3 = vector.shape_cast %2 : vector<128xf32> to vector<128x1xf32>
    %cst_2 = arith.constant 1.280000e+02 : f32
    %4 = vector.broadcast %cst_2 : f32 to vector<128x1xf32>
    %5 = arith.divf %3, %4 : vector<128x1xf32>
    %6 = vector.broadcast %5 : vector<128x1xf32> to vector<128x128xf32>
    %7 = arith.subf %1, %6 : vector<128x128xf32>
    %8 = arith.mulf %7, %7 : vector<128x128xf32>
    %cst_3 = arith.constant dense<0.000000e+00> : vector<128xf32>
    %9 = vector.multi_reduction <add>, %8, %cst_3 [1] : vector<128x128xf32> to vector<128xf32>
    %10 = vector.shape_cast %9 : vector<128xf32> to vector<128x1xf32>
    %cst_4 = arith.constant 1.280000e+02 : f32
    %11 = vector.broadcast %cst_4 : f32 to vector<128x1xf32>
    %12 = arith.divf %10, %11 : vector<128x1xf32>
    %cst_5 = arith.constant 9.99999974E-6 : f32
    %13 = vector.broadcast %cst_5 : f32 to vector<128x1xf32>
    %14 = arith.addf %12, %13 : vector<128x1xf32>
    %15 = math.rsqrt %14 : vector<128x1xf32>
    %16 = vector.broadcast %15 : vector<128x1xf32> to vector<128x128xf32>
    %17 = arith.mulf %7, %16 : vector<128x128xf32>
    %c0_6 = arith.constant 0 : index
    %c0_7 = arith.constant 0 : index
    %18 = vector.load %arg2[%c0_6, %c0_7] : memref<1x128xf32, #tpu.memory_space<vmem>>, vector<1x128xf32>
    %19 = vector.broadcast %18 : vector<1x128xf32> to vector<128x128xf32>
    %20 = arith.mulf %17, %19 : vector<128x128xf32>
    %c0_8 = arith.constant 0 : index
    %c0_9 = arith.constant 0 : index
    %21 = vector.load %arg3[%c0_8, %c0_9] : memref<1x128xf32, #tpu.memory_space<vmem>>, vector<1x128xf32>
    %22 = vector.broadcast %21 : vector<1x128xf32> to vector<128x128xf32>
    %23 = arith.addf %20, %22 : vector<128x128xf32>
    %c0_10 = arith.constant 0 : index
    %c0_11 = arith.constant 0 : index
    %24 = vector.load %arg4[%c0_10, %c0_11] : memref<128x768xf32, #tpu.memory_space<vmem>>, vector<128x768xf32>
    %cst_12 = arith.constant dense<0.000000e+00> : vector<128x768xf32>
    %25 = tpu.matmul %23, %24, %cst_12 {dimension_numbers = #tpu.dot_dimension_numbers<[1], [0], [0], [1], [0, 0, 1, 1], [], []>} : vector<128x128xf32>, vector<128x768xf32>, vector<128x768xf32> -> vector<128x768xf32>
    %c0_13 = arith.constant 0 : index
    %c0_14 = arith.constant 0 : index
    %26 = vector.load %arg5[%c0_13, %c0_14] : memref<256x128xf32, #tpu.memory_space<vmem>>, vector<256x128xf32>
    %cst_15 = arith.constant 0.000000e+00 : f32
    %27 = vector.broadcast %cst_15 : f32 to vector<128x128xf32>
    %28 = vector.extract_strided_slice %25 {offsets = [0, 0], sizes = [128, 128], strides = [1, 1]} : vector<128x768xf32> to vector<128x128xf32>
    %29 = vector.extract_strided_slice %25 {offsets = [0, 256], sizes = [128, 128], strides = [1, 1]} : vector<128x768xf32> to vector<128x128xf32>
    %30 = vector.extract_strided_slice %25 {offsets = [0, 512], sizes = [128, 128], strides = [1, 1]} : vector<128x768xf32> to vector<128x128xf32>
    %cst_16 = arith.constant dense<0.000000e+00> : vector<128x128xf32>
    %31 = tpu.matmul %28, %29, %cst_16 {dimension_numbers = #tpu.dot_dimension_numbers<[1], [1], [0], [0], [0, 0, 1, 0], [], []>} : vector<128x128xf32>, vector<128x128xf32>, vector<128x128xf32> -> vector<128x128xf32>
    %cst_17 = arith.constant 0.0883883461 : f32
    %32 = vector.broadcast %cst_17 : f32 to vector<128x128xf32>
    %33 = arith.mulf %31, %32 : vector<128x128xf32>
    %cst_18 = arith.constant dense<0xFF800000> : vector<128xf32>
    %34 = vector.multi_reduction <maximumf>, %33, %cst_18 [1] : vector<128x128xf32> to vector<128xf32>
    %35 = vector.shape_cast %34 : vector<128xf32> to vector<128x1xf32>
    %36 = vector.broadcast %35 : vector<128x1xf32> to vector<128x128xf32>
    %37 = arith.subf %33, %36 : vector<128x128xf32>
    %38 = math.exp %37 : vector<128x128xf32>
    %cst_19 = arith.constant dense<0.000000e+00> : vector<128xf32>
    %39 = vector.multi_reduction <add>, %38, %cst_19 [1] : vector<128x128xf32> to vector<128xf32>
    %40 = vector.shape_cast %39 : vector<128xf32> to vector<128x1xf32>
    %41 = vector.broadcast %40 : vector<128x1xf32> to vector<128x128xf32>
    %42 = arith.divf %38, %41 : vector<128x128xf32>
    %cst_20 = arith.constant dense<0.000000e+00> : vector<128x128xf32>
    %43 = tpu.matmul %42, %30, %cst_20 {dimension_numbers = #tpu.dot_dimension_numbers<[1], [0], [0], [1], [0, 0, 1, 1], [], []>} : vector<128x128xf32>, vector<128x128xf32>, vector<128x128xf32> -> vector<128x128xf32>
    %44 = vector.extract_strided_slice %26 {offsets = [0, 0], sizes = [128, 128], strides = [1, 1]} : vector<256x128xf32> to vector<128x128xf32>
    %cst_21 = arith.constant dense<0.000000e+00> : vector<128x128xf32>
    %45 = tpu.matmul %43, %44, %cst_21 {dimension_numbers = #tpu.dot_dimension_numbers<[1], [0], [0], [1], [0, 0, 1, 1], [], []>} : vector<128x128xf32>, vector<128x128xf32>, vector<128x128xf32> -> vector<128x128xf32>
    %46 = arith.addf %27, %45 : vector<128x128xf32>
    %47 = vector.extract_strided_slice %25 {offsets = [0, 128], sizes = [128, 128], strides = [1, 1]} : vector<128x768xf32> to vector<128x128xf32>
    %48 = vector.extract_strided_slice %25 {offsets = [0, 384], sizes = [128, 128], strides = [1, 1]} : vector<128x768xf32> to vector<128x128xf32>
    %49 = vector.extract_strided_slice %25 {offsets = [0, 640], sizes = [128, 128], strides = [1, 1]} : vector<128x768xf32> to vector<128x128xf32>
    %cst_22 = arith.constant dense<0.000000e+00> : vector<128x128xf32>
    %50 = tpu.matmul %47, %48, %cst_22 {dimension_numbers = #tpu.dot_dimension_numbers<[1], [1], [0], [0], [0, 0, 1, 0], [], []>} : vector<128x128xf32>, vector<128x128xf32>, vector<128x128xf32> -> vector<128x128xf32>
    %cst_23 = arith.constant 0.0883883461 : f32
    %51 = vector.broadcast %cst_23 : f32 to vector<128x128xf32>
    %52 = arith.mulf %50, %51 : vector<128x128xf32>
    %cst_24 = arith.constant dense<0xFF800000> : vector<128xf32>
    %53 = vector.multi_reduction <maximumf>, %52, %cst_24 [1] : vector<128x128xf32> to vector<128xf32>
    %54 = vector.shape_cast %53 : vector<128xf32> to vector<128x1xf32>
    %55 = vector.broadcast %54 : vector<128x1xf32> to vector<128x128xf32>
    %56 = arith.subf %52, %55 : vector<128x128xf32>
    %57 = math.exp %56 : vector<128x128xf32>
    %cst_25 = arith.constant dense<0.000000e+00> : vector<128xf32>
    %58 = vector.multi_reduction <add>, %57, %cst_25 [1] : vector<128x128xf32> to vector<128xf32>
    %59 = vector.shape_cast %58 : vector<128xf32> to vector<128x1xf32>
    %60 = vector.broadcast %59 : vector<128x1xf32> to vector<128x128xf32>
    %61 = arith.divf %57, %60 : vector<128x128xf32>
    %cst_26 = arith.constant dense<0.000000e+00> : vector<128x128xf32>
    %62 = tpu.matmul %61, %49, %cst_26 {dimension_numbers = #tpu.dot_dimension_numbers<[1], [0], [0], [1], [0, 0, 1, 1], [], []>} : vector<128x128xf32>, vector<128x128xf32>, vector<128x128xf32> -> vector<128x128xf32>
    %63 = vector.extract_strided_slice %26 {offsets = [128, 0], sizes = [128, 128], strides = [1, 1]} : vector<256x128xf32> to vector<128x128xf32>
    %cst_27 = arith.constant dense<0.000000e+00> : vector<128x128xf32>
    %64 = tpu.matmul %62, %63, %cst_27 {dimension_numbers = #tpu.dot_dimension_numbers<[1], [0], [0], [1], [0, 0, 1, 1], [], []>} : vector<128x128xf32>, vector<128x128xf32>, vector<128x128xf32> -> vector<128x128xf32>
    %65 = arith.addf %46, %64 : vector<128x128xf32>
    %66 = arith.addf %1, %65 : vector<128x128xf32>
    %c0_28 = arith.constant 0 : index
    %c0_29 = arith.constant 0 : index
    %c0_30 = arith.constant 0 : index
    %67 = vector.load %arg6[%c0_28, %c0_29, %c0_30] : memref<1x128x128xf32, #tpu.memory_space<vmem>>, vector<1x128x128xf32>
    %68 = vector.shape_cast %67 : vector<1x128x128xf32> to vector<128x128xf32>
    %69 = vector.shape_cast %66 : vector<128x128xf32> to vector<1x128x128xf32>
    tpu.vector_store %arg6[%c0_28, %c0_29, %c0_30], %69 {strides = array<i32>} : memref<1x128x128xf32, #tpu.memory_space<vmem>>, vector<1x128x128xf32>,
    return
  }
  func.func @transform_0(%arg0: i32) -> (i32, i32, i32) {
    %c0_i32 = arith.constant 0 : i32
    %c0_i32_0 = arith.constant 0 : i32
    %c0_i32_1 = arith.constant 0 : i32
    return %arg0, %c0_i32, %c0_i32_0 : i32, i32, i32
  }
  func.func @transform_1(%arg0: i32) -> (i32, i32) {
    %c0_i32 = arith.constant 0 : i32
    %c0_i32_0 = arith.constant 0 : i32
    %c0_i32_1 = arith.constant 0 : i32
    return %c0_i32, %c0_i32_0 : i32, i32
  }
  func.func @transform_2(%arg0: i32) -> (i32, i32) {
    %c0_i32 = arith.constant 0 : i32
    %c0_i32_0 = arith.constant 0 : i32
    %c0_i32_1 = arith.constant 0 : i32
    return %c0_i32, %c0_i32_0 : i32, i32
  }
  func.func @transform_3(%arg0: i32) -> (i32, i32) {
    %c0_i32 = arith.constant 0 : i32
    %c0_i32_0 = arith.constant 0 : i32
    %c0_i32_1 = arith.constant 0 : i32
    return %c0_i32, %c0_i32_0 : i32, i32
  }
  func.func @transform_4(%arg0: i32) -> (i32, i32) {
    %c0_i32 = arith.constant 0 : i32
    %c0_i32_0 = arith.constant 0 : i32
    %c0_i32_1 = arith.constant 0 : i32
    return %c0_i32, %c0_i32_0 : i32, i32
  }
  func.func @transform_5(%arg0: i32) -> (i32, i32, i32) {
    %c0_i32 = arith.constant 0 : i32
    %c0_i32_0 = arith.constant 0 : i32
    %c0_i32_1 = arith.constant 0 : i32
    return %arg0, %c0_i32, %c0_i32_0 : i32, i32, i32
  }
}

module attributes {stable_mosaic.version = 11 : i64} {
  func.func @_ffn_kernel(%arg0: i32, %arg1: i32, %arg2: memref<1x128x128xf32, #tpu.memory_space<vmem>>, %arg3: memref<1x128xf32, #tpu.memory_space<vmem>>, %arg4: memref<1x128xf32, #tpu.memory_space<vmem>>, %arg5: memref<128x256xf32, #tpu.memory_space<vmem>>, %arg6: memref<1x256xf32, #tpu.memory_space<vmem>>, %arg7: memref<256x128xf32, #tpu.memory_space<vmem>>, %arg8: memref<1x128xf32, #tpu.memory_space<vmem>>, %arg9: memref<1x128x128xf32, #tpu.memory_space<vmem>>) attributes {dimension_semantics = [#tpu.dimension_semantics<parallel>, #tpu.dimension_semantics<parallel>], iteration_bounds = array<i64: 2, 1>, scalar_prefetch = 0 : i64, scratch_operands = 0 : i64, tpu.core_type = #tpu.core_type<tc>, window_params = [{transform_indices = @transform_0, window_bounds = array<i64: 1, 128, 128>}, {pipeline_mode = #tpu.pipeline_mode<synchronous>, transform_indices = @transform_1, window_bounds = array<i64: 1, 128>}, {pipeline_mode = #tpu.pipeline_mode<synchronous>, transform_indices = @transform_2, window_bounds = array<i64: 1, 128>}, {pipeline_mode = #tpu.pipeline_mode<synchronous>, transform_indices = @transform_3, window_bounds = array<i64: 128, 256>}, {pipeline_mode = #tpu.pipeline_mode<synchronous>, transform_indices = @transform_4, window_bounds = array<i64: 1, 256>}, {pipeline_mode = #tpu.pipeline_mode<synchronous>, transform_indices = @transform_5, window_bounds = array<i64: 256, 128>}, {pipeline_mode = #tpu.pipeline_mode<synchronous>, transform_indices = @transform_6, window_bounds = array<i64: 1, 128>}, {transform_indices = @transform_7, window_bounds = array<i64: 1, 128, 128>}]} {
    %c0 = arith.constant 0 : index
    %c0_0 = arith.constant 0 : index
    %c0_1 = arith.constant 0 : index
    %0 = vector.load %arg2[%c0, %c0_0, %c0_1] : memref<1x128x128xf32, #tpu.memory_space<vmem>>, vector<1x128x128xf32>
    %1 = vector.shape_cast %0 : vector<1x128x128xf32> to vector<128x128xf32>
    %cst = arith.constant dense<0.000000e+00> : vector<128xf32>
    %2 = vector.multi_reduction <add>, %1, %cst [1] : vector<128x128xf32> to vector<128xf32>
    %3 = vector.shape_cast %2 : vector<128xf32> to vector<128x1xf32>
    %cst_2 = arith.constant 1.280000e+02 : f32
    %4 = vector.broadcast %cst_2 : f32 to vector<128x1xf32>
    %5 = arith.divf %3, %4 : vector<128x1xf32>
    %6 = vector.broadcast %5 : vector<128x1xf32> to vector<128x128xf32>
    %7 = arith.subf %1, %6 : vector<128x128xf32>
    %8 = arith.mulf %7, %7 : vector<128x128xf32>
    %cst_3 = arith.constant dense<0.000000e+00> : vector<128xf32>
    %9 = vector.multi_reduction <add>, %8, %cst_3 [1] : vector<128x128xf32> to vector<128xf32>
    %10 = vector.shape_cast %9 : vector<128xf32> to vector<128x1xf32>
    %cst_4 = arith.constant 1.280000e+02 : f32
    %11 = vector.broadcast %cst_4 : f32 to vector<128x1xf32>
    %12 = arith.divf %10, %11 : vector<128x1xf32>
    %cst_5 = arith.constant 9.99999974E-6 : f32
    %13 = vector.broadcast %cst_5 : f32 to vector<128x1xf32>
    %14 = arith.addf %12, %13 : vector<128x1xf32>
    %15 = math.rsqrt %14 : vector<128x1xf32>
    %16 = vector.broadcast %15 : vector<128x1xf32> to vector<128x128xf32>
    %17 = arith.mulf %7, %16 : vector<128x128xf32>
    %c0_6 = arith.constant 0 : index
    %c0_7 = arith.constant 0 : index
    %18 = vector.load %arg3[%c0_6, %c0_7] : memref<1x128xf32, #tpu.memory_space<vmem>>, vector<1x128xf32>
    %19 = vector.broadcast %18 : vector<1x128xf32> to vector<128x128xf32>
    %20 = arith.mulf %17, %19 : vector<128x128xf32>
    %c0_8 = arith.constant 0 : index
    %c0_9 = arith.constant 0 : index
    %21 = vector.load %arg4[%c0_8, %c0_9] : memref<1x128xf32, #tpu.memory_space<vmem>>, vector<1x128xf32>
    %22 = vector.broadcast %21 : vector<1x128xf32> to vector<128x128xf32>
    %23 = arith.addf %20, %22 : vector<128x128xf32>
    %c0_10 = arith.constant 0 : index
    %c0_11 = arith.constant 0 : index
    %24 = vector.load %arg5[%c0_10, %c0_11] : memref<128x256xf32, #tpu.memory_space<vmem>>, vector<128x256xf32>
    %cst_12 = arith.constant dense<0.000000e+00> : vector<128x256xf32>
    %25 = tpu.matmul %23, %24, %cst_12 {dimension_numbers = #tpu.dot_dimension_numbers<[1], [0], [0], [1], [0, 0, 1, 1], [], []>} : vector<128x128xf32>, vector<128x256xf32>, vector<128x256xf32> -> vector<128x256xf32>
    %c0_13 = arith.constant 0 : index
    %c0_14 = arith.constant 0 : index
    %26 = vector.load %arg6[%c0_13, %c0_14] : memref<1x256xf32, #tpu.memory_space<vmem>>, vector<1x256xf32>
    %27 = vector.broadcast %26 : vector<1x256xf32> to vector<128x256xf32>
    %28 = arith.addf %25, %27 : vector<128x256xf32>
    %cst_15 = arith.constant 5.000000e-01 : f32
    %29 = vector.broadcast %cst_15 : f32 to vector<128x256xf32>
    %30 = arith.mulf %29, %28 : vector<128x256xf32>
    %cst_16 = arith.constant 4.471500e-02 : f32
    %31 = vector.broadcast %cst_16 : f32 to vector<128x256xf32>
    %32 = arith.mulf %31, %28 : vector<128x256xf32>
    %33 = arith.mulf %32, %28 : vector<128x256xf32>
    %34 = arith.mulf %33, %28 : vector<128x256xf32>
    %35 = arith.addf %28, %34 : vector<128x256xf32>
    %cst_17 = arith.constant 0.797884583 : f32
    %36 = vector.broadcast %cst_17 : f32 to vector<128x256xf32>
    %37 = arith.mulf %36, %35 : vector<128x256xf32>
    %38 = math.tanh %37 : vector<128x256xf32>
    %cst_18 = arith.constant 1.000000e+00 : f32
    %39 = vector.broadcast %cst_18 : f32 to vector<128x256xf32>
    %40 = arith.addf %39, %38 : vector<128x256xf32>
    %41 = arith.mulf %30, %40 : vector<128x256xf32>
    %c0_19 = arith.constant 0 : index
    %c0_20 = arith.constant 0 : index
    %42 = vector.load %arg7[%c0_19, %c0_20] : memref<256x128xf32, #tpu.memory_space<vmem>>, vector<256x128xf32>
    %cst_21 = arith.constant dense<0.000000e+00> : vector<128x128xf32>
    %43 = tpu.matmul %41, %42, %cst_21 {dimension_numbers = #tpu.dot_dimension_numbers<[1], [0], [0], [1], [0, 0, 1, 1], [], []>} : vector<128x256xf32>, vector<256x128xf32>, vector<128x128xf32> -> vector<128x128xf32>
    %c0_22 = arith.constant 0 : index
    %c0_23 = arith.constant 0 : index
    %44 = vector.load %arg8[%c0_22, %c0_23] : memref<1x128xf32, #tpu.memory_space<vmem>>, vector<1x128xf32>
    %45 = vector.broadcast %44 : vector<1x128xf32> to vector<128x128xf32>
    %46 = arith.addf %43, %45 : vector<128x128xf32>
    %47 = arith.addf %1, %46 : vector<128x128xf32>
    %c0_24 = arith.constant 0 : index
    %c0_25 = arith.constant 0 : index
    %c0_26 = arith.constant 0 : index
    %48 = vector.load %arg9[%c0_24, %c0_25, %c0_26] : memref<1x128x128xf32, #tpu.memory_space<vmem>>, vector<1x128x128xf32>
    %49 = vector.shape_cast %48 : vector<1x128x128xf32> to vector<128x128xf32>
    %50 = vector.shape_cast %47 : vector<128x128xf32> to vector<1x128x128xf32>
    tpu.vector_store %arg9[%c0_24, %c0_25, %c0_26], %50 {strides = array<i32>} : memref<1x128x128xf32, #tpu.memory_space<vmem>>, vector<1x128x128xf32>,
    return
  }
  func.func @transform_0(%arg0: i32, %arg1: i32) -> (i32, i32, i32) {
    %c0_i32 = arith.constant 0 : i32
    %c0_i32_0 = arith.constant 0 : i32
    return %arg0, %arg1, %c0_i32 : i32, i32, i32
  }
  func.func @transform_1(%arg0: i32, %arg1: i32) -> (i32, i32) {
    %c0_i32 = arith.constant 0 : i32
    %c0_i32_0 = arith.constant 0 : i32
    %c0_i32_1 = arith.constant 0 : i32
    return %c0_i32, %c0_i32_0 : i32, i32
  }
  func.func @transform_2(%arg0: i32, %arg1: i32) -> (i32, i32) {
    %c0_i32 = arith.constant 0 : i32
    %c0_i32_0 = arith.constant 0 : i32
    %c0_i32_1 = arith.constant 0 : i32
    return %c0_i32, %c0_i32_0 : i32, i32
  }
  func.func @transform_3(%arg0: i32, %arg1: i32) -> (i32, i32) {
    %c0_i32 = arith.constant 0 : i32
    %c0_i32_0 = arith.constant 0 : i32
    %c0_i32_1 = arith.constant 0 : i32
    return %c0_i32, %c0_i32_0 : i32, i32
  }
  func.func @transform_4(%arg0: i32, %arg1: i32) -> (i32, i32) {
    %c0_i32 = arith.constant 0 : i32
    %c0_i32_0 = arith.constant 0 : i32
    %c0_i32_1 = arith.constant 0 : i32
    return %c0_i32, %c0_i32_0 : i32, i32
  }
  func.func @transform_5(%arg0: i32, %arg1: i32) -> (i32, i32) {
    %c0_i32 = arith.constant 0 : i32
    %c0_i32_0 = arith.constant 0 : i32
    %c0_i32_1 = arith.constant 0 : i32
    return %c0_i32, %c0_i32_0 : i32, i32
  }
  func.func @transform_6(%arg0: i32, %arg1: i32) -> (i32, i32) {
    %c0_i32 = arith.constant 0 : i32
    %c0_i32_0 = arith.constant 0 : i32
    %c0_i32_1 = arith.constant 0 : i32
    return %c0_i32, %c0_i32_0 : i32, i32
  }
  func.func @transform_7(%arg0: i32, %arg1: i32) -> (i32, i32, i32) {
    %c0_i32 = arith.constant 0 : i32
    %c0_i32_0 = arith.constant 0 : i32
    return %arg0, %arg1, %c0_i32 : i32, i32, i32
  }
}

module attributes {stable_mosaic.version = 11 : i64} {
  func.func @_attn_kernel(%arg0: i32, %arg1: memref<1x128x128xf32, #tpu.memory_space<vmem>>, %arg2: memref<1x128xf32, #tpu.memory_space<vmem>>, %arg3: memref<1x128xf32, #tpu.memory_space<vmem>>, %arg4: memref<128x768xf32, #tpu.memory_space<vmem>>, %arg5: memref<256x128xf32, #tpu.memory_space<vmem>>, %arg6: memref<1x128x128xf32, #tpu.memory_space<vmem>>) attributes {dimension_semantics = [#tpu.dimension_semantics<parallel>], iteration_bounds = array<i64: 2>, scalar_prefetch = 0 : i64, scratch_operands = 0 : i64, tpu.core_type = #tpu.core_type<tc>, window_params = [{transform_indices = @transform_0, window_bounds = array<i64: 1, 128, 128>}, {pipeline_mode = #tpu.pipeline_mode<synchronous>, transform_indices = @transform_1, window_bounds = array<i64: 1, 128>}, {pipeline_mode = #tpu.pipeline_mode<synchronous>, transform_indices = @transform_2, window_bounds = array<i64: 1, 128>}, {pipeline_mode = #tpu.pipeline_mode<synchronous>, transform_indices = @transform_3, window_bounds = array<i64: 128, 768>}, {pipeline_mode = #tpu.pipeline_mode<synchronous>, transform_indices = @transform_4, window_bounds = array<i64: 256, 128>}, {transform_indices = @transform_5, window_bounds = array<i64: 1, 128, 128>}]} {
    %c0 = arith.constant 0 : index
    %c0_0 = arith.constant 0 : index
    %c0_1 = arith.constant 0 : index
    %0 = vector.load %arg1[%c0, %c0_0, %c0_1] : memref<1x128x128xf32, #tpu.memory_space<vmem>>, vector<1x128x128xf32>
    %1 = vector.shape_cast %0 : vector<1x128x128xf32> to vector<128x128xf32>
    %cst = arith.constant dense<0.000000e+00> : vector<128xf32>
    %2 = vector.multi_reduction <add>, %1, %cst [1] : vector<128x128xf32> to vector<128xf32>
    %3 = vector.shape_cast %2 : vector<128xf32> to vector<128x1xf32>
    %cst_2 = arith.constant 1.280000e+02 : f32
    %4 = vector.broadcast %cst_2 : f32 to vector<128x1xf32>
    %5 = arith.divf %3, %4 : vector<128x1xf32>
    %6 = vector.broadcast %5 : vector<128x1xf32> to vector<128x128xf32>
    %7 = arith.subf %1, %6 : vector<128x128xf32>
    %8 = arith.mulf %7, %7 : vector<128x128xf32>
    %cst_3 = arith.constant dense<0.000000e+00> : vector<128xf32>
    %9 = vector.multi_reduction <add>, %8, %cst_3 [1] : vector<128x128xf32> to vector<128xf32>
    %10 = vector.shape_cast %9 : vector<128xf32> to vector<128x1xf32>
    %cst_4 = arith.constant 1.280000e+02 : f32
    %11 = vector.broadcast %cst_4 : f32 to vector<128x1xf32>
    %12 = arith.divf %10, %11 : vector<128x1xf32>
    %cst_5 = arith.constant 9.99999974E-6 : f32
    %13 = vector.broadcast %cst_5 : f32 to vector<128x1xf32>
    %14 = arith.addf %12, %13 : vector<128x1xf32>
    %15 = math.rsqrt %14 : vector<128x1xf32>
    %16 = vector.broadcast %15 : vector<128x1xf32> to vector<128x128xf32>
    %17 = arith.mulf %7, %16 : vector<128x128xf32>
    %c0_6 = arith.constant 0 : index
    %c0_7 = arith.constant 0 : index
    %18 = vector.load %arg2[%c0_6, %c0_7] : memref<1x128xf32, #tpu.memory_space<vmem>>, vector<1x128xf32>
    %19 = vector.broadcast %18 : vector<1x128xf32> to vector<128x128xf32>
    %20 = arith.mulf %17, %19 : vector<128x128xf32>
    %c0_8 = arith.constant 0 : index
    %c0_9 = arith.constant 0 : index
    %21 = vector.load %arg3[%c0_8, %c0_9] : memref<1x128xf32, #tpu.memory_space<vmem>>, vector<1x128xf32>
    %22 = vector.broadcast %21 : vector<1x128xf32> to vector<128x128xf32>
    %23 = arith.addf %20, %22 : vector<128x128xf32>
    %c0_10 = arith.constant 0 : index
    %c0_11 = arith.constant 0 : index
    %24 = vector.load %arg4[%c0_10, %c0_11] : memref<128x768xf32, #tpu.memory_space<vmem>>, vector<128x768xf32>
    %cst_12 = arith.constant dense<0.000000e+00> : vector<128x768xf32>
    %25 = tpu.matmul %23, %24, %cst_12 {dimension_numbers = #tpu.dot_dimension_numbers<[1], [0], [0], [1], [0, 0, 1, 1], [], []>} : vector<128x128xf32>, vector<128x768xf32>, vector<128x768xf32> -> vector<128x768xf32>
    %c0_13 = arith.constant 0 : index
    %c0_14 = arith.constant 0 : index
    %26 = vector.load %arg5[%c0_13, %c0_14] : memref<256x128xf32, #tpu.memory_space<vmem>>, vector<256x128xf32>
    %cst_15 = arith.constant 0.000000e+00 : f32
    %27 = vector.broadcast %cst_15 : f32 to vector<128x128xf32>
    %28 = vector.extract_strided_slice %25 {offsets = [0, 0], sizes = [128, 128], strides = [1, 1]} : vector<128x768xf32> to vector<128x128xf32>
    %29 = vector.extract_strided_slice %25 {offsets = [0, 256], sizes = [128, 128], strides = [1, 1]} : vector<128x768xf32> to vector<128x128xf32>
    %30 = vector.extract_strided_slice %25 {offsets = [0, 512], sizes = [128, 128], strides = [1, 1]} : vector<128x768xf32> to vector<128x128xf32>
    %cst_16 = arith.constant dense<0.000000e+00> : vector<128x128xf32>
    %31 = tpu.matmul %28, %29, %cst_16 {dimension_numbers = #tpu.dot_dimension_numbers<[1], [1], [0], [0], [0, 0, 1, 0], [], []>} : vector<128x128xf32>, vector<128x128xf32>, vector<128x128xf32> -> vector<128x128xf32>
    %cst_17 = arith.constant 0.0883883461 : f32
    %32 = vector.broadcast %cst_17 : f32 to vector<128x128xf32>
    %33 = arith.mulf %31, %32 : vector<128x128xf32>
    %cst_18 = arith.constant dense<0xFF800000> : vector<128xf32>
    %34 = vector.multi_reduction <maximumf>, %33, %cst_18 [1] : vector<128x128xf32> to vector<128xf32>
    %35 = vector.shape_cast %34 : vector<128xf32> to vector<128x1xf32>
    %36 = vector.broadcast %35 : vector<128x1xf32> to vector<128x128xf32>
    %37 = arith.subf %33, %36 : vector<128x128xf32>
    %38 = math.exp %37 : vector<128x128xf32>
    %cst_19 = arith.constant dense<0.000000e+00> : vector<128xf32>
    %39 = vector.multi_reduction <add>, %38, %cst_19 [1] : vector<128x128xf32> to vector<128xf32>
    %40 = vector.shape_cast %39 : vector<128xf32> to vector<128x1xf32>
    %41 = vector.broadcast %40 : vector<128x1xf32> to vector<128x128xf32>
    %42 = arith.divf %38, %41 : vector<128x128xf32>
    %cst_20 = arith.constant dense<0.000000e+00> : vector<128x128xf32>
    %43 = tpu.matmul %42, %30, %cst_20 {dimension_numbers = #tpu.dot_dimension_numbers<[1], [0], [0], [1], [0, 0, 1, 1], [], []>} : vector<128x128xf32>, vector<128x128xf32>, vector<128x128xf32> -> vector<128x128xf32>
    %44 = vector.extract_strided_slice %26 {offsets = [0, 0], sizes = [128, 128], strides = [1, 1]} : vector<256x128xf32> to vector<128x128xf32>
    %cst_21 = arith.constant dense<0.000000e+00> : vector<128x128xf32>
    %45 = tpu.matmul %43, %44, %cst_21 {dimension_numbers = #tpu.dot_dimension_numbers<[1], [0], [0], [1], [0, 0, 1, 1], [], []>} : vector<128x128xf32>, vector<128x128xf32>, vector<128x128xf32> -> vector<128x128xf32>
    %46 = arith.addf %27, %45 : vector<128x128xf32>
    %47 = vector.extract_strided_slice %25 {offsets = [0, 128], sizes = [128, 128], strides = [1, 1]} : vector<128x768xf32> to vector<128x128xf32>
    %48 = vector.extract_strided_slice %25 {offsets = [0, 384], sizes = [128, 128], strides = [1, 1]} : vector<128x768xf32> to vector<128x128xf32>
    %49 = vector.extract_strided_slice %25 {offsets = [0, 640], sizes = [128, 128], strides = [1, 1]} : vector<128x768xf32> to vector<128x128xf32>
    %cst_22 = arith.constant dense<0.000000e+00> : vector<128x128xf32>
    %50 = tpu.matmul %47, %48, %cst_22 {dimension_numbers = #tpu.dot_dimension_numbers<[1], [1], [0], [0], [0, 0, 1, 0], [], []>} : vector<128x128xf32>, vector<128x128xf32>, vector<128x128xf32> -> vector<128x128xf32>
    %cst_23 = arith.constant 0.0883883461 : f32
    %51 = vector.broadcast %cst_23 : f32 to vector<128x128xf32>
    %52 = arith.mulf %50, %51 : vector<128x128xf32>
    %cst_24 = arith.constant dense<0xFF800000> : vector<128xf32>
    %53 = vector.multi_reduction <maximumf>, %52, %cst_24 [1] : vector<128x128xf32> to vector<128xf32>
    %54 = vector.shape_cast %53 : vector<128xf32> to vector<128x1xf32>
    %55 = vector.broadcast %54 : vector<128x1xf32> to vector<128x128xf32>
    %56 = arith.subf %52, %55 : vector<128x128xf32>
    %57 = math.exp %56 : vector<128x128xf32>
    %cst_25 = arith.constant dense<0.000000e+00> : vector<128xf32>
    %58 = vector.multi_reduction <add>, %57, %cst_25 [1] : vector<128x128xf32> to vector<128xf32>
    %59 = vector.shape_cast %58 : vector<128xf32> to vector<128x1xf32>
    %60 = vector.broadcast %59 : vector<128x1xf32> to vector<128x128xf32>
    %61 = arith.divf %57, %60 : vector<128x128xf32>
    %cst_26 = arith.constant dense<0.000000e+00> : vector<128x128xf32>
    %62 = tpu.matmul %61, %49, %cst_26 {dimension_numbers = #tpu.dot_dimension_numbers<[1], [0], [0], [1], [0, 0, 1, 1], [], []>} : vector<128x128xf32>, vector<128x128xf32>, vector<128x128xf32> -> vector<128x128xf32>
    %63 = vector.extract_strided_slice %26 {offsets = [128, 0], sizes = [128, 128], strides = [1, 1]} : vector<256x128xf32> to vector<128x128xf32>
    %cst_27 = arith.constant dense<0.000000e+00> : vector<128x128xf32>
    %64 = tpu.matmul %62, %63, %cst_27 {dimension_numbers = #tpu.dot_dimension_numbers<[1], [0], [0], [1], [0, 0, 1, 1], [], []>} : vector<128x128xf32>, vector<128x128xf32>, vector<128x128xf32> -> vector<128x128xf32>
    %65 = arith.addf %46, %64 : vector<128x128xf32>
    %66 = arith.addf %1, %65 : vector<128x128xf32>
    %c0_28 = arith.constant 0 : index
    %c0_29 = arith.constant 0 : index
    %c0_30 = arith.constant 0 : index
    %67 = vector.load %arg6[%c0_28, %c0_29, %c0_30] : memref<1x128x128xf32, #tpu.memory_space<vmem>>, vector<1x128x128xf32>
    %68 = vector.shape_cast %67 : vector<1x128x128xf32> to vector<128x128xf32>
    %69 = vector.shape_cast %66 : vector<128x128xf32> to vector<1x128x128xf32>
    tpu.vector_store %arg6[%c0_28, %c0_29, %c0_30], %69 {strides = array<i32>} : memref<1x128x128xf32, #tpu.memory_space<vmem>>, vector<1x128x128xf32>,
    return
  }
  func.func @transform_0(%arg0: i32) -> (i32, i32, i32) {
    %c0_i32 = arith.constant 0 : i32
    %c0_i32_0 = arith.constant 0 : i32
    %c0_i32_1 = arith.constant 0 : i32
    return %arg0, %c0_i32, %c0_i32_0 : i32, i32, i32
  }
  func.func @transform_1(%arg0: i32) -> (i32, i32) {
    %c0_i32 = arith.constant 0 : i32
    %c0_i32_0 = arith.constant 0 : i32
    %c0_i32_1 = arith.constant 0 : i32
    return %c0_i32, %c0_i32_0 : i32, i32
  }
  func.func @transform_2(%arg0: i32) -> (i32, i32) {
    %c0_i32 = arith.constant 0 : i32
    %c0_i32_0 = arith.constant 0 : i32
    %c0_i32_1 = arith.constant 0 : i32
    return %c0_i32, %c0_i32_0 : i32, i32
  }
  func.func @transform_3(%arg0: i32) -> (i32, i32) {
    %c0_i32 = arith.constant 0 : i32
    %c0_i32_0 = arith.constant 0 : i32
    %c0_i32_1 = arith.constant 0 : i32
    return %c0_i32, %c0_i32_0 : i32, i32
  }
  func.func @transform_4(%arg0: i32) -> (i32, i32) {
    %c0_i32 = arith.constant 0 : i32
    %c0_i32_0 = arith.constant 0 : i32
    %c0_i32_1 = arith.constant 0 : i32
    return %c0_i32, %c0_i32_0 : i32, i32
  }
  func.func @transform_5(%arg0: i32) -> (i32, i32, i32) {
    %c0_i32 = arith.constant 0 : i32
    %c0_i32_0 = arith.constant 0 : i32
    %c0_i32_1 = arith.constant 0 : i32
    return %arg0, %c0_i32, %c0_i32_0 : i32, i32, i32
  }
}

module attributes {stable_mosaic.version = 11 : i64} {
  func.func @_ffn_kernel(%arg0: i32, %arg1: i32, %arg2: memref<1x128x128xf32, #tpu.memory_space<vmem>>, %arg3: memref<1x128xf32, #tpu.memory_space<vmem>>, %arg4: memref<1x128xf32, #tpu.memory_space<vmem>>, %arg5: memref<128x256xf32, #tpu.memory_space<vmem>>, %arg6: memref<1x256xf32, #tpu.memory_space<vmem>>, %arg7: memref<256x128xf32, #tpu.memory_space<vmem>>, %arg8: memref<1x128xf32, #tpu.memory_space<vmem>>, %arg9: memref<1x128x128xf32, #tpu.memory_space<vmem>>) attributes {dimension_semantics = [#tpu.dimension_semantics<parallel>, #tpu.dimension_semantics<parallel>], iteration_bounds = array<i64: 2, 1>, scalar_prefetch = 0 : i64, scratch_operands = 0 : i64, tpu.core_type = #tpu.core_type<tc>, window_params = [{transform_indices = @transform_0, window_bounds = array<i64: 1, 128, 128>}, {pipeline_mode = #tpu.pipeline_mode<synchronous>, transform_indices = @transform_1, window_bounds = array<i64: 1, 128>}, {pipeline_mode = #tpu.pipeline_mode<synchronous>, transform_indices = @transform_2, window_bounds = array<i64: 1, 128>}, {pipeline_mode = #tpu.pipeline_mode<synchronous>, transform_indices = @transform_3, window_bounds = array<i64: 128, 256>}, {pipeline_mode = #tpu.pipeline_mode<synchronous>, transform_indices = @transform_4, window_bounds = array<i64: 1, 256>}, {pipeline_mode = #tpu.pipeline_mode<synchronous>, transform_indices = @transform_5, window_bounds = array<i64: 256, 128>}, {pipeline_mode = #tpu.pipeline_mode<synchronous>, transform_indices = @transform_6, window_bounds = array<i64: 1, 128>}, {transform_indices = @transform_7, window_bounds = array<i64: 1, 128, 128>}]} {
    %c0 = arith.constant 0 : index
    %c0_0 = arith.constant 0 : index
    %c0_1 = arith.constant 0 : index
    %0 = vector.load %arg2[%c0, %c0_0, %c0_1] : memref<1x128x128xf32, #tpu.memory_space<vmem>>, vector<1x128x128xf32>
    %1 = vector.shape_cast %0 : vector<1x128x128xf32> to vector<128x128xf32>
    %cst = arith.constant dense<0.000000e+00> : vector<128xf32>
    %2 = vector.multi_reduction <add>, %1, %cst [1] : vector<128x128xf32> to vector<128xf32>
    %3 = vector.shape_cast %2 : vector<128xf32> to vector<128x1xf32>
    %cst_2 = arith.constant 1.280000e+02 : f32
    %4 = vector.broadcast %cst_2 : f32 to vector<128x1xf32>
    %5 = arith.divf %3, %4 : vector<128x1xf32>
    %6 = vector.broadcast %5 : vector<128x1xf32> to vector<128x128xf32>
    %7 = arith.subf %1, %6 : vector<128x128xf32>
    %8 = arith.mulf %7, %7 : vector<128x128xf32>
    %cst_3 = arith.constant dense<0.000000e+00> : vector<128xf32>
    %9 = vector.multi_reduction <add>, %8, %cst_3 [1] : vector<128x128xf32> to vector<128xf32>
    %10 = vector.shape_cast %9 : vector<128xf32> to vector<128x1xf32>
    %cst_4 = arith.constant 1.280000e+02 : f32
    %11 = vector.broadcast %cst_4 : f32 to vector<128x1xf32>
    %12 = arith.divf %10, %11 : vector<128x1xf32>
    %cst_5 = arith.constant 9.99999974E-6 : f32
    %13 = vector.broadcast %cst_5 : f32 to vector<128x1xf32>
    %14 = arith.addf %12, %13 : vector<128x1xf32>
    %15 = math.rsqrt %14 : vector<128x1xf32>
    %16 = vector.broadcast %15 : vector<128x1xf32> to vector<128x128xf32>
    %17 = arith.mulf %7, %16 : vector<128x128xf32>
    %c0_6 = arith.constant 0 : index
    %c0_7 = arith.constant 0 : index
    %18 = vector.load %arg3[%c0_6, %c0_7] : memref<1x128xf32, #tpu.memory_space<vmem>>, vector<1x128xf32>
    %19 = vector.broadcast %18 : vector<1x128xf32> to vector<128x128xf32>
    %20 = arith.mulf %17, %19 : vector<128x128xf32>
    %c0_8 = arith.constant 0 : index
    %c0_9 = arith.constant 0 : index
    %21 = vector.load %arg4[%c0_8, %c0_9] : memref<1x128xf32, #tpu.memory_space<vmem>>, vector<1x128xf32>
    %22 = vector.broadcast %21 : vector<1x128xf32> to vector<128x128xf32>
    %23 = arith.addf %20, %22 : vector<128x128xf32>
    %c0_10 = arith.constant 0 : index
    %c0_11 = arith.constant 0 : index
    %24 = vector.load %arg5[%c0_10, %c0_11] : memref<128x256xf32, #tpu.memory_space<vmem>>, vector<128x256xf32>
    %cst_12 = arith.constant dense<0.000000e+00> : vector<128x256xf32>
    %25 = tpu.matmul %23, %24, %cst_12 {dimension_numbers = #tpu.dot_dimension_numbers<[1], [0], [0], [1], [0, 0, 1, 1], [], []>} : vector<128x128xf32>, vector<128x256xf32>, vector<128x256xf32> -> vector<128x256xf32>
    %c0_13 = arith.constant 0 : index
    %c0_14 = arith.constant 0 : index
    %26 = vector.load %arg6[%c0_13, %c0_14] : memref<1x256xf32, #tpu.memory_space<vmem>>, vector<1x256xf32>
    %27 = vector.broadcast %26 : vector<1x256xf32> to vector<128x256xf32>
    %28 = arith.addf %25, %27 : vector<128x256xf32>
    %cst_15 = arith.constant 5.000000e-01 : f32
    %29 = vector.broadcast %cst_15 : f32 to vector<128x256xf32>
    %30 = arith.mulf %29, %28 : vector<128x256xf32>
    %cst_16 = arith.constant 4.471500e-02 : f32
    %31 = vector.broadcast %cst_16 : f32 to vector<128x256xf32>
    %32 = arith.mulf %31, %28 : vector<128x256xf32>
    %33 = arith.mulf %32, %28 : vector<128x256xf32>
    %34 = arith.mulf %33, %28 : vector<128x256xf32>
    %35 = arith.addf %28, %34 : vector<128x256xf32>
    %cst_17 = arith.constant 0.797884583 : f32
    %36 = vector.broadcast %cst_17 : f32 to vector<128x256xf32>
    %37 = arith.mulf %36, %35 : vector<128x256xf32>
    %38 = math.tanh %37 : vector<128x256xf32>
    %cst_18 = arith.constant 1.000000e+00 : f32
    %39 = vector.broadcast %cst_18 : f32 to vector<128x256xf32>
    %40 = arith.addf %39, %38 : vector<128x256xf32>
    %41 = arith.mulf %30, %40 : vector<128x256xf32>
    %c0_19 = arith.constant 0 : index
    %c0_20 = arith.constant 0 : index
    %42 = vector.load %arg7[%c0_19, %c0_20] : memref<256x128xf32, #tpu.memory_space<vmem>>, vector<256x128xf32>
    %cst_21 = arith.constant dense<0.000000e+00> : vector<128x128xf32>
    %43 = tpu.matmul %41, %42, %cst_21 {dimension_numbers = #tpu.dot_dimension_numbers<[1], [0], [0], [1], [0, 0, 1, 1], [], []>} : vector<128x256xf32>, vector<256x128xf32>, vector<128x128xf32> -> vector<128x128xf32>
    %c0_22 = arith.constant 0 : index
    %c0_23 = arith.constant 0 : index
    %44 = vector.load %arg8[%c0_22, %c0_23] : memref<1x128xf32, #tpu.memory_space<vmem>>, vector<1x128xf32>
    %45 = vector.broadcast %44 : vector<1x128xf32> to vector<128x128xf32>
    %46 = arith.addf %43, %45 : vector<128x128xf32>
    %47 = arith.addf %1, %46 : vector<128x128xf32>
    %c0_24 = arith.constant 0 : index
    %c0_25 = arith.constant 0 : index
    %c0_26 = arith.constant 0 : index
    %48 = vector.load %arg9[%c0_24, %c0_25, %c0_26] : memref<1x128x128xf32, #tpu.memory_space<vmem>>, vector<1x128x128xf32>
    %49 = vector.shape_cast %48 : vector<1x128x128xf32> to vector<128x128xf32>
    %50 = vector.shape_cast %47 : vector<128x128xf32> to vector<1x128x128xf32>
    tpu.vector_store %arg9[%c0_24, %c0_25, %c0_26], %50 {strides = array<i32>} : memref<1x128x128xf32, #tpu.memory_space<vmem>>, vector<1x128x128xf32>,
    return
  }
  func.func @transform_0(%arg0: i32, %arg1: i32) -> (i32, i32, i32) {
    %c0_i32 = arith.constant 0 : i32
    %c0_i32_0 = arith.constant 0 : i32
    return %arg0, %arg1, %c0_i32 : i32, i32, i32
  }
  func.func @transform_1(%arg0: i32, %arg1: i32) -> (i32, i32) {
    %c0_i32 = arith.constant 0 : i32
    %c0_i32_0 = arith.constant 0 : i32
    %c0_i32_1 = arith.constant 0 : i32
    return %c0_i32, %c0_i32_0 : i32, i32
  }
  func.func @transform_2(%arg0: i32, %arg1: i32) -> (i32, i32) {
    %c0_i32 = arith.constant 0 : i32
    %c0_i32_0 = arith.constant 0 : i32
    %c0_i32_1 = arith.constant 0 : i32
    return %c0_i32, %c0_i32_0 : i32, i32
  }
  func.func @transform_3(%arg0: i32, %arg1: i32) -> (i32, i32) {
    %c0_i32 = arith.constant 0 : i32
    %c0_i32_0 = arith.constant 0 : i32
    %c0_i32_1 = arith.constant 0 : i32
    return %c0_i32, %c0_i32_0 : i32, i32
  }
  func.func @transform_4(%arg0: i32, %arg1: i32) -> (i32, i32) {
    %c0_i32 = arith.constant 0 : i32
    %c0_i32_0 = arith.constant 0 : i32
    %c0_i32_1 = arith.constant 0 : i32
    return %c0_i32, %c0_i32_0 : i32, i32
  }
  func.func @transform_5(%arg0: i32, %arg1: i32) -> (i32, i32) {
    %c0_i32 = arith.constant 0 : i32
    %c0_i32_0 = arith.constant 0 : i32
    %c0_i32_1 = arith.constant 0 : i32
    return %c0_i32, %c0_i32_0 : i32, i32
  }
  func.func @transform_6(%arg0: i32, %arg1: i32) -> (i32, i32) {
    %c0_i32 = arith.constant 0 : i32
    %c0_i32_0 = arith.constant 0 : i32
    %c0_i32_1 = arith.constant 0 : i32
    return %c0_i32, %c0_i32_0 : i32, i32
  }
  func.func @transform_7(%arg0: i32, %arg1: i32) -> (i32, i32, i32) {
    %c0_i32 = arith.constant 0 : i32
    %c0_i32_0 = arith.constant 0 : i32
    return %arg0, %arg1, %c0_i32 : i32, i32, i32
  }
}

</mosaic_0001>

<llo_original>
// kernel: transformer_forward.7
$region0: #{transformer_forward.7}
  #allocation0 [shape = 'u32[]', space=smem, size = 0x4, offset = 0x4, fixed_abs, tag = 'smem constant byte address 0x4 - core index']
  #allocation1 [shape = 'u32[72,128]{1,0:T(1,128)}', space=vmem, size = 0x9000, scoped, tag = 'internal scratch']
  %s0 = inlined_call_operand.hbm [shape: f32[2,128,128], index: 0, kind: input, shape index: {}, may-alias: {0,7}]
  %s1 = inlined_call_operand.vmem [shape: f32[1,128], index: 1, kind: input, shape index: {}]
  %s2 = inlined_call_operand.vmem [shape: f32[1,128], index: 2, kind: input, shape index: {}]
  %s3 = inlined_call_operand.vmem [shape: f32[128,256], index: 3, kind: input, shape index: {}]
  %s4 = inlined_call_operand.vmem [shape: f32[1,256], index: 4, kind: input, shape index: {}]
  %s5 = inlined_call_operand.vmem [shape: f32[256,128], index: 5, kind: input, shape index: {}]
  %s6 = inlined_call_operand.vmem [shape: f32[1,128], index: 6, kind: input, shape index: {}]
  %s7 = inlined_call_operand.hbm [shape: f32[2,128,128], index: 7, kind: output, shape index: {}, may-alias: {0,7}]
  %s8 = sld [smem:[#allocation0]]
  $region65: #{transformer_forward.7} parent=0
    _
  %s10 = ssub.s32 1, %s8
  %s11 = scalar_select 0, %s10, %s8
  $region1: #{transformer_forward.7} parent=0
    #allocation2 [shape = 'u8[131072]{0}', space=vmem, size = 0x20000, scoped, tag = 'input window, operand 0']
    #allocation3 [shape = 's32[2]{0}', space=sflag, size = 0x8, scoped, tag = 'scoped memory for transformer_forward.7']
    #allocation4 [shape = 's32[2]{0}', space=sflag, size = 0x8, scoped, tag = 'scoped memory for transformer_forward.7']
    #allocation5 [shape = 'u8[131072]{0}', space=vmem, size = 0x20000, scoped, tag = 'output window, operand 0']
    %12 = vsyncpa [#allocation3], 0
    %s13 = scalar_lea.sflag [#allocation3], 1
    %14 = vsyncpa %s13, 0
    %15 = vsyncpa [#allocation4], 0
    %s16 = scalar_lea.sflag [#allocation4], 1
    %17 = vsyncpa %s16, 0
    loop: start=0, step=1, limit=4
    $region2: #{transformer_forward.7} parent=1 // loop_pre_header
      _
    $region3: #{transformer_forward.7} parent=1 // loop_header
      %s19 = sphi 0, %s23
      %p20 = scmp.ge.s32.totalorder %s19, 4
      %s26 = sphi 0, %s38
      %s27 = sphi 0, %s34
      %s28 = sphi 0, %s26
      %s29 = sphi 0, %s27
      %s30 = sphi 0, %s28
      %s31 = sphi 0, %s29
      %s43 = sphi 0, %s45
      %s46 = sphi 0, %s43
      %s47 = sphi 0, %s46
      %s63 = sphi 0, %s47
      %s67 = sphi 0, %s67
      %s69 = sphi 0, %s67
      %s70 = sphi 0, %s69
      %s84 = sphi 0, %s70
      %s88 = sphi 0, %s88
      %s90 = sphi 0, %s88
      %s91 = sphi 0, %s90
      %s105 = sphi 0, %s91
      %s109 = sphi 0, %s109
      %s111 = sphi 0, %s109
      %s112 = sphi 0, %s111
      %s126 = sphi 0, %s112
      %s130 = sphi 0, %s130
      %s132 = sphi 0, %s130
      %s133 = sphi 0, %s132
      %s147 = sphi 0, %s133
      %s151 = sphi 0, %s151
      %s153 = sphi 0, %s151
      %s154 = sphi 0, %s153
      %s168 = sphi 0, %s154
      %s172 = sphi 0, %s172
      %s174 = sphi 0, %s172
      %s175 = sphi 0, %s174
      %s189 = sphi 0, %s175
      %s197 = sphi 0, %s199
      %s200 = sphi 0, %s197
      %s201 = sphi 0, %s200
      %s217 = sphi 0, %s201
    $region4: #{transformer_forward.7} parent=1 // loop_header_branch
      %22 = sbr.rel (%p20) target = $region8
    $region5: #{transformer_forward.7} parent=1 // loop_body
      %s24 = ssub.s32 %s19, 1
      %s25 = ssub.s32 %s19, 2
      %s32 = sadd.s32 1, %s27
      %p33 = scmp.ge.s32.totalorder %s32, 1
      %s34 = scalar_select %p33, 0, %s32
      %s35 = sadd.s32 1, %s26
      %s36 = scalar_select %p33, %s35, %s26
      %p37 = scmp.ge.s32.totalorder %s36, 2
      %s38 = scalar_select %p37, 0, %s36
      %s39 = ssub.s32 %s26, %s38
      %s40 = ssub.s32 %s27, %s34
      %s41 = sor.u32 %s39, %s40
      %p42 = scmp.eq.s32.totalorder %s41, 0
      %s44 = sadd.s32 %s43, 1
      %s45 = scalar_select %p42, %s43, %s44
      %p48 = pneg %p42
      %p49 = scmp.eq.s32.totalorder %s19, 1
      %p50 = por %p48, %p49
      %p51 = scmp.ne.s32.totalorder %s43, %s46
      %p52 = scmp.eq.s32.totalorder %s19, 0
      %p53 = por %p51, %p52
      %p54 = scmp.ne.s32.totalorder %s43, %s46
      %p55 = scmp.eq.s32.totalorder %s24, 1
      %p56 = por %p54, %p55
      %p57 = scmp.ne.s32.totalorder %s46, %s47
      %p58 = scmp.eq.s32.totalorder %s24, 0
      %p59 = por %p57, %p58
      %p60 = scmp.ne.s32.totalorder %s46, %s47
      %p61 = scmp.eq.s32.totalorder %s25, 1
      %p62 = por %p60, %p61
      %p64 = scmp.ne.s32.totalorder %s47, %s63
      %p65 = scmp.eq.s32.totalorder %s25, 0
      %p66 = por %p64, %p65
      %s68 = sadd.s32 %s67, 1
      %p71 = scmp.eq.s32.totalorder %s19, 1
      %p72 = scmp.ne.s32.totalorder %s67, %s69
      %p73 = scmp.eq.s32.totalorder %s19, 0
      %p74 = por %p72, %p73
      %p75 = scmp.ne.s32.totalorder %s67, %s69
      %p76 = scmp.eq.s32.totalorder %s24, 1
      %p77 = por %p75, %p76
      %p78 = scmp.ne.s32.totalorder %s69, %s70
      %p79 = scmp.eq.s32.totalorder %s24, 0
      %p80 = por %p78, %p79
      %p81 = scmp.ne.s32.totalorder %s69, %s70
      %p82 = scmp.eq.s32.totalorder %s25, 1
      %p83 = por %p81, %p82
      %p85 = scmp.ne.s32.totalorder %s70, %s84
      %p86 = scmp.eq.s32.totalorder %s25, 0
      %p87 = por %p85, %p86
      %s89 = sadd.s32 %s88, 1
      %p92 = scmp.eq.s32.totalorder %s19, 1
      %p93 = scmp.ne.s32.totalorder %s88, %s90
      %p94 = scmp.eq.s32.totalorder %s19, 0
      %p95 = por %p93, %p94
      %p96 = scmp.ne.s32.totalorder %s88, %s90
      %p97 = scmp.eq.s32.totalorder %s24, 1
      %p98 = por %p96, %p97
      %p99 = scmp.ne.s32.totalorder %s90, %s91
      %p100 = scmp.eq.s32.totalorder %s24, 0
      %p101 = por %p99, %p100
      %p102 = scmp.ne.s32.totalorder %s90, %s91
      %p103 = scmp.eq.s32.totalorder %s25, 1
      %p104 = por %p102, %p103
      %p106 = scmp.ne.s32.totalorder %s91, %s105
      %p107 = scmp.eq.s32.totalorder %s25, 0
      %p108 = por %p106, %p107
      %s110 = sadd.s32 %s109, 1
      %p113 = scmp.eq.s32.totalorder %s19, 1
      %p114 = scmp.ne.s32.totalorder %s109, %s111
      %p115 = scmp.eq.s32.totalorder %s19, 0
      %p116 = por %p114, %p115
      %p117 = scmp.ne.s32.totalorder %s109, %s111
      %p118 = scmp.eq.s32.totalorder %s24, 1
      %p119 = por %p117, %p118
      %p120 = scmp.ne.s32.totalorder %s111, %s112
      %p121 = scmp.eq.s32.totalorder %s24, 0
      %p122 = por %p120, %p121
      %p123 = scmp.ne.s32.totalorder %s111, %s112
      %p124 = scmp.eq.s32.totalorder %s25, 1
      %p125 = por %p123, %p124
      %p127 = scmp.ne.s32.totalorder %s112, %s126
      %p128 = scmp.eq.s32.totalorder %s25, 0
      %p129 = por %p127, %p128
      %s131 = sadd.s32 %s130, 1
      %p134 = scmp.eq.s32.totalorder %s19, 1
      %p135 = scmp.ne.s32.totalorder %s130, %s132
      %p136 = scmp.eq.s32.totalorder %s19, 0
      %p137 = por %p135, %p136
      %p138 = scmp.ne.s32.totalorder %s130, %s132
      %p139 = scmp.eq.s32.totalorder %s24, 1
      %p140 = por %p138, %p139
      %p141 = scmp.ne.s32.totalorder %s132, %s133
      %p142 = scmp.eq.s32.totalorder %s24, 0
      %p143 = por %p141, %p142
      %p144 = scmp.ne.s32.totalorder %s132, %s133
      %p145 = scmp.eq.s32.totalorder %s25, 1
      %p146 = por %p144, %p145
      %p148 = scmp.ne.s32.totalorder %s133, %s147
      %p149 = scmp.eq.s32.totalorder %s25, 0
      %p150 = por %p148, %p149
      %s152 = sadd.s32 %s151, 1
      %p155 = scmp.eq.s32.totalorder %s19, 1
      %p156 = scmp.ne.s32.totalorder %s151, %s153
      %p157 = scmp.eq.s32.totalorder %s19, 0
      %p158 = por %p156, %p157
      %p159 = scmp.ne.s32.totalorder %s151, %s153
      %p160 = scmp.eq.s32.totalorder %s24, 1
      %p161 = por %p159, %p160
      %p162 = scmp.ne.s32.totalorder %s153, %s154
      %p163 = scmp.eq.s32.totalorder %s24, 0
      %p164 = por %p162, %p163
      %p165 = scmp.ne.s32.totalorder %s153, %s154
      %p166 = scmp.eq.s32.totalorder %s25, 1
      %p167 = por %p165, %p166
      %p169 = scmp.ne.s32.totalorder %s154, %s168
      %p170 = scmp.eq.s32.totalorder %s25, 0
      %p171 = por %p169, %p170
      %s173 = sadd.s32 %s172, 1
      %p176 = scmp.eq.s32.totalorder %s19, 1
      %p177 = scmp.ne.s32.totalorder %s172, %s174
      %p178 = scmp.eq.s32.totalorder %s19, 0
      %p179 = por %p177, %p178
      %p180 = scmp.ne.s32.totalorder %s172, %s174
      %p181 = scmp.eq.s32.totalorder %s24, 1
      %p182 = por %p180, %p181
      %p183 = scmp.ne.s32.totalorder %s174, %s175
      %p184 = scmp.eq.s32.totalorder %s24, 0
      %p185 = por %p183, %p184
      %p186 = scmp.ne.s32.totalorder %s174, %s175
      %p187 = scmp.eq.s32.totalorder %s25, 1
      %p188 = por %p186, %p187
      %p190 = scmp.ne.s32.totalorder %s175, %s189
      %p191 = scmp.eq.s32.totalorder %s25, 0
      %p192 = por %p190, %p191
      %s193 = ssub.s32 %s26, %s38
      %s194 = ssub.s32 %s27, %s34
      %s195 = sor.u32 %s193, %s194
      %p196 = scmp.eq.s32.totalorder %s195, 0
      %s198 = sadd.s32 %s197, 1
      %s199 = scalar_select %p196, %s197, %s198
      %p202 = pneg %p196
      %p203 = scmp.eq.s32.totalorder %s19, 1
      %p204 = por %p202, %p203
      %p205 = scmp.ne.s32.totalorder %s197, %s200
      %p206 = scmp.eq.s32.totalorder %s19, 0
      %p207 = por %p205, %p206
      %p208 = scmp.ne.s32.totalorder %s197, %s200
      %p209 = scmp.eq.s32.totalorder %s24, 1
      %p210 = por %p208, %p209
      %p211 = scmp.ne.s32.totalorder %s200, %s201
      %p212 = scmp.eq.s32.totalorder %s24, 0
      %p213 = por %p211, %p212
      %p214 = scmp.ne.s32.totalorder %s200, %s201
      %p215 = scmp.eq.s32.totalorder %s25, 1
      %p216 = por %p214, %p215
      %p218 = scmp.ne.s32.totalorder %s201, %s217
      %p219 = scmp.eq.s32.totalorder %s25, 0
      %p220 = por %p218, %p219
      %p221 = scmp.le.s32.totalorder 1, %s19
      %p222 = scmp.lt.s32.totalorder %s19, 3
      %p223 = pnand %p221, %p222
      %p224 = pneg %p223
      // Predicated region
      $region9: #{transformer_forward.7} parent=5 // pred_check
        _
      $region10: #{transformer_forward.7} parent=5 // pred_check_branch
        %226 = sbr.rel (%p223) target = $region12
      $region11: #{transformer_forward.7} parent=5 // pred_region
        %s227 = ssub.s32 %s19, 1
        // Predicated region
        $region13: #{transformer_forward.7} parent=11 // pred_check
          %p228 = pneg %p80
        $region14: #{transformer_forward.7} parent=11 // pred_check_branch
          %230 = sbr.rel (%p228) target = $region16
        $region15: #{transformer_forward.7} parent=11 // pred_region
          _
        $region16: #{transformer_forward.7} parent=11 // pred_fallthru
          _
        // Predicated region
        $region17: #{transformer_forward.7} parent=11 // pred_check
          %p231 = pneg %p101
        $region18: #{transformer_forward.7} parent=11 // pred_check_branch
          %233 = sbr.rel (%p231) target = $region20
        $region19: #{transformer_forward.7} parent=11 // pred_region
          _
        $region20: #{transformer_forward.7} parent=11 // pred_fallthru
          _
        // Predicated region
        $region21: #{transformer_forward.7} parent=11 // pred_check
          %p234 = pneg %p122
        $region22: #{transformer_forward.7} parent=11 // pred_check_branch
          %236 = sbr.rel (%p234) target = $region24
        $region23: #{transformer_forward.7} parent=11 // pred_region
          _
        $region24: #{transformer_forward.7} parent=11 // pred_fallthru
          _
        // Predicated region
        $region25: #{transformer_forward.7} parent=11 // pred_check
          %p237 = pneg %p143
        $region26: #{transformer_forward.7} parent=11 // pred_check_branch
          %239 = sbr.rel (%p237) target = $region28
        $region27: #{transformer_forward.7} parent=11 // pred_region
          _
        $region28: #{transformer_forward.7} parent=11 // pred_fallthru
          _
        // Predicated region
        $region29: #{transformer_forward.7} parent=11 // pred_check
          %p240 = pneg %p164
        $region30: #{transformer_forward.7} parent=11 // pred_check_branch
          %242 = sbr.rel (%p240) target = $region32
        $region31: #{transformer_forward.7} parent=11 // pred_region
          _
        $region32: #{transformer_forward.7} parent=11 // pred_fallthru
          _
        // Predicated region
        $region33: #{transformer_forward.7} parent=11 // pred_check
          %p243 = pneg %p185
        $region34: #{transformer_forward.7} parent=11 // pred_check_branch
          %245 = sbr.rel (%p243) target = $region36
        $region35: #{transformer_forward.7} parent=11 // pred_region
          _
        $region36: #{transformer_forward.7} parent=11 // pred_fallthru
          _
      $region12: #{transformer_forward.7} parent=5 // pred_fallthru
        _
      %p246 = scmp.lt.s32.totalorder %s19, 2
      // Predicated region
      $region37: #{transformer_forward.7} parent=5 // pred_check
        %p247 = pneg %p246
      $region38: #{transformer_forward.7} parent=5 // pred_check_branch
        %249 = sbr.rel (%p247) target = $region40
      $region39: #{transformer_forward.7} parent=5 // pred_region
        // Predicated region
        $region41: #{transformer_forward.7} parent=39 // pred_check
          %p250 = pneg %p53
        $region42: #{transformer_forward.7} parent=39 // pred_check_branch
          %252 = sbr.rel (%p250) target = $region44
        $region43: #{transformer_forward.7} parent=39 // pred_region
          %s253 = sand.u32 %s43, 1
          %s254 = scalar_lea.sflag [#allocation3], %s253
          %s255 = sand.u32 %s43, 1
          %s256 = smul.addr %s255, 128
          %s257 = scalar_lea.vmem [#allocation2], %s256
          %s258 = smul.u32 16, %s27
          %260 = vsyncadd %s254, 0
          %s261 = smul.addr %s26, 16
          %s262 = sadd.s32 %s258, %s261
          %s263 = smul.addr %s262, 8
          %s264 = scalar_lea.hbm %s0, %s263
          %s265 = sshll.u32 %s264, 4
          %s266 = int_to_ptr.hbm [resolvable:$true] %s265
          %s267 = sshll.u32 %s257, 4
          %s268 = int_to_ptr.vmem [resolvable:$true] %s267
          %273 = dma.hbm_to_vmem [thread:$0]  %s266, 2048, %s268, %s254, 128, 128, 8
        $region44: #{transformer_forward.7} parent=39 // pred_fallthru
          _
      $region40: #{transformer_forward.7} parent=5 // pred_fallthru
        _
      %p274 = scmp.le.s32.totalorder 1, %s19
      %p275 = scmp.lt.s32.totalorder %s19, 3
      %p276 = pnand %p274, %p275
      %p277 = pneg %p276
      // Predicated region
      $region45: #{transformer_forward.7} parent=5 // pred_check
        _
      $region46: #{transformer_forward.7} parent=5 // pred_check_branch
        %279 = sbr.rel (%p276) target = $region48
      $region47: #{transformer_forward.7} parent=5 // pred_region
        %s280 = ssub.s32 %s19, 1
        %s281 = sand.u32 %s46, 1
        %s282 = scalar_lea.sflag [#allocation3], %s281
        %s283 = sand.u32 %s46, 1
        %s284 = smul.addr %s283, 128
        %s285 = scalar_lea.vmem [#allocation2], %s284
        // Predicated region
        $region49: #{transformer_forward.7} parent=47 // pred_check
          %p286 = pneg %p59
        $region50: #{transformer_forward.7} parent=47 // pred_check_branch
          %288 = sbr.rel (%p286) target = $region52
        $region51: #{transformer_forward.7} parent=47 // pred_region
          %290 = dma.done %s282, 2048
        $region52: #{transformer_forward.7} parent=47 // pred_fallthru
          _
        %s291 = sand.u32 %s46, 1
        %s292 = scalar_lea.sflag [#allocation3], %s291
        %s293 = sand.u32 %s46, 1
        %s294 = smul.addr %s293, 128
        %s295 = scalar_lea.vmem [#allocation2], %s294
        %p296 = pneg %p59
        %p297 = pneg %p56
        %p298 = pneg %p80
        %p299 = pneg %p77
        %p300 = pneg %p101
        %p301 = pneg %p98
        %p302 = pneg %p122
        %p303 = pneg %p119
        %p304 = pneg %p143
        %p305 = pneg %p140
        %p306 = pneg %p164
        %p307 = pneg %p161
        %p308 = pneg %p185
        %p309 = pneg %p182
        %p310 = pneg %p213
        %p311 = pneg %p210
        %s312 = sand.u32 %s200, 1
        %s313 = scalar_lea.sflag [#allocation4], %s312
        %s314 = sand.u32 %s200, 1
        %s315 = smul.addr %s314, 128
        %s316 = scalar_lea.vmem [#allocation5], %s315
        %s317 = smul.u32 16, %s29
        %s318 = smul.u32 16, %s29
        %v319 = vld [vmem:[%s285] sm:$0xff]
        %v320 = vld [vmem:[%s285 + $0x8] sm:$0xff]
        %v321 = vld [vmem:[%s285 + $0x10] sm:$0xff]
        %v322 = vld [vmem:[%s285 + $0x18] sm:$0xff]
        %v323 = vld [vmem:[%s285 + $0x20] sm:$0xff]
        %v324 = vld [vmem:[%s285 + $0x28] sm:$0xff]
        %v325 = vld [vmem:[%s285 + $0x30] sm:$0xff]
        %v326 = vld [vmem:[%s285 + $0x38] sm:$0xff]
        %v327 = vld [vmem:[%s285 + $0x40] sm:$0xff]
        %v328 = vld [vmem:[%s285 + $0x48] sm:$0xff]
        %v329 = vld [vmem:[%s285 + $0x50] sm:$0xff]
        %v330 = vld [vmem:[%s285 + $0x58] sm:$0xff]
        %v331 = vld [vmem:[%s285 + $0x60] sm:$0xff]
        %v332 = vld [vmem:[%s285 + $0x68] sm:$0xff]
        %v333 = vld [vmem:[%s285 + $0x70] sm:$0xff]
        %v334 = vld [vmem:[%s285 + $0x78] sm:$0xff]
        %335 = vadd.xlane.f32.xlu0 %v319
        %v336 = vpop.xlane.xlu0 %335
        %337 = vadd.xlane.f32.xlu0 %v320
        %v338 = vpop.xlane.xlu0 %337
        %339 = vadd.xlane.f32.xlu0 %v321
        %v340 = vpop.xlane.xlu0 %339
        %341 = vadd.xlane.f32.xlu0 %v322
        %v342 = vpop.xlane.xlu0 %341
        %343 = vadd.xlane.f32.xlu0 %v323
        %v344 = vpop.xlane.xlu0 %343
        %345 = vadd.xlane.f32.xlu0 %v324
        %v346 = vpop.xlane.xlu0 %345
        %347 = vadd.xlane.f32.xlu0 %v325
        %v348 = vpop.xlane.xlu0 %347
        %349 = vadd.xlane.f32.xlu0 %v326
        %v350 = vpop.xlane.xlu0 %349
        %351 = vadd.xlane.f32.xlu0 %v327
        %v352 = vpop.xlane.xlu0 %351
        %353 = vadd.xlane.f32.xlu0 %v328
        %v354 = vpop.xlane.xlu0 %353
        %355 = vadd.xlane.f32.xlu0 %v329
        %v356 = vpop.xlane.xlu0 %355
        %357 = vadd.xlane.f32.xlu0 %v330
        %v358 = vpop.xlane.xlu0 %357
        %359 = vadd.xlane.f32.xlu0 %v331
        %v360 = vpop.xlane.xlu0 %359
        %361 = vadd.xlane.f32.xlu0 %v332
        %v362 = vpop.xlane.xlu0 %361
        %363 = vadd.xlane.f32.xlu0 %v333
        %v364 = vpop.xlane.xlu0 %363
        %365 = vadd.xlane.f32.xlu0 %v334
        %v366 = vpop.xlane.xlu0 %365
        %v367 = vrcp.pop 128.0
        %v368 = vmul.f32 128.0, %v367
        %v369 = vsub.f32 1.0, %v368
        %v370 = vmul.f32 %v367, %v369
        %v371 = vadd.f32 %v367, %v370
        %vm372 = vweird.f32 %v367
        %v373 = vsel %vm372, %v367, %v371
        %v374 = vmul.f32 %v336, %v373
        %v375 = vmul.f32 %v338, %v373
        %v376 = vmul.f32 %v340, %v373
        %v377 = vmul.f32 %v342, %v373
        %v378 = vmul.f32 %v344, %v373
        %v379 = vmul.f32 %v346, %v373
        %v380 = vmul.f32 %v348, %v373
        %v381 = vmul.f32 %v350, %v373
        %v382 = vmul.f32 %v352, %v373
        %v383 = vmul.f32 %v354, %v373
        %v384 = vmul.f32 %v356, %v373
        %v385 = vmul.f32 %v358, %v373
        %v386 = vmul.f32 %v360, %v373
        %v387 = vmul.f32 %v362, %v373
        %v388 = vmul.f32 %v364, %v373
        %v389 = vmul.f32 %v366, %v373
        %v390 = vsub.f32 %v319, %v374
        %v391 = vsub.f32 %v320, %v375
        %v392 = vsub.f32 %v321, %v376
        %v393 = vsub.f32 %v322, %v377
        %v394 = vsub.f32 %v323, %v378
        %v395 = vsub.f32 %v324, %v379
        %v396 = vsub.f32 %v325, %v380
        %v397 = vsub.f32 %v326, %v381
        %v398 = vsub.f32 %v327, %v382
        %v399 = vsub.f32 %v328, %v383
        %v400 = vsub.f32 %v329, %v384
        %v401 = vsub.f32 %v330, %v385
        %v402 = vsub.f32 %v331, %v386
        %v403 = vsub.f32 %v332, %v387
        %v404 = vsub.f32 %v333, %v388
        %v405 = vsub.f32 %v334, %v389
        %v406 = vmul.f32 %v390, %v390
        %v407 = vmul.f32 %v391, %v391
        %v408 = vmul.f32 %v392, %v392
        %v409 = vmul.f32 %v393, %v393
        %v410 = vmul.f32 %v394, %v394
        %v411 = vmul.f32 %v395, %v395
        %v412 = vmul.f32 %v396, %v396
        %v413 = vmul.f32 %v397, %v397
        %v414 = vmul.f32 %v398, %v398
        %v415 = vmul.f32 %v399, %v399
        %v416 = vmul.f32 %v400, %v400
        %v417 = vmul.f32 %v401, %v401
        %v418 = vmul.f32 %v402, %v402
        %v419 = vmul.f32 %v403, %v403
        %v420 = vmul.f32 %v404, %v404
        %v421 = vmul.f32 %v405, %v405
        %422 = vadd.xlane.f32.xlu0 %v406
        %v423 = vpop.xlane.xlu0 %422
        %424 = vadd.xlane.f32.xlu0 %v407
        %v425 = vpop.xlane.xlu0 %424
        %426 = vadd.xlane.f32.xlu0 %v408
        %v427 = vpop.xlane.xlu0 %426
        %428 = vadd.xlane.f32.xlu0 %v409
        %v429 = vpop.xlane.xlu0 %428
        %430 = vadd.xlane.f32.xlu0 %v410
        %v431 = vpop.xlane.xlu0 %430
        %432 = vadd.xlane.f32.xlu0 %v411
        %v433 = vpop.xlane.xlu0 %432
        %434 = vadd.xlane.f32.xlu0 %v412
        %v435 = vpop.xlane.xlu0 %434
        %436 = vadd.xlane.f32.xlu0 %v413
        %v437 = vpop.xlane.xlu0 %436
        %438 = vadd.xlane.f32.xlu0 %v414
        %v439 = vpop.xlane.xlu0 %438
        %440 = vadd.xlane.f32.xlu0 %v415
        %v441 = vpop.xlane.xlu0 %440
        %442 = vadd.xlane.f32.xlu0 %v416
        %v443 = vpop.xlane.xlu0 %442
        %444 = vadd.xlane.f32.xlu0 %v417
        %v445 = vpop.xlane.xlu0 %444
        %446 = vadd.xlane.f32.xlu0 %v418
        %v447 = vpop.xlane.xlu0 %446
        %448 = vadd.xlane.f32.xlu0 %v419
        %v449 = vpop.xlane.xlu0 %448
        %450 = vadd.xlane.f32.xlu0 %v420
        %v451 = vpop.xlane.xlu0 %450
        %452 = vadd.xlane.f32.xlu0 %v421
        %v453 = vpop.xlane.xlu0 %452
        %v454 = vmul.f32 %v423, %v373
        %v455 = vmul.f32 %v425, %v373
        %v456 = vmul.f32 %v427, %v373
        %v457 = vmul.f32 %v429, %v373
        %v458 = vmul.f32 %v431, %v373
        %v459 = vmul.f32 %v433, %v373
        %v460 = vmul.f32 %v435, %v373
        %v461 = vmul.f32 %v437, %v373
        %v462 = vmul.f32 %v439, %v373
        %v463 = vmul.f32 %v441, %v373
        %v464 = vmul.f32 %v443, %v373
        %v465 = vmul.f32 %v445, %v373
        %v466 = vmul.f32 %v447, %v373
        %v467 = vmul.f32 %v449, %v373
        %v468 = vmul.f32 %v451, %v373
        %v469 = vmul.f32 %v453, %v373
        %v470 = vadd.f32 %v454, 1e-05
        %v471 = vadd.f32 %v455, 1e-05
        %v472 = vadd.f32 %v456, 1e-05
        %v473 = vadd.f32 %v457, 1e-05
        %v474 = vadd.f32 %v458, 1e-05
        %v475 = vadd.f32 %v459, 1e-05
        %v476 = vadd.f32 %v460, 1e-05
        %v477 = vadd.f32 %v461, 1e-05
        %v478 = vadd.f32 %v462, 1e-05
        %v479 = vadd.f32 %v463, 1e-05
        %v480 = vadd.f32 %v464, 1e-05
        %v481 = vadd.f32 %v465, 1e-05
        %v482 = vadd.f32 %v466, 1e-05
        %v483 = vadd.f32 %v467, 1e-05
        %v484 = vadd.f32 %v468, 1e-05
        %v485 = vadd.f32 %v469, 1e-05
        %v486 = vrsqrt.pop %v470
        %v487 = vmul.f32 %v486, %v470
        %v488 = vmul.f32 %v487, %v486
        %v489 = vmul.f32 0.5, %v488
        %v490 = vsub.f32 1.5, %v489
        %v491 = vmul.f32 %v486, %v490
        %vm492 = vweird.f32 %v470
        %vm493 = vweird.f32 %v486
        %vm494 = vmor %vm492, %vm493
        %v495 = vsel %vm494, %v486, %v491
        %v496 = vrsqrt.pop %v471
        %v497 = vmul.f32 %v496, %v471
        %v498 = vmul.f32 %v497, %v496
        %v499 = vmul.f32 0.5, %v498
        %v500 = vsub.f32 1.5, %v499
        %v501 = vmul.f32 %v496, %v500
        %vm502 = vweird.f32 %v471
        %vm503 = vweird.f32 %v496
        %vm504 = vmor %vm502, %vm503
        %v505 = vsel %vm504, %v496, %v501
        %v506 = vrsqrt.pop %v472
        %v507 = vmul.f32 %v506, %v472
        %v508 = vmul.f32 %v507, %v506
        %v509 = vmul.f32 0.5, %v508
        %v510 = vsub.f32 1.5, %v509
        %v511 = vmul.f32 %v506, %v510
        %vm512 = vweird.f32 %v472
        %vm513 = vweird.f32 %v506
        %vm514 = vmor %vm512, %vm513
        %v515 = vsel %vm514, %v506, %v511
        %v516 = vrsqrt.pop %v473
        %v517 = vmul.f32 %v516, %v473
        %v518 = vmul.f32 %v517, %v516
        %v519 = vmul.f32 0.5, %v518
        %v520 = vsub.f32 1.5, %v519
        %v521 = vmul.f32 %v516, %v520
        %vm522 = vweird.f32 %v473
        %vm523 = vweird.f32 %v516
        %vm524 = vmor %vm522, %vm523
        %v525 = vsel %vm524, %v516, %v521
        %v526 = vrsqrt.pop %v474
        %v527 = vmul.f32 %v526, %v474
        %v528 = vmul.f32 %v527, %v526
        %v529 = vmul.f32 0.5, %v528
        %v530 = vsub.f32 1.5, %v529
        %v531 = vmul.f32 %v526, %v530
        %vm532 = vweird.f32 %v474
        %vm533 = vweird.f32 %v526
        %vm534 = vmor %vm532, %vm533
        %v535 = vsel %vm534, %v526, %v531
        %v536 = vrsqrt.pop %v475
        %v537 = vmul.f32 %v536, %v475
        %v538 = vmul.f32 %v537, %v536
        %v539 = vmul.f32 0.5, %v538
        %v540 = vsub.f32 1.5, %v539
        %v541 = vmul.f32 %v536, %v540
        %vm542 = vweird.f32 %v475
        %vm543 = vweird.f32 %v536
        %vm544 = vmor %vm542, %vm543
        %v545 = vsel %vm544, %v536, %v541
        %v546 = vrsqrt.pop %v476
        %v547 = vmul.f32 %v546, %v476
        %v548 = vmul.f32 %v547, %v546
        %v549 = vmul.f32 0.5, %v548
        %v550 = vsub.f32 1.5, %v549
        %v551 = vmul.f32 %v546, %v550
        %vm552 = vweird.f32 %v476
        %vm553 = vweird.f32 %v546
        %vm554 = vmor %vm552, %vm553
        %v555 = vsel %vm554, %v546, %v551
        %v556 = vrsqrt.pop %v477
        %v557 = vmul.f32 %v556, %v477
        %v558 = vmul.f32 %v557, %v556
        %v559 = vmul.f32 0.5, %v558
        %v560 = vsub.f32 1.5, %v559
        %v561 = vmul.f32 %v556, %v560
        %vm562 = vweird.f32 %v477
        %vm563 = vweird.f32 %v556
        %vm564 = vmor %vm562, %vm563
        %v565 = vsel %vm564, %v556, %v561
        %v566 = vrsqrt.pop %v478
        %v567 = vmul.f32 %v566, %v478
        %v568 = vmul.f32 %v567, %v566
        %v569 = vmul.f32 0.5, %v568
        %v570 = vsub.f32 1.5, %v569
        %v571 = vmul.f32 %v566, %v570
        %vm572 = vweird.f32 %v478
        %vm573 = vweird.f32 %v566
        %vm574 = vmor %vm572, %vm573
        %v575 = vsel %vm574, %v566, %v571
        %v576 = vrsqrt.pop %v479
        %v577 = vmul.f32 %v576, %v479
        %v578 = vmul.f32 %v577, %v576
        %v579 = vmul.f32 0.5, %v578
        %v580 = vsub.f32 1.5, %v579
        %v581 = vmul.f32 %v576, %v580
        %vm582 = vweird.f32 %v479
        %vm583 = vweird.f32 %v576
        %vm584 = vmor %vm582, %vm583
        %v585 = vsel %vm584, %v576, %v581
        %v586 = vrsqrt.pop %v480
        %v587 = vmul.f32 %v586, %v480
        %v588 = vmul.f32 %v587, %v586
        %v589 = vmul.f32 0.5, %v588
        %v590 = vsub.f32 1.5, %v589
        %v591 = vmul.f32 %v586, %v590
        %vm592 = vweird.f32 %v480
        %vm593 = vweird.f32 %v586
        %vm594 = vmor %vm592, %vm593
        %v595 = vsel %vm594, %v586, %v591
        %v596 = vrsqrt.pop %v481
        %v597 = vmul.f32 %v596, %v481
        %v598 = vmul.f32 %v597, %v596
        %v599 = vmul.f32 0.5, %v598
        %v600 = vsub.f32 1.5, %v599
        %v601 = vmul.f32 %v596, %v600
        %vm602 = vweird.f32 %v481
        %vm603 = vweird.f32 %v596
        %vm604 = vmor %vm602, %vm603
        %v605 = vsel %vm604, %v596, %v601
        %v606 = vrsqrt.pop %v482
        %v607 = vmul.f32 %v606, %v482
        %v608 = vmul.f32 %v607, %v606
        %v609 = vmul.f32 0.5, %v608
        %v610 = vsub.f32 1.5, %v609
        %v611 = vmul.f32 %v606, %v610
        %vm612 = vweird.f32 %v482
        %vm613 = vweird.f32 %v606
        %vm614 = vmor %vm612, %vm613
        %v615 = vsel %vm614, %v606, %v611
        %v616 = vrsqrt.pop %v483
        %v617 = vmul.f32 %v616, %v483
        %v618 = vmul.f32 %v617, %v616
        %v619 = vmul.f32 0.5, %v618
        %v620 = vsub.f32 1.5, %v619
        %v621 = vmul.f32 %v616, %v620
        %vm622 = vweird.f32 %v483
        %vm623 = vweird.f32 %v616
        %vm624 = vmor %vm622, %vm623
        %v625 = vsel %vm624, %v616, %v621
        %v626 = vrsqrt.pop %v484
        %v627 = vmul.f32 %v626, %v484
        %v628 = vmul.f32 %v627, %v626
        %v629 = vmul.f32 0.5, %v628
        %v630 = vsub.f32 1.5, %v629
        %v631 = vmul.f32 %v626, %v630
        %vm632 = vweird.f32 %v484
        %vm633 = vweird.f32 %v626
        %vm634 = vmor %vm632, %vm633
        %v635 = vsel %vm634, %v626, %v631
        %v636 = vrsqrt.pop %v485
        %v637 = vmul.f32 %v636, %v485
        %v638 = vmul.f32 %v637, %v636
        %v639 = vmul.f32 0.5, %v638
        %v640 = vsub.f32 1.5, %v639
        %v641 = vmul.f32 %v636, %v640
        %vm642 = vweird.f32 %v485
        %vm643 = vweird.f32 %v636
        %vm644 = vmor %vm642, %vm643
        %v645 = vsel %vm644, %v636, %v641
        %v646 = vmul.f32 %v390, %v495
        %v647 = vmul.f32 %v391, %v505
        %v648 = vmul.f32 %v392, %v515
        %v649 = vmul.f32 %v393, %v525
        %v650 = vmul.f32 %v394, %v535
        %v651 = vmul.f32 %v395, %v545
        %v652 = vmul.f32 %v396, %v555
        %v653 = vmul.f32 %v397, %v565
        %v654 = vmul.f32 %v398, %v575
        %v655 = vmul.f32 %v399, %v585
        %v656 = vmul.f32 %v400, %v595
        %v657 = vmul.f32 %v401, %v605
        %v658 = vmul.f32 %v402, %v615
        %v659 = vmul.f32 %v403, %v625
        %v660 = vmul.f32 %v404, %v635
        %v661 = vmul.f32 %v405, %v645
        %v662 = vld [vmem:[%s1] sm:$0x1]
        %v664 = vperm.slane %v662, 0
        %v666 = vmul.f32 %v646, %v664
        %v667 = vmul.f32 %v647, %v664
        %v668 = vmul.f32 %v648, %v664
        %v669 = vmul.f32 %v649, %v664
        %v670 = vmul.f32 %v650, %v664
        %v671 = vmul.f32 %v651, %v664
        %v672 = vmul.f32 %v652, %v664
        %v673 = vmul.f32 %v653, %v664
        %v674 = vmul.f32 %v654, %v664
        %v675 = vmul.f32 %v655, %v664
        %v676 = vmul.f32 %v656, %v664
        %v677 = vmul.f32 %v657, %v664
        %v678 = vmul.f32 %v658, %v664
        %v679 = vmul.f32 %v659, %v664
        %v680 = vmul.f32 %v660, %v664
        %v681 = vmul.f32 %v661, %v664
        %v682 = vld [vmem:[%s2] sm:$0x1]
        %v684 = vperm.slane %v682, 0
        %v686 = vadd.f32 %v666, %v684
        %v687 = vadd.f32 %v667, %v684
        %v688 = vadd.f32 %v668, %v684
        %v689 = vadd.f32 %v669, %v684
        %v690 = vadd.f32 %v670, %v684
        %v691 = vadd.f32 %v671, %v684
        %v692 = vadd.f32 %v672, %v684
        %v693 = vadd.f32 %v673, %v684
        %v694 = vadd.f32 %v674, %v684
        %v695 = vadd.f32 %v675, %v684
        %v696 = vadd.f32 %v676, %v684
        %v697 = vadd.f32 %v677, %v684
        %v698 = vadd.f32 %v678, %v684
        %v699 = vadd.f32 %v679, %v684
        %v700 = vadd.f32 %v680, %v684
        %v701 = vadd.f32 %v681, %v684
        %v702 = vld [vmem:[%s3] sm:$0xff]
        %v703 = vld [vmem:[%s3 + $0x8] sm:$0xff]
        %v704 = vld [vmem:[%s3 + $0x10] sm:$0xff]
        %v705 = vld [vmem:[%s3 + $0x18] sm:$0xff]
        %v706 = vld [vmem:[%s3 + $0x20] sm:$0xff]
        %v707 = vld [vmem:[%s3 + $0x28] sm:$0xff]
        %v708 = vld [vmem:[%s3 + $0x30] sm:$0xff]
        %v709 = vld [vmem:[%s3 + $0x38] sm:$0xff]
        %v710 = vld [vmem:[%s3 + $0x40] sm:$0xff]
        %v711 = vld [vmem:[%s3 + $0x48] sm:$0xff]
        %v712 = vld [vmem:[%s3 + $0x50] sm:$0xff]
        %v713 = vld [vmem:[%s3 + $0x58] sm:$0xff]
        %v714 = vld [vmem:[%s3 + $0x60] sm:$0xff]
        %v715 = vld [vmem:[%s3 + $0x68] sm:$0xff]
        %v716 = vld [vmem:[%s3 + $0x70] sm:$0xff]
        %v717 = vld [vmem:[%s3 + $0x78] sm:$0xff]
        %v718 = vld [vmem:[%s3 + $0x80] sm:$0xff]
        %v719 = vld [vmem:[%s3 + $0x88] sm:$0xff]
        %v720 = vld [vmem:[%s3 + $0x90] sm:$0xff]
        %v721 = vld [vmem:[%s3 + $0x98] sm:$0xff]
        %v722 = vld [vmem:[%s3 + $0xa0] sm:$0xff]
        %v723 = vld [vmem:[%s3 + $0xa8] sm:$0xff]
        %v724 = vld [vmem:[%s3 + $0xb0] sm:$0xff]
        %v725 = vld [vmem:[%s3 + $0xb8] sm:$0xff]
        %v726 = vld [vmem:[%s3 + $0xc0] sm:$0xff]
        %v727 = vld [vmem:[%s3 + $0xc8] sm:$0xff]
        %v728 = vld [vmem:[%s3 + $0xd0] sm:$0xff]
        %v729 = vld [vmem:[%s3 + $0xd8] sm:$0xff]
        %v730 = vld [vmem:[%s3 + $0xe0] sm:$0xff]
        %v731 = vld [vmem:[%s3 + $0xe8] sm:$0xff]
        %v732 = vld [vmem:[%s3 + $0xf0] sm:$0xff]
        %v733 = vld [vmem:[%s3 + $0xf8] sm:$0xff]
        %v734 = vld [vmem:[%s4] sm:$0x3]
        %v736 = vperm.slane %v734, 0
        %v737 = vperm.slane %v734, 1
        %740 = vmatpush.msra.mxu0 %v732
        %741 = vmatpush.msra.mxu0 %v730
        %742 = vmatpush.msra.mxu0 %v728
        %743 = vmatpush.msra.mxu0 %v726
        %744 = vmatpush.msra.mxu0 %v724
        %745 = vmatpush.msra.mxu0 %v722
        %746 = vmatpush.msra.mxu0 %v720
        %747 = vmatpush.msra.mxu0 %v718
        %748 = vmatpush.msra.mxu0 %v716
        %749 = vmatpush.msra.mxu0 %v714
        %750 = vmatpush.msra.mxu0 %v712
        %751 = vmatpush.msra.mxu0 %v710
        %752 = vmatpush.msra.mxu0 %v708
        %753 = vmatpush.msra.mxu0 %v706
        %754 = vmatpush.msra.mxu0 %v704
        %755 = vmatpush.msra.mxu0 %v702
        %756 = vmatmul.f32.gmra.mxu0 %v686
        %v757 = vpop.f32.mrf.mxu0
        %v758 = vadd.f32 %v736, %v757
        %759 = vmatmul.f32.gmra.mxu0 %v687
        %v760 = vpop.f32.mrf.mxu0
        %v761 = vadd.f32 %v736, %v760
        %762 = vmatmul.f32.gmra.mxu0 %v688
        %v763 = vpop.f32.mrf.mxu0
        %v764 = vadd.f32 %v736, %v763
        %765 = vmatmul.f32.gmra.mxu0 %v689
        %v766 = vpop.f32.mrf.mxu0
        %v767 = vadd.f32 %v736, %v766
        %768 = vmatmul.f32.gmra.mxu0 %v690
        %v769 = vpop.f32.mrf.mxu0
        %v770 = vadd.f32 %v736, %v769
        %771 = vmatmul.f32.gmra.mxu0 %v691
        %v772 = vpop.f32.mrf.mxu0
        %v773 = vadd.f32 %v736, %v772
        %774 = vmatmul.f32.gmra.mxu0 %v692
        %v775 = vpop.f32.mrf.mxu0
        %v776 = vadd.f32 %v736, %v775
        %777 = vmatmul.f32.gmra.mxu0 %v693
        %v778 = vpop.f32.mrf.mxu0
        %v779 = vadd.f32 %v736, %v778
        %780 = vmatmul.f32.gmra.mxu0 %v694
        %v781 = vpop.f32.mrf.mxu0
        %v782 = vadd.f32 %v736, %v781
        %783 = vmatmul.f32.gmra.mxu0 %v695
        %v784 = vpop.f32.mrf.mxu0
        %v785 = vadd.f32 %v736, %v784
        %786 = vmatmul.f32.gmra.mxu0 %v696
        %v787 = vpop.f32.mrf.mxu0
        %v788 = vadd.f32 %v736, %v787
        %789 = vmatmul.f32.gmra.mxu0 %v697
        %v790 = vpop.f32.mrf.mxu0
        %v791 = vadd.f32 %v736, %v790
        %792 = vmatmul.f32.gmra.mxu0 %v698
        %v793 = vpop.f32.mrf.mxu0
        %v794 = vadd.f32 %v736, %v793
        %795 = vmatmul.f32.gmra.mxu0 %v699
        %v796 = vpop.f32.mrf.mxu0
        %v797 = vadd.f32 %v736, %v796
        %798 = vmatmul.f32.gmra.mxu0 %v700
        %v799 = vpop.f32.mrf.mxu0
        %v800 = vadd.f32 %v736, %v799
        %801 = vmatmul.f32.gmra.mxu0 %v701
        %v802 = vpop.f32.mrf.mxu0
        %v803 = vadd.f32 %v736, %v802
        %804 = vdwg.mxu0
        %805 = vmatpush.msra.mxu0 %v733
        %806 = vmatpush.msra.mxu0 %v731
        %807 = vmatpush.msra.mxu0 %v729
        %808 = vmatpush.msra.mxu0 %v727
        %809 = vmatpush.msra.mxu0 %v725
        %810 = vmatpush.msra.mxu0 %v723
        %811 = vmatpush.msra.mxu0 %v721
        %812 = vmatpush.msra.mxu0 %v719
        %813 = vmatpush.msra.mxu0 %v717
        %814 = vmatpush.msra.mxu0 %v715
        %815 = vmatpush.msra.mxu0 %v713
        %816 = vmatpush.msra.mxu0 %v711
        %817 = vmatpush.msra.mxu0 %v709
        %818 = vmatpush.msra.mxu0 %v707
        %819 = vmatpush.msra.mxu0 %v705
        %820 = vmatpush.msra.mxu0 %v703
        %821 = vmatmul.f32.gmra.mxu0 %v686
        %v822 = vpop.f32.mrf.mxu0
        %v823 = vadd.f32 %v737, %v822
        %824 = vmatmul.f32.gmra.mxu0 %v687
        %v825 = vpop.f32.mrf.mxu0
        %v826 = vadd.f32 %v737, %v825
        %827 = vmatmul.f32.gmra.mxu0 %v688
        %v828 = vpop.f32.mrf.mxu0
        %v829 = vadd.f32 %v737, %v828
        %830 = vmatmul.f32.gmra.mxu0 %v689
        %v831 = vpop.f32.mrf.mxu0
        %v832 = vadd.f32 %v737, %v831
        %833 = vmatmul.f32.gmra.mxu0 %v690
        %v834 = vpop.f32.mrf.mxu0
        %v835 = vadd.f32 %v737, %v834
        %836 = vmatmul.f32.gmra.mxu0 %v691
        %v837 = vpop.f32.mrf.mxu0
        %v838 = vadd.f32 %v737, %v837
        %839 = vmatmul.f32.gmra.mxu0 %v692
        %v840 = vpop.f32.mrf.mxu0
        %v841 = vadd.f32 %v737, %v840
        %842 = vmatmul.f32.gmra.mxu0 %v693
        %v843 = vpop.f32.mrf.mxu0
        %v844 = vadd.f32 %v737, %v843
        %845 = vmatmul.f32.gmra.mxu0 %v694
        %v846 = vpop.f32.mrf.mxu0
        %v847 = vadd.f32 %v737, %v846
        %848 = vmatmul.f32.gmra.mxu0 %v695
        %v849 = vpop.f32.mrf.mxu0
        %v850 = vadd.f32 %v737, %v849
        %851 = vmatmul.f32.gmra.mxu0 %v696
        %v852 = vpop.f32.mrf.mxu0
        %v853 = vadd.f32 %v737, %v852
        %854 = vmatmul.f32.gmra.mxu0 %v697
        %v855 = vpop.f32.mrf.mxu0
        %v856 = vadd.f32 %v737, %v855
        %857 = vmatmul.f32.gmra.mxu0 %v698
        %v858 = vpop.f32.mrf.mxu0
        %v859 = vadd.f32 %v737, %v858
        %860 = vmatmul.f32.gmra.mxu0 %v699
        %v861 = vpop.f32.mrf.mxu0
        %v862 = vadd.f32 %v737, %v861
        %863 = vmatmul.f32.gmra.mxu0 %v700
        %v864 = vpop.f32.mrf.mxu0
        %v865 = vadd.f32 %v737, %v864
        %866 = vmatmul.f32.gmra.mxu0 %v701
        %v867 = vpop.f32.mrf.mxu0
        %v868 = vadd.f32 %v737, %v867
        %869 = vdwg.mxu0
        %v870 = vmul.f32 %v758, 0.5
        %v871 = vmul.f32 %v823, 0.5
        %v872 = vmul.f32 %v761, 0.5
        %v873 = vmul.f32 %v826, 0.5
        %v874 = vmul.f32 %v764, 0.5
        %v875 = vmul.f32 %v829, 0.5
        %v876 = vmul.f32 %v767, 0.5
        %v877 = vmul.f32 %v832, 0.5
        %v878 = vmul.f32 %v770, 0.5
        %v879 = vmul.f32 %v835, 0.5
        %v880 = vmul.f32 %v773, 0.5
        %v881 = vmul.f32 %v838, 0.5
        %v882 = vmul.f32 %v776, 0.5
        %v883 = vmul.f32 %v841, 0.5
        %v884 = vmul.f32 %v779, 0.5
        %v885 = vmul.f32 %v844, 0.5
        %v886 = vmul.f32 %v782, 0.5
        %v887 = vmul.f32 %v847, 0.5
        %v888 = vmul.f32 %v785, 0.5
        %v889 = vmul.f32 %v850, 0.5
        %v890 = vmul.f32 %v788, 0.5
        %v891 = vmul.f32 %v853, 0.5
        %v892 = vmul.f32 %v791, 0.5
        %v893 = vmul.f32 %v856, 0.5
        %v894 = vmul.f32 %v794, 0.5
        %v895 = vmul.f32 %v859, 0.5
        %v896 = vmul.f32 %v797, 0.5
        %v897 = vmul.f32 %v862, 0.5
        %v898 = vmul.f32 %v800, 0.5
        %v899 = vmul.f32 %v865, 0.5
        %v900 = vmul.f32 %v803, 0.5
        %v901 = vmul.f32 %v868, 0.5
        %v902 = vmul.f32 %v758, 0.044715
        %v903 = vmul.f32 %v823, 0.044715
        %v904 = vmul.f32 %v761, 0.044715
        %v905 = vmul.f32 %v826, 0.044715
        %v906 = vmul.f32 %v764, 0.044715
        %v907 = vmul.f32 %v829, 0.044715
        %v908 = vmul.f32 %v767, 0.044715
        %v909 = vmul.f32 %v832, 0.044715
        %v910 = vmul.f32 %v770, 0.044715
        %v911 = vmul.f32 %v835, 0.044715
        %v912 = vmul.f32 %v773, 0.044715
        %v913 = vmul.f32 %v838, 0.044715
        %v914 = vmul.f32 %v776, 0.044715
        %v915 = vmul.f32 %v841, 0.044715
        %v916 = vmul.f32 %v779, 0.044715
        %v917 = vmul.f32 %v844, 0.044715
        %v918 = vmul.f32 %v782, 0.044715
        %v919 = vmul.f32 %v847, 0.044715
        %v920 = vmul.f32 %v785, 0.044715
        %v921 = vmul.f32 %v850, 0.044715
        %v922 = vmul.f32 %v788, 0.044715
        %v923 = vmul.f32 %v853, 0.044715
        %v924 = vmul.f32 %v791, 0.044715
        %v925 = vmul.f32 %v856, 0.044715
        %v926 = vmul.f32 %v794, 0.044715
        %v927 = vmul.f32 %v859, 0.044715
        %v928 = vmul.f32 %v797, 0.044715
        %v929 = vmul.f32 %v862, 0.044715
        %v930 = vmul.f32 %v800, 0.044715
        %v931 = vmul.f32 %v865, 0.044715
        %v932 = vmul.f32 %v803, 0.044715
        %v933 = vmul.f32 %v868, 0.044715
        %v934 = vmul.f32 %v902, %v758
        %v935 = vmul.f32 %v903, %v823
        %v936 = vmul.f32 %v904, %v761
        %v937 = vmul.f32 %v905, %v826
        %v938 = vmul.f32 %v906, %v764
        %v939 = vmul.f32 %v907, %v829
        %v940 = vmul.f32 %v908, %v767
        %v941 = vmul.f32 %v909, %v832
        %v942 = vmul.f32 %v910, %v770
        %v943 = vmul.f32 %v911, %v835
        %v944 = vmul.f32 %v912, %v773
        %v945 = vmul.f32 %v913, %v838
        %v946 = vmul.f32 %v914, %v776
        %v947 = vmul.f32 %v915, %v841
        %v948 = vmul.f32 %v916, %v779
        %v949 = vmul.f32 %v917, %v844
        %v950 = vmul.f32 %v918, %v782
        %v951 = vmul.f32 %v919, %v847
        %v952 = vmul.f32 %v920, %v785
        %v953 = vmul.f32 %v921, %v850
        %v954 = vmul.f32 %v922, %v788
        %v955 = vmul.f32 %v923, %v853
        %v956 = vmul.f32 %v924, %v791
        %v957 = vmul.f32 %v925, %v856
        %v958 = vmul.f32 %v926, %v794
        %v959 = vmul.f32 %v927, %v859
        %v960 = vmul.f32 %v928, %v797
        %v961 = vmul.f32 %v929, %v862
        %v962 = vmul.f32 %v930, %v800
        %v963 = vmul.f32 %v931, %v865
        %v964 = vmul.f32 %v932, %v803
        %v965 = vmul.f32 %v933, %v868
        %v966 = vmul.f32 %v934, %v758
        %v967 = vmul.f32 %v935, %v823
        %v968 = vmul.f32 %v936, %v761
        %v969 = vmul.f32 %v937, %v826
        %v970 = vmul.f32 %v938, %v764
        %v971 = vmul.f32 %v939, %v829
        %v972 = vmul.f32 %v940, %v767
        %v973 = vmul.f32 %v941, %v832
        %v974 = vmul.f32 %v942, %v770
        %v975 = vmul.f32 %v943, %v835
        %v976 = vmul.f32 %v944, %v773
        %v977 = vmul.f32 %v945, %v838
        %v978 = vmul.f32 %v946, %v776
        %v979 = vmul.f32 %v947, %v841
        %v980 = vmul.f32 %v948, %v779
        %v981 = vmul.f32 %v949, %v844
        %v982 = vmul.f32 %v950, %v782
        %v983 = vmul.f32 %v951, %v847
        %v984 = vmul.f32 %v952, %v785
        %v985 = vmul.f32 %v953, %v850
        %v986 = vmul.f32 %v954, %v788
        %v987 = vmul.f32 %v955, %v853
        %v988 = vmul.f32 %v956, %v791
        %v989 = vmul.f32 %v957, %v856
        %v990 = vmul.f32 %v958, %v794
        %v991 = vmul.f32 %v959, %v859
        %v992 = vmul.f32 %v960, %v797
        %v993 = vmul.f32 %v961, %v862
        %v994 = vmul.f32 %v962, %v800
        %v995 = vmul.f32 %v963, %v865
        %v996 = vmul.f32 %v964, %v803
        %v997 = vmul.f32 %v965, %v868
        %v998 = vadd.f32 %v758, %v966
        %v999 = vadd.f32 %v823, %v967
        %v1000 = vadd.f32 %v761, %v968
        %v1001 = vadd.f32 %v826, %v969
        %v1002 = vadd.f32 %v764, %v970
        %v1003 = vadd.f32 %v829, %v971
        %v1004 = vadd.f32 %v767, %v972
        %v1005 = vadd.f32 %v832, %v973
        %v1006 = vadd.f32 %v770, %v974
        %v1007 = vadd.f32 %v835, %v975
        %v1008 = vadd.f32 %v773, %v976
        %v1009 = vadd.f32 %v838, %v977
        %v1010 = vadd.f32 %v776, %v978
        %v1011 = vadd.f32 %v841, %v979
        %v1012 = vadd.f32 %v779, %v980
        %v1013 = vadd.f32 %v844, %v981
        %v1014 = vadd.f32 %v782, %v982
        %v1015 = vadd.f32 %v847, %v983
        %v1016 = vadd.f32 %v785, %v984
        %v1017 = vadd.f32 %v850, %v985
        %v1018 = vadd.f32 %v788, %v986
        %v1019 = vadd.f32 %v853, %v987
        %v1020 = vadd.f32 %v791, %v988
        %v1021 = vadd.f32 %v856, %v989
        %v1022 = vadd.f32 %v794, %v990
        %v1023 = vadd.f32 %v859, %v991
        %v1024 = vadd.f32 %v797, %v992
        %v1025 = vadd.f32 %v862, %v993
        %v1026 = vadd.f32 %v800, %v994
        %v1027 = vadd.f32 %v865, %v995
        %v1028 = vadd.f32 %v803, %v996
        %v1029 = vadd.f32 %v868, %v997
        %v1030 = vmul.f32 %v998, 0.7978846
        %v1031 = vmul.f32 %v999, 0.7978846
        %v1032 = vmul.f32 %v1000, 0.7978846
        %v1033 = vmul.f32 %v1001, 0.7978846
        %v1034 = vmul.f32 %v1002, 0.7978846
        %v1035 = vmul.f32 %v1003, 0.7978846
        %v1036 = vmul.f32 %v1004, 0.7978846
        %v1037 = vmul.f32 %v1005, 0.7978846
        %v1038 = vmul.f32 %v1006, 0.7978846
        %v1039 = vmul.f32 %v1007, 0.7978846
        %v1040 = vmul.f32 %v1008, 0.7978846
        %v1041 = vmul.f32 %v1009, 0.7978846
        %v1042 = vmul.f32 %v1010, 0.7978846
        %v1043 = vmul.f32 %v1011, 0.7978846
        %v1044 = vmul.f32 %v1012, 0.7978846
        %v1045 = vmul.f32 %v1013, 0.7978846
        %v1046 = vmul.f32 %v1014, 0.7978846
        %v1047 = vmul.f32 %v1015, 0.7978846
        %v1048 = vmul.f32 %v1016, 0.7978846
        %v1049 = vmul.f32 %v1017, 0.7978846
        %v1050 = vmul.f32 %v1018, 0.7978846
        %v1051 = vmul.f32 %v1019, 0.7978846
        %v1052 = vmul.f32 %v1020, 0.7978846
        %v1053 = vmul.f32 %v1021, 0.7978846
        %v1054 = vmul.f32 %v1022, 0.7978846
        %v1055 = vmul.f32 %v1023, 0.7978846
        %v1056 = vmul.f32 %v1024, 0.7978846
        %v1057 = vmul.f32 %v1025, 0.7978846
        %v1058 = vmul.f32 %v1026, 0.7978846
        %v1059 = vmul.f32 %v1027, 0.7978846
        %v1060 = vmul.f32 %v1028, 0.7978846
        %v1061 = vmul.f32 %v1029, 0.7978846
        %v1062 = vtanh.pop %v1030
        %v1063 = vtanh.pop %v1031
        %v1064 = vtanh.pop %v1032
        %v1065 = vtanh.pop %v1033
        %v1066 = vtanh.pop %v1034
        %v1067 = vtanh.pop %v1035
        %v1068 = vtanh.pop %v1036
        %v1069 = vtanh.pop %v1037
        %v1070 = vtanh.pop %v1038
        %v1071 = vtanh.pop %v1039
        %v1072 = vtanh.pop %v1040
        %v1073 = vtanh.pop %v1041
        %v1074 = vtanh.pop %v1042
        %v1075 = vtanh.pop %v1043
        %v1076 = vtanh.pop %v1044
        %v1077 = vtanh.pop %v1045
        %v1078 = vtanh.pop %v1046
        %v1079 = vtanh.pop %v1047
        %v1080 = vtanh.pop %v1048
        %v1081 = vtanh.pop %v1049
        %v1082 = vtanh.pop %v1050
        %v1083 = vtanh.pop %v1051
        %v1084 = vtanh.pop %v1052
        %v1085 = vtanh.pop %v1053
        %v1086 = vtanh.pop %v1054
        %v1087 = vtanh.pop %v1055
        %v1088 = vtanh.pop %v1056
        %v1089 = vtanh.pop %v1057
        %v1090 = vtanh.pop %v1058
        %v1091 = vtanh.pop %v1059
        %v1092 = vtanh.pop %v1060
        %v1093 = vtanh.pop %v1061
        %v1094 = vadd.f32 %v1062, 1.0
        %v1095 = vadd.f32 %v1063, 1.0
        %v1096 = vadd.f32 %v1064, 1.0
        %v1097 = vadd.f32 %v1065, 1.0
        %v1098 = vadd.f32 %v1066, 1.0
        %v1099 = vadd.f32 %v1067, 1.0
        %v1100 = vadd.f32 %v1068, 1.0
        %v1101 = vadd.f32 %v1069, 1.0
        %v1102 = vadd.f32 %v1070, 1.0
        %v1103 = vadd.f32 %v1071, 1.0
        %v1104 = vadd.f32 %v1072, 1.0
        %v1105 = vadd.f32 %v1073, 1.0
        %v1106 = vadd.f32 %v1074, 1.0
        %v1107 = vadd.f32 %v1075, 1.0
        %v1108 = vadd.f32 %v1076, 1.0
        %v1109 = vadd.f32 %v1077, 1.0
        %v1110 = vadd.f32 %v1078, 1.0
        %v1111 = vadd.f32 %v1079, 1.0
        %v1112 = vadd.f32 %v1080, 1.0
        %v1113 = vadd.f32 %v1081, 1.0
        %v1114 = vadd.f32 %v1082, 1.0
        %v1115 = vadd.f32 %v1083, 1.0
        %v1116 = vadd.f32 %v1084, 1.0
        %v1117 = vadd.f32 %v1085, 1.0
        %v1118 = vadd.f32 %v1086, 1.0
        %v1119 = vadd.f32 %v1087, 1.0
        %v1120 = vadd.f32 %v1088, 1.0
        %v1121 = vadd.f32 %v1089, 1.0
        %v1122 = vadd.f32 %v1090, 1.0
        %v1123 = vadd.f32 %v1091, 1.0
        %v1124 = vadd.f32 %v1092, 1.0
        %v1125 = vadd.f32 %v1093, 1.0
        %v1126 = vmul.f32 %v870, %v1094
        %v1127 = vmul.f32 %v871, %v1095
        %v1128 = vmul.f32 %v872, %v1096
        %v1129 = vmul.f32 %v873, %v1097
        %v1130 = vmul.f32 %v874, %v1098
        %v1131 = vmul.f32 %v875, %v1099
        %v1132 = vmul.f32 %v876, %v1100
        %v1133 = vmul.f32 %v877, %v1101
        %v1134 = vmul.f32 %v878, %v1102
        %v1135 = vmul.f32 %v879, %v1103
        %v1136 = vmul.f32 %v880, %v1104
        %v1137 = vmul.f32 %v881, %v1105
        %v1138 = vmul.f32 %v882, %v1106
        %v1139 = vmul.f32 %v883, %v1107
        %v1140 = vmul.f32 %v884, %v1108
        %v1141 = vmul.f32 %v885, %v1109
        %v1142 = vmul.f32 %v886, %v1110
        %v1143 = vmul.f32 %v887, %v1111
        %v1144 = vmul.f32 %v888, %v1112
        %v1145 = vmul.f32 %v889, %v1113
        %v1146 = vmul.f32 %v890, %v1114
        %v1147 = vmul.f32 %v891, %v1115
        %v1148 = vmul.f32 %v892, %v1116
        %v1149 = vmul.f32 %v893, %v1117
        %v1150 = vmul.f32 %v894, %v1118
        %v1151 = vmul.f32 %v895, %v1119
        %v1152 = vmul.f32 %v896, %v1120
        %v1153 = vmul.f32 %v897, %v1121
        %v1154 = vmul.f32 %v898, %v1122
        %v1155 = vmul.f32 %v899, %v1123
        %v1156 = vmul.f32 %v900, %v1124
        %v1157 = vmul.f32 %v901, %v1125
        %v1158 = vld [vmem:[%s5] sm:$0xff]
        %v1159 = vld [vmem:[%s5 + $0x8] sm:$0xff]
        %v1160 = vld [vmem:[%s5 + $0x10] sm:$0xff]
        %v1161 = vld [vmem:[%s5 + $0x18] sm:$0xff]
        %v1162 = vld [vmem:[%s5 + $0x20] sm:$0xff]
        %v1163 = vld [vmem:[%s5 + $0x28] sm:$0xff]
        %v1164 = vld [vmem:[%s5 + $0x30] sm:$0xff]
        %v1165 = vld [vmem:[%s5 + $0x38] sm:$0xff]
        %v1166 = vld [vmem:[%s5 + $0x40] sm:$0xff]
        %v1167 = vld [vmem:[%s5 + $0x48] sm:$0xff]
        %v1168 = vld [vmem:[%s5 + $0x50] sm:$0xff]
        %v1169 = vld [vmem:[%s5 + $0x58] sm:$0xff]
        %v1170 = vld [vmem:[%s5 + $0x60] sm:$0xff]
        %v1171 = vld [vmem:[%s5 + $0x68] sm:$0xff]
        %v1172 = vld [vmem:[%s5 + $0x70] sm:$0xff]
        %v1173 = vld [vmem:[%s5 + $0x78] sm:$0xff]
        %v1174 = vld [vmem:[%s5 + $0x80] sm:$0xff]
        %v1175 = vld [vmem:[%s5 + $0x88] sm:$0xff]
        %v1176 = vld [vmem:[%s5 + $0x90] sm:$0xff]
        %v1177 = vld [vmem:[%s5 + $0x98] sm:$0xff]
        %v1178 = vld [vmem:[%s5 + $0xa0] sm:$0xff]
        %v1179 = vld [vmem:[%s5 + $0xa8] sm:$0xff]
        %v1180 = vld [vmem:[%s5 + $0xb0] sm:$0xff]
        %v1181 = vld [vmem:[%s5 + $0xb8] sm:$0xff]
        %v1182 = vld [vmem:[%s5 + $0xc0] sm:$0xff]
        %v1183 = vld [vmem:[%s5 + $0xc8] sm:$0xff]
        %v1184 = vld [vmem:[%s5 + $0xd0] sm:$0xff]
        %v1185 = vld [vmem:[%s5 + $0xd8] sm:$0xff]
        %v1186 = vld [vmem:[%s5 + $0xe0] sm:$0xff]
        %v1187 = vld [vmem:[%s5 + $0xe8] sm:$0xff]
        %v1188 = vld [vmem:[%s5 + $0xf0] sm:$0xff]
        %v1189 = vld [vmem:[%s5 + $0xf8] sm:$0xff]
        %v1190 = vld [vmem:[%s6] sm:$0x1]
        %v1192 = vperm.slane %v1190, 0
        %1194 = vmatpush.msra.mxu0 %v1173
        %1195 = vmatpush.msra.mxu0 %v1172
        %1196 = vmatpush.msra.mxu0 %v1171
        %1197 = vmatpush.msra.mxu0 %v1170
        %1198 = vmatpush.msra.mxu0 %v1169
        %1199 = vmatpush.msra.mxu0 %v1168
        %1200 = vmatpush.msra.mxu0 %v1167
        %1201 = vmatpush.msra.mxu0 %v1166
        %1202 = vmatpush.msra.mxu0 %v1165
        %1203 = vmatpush.msra.mxu0 %v1164
        %1204 = vmatpush.msra.mxu0 %v1163
        %1205 = vmatpush.msra.mxu0 %v1162
        %1206 = vmatpush.msra.mxu0 %v1161
        %1207 = vmatpush.msra.mxu0 %v1160
        %1208 = vmatpush.msra.mxu0 %v1159
        %1209 = vmatpush.msra.mxu0 %v1158
        %1210 = vmatmul.f32.gmra.mxu0 %v1126
        %v1211 = vpop.f32.mrf.mxu0
        %v1212 = vadd.f32 %v1192, %v1211
        %1213 = vmatmul.f32.gmra.mxu0 %v1128
        %v1214 = vpop.f32.mrf.mxu0
        %v1215 = vadd.f32 %v1192, %v1214
        %1216 = vmatmul.f32.gmra.mxu0 %v1130
        %v1217 = vpop.f32.mrf.mxu0
        %v1218 = vadd.f32 %v1192, %v1217
        %1219 = vmatmul.f32.gmra.mxu0 %v1132
        %v1220 = vpop.f32.mrf.mxu0
        %v1221 = vadd.f32 %v1192, %v1220
        %1222 = vmatmul.f32.gmra.mxu0 %v1134
        %v1223 = vpop.f32.mrf.mxu0
        %v1224 = vadd.f32 %v1192, %v1223
        %1225 = vmatmul.f32.gmra.mxu0 %v1136
        %v1226 = vpop.f32.mrf.mxu0
        %v1227 = vadd.f32 %v1192, %v1226
        %1228 = vmatmul.f32.gmra.mxu0 %v1138
        %v1229 = vpop.f32.mrf.mxu0
        %v1230 = vadd.f32 %v1192, %v1229
        %1231 = vmatmul.f32.gmra.mxu0 %v1140
        %v1232 = vpop.f32.mrf.mxu0
        %v1233 = vadd.f32 %v1192, %v1232
        %1234 = vmatmul.f32.gmra.mxu0 %v1142
        %v1235 = vpop.f32.mrf.mxu0
        %v1236 = vadd.f32 %v1192, %v1235
        %1237 = vmatmul.f32.gmra.mxu0 %v1144
        %v1238 = vpop.f32.mrf.mxu0
        %v1239 = vadd.f32 %v1192, %v1238
        %1240 = vmatmul.f32.gmra.mxu0 %v1146
        %v1241 = vpop.f32.mrf.mxu0
        %v1242 = vadd.f32 %v1192, %v1241
        %1243 = vmatmul.f32.gmra.mxu0 %v1148
        %v1244 = vpop.f32.mrf.mxu0
        %v1245 = vadd.f32 %v1192, %v1244
        %1246 = vmatmul.f32.gmra.mxu0 %v1150
        %v1247 = vpop.f32.mrf.mxu0
        %v1248 = vadd.f32 %v1192, %v1247
        %1249 = vmatmul.f32.gmra.mxu0 %v1152
        %v1250 = vpop.f32.mrf.mxu0
        %v1251 = vadd.f32 %v1192, %v1250
        %1252 = vmatmul.f32.gmra.mxu0 %v1154
        %v1253 = vpop.f32.mrf.mxu0
        %v1254 = vadd.f32 %v1192, %v1253
        %1255 = vmatmul.f32.gmra.mxu0 %v1156
        %v1256 = vpop.f32.mrf.mxu0
        %v1257 = vadd.f32 %v1192, %v1256
        %1258 = vdwg.mxu0
        %1259 = vmatpush.msra.mxu0 %v1189
        %1260 = vmatpush.msra.mxu0 %v1188
        %1261 = vmatpush.msra.mxu0 %v1187
        %1262 = vmatpush.msra.mxu0 %v1186
        %1263 = vmatpush.msra.mxu0 %v1185
        %1264 = vmatpush.msra.mxu0 %v1184
        %1265 = vmatpush.msra.mxu0 %v1183
        %1266 = vmatpush.msra.mxu0 %v1182
        %1267 = vmatpush.msra.mxu0 %v1181
        %1268 = vmatpush.msra.mxu0 %v1180
        %1269 = vmatpush.msra.mxu0 %v1179
        %1270 = vmatpush.msra.mxu0 %v1178
        %1271 = vmatpush.msra.mxu0 %v1177
        %1272 = vmatpush.msra.mxu0 %v1176
        %1273 = vmatpush.msra.mxu0 %v1175
        %1274 = vmatpush.msra.mxu0 %v1174
        %1275 = vmatmul.f32.gmra.mxu0 %v1127
        %v1276 = vpop.f32.mrf.mxu0
        %v1277 = vadd.f32 %v1212, %v1276
        %1278 = vmatmul.f32.gmra.mxu0 %v1129
        %v1279 = vpop.f32.mrf.mxu0
        %v1280 = vadd.f32 %v1215, %v1279
        %1281 = vmatmul.f32.gmra.mxu0 %v1131
        %v1282 = vpop.f32.mrf.mxu0
        %v1283 = vadd.f32 %v1218, %v1282
        %1284 = vmatmul.f32.gmra.mxu0 %v1133
        %v1285 = vpop.f32.mrf.mxu0
        %v1286 = vadd.f32 %v1221, %v1285
        %1287 = vmatmul.f32.gmra.mxu0 %v1135
        %v1288 = vpop.f32.mrf.mxu0
        %v1289 = vadd.f32 %v1224, %v1288
        %1290 = vmatmul.f32.gmra.mxu0 %v1137
        %v1291 = vpop.f32.mrf.mxu0
        %v1292 = vadd.f32 %v1227, %v1291
        %1293 = vmatmul.f32.gmra.mxu0 %v1139
        %v1294 = vpop.f32.mrf.mxu0
        %v1295 = vadd.f32 %v1230, %v1294
        %1296 = vmatmul.f32.gmra.mxu0 %v1141
        %v1297 = vpop.f32.mrf.mxu0
        %v1298 = vadd.f32 %v1233, %v1297
        %1299 = vmatmul.f32.gmra.mxu0 %v1143
        %v1300 = vpop.f32.mrf.mxu0
        %v1301 = vadd.f32 %v1236, %v1300
        %1302 = vmatmul.f32.gmra.mxu0 %v1145
        %v1303 = vpop.f32.mrf.mxu0
        %v1304 = vadd.f32 %v1239, %v1303
        %1305 = vmatmul.f32.gmra.mxu0 %v1147
        %v1306 = vpop.f32.mrf.mxu0
        %v1307 = vadd.f32 %v1242, %v1306
        %1308 = vmatmul.f32.gmra.mxu0 %v1149
        %v1309 = vpop.f32.mrf.mxu0
        %v1310 = vadd.f32 %v1245, %v1309
        %1311 = vmatmul.f32.gmra.mxu0 %v1151
        %v1312 = vpop.f32.mrf.mxu0
        %v1313 = vadd.f32 %v1248, %v1312
        %1314 = vmatmul.f32.gmra.mxu0 %v1153
        %v1315 = vpop.f32.mrf.mxu0
        %v1316 = vadd.f32 %v1251, %v1315
        %1317 = vmatmul.f32.gmra.mxu0 %v1155
        %v1318 = vpop.f32.mrf.mxu0
        %v1319 = vadd.f32 %v1254, %v1318
        %1320 = vmatmul.f32.gmra.mxu0 %v1157
        %v1321 = vpop.f32.mrf.mxu0
        %v1322 = vadd.f32 %v1257, %v1321
        %1323 = vdwg.mxu0
        %v1324 = vadd.f32 %v319, %v1277
        %v1325 = vadd.f32 %v320, %v1280
        %v1326 = vadd.f32 %v321, %v1283
        %v1327 = vadd.f32 %v322, %v1286
        %v1328 = vadd.f32 %v323, %v1289
        %v1329 = vadd.f32 %v324, %v1292
        %v1330 = vadd.f32 %v325, %v1295
        %v1331 = vadd.f32 %v326, %v1298
        %v1332 = vadd.f32 %v327, %v1301
        %v1333 = vadd.f32 %v328, %v1304
        %v1334 = vadd.f32 %v329, %v1307
        %v1335 = vadd.f32 %v330, %v1310
        %v1336 = vadd.f32 %v331, %v1313
        %v1337 = vadd.f32 %v332, %v1316
        %v1338 = vadd.f32 %v333, %v1319
        %v1339 = vadd.f32 %v334, %v1322
        %1340 = vst [vmem:[%s316] sm:$0xff] %v1324
        %1341 = vst [vmem:[%s316 + $0x8] sm:$0xff] %v1325
        %1342 = vst [vmem:[%s316 + $0x10] sm:$0xff] %v1326
        %1343 = vst [vmem:[%s316 + $0x18] sm:$0xff] %v1327
        %1344 = vst [vmem:[%s316 + $0x20] sm:$0xff] %v1328
        %1345 = vst [vmem:[%s316 + $0x28] sm:$0xff] %v1329
        %1346 = vst [vmem:[%s316 + $0x30] sm:$0xff] %v1330
        %1347 = vst [vmem:[%s316 + $0x38] sm:$0xff] %v1331
        %1348 = vst [vmem:[%s316 + $0x40] sm:$0xff] %v1332
        %1349 = vst [vmem:[%s316 + $0x48] sm:$0xff] %v1333
        %1350 = vst [vmem:[%s316 + $0x50] sm:$0xff] %v1334
        %1351 = vst [vmem:[%s316 + $0x58] sm:$0xff] %v1335
        %1352 = vst [vmem:[%s316 + $0x60] sm:$0xff] %v1336
        %1353 = vst [vmem:[%s316 + $0x68] sm:$0xff] %v1337
        %1354 = vst [vmem:[%s316 + $0x70] sm:$0xff] %v1338
        %1355 = vst [vmem:[%s316 + $0x78] sm:$0xff] %v1339
        %s1356 = sand.u32 %s200, 1
        %s1357 = scalar_lea.sflag [#allocation4], %s1356
        %s1358 = sand.u32 %s200, 1
        %s1359 = smul.addr %s1358, 128
        %s1360 = scalar_lea.vmem [#allocation5], %s1359
        // Predicated region
        $region53: #{transformer_forward.7} parent=47 // pred_check
          %p1361 = pneg %p210
        $region54: #{transformer_forward.7} parent=47 // pred_check_branch
          %1363 = sbr.rel (%p1361) target = $region56
        $region55: #{transformer_forward.7} parent=47 // pred_region
          %s1364 = smul.u32 16, %s29
          %1366 = vsyncadd %s1357, 0
          %s1367 = smul.addr %s28, 16
          %s1368 = sadd.s32 %s1364, %s1367
          %s1369 = smul.addr %s1368, 8
          %s1370 = scalar_lea.hbm %s7, %s1369
          %s1371 = sshll.u32 %s1360, 4
          %s1372 = int_to_ptr.vmem [resolvable:$true] %s1371
          %s1373 = sshll.u32 %s1370, 4
          %s1374 = int_to_ptr.hbm [resolvable:$true] %s1373
          %1379 = dma.vmem_to_hbm [thread:$0]  %s1372, 2048, %s1374, %s1357, 128, 128, 8
        $region56: #{transformer_forward.7} parent=47 // pred_fallthru
          _
      $region48: #{transformer_forward.7} parent=5 // pred_fallthru
        _
      %p1380 = scmp.le.s32.totalorder 2, %s19
      // Predicated region
      $region57: #{transformer_forward.7} parent=5 // pred_check
        %p1381 = pneg %p1380
      $region58: #{transformer_forward.7} parent=5 // pred_check_branch
        %1383 = sbr.rel (%p1381) target = $region60
      $region59: #{transformer_forward.7} parent=5 // pred_region
        %s1384 = ssub.s32 %s19, 2
        // Predicated region
        $region61: #{transformer_forward.7} parent=59 // pred_check
          %p1385 = pneg %p216
        $region62: #{transformer_forward.7} parent=59 // pred_check_branch
          %1387 = sbr.rel (%p1385) target = $region64
        $region63: #{transformer_forward.7} parent=59 // pred_region
          %s1388 = sand.u32 %s201, 1
          %s1389 = scalar_lea.sflag [#allocation4], %s1388
          %s1390 = sand.u32 %s201, 1
          %s1391 = smul.addr %s1390, 128
          %s1392 = scalar_lea.vmem [#allocation5], %s1391
          %1394 = dma.done %s1389, 2048
        $region64: #{transformer_forward.7} parent=59 // pred_fallthru
          _
      $region60: #{transformer_forward.7} parent=5 // pred_fallthru
        _
    $region6: #{transformer_forward.7} parent=1 // loop_footer
      %s23 = sadd.s32 1, %s19
    $region7: #{transformer_forward.7} parent=1 // loop_footer_branch
      %18 = sbr.rel target = $region3
    $region8: #{transformer_forward.7} parent=1 // loop_exit
      _
    %1395 = vsyncpa [#allocation3], 1
    %s1396 = scalar_lea.sflag [#allocation3], 1
    %1397 = vsyncpa %s1396, 1
    %1398 = vsyncpa [#allocation4], 1
    %s1399 = scalar_lea.sflag [#allocation4], 1
    %1400 = vsyncpa %s1399, 1

// kernel: transformer_forward.5
$region0: #{transformer_forward.5}
  #allocation0 [shape = 'u32[]', space=smem, size = 0x4, offset = 0x4, fixed_abs, tag = 'smem constant byte address 0x4 - core index']
  #allocation1 [shape = 'u32[72,128]{1,0:T(1,128)}', space=vmem, size = 0x9000, scoped, tag = 'internal scratch']
  %s0 = inlined_call_operand.vmem [shape: f32[2,128,128], index: 0, kind: input, shape index: {}, may-alias: {0,7}]
  %s1 = inlined_call_operand.vmem [shape: f32[1,128], index: 1, kind: input, shape index: {}]
  %s2 = inlined_call_operand.vmem [shape: f32[1,128], index: 2, kind: input, shape index: {}]
  %s3 = inlined_call_operand.vmem [shape: f32[128,256], index: 3, kind: input, shape index: {}]
  %s4 = inlined_call_operand.vmem [shape: f32[1,256], index: 4, kind: input, shape index: {}]
  %s5 = inlined_call_operand.vmem [shape: f32[256,128], index: 5, kind: input, shape index: {}]
  %s6 = inlined_call_operand.vmem [shape: f32[1,128], index: 6, kind: input, shape index: {}]
  %s7 = inlined_call_operand.vmem [shape: f32[2,128,128], index: 7, kind: output, shape index: {}, may-alias: {0,7}]
  %s8 = sld [smem:[#allocation0]]
  $region61: #{transformer_forward.5} parent=0
    _
  %s10 = ssub.s32 1, %s8
  %s11 = scalar_select 0, %s10, %s8
  loop: start=0, step=1, limit=4
  $region2: #{transformer_forward.5} parent=0 // loop_pre_header
    _
  $region3: #{transformer_forward.5} parent=0 // loop_header
    %s13 = sphi 0, %s17
    %p14 = scmp.ge.s32.totalorder %s13, 4
    %s20 = sphi 0, %s32
    %s21 = sphi 0, %s28
    %s22 = sphi 0, %s20
    %s23 = sphi 0, %s21
    %s24 = sphi 0, %s22
    %s25 = sphi 0, %s23
    %s37 = sphi 0, %s39
    %s40 = sphi 0, %s37
    %s41 = sphi 0, %s40
    %s57 = sphi 0, %s41
    %s61 = sphi 0, %s61
    %s63 = sphi 0, %s61
    %s64 = sphi 0, %s63
    %s78 = sphi 0, %s64
    %s82 = sphi 0, %s82
    %s84 = sphi 0, %s82
    %s85 = sphi 0, %s84
    %s99 = sphi 0, %s85
    %s103 = sphi 0, %s103
    %s105 = sphi 0, %s103
    %s106 = sphi 0, %s105
    %s120 = sphi 0, %s106
    %s124 = sphi 0, %s124
    %s126 = sphi 0, %s124
    %s127 = sphi 0, %s126
    %s141 = sphi 0, %s127
    %s145 = sphi 0, %s145
    %s147 = sphi 0, %s145
    %s148 = sphi 0, %s147
    %s162 = sphi 0, %s148
    %s166 = sphi 0, %s166
    %s168 = sphi 0, %s166
    %s169 = sphi 0, %s168
    %s183 = sphi 0, %s169
    %s191 = sphi 0, %s193
    %s194 = sphi 0, %s191
    %s195 = sphi 0, %s194
    %s211 = sphi 0, %s195
  $region4: #{transformer_forward.5} parent=0 // loop_header_branch
    %16 = sbr.rel (%p14) target = $region8
  $region5: #{transformer_forward.5} parent=0 // loop_body
    %s18 = ssub.s32 %s13, 1
    %s19 = ssub.s32 %s13, 2
    %s26 = sadd.s32 1, %s21
    %p27 = scmp.ge.s32.totalorder %s26, 1
    %s28 = scalar_select %p27, 0, %s26
    %s29 = sadd.s32 1, %s20
    %s30 = scalar_select %p27, %s29, %s20
    %p31 = scmp.ge.s32.totalorder %s30, 2
    %s32 = scalar_select %p31, 0, %s30
    %s33 = ssub.s32 %s20, %s32
    %s34 = ssub.s32 %s21, %s28
    %s35 = sor.u32 %s33, %s34
    %p36 = scmp.eq.s32.totalorder %s35, 0
    %s38 = sadd.s32 %s37, 1
    %s39 = scalar_select %p36, %s37, %s38
    %p42 = pneg %p36
    %p43 = scmp.eq.s32.totalorder %s13, 1
    %p44 = por %p42, %p43
    %p45 = scmp.ne.s32.totalorder %s37, %s40
    %p46 = scmp.eq.s32.totalorder %s13, 0
    %p47 = por %p45, %p46
    %p48 = scmp.ne.s32.totalorder %s37, %s40
    %p49 = scmp.eq.s32.totalorder %s18, 1
    %p50 = por %p48, %p49
    %p51 = scmp.ne.s32.totalorder %s40, %s41
    %p52 = scmp.eq.s32.totalorder %s18, 0
    %p53 = por %p51, %p52
    %p54 = scmp.ne.s32.totalorder %s40, %s41
    %p55 = scmp.eq.s32.totalorder %s19, 1
    %p56 = por %p54, %p55
    %p58 = scmp.ne.s32.totalorder %s41, %s57
    %p59 = scmp.eq.s32.totalorder %s19, 0
    %p60 = por %p58, %p59
    %s62 = sadd.s32 %s61, 1
    %p65 = scmp.eq.s32.totalorder %s13, 1
    %p66 = scmp.ne.s32.totalorder %s61, %s63
    %p67 = scmp.eq.s32.totalorder %s13, 0
    %p68 = por %p66, %p67
    %p69 = scmp.ne.s32.totalorder %s61, %s63
    %p70 = scmp.eq.s32.totalorder %s18, 1
    %p71 = por %p69, %p70
    %p72 = scmp.ne.s32.totalorder %s63, %s64
    %p73 = scmp.eq.s32.totalorder %s18, 0
    %p74 = por %p72, %p73
    %p75 = scmp.ne.s32.totalorder %s63, %s64
    %p76 = scmp.eq.s32.totalorder %s19, 1
    %p77 = por %p75, %p76
    %p79 = scmp.ne.s32.totalorder %s64, %s78
    %p80 = scmp.eq.s32.totalorder %s19, 0
    %p81 = por %p79, %p80
    %s83 = sadd.s32 %s82, 1
    %p86 = scmp.eq.s32.totalorder %s13, 1
    %p87 = scmp.ne.s32.totalorder %s82, %s84
    %p88 = scmp.eq.s32.totalorder %s13, 0
    %p89 = por %p87, %p88
    %p90 = scmp.ne.s32.totalorder %s82, %s84
    %p91 = scmp.eq.s32.totalorder %s18, 1
    %p92 = por %p90, %p91
    %p93 = scmp.ne.s32.totalorder %s84, %s85
    %p94 = scmp.eq.s32.totalorder %s18, 0
    %p95 = por %p93, %p94
    %p96 = scmp.ne.s32.totalorder %s84, %s85
    %p97 = scmp.eq.s32.totalorder %s19, 1
    %p98 = por %p96, %p97
    %p100 = scmp.ne.s32.totalorder %s85, %s99
    %p101 = scmp.eq.s32.totalorder %s19, 0
    %p102 = por %p100, %p101
    %s104 = sadd.s32 %s103, 1
    %p107 = scmp.eq.s32.totalorder %s13, 1
    %p108 = scmp.ne.s32.totalorder %s103, %s105
    %p109 = scmp.eq.s32.totalorder %s13, 0
    %p110 = por %p108, %p109
    %p111 = scmp.ne.s32.totalorder %s103, %s105
    %p112 = scmp.eq.s32.totalorder %s18, 1
    %p113 = por %p111, %p112
    %p114 = scmp.ne.s32.totalorder %s105, %s106
    %p115 = scmp.eq.s32.totalorder %s18, 0
    %p116 = por %p114, %p115
    %p117 = scmp.ne.s32.totalorder %s105, %s106
    %p118 = scmp.eq.s32.totalorder %s19, 1
    %p119 = por %p117, %p118
    %p121 = scmp.ne.s32.totalorder %s106, %s120
    %p122 = scmp.eq.s32.totalorder %s19, 0
    %p123 = por %p121, %p122
    %s125 = sadd.s32 %s124, 1
    %p128 = scmp.eq.s32.totalorder %s13, 1
    %p129 = scmp.ne.s32.totalorder %s124, %s126
    %p130 = scmp.eq.s32.totalorder %s13, 0
    %p131 = por %p129, %p130
    %p132 = scmp.ne.s32.totalorder %s124, %s126
    %p133 = scmp.eq.s32.totalorder %s18, 1
    %p134 = por %p132, %p133
    %p135 = scmp.ne.s32.totalorder %s126, %s127
    %p136 = scmp.eq.s32.totalorder %s18, 0
    %p137 = por %p135, %p136
    %p138 = scmp.ne.s32.totalorder %s126, %s127
    %p139 = scmp.eq.s32.totalorder %s19, 1
    %p140 = por %p138, %p139
    %p142 = scmp.ne.s32.totalorder %s127, %s141
    %p143 = scmp.eq.s32.totalorder %s19, 0
    %p144 = por %p142, %p143
    %s146 = sadd.s32 %s145, 1
    %p149 = scmp.eq.s32.totalorder %s13, 1
    %p150 = scmp.ne.s32.totalorder %s145, %s147
    %p151 = scmp.eq.s32.totalorder %s13, 0
    %p152 = por %p150, %p151
    %p153 = scmp.ne.s32.totalorder %s145, %s147
    %p154 = scmp.eq.s32.totalorder %s18, 1
    %p155 = por %p153, %p154
    %p156 = scmp.ne.s32.totalorder %s147, %s148
    %p157 = scmp.eq.s32.totalorder %s18, 0
    %p158 = por %p156, %p157
    %p159 = scmp.ne.s32.totalorder %s147, %s148
    %p160 = scmp.eq.s32.totalorder %s19, 1
    %p161 = por %p159, %p160
    %p163 = scmp.ne.s32.totalorder %s148, %s162
    %p164 = scmp.eq.s32.totalorder %s19, 0
    %p165 = por %p163, %p164
    %s167 = sadd.s32 %s166, 1
    %p170 = scmp.eq.s32.totalorder %s13, 1
    %p171 = scmp.ne.s32.totalorder %s166, %s168
    %p172 = scmp.eq.s32.totalorder %s13, 0
    %p173 = por %p171, %p172
    %p174 = scmp.ne.s32.totalorder %s166, %s168
    %p175 = scmp.eq.s32.totalorder %s18, 1
    %p176 = por %p174, %p175
    %p177 = scmp.ne.s32.totalorder %s168, %s169
    %p178 = scmp.eq.s32.totalorder %s18, 0
    %p179 = por %p177, %p178
    %p180 = scmp.ne.s32.totalorder %s168, %s169
    %p181 = scmp.eq.s32.totalorder %s19, 1
    %p182 = por %p180, %p181
    %p184 = scmp.ne.s32.totalorder %s169, %s183
    %p185 = scmp.eq.s32.totalorder %s19, 0
    %p186 = por %p184, %p185
    %s187 = ssub.s32 %s20, %s32
    %s188 = ssub.s32 %s21, %s28
    %s189 = sor.u32 %s187, %s188
    %p190 = scmp.eq.s32.totalorder %s189, 0
    %s192 = sadd.s32 %s191, 1
    %s193 = scalar_select %p190, %s191, %s192
    %p196 = pneg %p190
    %p197 = scmp.eq.s32.totalorder %s13, 1
    %p198 = por %p196, %p197
    %p199 = scmp.ne.s32.totalorder %s191, %s194
    %p200 = scmp.eq.s32.totalorder %s13, 0
    %p201 = por %p199, %p200
    %p202 = scmp.ne.s32.totalorder %s191, %s194
    %p203 = scmp.eq.s32.totalorder %s18, 1
    %p204 = por %p202, %p203
    %p205 = scmp.ne.s32.totalorder %s194, %s195
    %p206 = scmp.eq.s32.totalorder %s18, 0
    %p207 = por %p205, %p206
    %p208 = scmp.ne.s32.totalorder %s194, %s195
    %p209 = scmp.eq.s32.totalorder %s19, 1
    %p210 = por %p208, %p209
    %p212 = scmp.ne.s32.totalorder %s195, %s211
    %p213 = scmp.eq.s32.totalorder %s19, 0
    %p214 = por %p212, %p213
    %p215 = scmp.le.s32.totalorder 1, %s13
    %p216 = scmp.lt.s32.totalorder %s13, 3
    %p217 = pnand %p215, %p216
    %p218 = pneg %p217
    // Predicated region
    $region9: #{transformer_forward.5} parent=5 // pred_check
      _
    $region10: #{transformer_forward.5} parent=5 // pred_check_branch
      %220 = sbr.rel (%p217) target = $region12
    $region11: #{transformer_forward.5} parent=5 // pred_region
      %s221 = ssub.s32 %s13, 1
      // Predicated region
      $region13: #{transformer_forward.5} parent=11 // pred_check
        %p222 = pneg %p74
      $region14: #{transformer_forward.5} parent=11 // pred_check_branch
        %224 = sbr.rel (%p222) target = $region16
      $region15: #{transformer_forward.5} parent=11 // pred_region
        _
      $region16: #{transformer_forward.5} parent=11 // pred_fallthru
        _
      // Predicated region
      $region17: #{transformer_forward.5} parent=11 // pred_check
        %p225 = pneg %p95
      $region18: #{transformer_forward.5} parent=11 // pred_check_branch
        %227 = sbr.rel (%p225) target = $region20
      $region19: #{transformer_forward.5} parent=11 // pred_region
        _
      $region20: #{transformer_forward.5} parent=11 // pred_fallthru
        _
      // Predicated region
      $region21: #{transformer_forward.5} parent=11 // pred_check
        %p228 = pneg %p116
      $region22: #{transformer_forward.5} parent=11 // pred_check_branch
        %230 = sbr.rel (%p228) target = $region24
      $region23: #{transformer_forward.5} parent=11 // pred_region
        _
      $region24: #{transformer_forward.5} parent=11 // pred_fallthru
        _
      // Predicated region
      $region25: #{transformer_forward.5} parent=11 // pred_check
        %p231 = pneg %p137
      $region26: #{transformer_forward.5} parent=11 // pred_check_branch
        %233 = sbr.rel (%p231) target = $region28
      $region27: #{transformer_forward.5} parent=11 // pred_region
        _
      $region28: #{transformer_forward.5} parent=11 // pred_fallthru
        _
      // Predicated region
      $region29: #{transformer_forward.5} parent=11 // pred_check
        %p234 = pneg %p158
      $region30: #{transformer_forward.5} parent=11 // pred_check_branch
        %236 = sbr.rel (%p234) target = $region32
      $region31: #{transformer_forward.5} parent=11 // pred_region
        _
      $region32: #{transformer_forward.5} parent=11 // pred_fallthru
        _
      // Predicated region
      $region33: #{transformer_forward.5} parent=11 // pred_check
        %p237 = pneg %p179
      $region34: #{transformer_forward.5} parent=11 // pred_check_branch
        %239 = sbr.rel (%p237) target = $region36
      $region35: #{transformer_forward.5} parent=11 // pred_region
        _
      $region36: #{transformer_forward.5} parent=11 // pred_fallthru
        _
    $region12: #{transformer_forward.5} parent=5 // pred_fallthru
      _
    %p240 = scmp.lt.s32.totalorder %s13, 2
    // Predicated region
    $region37: #{transformer_forward.5} parent=5 // pred_check
      %p241 = pneg %p240
    $region38: #{transformer_forward.5} parent=5 // pred_check_branch
      %243 = sbr.rel (%p241) target = $region40
    $region39: #{transformer_forward.5} parent=5 // pred_region
      // Predicated region
      $region41: #{transformer_forward.5} parent=39 // pred_check
        %p244 = pneg %p47
      $region42: #{transformer_forward.5} parent=39 // pred_check_branch
        %246 = sbr.rel (%p244) target = $region44
      $region43: #{transformer_forward.5} parent=39 // pred_region
        %s247 = smul.u32 16, %s21
        %p248 = scmp.lt.s32.totalorder %s20, 1
        %s249 = scalar_select %p248, %s20, 1
        %p250 = scmp.lt.s32.totalorder %s247, 15
        %s251 = scalar_select %p250, %s247, 15
        %s252 = smul.addr %s249, 16
        %s253 = sadd.s32 %s251, %s252
        %s254 = smul.addr %s253, 8
        %s255 = scalar_lea.vmem %s0, %s254
        %s256 = smul.u32 16, %s21
      $region44: #{transformer_forward.5} parent=39 // pred_fallthru
        _
    $region40: #{transformer_forward.5} parent=5 // pred_fallthru
      _
    %p257 = scmp.le.s32.totalorder 1, %s13
    %p258 = scmp.lt.s32.totalorder %s13, 3
    %p259 = pnand %p257, %p258
    %p260 = pneg %p259
    // Predicated region
    $region45: #{transformer_forward.5} parent=5 // pred_check
      _
    $region46: #{transformer_forward.5} parent=5 // pred_check_branch
      %262 = sbr.rel (%p259) target = $region48
    $region47: #{transformer_forward.5} parent=5 // pred_region
      %s263 = ssub.s32 %s13, 1
      %s264 = smul.u32 16, %s23
      %p265 = scmp.lt.s32.totalorder %s22, 1
      %s266 = scalar_select %p265, %s22, 1
      %p267 = scmp.lt.s32.totalorder %s264, 15
      %s268 = scalar_select %p267, %s264, 15
      %s269 = smul.addr %s266, 16
      %s270 = sadd.s32 %s268, %s269
      %s271 = smul.addr %s270, 8
      %s272 = scalar_lea.vmem %s0, %s271
      %p273 = pneg %p53
      %p274 = pneg %p50
      %p275 = pneg %p74
      %p276 = pneg %p71
      %p277 = pneg %p95
      %p278 = pneg %p92
      %p279 = pneg %p116
      %p280 = pneg %p113
      %p281 = pneg %p137
      %p282 = pneg %p134
      %p283 = pneg %p158
      %p284 = pneg %p155
      %p285 = pneg %p179
      %p286 = pneg %p176
      %p287 = pneg %p207
      %p288 = pneg %p204
      %s289 = smul.u32 16, %s23
      %p290 = scmp.lt.s32.totalorder %s22, 1
      %s291 = scalar_select %p290, %s22, 1
      %p292 = scmp.lt.s32.totalorder %s289, 15
      %s293 = scalar_select %p292, %s289, 15
      %s294 = smul.addr %s291, 16
      %s295 = sadd.s32 %s293, %s294
      %s296 = smul.addr %s295, 8
      %s297 = scalar_lea.vmem %s7, %s296
      %s298 = smul.u32 16, %s23
      %p299 = scmp.lt.s32.totalorder %s22, 1
      %s300 = scalar_select %p299, %s22, 1
      %p301 = scmp.lt.s32.totalorder %s298, 15
      %s302 = scalar_select %p301, %s298, 15
      %s303 = smul.addr %s300, 16
      %s304 = sadd.s32 %s302, %s303
      %s305 = smul.addr %s304, 8
      %s306 = scalar_lea.vmem %s0, %s305
      %s307 = smul.u32 16, %s23
      %s308 = smul.u32 16, %s23
      %p309 = scmp.lt.s32.totalorder %s22, 1
      %s310 = scalar_select %p309, %s22, 1
      %p311 = scmp.lt.s32.totalorder %s308, 15
      %s312 = scalar_select %p311, %s308, 15
      %s313 = smul.addr %s310, 16
      %s314 = sadd.s32 %s312, %s313
      %s315 = smul.addr %s314, 8
      %s316 = scalar_lea.vmem %s7, %s315
      %s317 = smul.u32 16, %s23
      %v318 = vld [vmem:[%s306] sm:$0xff]
      %v319 = vld [vmem:[%s306 + $0x8] sm:$0xff]
      %v320 = vld [vmem:[%s306 + $0x10] sm:$0xff]
      %v321 = vld [vmem:[%s306 + $0x18] sm:$0xff]
      %v322 = vld [vmem:[%s306 + $0x20] sm:$0xff]
      %v323 = vld [vmem:[%s306 + $0x28] sm:$0xff]
      %v324 = vld [vmem:[%s306 + $0x30] sm:$0xff]
      %v325 = vld [vmem:[%s306 + $0x38] sm:$0xff]
      %v326 = vld [vmem:[%s306 + $0x40] sm:$0xff]
      %v327 = vld [vmem:[%s306 + $0x48] sm:$0xff]
      %v328 = vld [vmem:[%s306 + $0x50] sm:$0xff]
      %v329 = vld [vmem:[%s306 + $0x58] sm:$0xff]
      %v330 = vld [vmem:[%s306 + $0x60] sm:$0xff]
      %v331 = vld [vmem:[%s306 + $0x68] sm:$0xff]
      %v332 = vld [vmem:[%s306 + $0x70] sm:$0xff]
      %v333 = vld [vmem:[%s306 + $0x78] sm:$0xff]
      %334 = vadd.xlane.f32.xlu0 %v318
      %v335 = vpop.xlane.xlu0 %334
      %336 = vadd.xlane.f32.xlu0 %v319
      %v337 = vpop.xlane.xlu0 %336
      %338 = vadd.xlane.f32.xlu0 %v320
      %v339 = vpop.xlane.xlu0 %338
      %340 = vadd.xlane.f32.xlu0 %v321
      %v341 = vpop.xlane.xlu0 %340
      %342 = vadd.xlane.f32.xlu0 %v322
      %v343 = vpop.xlane.xlu0 %342
      %344 = vadd.xlane.f32.xlu0 %v323
      %v345 = vpop.xlane.xlu0 %344
      %346 = vadd.xlane.f32.xlu0 %v324
      %v347 = vpop.xlane.xlu0 %346
      %348 = vadd.xlane.f32.xlu0 %v325
      %v349 = vpop.xlane.xlu0 %348
      %350 = vadd.xlane.f32.xlu0 %v326
      %v351 = vpop.xlane.xlu0 %350
      %352 = vadd.xlane.f32.xlu0 %v327
      %v353 = vpop.xlane.xlu0 %352
      %354 = vadd.xlane.f32.xlu0 %v328
      %v355 = vpop.xlane.xlu0 %354
      %356 = vadd.xlane.f32.xlu0 %v329
      %v357 = vpop.xlane.xlu0 %356
      %358 = vadd.xlane.f32.xlu0 %v330
      %v359 = vpop.xlane.xlu0 %358
      %360 = vadd.xlane.f32.xlu0 %v331
      %v361 = vpop.xlane.xlu0 %360
      %362 = vadd.xlane.f32.xlu0 %v332
      %v363 = vpop.xlane.xlu0 %362
      %364 = vadd.xlane.f32.xlu0 %v333
      %v365 = vpop.xlane.xlu0 %364
      %v366 = vrcp.pop 128.0
      %v367 = vmul.f32 128.0, %v366
      %v368 = vsub.f32 1.0, %v367
      %v369 = vmul.f32 %v366, %v368
      %v370 = vadd.f32 %v366, %v369
      %vm371 = vweird.f32 %v366
      %v372 = vsel %vm371, %v366, %v370
      %v373 = vmul.f32 %v335, %v372
      %v374 = vmul.f32 %v337, %v372
      %v375 = vmul.f32 %v339, %v372
      %v376 = vmul.f32 %v341, %v372
      %v377 = vmul.f32 %v343, %v372
      %v378 = vmul.f32 %v345, %v372
      %v379 = vmul.f32 %v347, %v372
      %v380 = vmul.f32 %v349, %v372
      %v381 = vmul.f32 %v351, %v372
      %v382 = vmul.f32 %v353, %v372
      %v383 = vmul.f32 %v355, %v372
      %v384 = vmul.f32 %v357, %v372
      %v385 = vmul.f32 %v359, %v372
      %v386 = vmul.f32 %v361, %v372
      %v387 = vmul.f32 %v363, %v372
      %v388 = vmul.f32 %v365, %v372
      %v389 = vsub.f32 %v318, %v373
      %v390 = vsub.f32 %v319, %v374
      %v391 = vsub.f32 %v320, %v375
      %v392 = vsub.f32 %v321, %v376
      %v393 = vsub.f32 %v322, %v377
      %v394 = vsub.f32 %v323, %v378
      %v395 = vsub.f32 %v324, %v379
      %v396 = vsub.f32 %v325, %v380
      %v397 = vsub.f32 %v326, %v381
      %v398 = vsub.f32 %v327, %v382
      %v399 = vsub.f32 %v328, %v383
      %v400 = vsub.f32 %v329, %v384
      %v401 = vsub.f32 %v330, %v385
      %v402 = vsub.f32 %v331, %v386
      %v403 = vsub.f32 %v332, %v387
      %v404 = vsub.f32 %v333, %v388
      %v405 = vmul.f32 %v389, %v389
      %v406 = vmul.f32 %v390, %v390
      %v407 = vmul.f32 %v391, %v391
      %v408 = vmul.f32 %v392, %v392
      %v409 = vmul.f32 %v393, %v393
      %v410 = vmul.f32 %v394, %v394
      %v411 = vmul.f32 %v395, %v395
      %v412 = vmul.f32 %v396, %v396
      %v413 = vmul.f32 %v397, %v397
      %v414 = vmul.f32 %v398, %v398
      %v415 = vmul.f32 %v399, %v399
      %v416 = vmul.f32 %v400, %v400
      %v417 = vmul.f32 %v401, %v401
      %v418 = vmul.f32 %v402, %v402
      %v419 = vmul.f32 %v403, %v403
      %v420 = vmul.f32 %v404, %v404
      %421 = vadd.xlane.f32.xlu0 %v405
      %v422 = vpop.xlane.xlu0 %421
      %423 = vadd.xlane.f32.xlu0 %v406
      %v424 = vpop.xlane.xlu0 %423
      %425 = vadd.xlane.f32.xlu0 %v407
      %v426 = vpop.xlane.xlu0 %425
      %427 = vadd.xlane.f32.xlu0 %v408
      %v428 = vpop.xlane.xlu0 %427
      %429 = vadd.xlane.f32.xlu0 %v409
      %v430 = vpop.xlane.xlu0 %429
      %431 = vadd.xlane.f32.xlu0 %v410
      %v432 = vpop.xlane.xlu0 %431
      %433 = vadd.xlane.f32.xlu0 %v411
      %v434 = vpop.xlane.xlu0 %433
      %435 = vadd.xlane.f32.xlu0 %v412
      %v436 = vpop.xlane.xlu0 %435
      %437 = vadd.xlane.f32.xlu0 %v413
      %v438 = vpop.xlane.xlu0 %437
      %439 = vadd.xlane.f32.xlu0 %v414
      %v440 = vpop.xlane.xlu0 %439
      %441 = vadd.xlane.f32.xlu0 %v415
      %v442 = vpop.xlane.xlu0 %441
      %443 = vadd.xlane.f32.xlu0 %v416
      %v444 = vpop.xlane.xlu0 %443
      %445 = vadd.xlane.f32.xlu0 %v417
      %v446 = vpop.xlane.xlu0 %445
      %447 = vadd.xlane.f32.xlu0 %v418
      %v448 = vpop.xlane.xlu0 %447
      %449 = vadd.xlane.f32.xlu0 %v419
      %v450 = vpop.xlane.xlu0 %449
      %451 = vadd.xlane.f32.xlu0 %v420
      %v452 = vpop.xlane.xlu0 %451
      %v453 = vmul.f32 %v422, %v372
      %v454 = vmul.f32 %v424, %v372
      %v455 = vmul.f32 %v426, %v372
      %v456 = vmul.f32 %v428, %v372
      %v457 = vmul.f32 %v430, %v372
      %v458 = vmul.f32 %v432, %v372
      %v459 = vmul.f32 %v434, %v372
      %v460 = vmul.f32 %v436, %v372
      %v461 = vmul.f32 %v438, %v372
      %v462 = vmul.f32 %v440, %v372
      %v463 = vmul.f32 %v442, %v372
      %v464 = vmul.f32 %v444, %v372
      %v465 = vmul.f32 %v446, %v372
      %v466 = vmul.f32 %v448, %v372
      %v467 = vmul.f32 %v450, %v372
      %v468 = vmul.f32 %v452, %v372
      %v469 = vadd.f32 %v453, 1e-05
      %v470 = vadd.f32 %v454, 1e-05
      %v471 = vadd.f32 %v455, 1e-05
      %v472 = vadd.f32 %v456, 1e-05
      %v473 = vadd.f32 %v457, 1e-05
      %v474 = vadd.f32 %v458, 1e-05
      %v475 = vadd.f32 %v459, 1e-05
      %v476 = vadd.f32 %v460, 1e-05
      %v477 = vadd.f32 %v461, 1e-05
      %v478 = vadd.f32 %v462, 1e-05
      %v479 = vadd.f32 %v463, 1e-05
      %v480 = vadd.f32 %v464, 1e-05
      %v481 = vadd.f32 %v465, 1e-05
      %v482 = vadd.f32 %v466, 1e-05
      %v483 = vadd.f32 %v467, 1e-05
      %v484 = vadd.f32 %v468, 1e-05
      %v485 = vrsqrt.pop %v469
      %v486 = vmul.f32 %v485, %v469
      %v487 = vmul.f32 %v486, %v485
      %v488 = vmul.f32 0.5, %v487
      %v489 = vsub.f32 1.5, %v488
      %v490 = vmul.f32 %v485, %v489
      %vm491 = vweird.f32 %v469
      %vm492 = vweird.f32 %v485
      %vm493 = vmor %vm491, %vm492
      %v494 = vsel %vm493, %v485, %v490
      %v495 = vrsqrt.pop %v470
      %v496 = vmul.f32 %v495, %v470
      %v497 = vmul.f32 %v496, %v495
      %v498 = vmul.f32 0.5, %v497
      %v499 = vsub.f32 1.5, %v498
      %v500 = vmul.f32 %v495, %v499
      %vm501 = vweird.f32 %v470
      %vm502 = vweird.f32 %v495
      %vm503 = vmor %vm501, %vm502
      %v504 = vsel %vm503, %v495, %v500
      %v505 = vrsqrt.pop %v471
      %v506 = vmul.f32 %v505, %v471
      %v507 = vmul.f32 %v506, %v505
      %v508 = vmul.f32 0.5, %v507
      %v509 = vsub.f32 1.5, %v508
      %v510 = vmul.f32 %v505, %v509
      %vm511 = vweird.f32 %v471
      %vm512 = vweird.f32 %v505
      %vm513 = vmor %vm511, %vm512
      %v514 = vsel %vm513, %v505, %v510
      %v515 = vrsqrt.pop %v472
      %v516 = vmul.f32 %v515, %v472
      %v517 = vmul.f32 %v516, %v515
      %v518 = vmul.f32 0.5, %v517
      %v519 = vsub.f32 1.5, %v518
      %v520 = vmul.f32 %v515, %v519
      %vm521 = vweird.f32 %v472
      %vm522 = vweird.f32 %v515
      %vm523 = vmor %vm521, %vm522
      %v524 = vsel %vm523, %v515, %v520
      %v525 = vrsqrt.pop %v473
      %v526 = vmul.f32 %v525, %v473
      %v527 = vmul.f32 %v526, %v525
      %v528 = vmul.f32 0.5, %v527
      %v529 = vsub.f32 1.5, %v528
      %v530 = vmul.f32 %v525, %v529
      %vm531 = vweird.f32 %v473
      %vm532 = vweird.f32 %v525
      %vm533 = vmor %vm531, %vm532
      %v534 = vsel %vm533, %v525, %v530
      %v535 = vrsqrt.pop %v474
      %v536 = vmul.f32 %v535, %v474
      %v537 = vmul.f32 %v536, %v535
      %v538 = vmul.f32 0.5, %v537
      %v539 = vsub.f32 1.5, %v538
      %v540 = vmul.f32 %v535, %v539
      %vm541 = vweird.f32 %v474
      %vm542 = vweird.f32 %v535
      %vm543 = vmor %vm541, %vm542
      %v544 = vsel %vm543, %v535, %v540
      %v545 = vrsqrt.pop %v475
      %v546 = vmul.f32 %v545, %v475
      %v547 = vmul.f32 %v546, %v545
      %v548 = vmul.f32 0.5, %v547
      %v549 = vsub.f32 1.5, %v548
      %v550 = vmul.f32 %v545, %v549
      %vm551 = vweird.f32 %v475
      %vm552 = vweird.f32 %v545
      %vm553 = vmor %vm551, %vm552
      %v554 = vsel %vm553, %v545, %v550
      %v555 = vrsqrt.pop %v476
      %v556 = vmul.f32 %v555, %v476
      %v557 = vmul.f32 %v556, %v555
      %v558 = vmul.f32 0.5, %v557
      %v559 = vsub.f32 1.5, %v558
      %v560 = vmul.f32 %v555, %v559
      %vm561 = vweird.f32 %v476
      %vm562 = vweird.f32 %v555
      %vm563 = vmor %vm561, %vm562
      %v564 = vsel %vm563, %v555, %v560
      %v565 = vrsqrt.pop %v477
      %v566 = vmul.f32 %v565, %v477
      %v567 = vmul.f32 %v566, %v565
      %v568 = vmul.f32 0.5, %v567
      %v569 = vsub.f32 1.5, %v568
      %v570 = vmul.f32 %v565, %v569
      %vm571 = vweird.f32 %v477
      %vm572 = vweird.f32 %v565
      %vm573 = vmor %vm571, %vm572
      %v574 = vsel %vm573, %v565, %v570
      %v575 = vrsqrt.pop %v478
      %v576 = vmul.f32 %v575, %v478
      %v577 = vmul.f32 %v576, %v575
      %v578 = vmul.f32 0.5, %v577
      %v579 = vsub.f32 1.5, %v578
      %v580 = vmul.f32 %v575, %v579
      %vm581 = vweird.f32 %v478
      %vm582 = vweird.f32 %v575
      %vm583 = vmor %vm581, %vm582
      %v584 = vsel %vm583, %v575, %v580
      %v585 = vrsqrt.pop %v479
      %v586 = vmul.f32 %v585, %v479
      %v587 = vmul.f32 %v586, %v585
      %v588 = vmul.f32 0.5, %v587
      %v589 = vsub.f32 1.5, %v588
      %v590 = vmul.f32 %v585, %v589
      %vm591 = vweird.f32 %v479
      %vm592 = vweird.f32 %v585
      %vm593 = vmor %vm591, %vm592
      %v594 = vsel %vm593, %v585, %v590
      %v595 = vrsqrt.pop %v480
      %v596 = vmul.f32 %v595, %v480
      %v597 = vmul.f32 %v596, %v595
      %v598 = vmul.f32 0.5, %v597
      %v599 = vsub.f32 1.5, %v598
      %v600 = vmul.f32 %v595, %v599
      %vm601 = vweird.f32 %v480
      %vm602 = vweird.f32 %v595
      %vm603 = vmor %vm601, %vm602
      %v604 = vsel %vm603, %v595, %v600
      %v605 = vrsqrt.pop %v481
      %v606 = vmul.f32 %v605, %v481
      %v607 = vmul.f32 %v606, %v605
      %v608 = vmul.f32 0.5, %v607
      %v609 = vsub.f32 1.5, %v608
      %v610 = vmul.f32 %v605, %v609
      %vm611 = vweird.f32 %v481
      %vm612 = vweird.f32 %v605
      %vm613 = vmor %vm611, %vm612
      %v614 = vsel %vm613, %v605, %v610
      %v615 = vrsqrt.pop %v482
      %v616 = vmul.f32 %v615, %v482
      %v617 = vmul.f32 %v616, %v615
      %v618 = vmul.f32 0.5, %v617
      %v619 = vsub.f32 1.5, %v618
      %v620 = vmul.f32 %v615, %v619
      %vm621 = vweird.f32 %v482
      %vm622 = vweird.f32 %v615
      %vm623 = vmor %vm621, %vm622
      %v624 = vsel %vm623, %v615, %v620
      %v625 = vrsqrt.pop %v483
      %v626 = vmul.f32 %v625, %v483
      %v627 = vmul.f32 %v626, %v625
      %v628 = vmul.f32 0.5, %v627
      %v629 = vsub.f32 1.5, %v628
      %v630 = vmul.f32 %v625, %v629
      %vm631 = vweird.f32 %v483
      %vm632 = vweird.f32 %v625
      %vm633 = vmor %vm631, %vm632
      %v634 = vsel %vm633, %v625, %v630
      %v635 = vrsqrt.pop %v484
      %v636 = vmul.f32 %v635, %v484
      %v637 = vmul.f32 %v636, %v635
      %v638 = vmul.f32 0.5, %v637
      %v639 = vsub.f32 1.5, %v638
      %v640 = vmul.f32 %v635, %v639
      %vm641 = vweird.f32 %v484
      %vm642 = vweird.f32 %v635
      %vm643 = vmor %vm641, %vm642
      %v644 = vsel %vm643, %v635, %v640
      %v645 = vmul.f32 %v389, %v494
      %v646 = vmul.f32 %v390, %v504
      %v647 = vmul.f32 %v391, %v514
      %v648 = vmul.f32 %v392, %v524
      %v649 = vmul.f32 %v393, %v534
      %v650 = vmul.f32 %v394, %v544
      %v651 = vmul.f32 %v395, %v554
      %v652 = vmul.f32 %v396, %v564
      %v653 = vmul.f32 %v397, %v574
      %v654 = vmul.f32 %v398, %v584
      %v655 = vmul.f32 %v399, %v594
      %v656 = vmul.f32 %v400, %v604
      %v657 = vmul.f32 %v401, %v614
      %v658 = vmul.f32 %v402, %v624
      %v659 = vmul.f32 %v403, %v634
      %v660 = vmul.f32 %v404, %v644
      %v661 = vld [vmem:[%s1] sm:$0x1]
      %v663 = vperm.slane %v661, 0
      %v665 = vmul.f32 %v645, %v663
      %v666 = vmul.f32 %v646, %v663
      %v667 = vmul.f32 %v647, %v663
      %v668 = vmul.f32 %v648, %v663
      %v669 = vmul.f32 %v649, %v663
      %v670 = vmul.f32 %v650, %v663
      %v671 = vmul.f32 %v651, %v663
      %v672 = vmul.f32 %v652, %v663
      %v673 = vmul.f32 %v653, %v663
      %v674 = vmul.f32 %v654, %v663
      %v675 = vmul.f32 %v655, %v663
      %v676 = vmul.f32 %v656, %v663
      %v677 = vmul.f32 %v657, %v663
      %v678 = vmul.f32 %v658, %v663
      %v679 = vmul.f32 %v659, %v663
      %v680 = vmul.f32 %v660, %v663
      %v681 = vld [vmem:[%s2] sm:$0x1]
      %v683 = vperm.slane %v681, 0
      %v685 = vadd.f32 %v665, %v683
      %v686 = vadd.f32 %v666, %v683
      %v687 = vadd.f32 %v667, %v683
      %v688 = vadd.f32 %v668, %v683
      %v689 = vadd.f32 %v669, %v683
      %v690 = vadd.f32 %v670, %v683
      %v691 = vadd.f32 %v671, %v683
      %v692 = vadd.f32 %v672, %v683
      %v693 = vadd.f32 %v673, %v683
      %v694 = vadd.f32 %v674, %v683
      %v695 = vadd.f32 %v675, %v683
      %v696 = vadd.f32 %v676, %v683
      %v697 = vadd.f32 %v677, %v683
      %v698 = vadd.f32 %v678, %v683
      %v699 = vadd.f32 %v679, %v683
      %v700 = vadd.f32 %v680, %v683
      %v701 = vld [vmem:[%s3] sm:$0xff]
      %v702 = vld [vmem:[%s3 + $0x8] sm:$0xff]
      %v703 = vld [vmem:[%s3 + $0x10] sm:$0xff]
      %v704 = vld [vmem:[%s3 + $0x18] sm:$0xff]
      %v705 = vld [vmem:[%s3 + $0x20] sm:$0xff]
      %v706 = vld [vmem:[%s3 + $0x28] sm:$0xff]
      %v707 = vld [vmem:[%s3 + $0x30] sm:$0xff]
      %v708 = vld [vmem:[%s3 + $0x38] sm:$0xff]
      %v709 = vld [vmem:[%s3 + $0x40] sm:$0xff]
      %v710 = vld [vmem:[%s3 + $0x48] sm:$0xff]
      %v711 = vld [vmem:[%s3 + $0x50] sm:$0xff]
      %v712 = vld [vmem:[%s3 + $0x58] sm:$0xff]
      %v713 = vld [vmem:[%s3 + $0x60] sm:$0xff]
      %v714 = vld [vmem:[%s3 + $0x68] sm:$0xff]
      %v715 = vld [vmem:[%s3 + $0x70] sm:$0xff]
      %v716 = vld [vmem:[%s3 + $0x78] sm:$0xff]
      %v717 = vld [vmem:[%s3 + $0x80] sm:$0xff]
      %v718 = vld [vmem:[%s3 + $0x88] sm:$0xff]
      %v719 = vld [vmem:[%s3 + $0x90] sm:$0xff]
      %v720 = vld [vmem:[%s3 + $0x98] sm:$0xff]
      %v721 = vld [vmem:[%s3 + $0xa0] sm:$0xff]
      %v722 = vld [vmem:[%s3 + $0xa8] sm:$0xff]
      %v723 = vld [vmem:[%s3 + $0xb0] sm:$0xff]
      %v724 = vld [vmem:[%s3 + $0xb8] sm:$0xff]
      %v725 = vld [vmem:[%s3 + $0xc0] sm:$0xff]
      %v726 = vld [vmem:[%s3 + $0xc8] sm:$0xff]
      %v727 = vld [vmem:[%s3 + $0xd0] sm:$0xff]
      %v728 = vld [vmem:[%s3 + $0xd8] sm:$0xff]
      %v729 = vld [vmem:[%s3 + $0xe0] sm:$0xff]
      %v730 = vld [vmem:[%s3 + $0xe8] sm:$0xff]
      %v731 = vld [vmem:[%s3 + $0xf0] sm:$0xff]
      %v732 = vld [vmem:[%s3 + $0xf8] sm:$0xff]
      %v733 = vld [vmem:[%s4] sm:$0x3]
      %v735 = vperm.slane %v733, 0
      %v736 = vperm.slane %v733, 1
      %739 = vmatpush.msra.mxu0 %v731
      %740 = vmatpush.msra.mxu0 %v729
      %741 = vmatpush.msra.mxu0 %v727
      %742 = vmatpush.msra.mxu0 %v725
      %743 = vmatpush.msra.mxu0 %v723
      %744 = vmatpush.msra.mxu0 %v721
      %745 = vmatpush.msra.mxu0 %v719
      %746 = vmatpush.msra.mxu0 %v717
      %747 = vmatpush.msra.mxu0 %v715
      %748 = vmatpush.msra.mxu0 %v713
      %749 = vmatpush.msra.mxu0 %v711
      %750 = vmatpush.msra.mxu0 %v709
      %751 = vmatpush.msra.mxu0 %v707
      %752 = vmatpush.msra.mxu0 %v705
      %753 = vmatpush.msra.mxu0 %v703
      %754 = vmatpush.msra.mxu0 %v701
      %755 = vmatmul.f32.gmra.mxu0 %v685
      %v756 = vpop.f32.mrf.mxu0
      %v757 = vadd.f32 %v735, %v756
      %758 = vmatmul.f32.gmra.mxu0 %v686
      %v759 = vpop.f32.mrf.mxu0
      %v760 = vadd.f32 %v735, %v759
      %761 = vmatmul.f32.gmra.mxu0 %v687
      %v762 = vpop.f32.mrf.mxu0
      %v763 = vadd.f32 %v735, %v762
      %764 = vmatmul.f32.gmra.mxu0 %v688
      %v765 = vpop.f32.mrf.mxu0
      %v766 = vadd.f32 %v735, %v765
      %767 = vmatmul.f32.gmra.mxu0 %v689
      %v768 = vpop.f32.mrf.mxu0
      %v769 = vadd.f32 %v735, %v768
      %770 = vmatmul.f32.gmra.mxu0 %v690
      %v771 = vpop.f32.mrf.mxu0
      %v772 = vadd.f32 %v735, %v771
      %773 = vmatmul.f32.gmra.mxu0 %v691
      %v774 = vpop.f32.mrf.mxu0
      %v775 = vadd.f32 %v735, %v774
      %776 = vmatmul.f32.gmra.mxu0 %v692
      %v777 = vpop.f32.mrf.mxu0
      %v778 = vadd.f32 %v735, %v777
      %779 = vmatmul.f32.gmra.mxu0 %v693
      %v780 = vpop.f32.mrf.mxu0
      %v781 = vadd.f32 %v735, %v780
      %782 = vmatmul.f32.gmra.mxu0 %v694
      %v783 = vpop.f32.mrf.mxu0
      %v784 = vadd.f32 %v735, %v783
      %785 = vmatmul.f32.gmra.mxu0 %v695
      %v786 = vpop.f32.mrf.mxu0
      %v787 = vadd.f32 %v735, %v786
      %788 = vmatmul.f32.gmra.mxu0 %v696
      %v789 = vpop.f32.mrf.mxu0
      %v790 = vadd.f32 %v735, %v789
      %791 = vmatmul.f32.gmra.mxu0 %v697
      %v792 = vpop.f32.mrf.mxu0
      %v793 = vadd.f32 %v735, %v792
      %794 = vmatmul.f32.gmra.mxu0 %v698
      %v795 = vpop.f32.mrf.mxu0
      %v796 = vadd.f32 %v735, %v795
      %797 = vmatmul.f32.gmra.mxu0 %v699
      %v798 = vpop.f32.mrf.mxu0
      %v799 = vadd.f32 %v735, %v798
      %800 = vmatmul.f32.gmra.mxu0 %v700
      %v801 = vpop.f32.mrf.mxu0
      %v802 = vadd.f32 %v735, %v801
      %803 = vdwg.mxu0
      %804 = vmatpush.msra.mxu0 %v732
      %805 = vmatpush.msra.mxu0 %v730
      %806 = vmatpush.msra.mxu0 %v728
      %807 = vmatpush.msra.mxu0 %v726
      %808 = vmatpush.msra.mxu0 %v724
      %809 = vmatpush.msra.mxu0 %v722
      %810 = vmatpush.msra.mxu0 %v720
      %811 = vmatpush.msra.mxu0 %v718
      %812 = vmatpush.msra.mxu0 %v716
      %813 = vmatpush.msra.mxu0 %v714
      %814 = vmatpush.msra.mxu0 %v712
      %815 = vmatpush.msra.mxu0 %v710
      %816 = vmatpush.msra.mxu0 %v708
      %817 = vmatpush.msra.mxu0 %v706
      %818 = vmatpush.msra.mxu0 %v704
      %819 = vmatpush.msra.mxu0 %v702
      %820 = vmatmul.f32.gmra.mxu0 %v685
      %v821 = vpop.f32.mrf.mxu0
      %v822 = vadd.f32 %v736, %v821
      %823 = vmatmul.f32.gmra.mxu0 %v686
      %v824 = vpop.f32.mrf.mxu0
      %v825 = vadd.f32 %v736, %v824
      %826 = vmatmul.f32.gmra.mxu0 %v687
      %v827 = vpop.f32.mrf.mxu0
      %v828 = vadd.f32 %v736, %v827
      %829 = vmatmul.f32.gmra.mxu0 %v688
      %v830 = vpop.f32.mrf.mxu0
      %v831 = vadd.f32 %v736, %v830
      %832 = vmatmul.f32.gmra.mxu0 %v689
      %v833 = vpop.f32.mrf.mxu0
      %v834 = vadd.f32 %v736, %v833
      %835 = vmatmul.f32.gmra.mxu0 %v690
      %v836 = vpop.f32.mrf.mxu0
      %v837 = vadd.f32 %v736, %v836
      %838 = vmatmul.f32.gmra.mxu0 %v691
      %v839 = vpop.f32.mrf.mxu0
      %v840 = vadd.f32 %v736, %v839
      %841 = vmatmul.f32.gmra.mxu0 %v692
      %v842 = vpop.f32.mrf.mxu0
      %v843 = vadd.f32 %v736, %v842
      %844 = vmatmul.f32.gmra.mxu0 %v693
      %v845 = vpop.f32.mrf.mxu0
      %v846 = vadd.f32 %v736, %v845
      %847 = vmatmul.f32.gmra.mxu0 %v694
      %v848 = vpop.f32.mrf.mxu0
      %v849 = vadd.f32 %v736, %v848
      %850 = vmatmul.f32.gmra.mxu0 %v695
      %v851 = vpop.f32.mrf.mxu0
      %v852 = vadd.f32 %v736, %v851
      %853 = vmatmul.f32.gmra.mxu0 %v696
      %v854 = vpop.f32.mrf.mxu0
      %v855 = vadd.f32 %v736, %v854
      %856 = vmatmul.f32.gmra.mxu0 %v697
      %v857 = vpop.f32.mrf.mxu0
      %v858 = vadd.f32 %v736, %v857
      %859 = vmatmul.f32.gmra.mxu0 %v698
      %v860 = vpop.f32.mrf.mxu0
      %v861 = vadd.f32 %v736, %v860
      %862 = vmatmul.f32.gmra.mxu0 %v699
      %v863 = vpop.f32.mrf.mxu0
      %v864 = vadd.f32 %v736, %v863
      %865 = vmatmul.f32.gmra.mxu0 %v700
      %v866 = vpop.f32.mrf.mxu0
      %v867 = vadd.f32 %v736, %v866
      %868 = vdwg.mxu0
      %v869 = vmul.f32 %v757, 0.5
      %v870 = vmul.f32 %v822, 0.5
      %v871 = vmul.f32 %v760, 0.5
      %v872 = vmul.f32 %v825, 0.5
      %v873 = vmul.f32 %v763, 0.5
      %v874 = vmul.f32 %v828, 0.5
      %v875 = vmul.f32 %v766, 0.5
      %v876 = vmul.f32 %v831, 0.5
      %v877 = vmul.f32 %v769, 0.5
      %v878 = vmul.f32 %v834, 0.5
      %v879 = vmul.f32 %v772, 0.5
      %v880 = vmul.f32 %v837, 0.5
      %v881 = vmul.f32 %v775, 0.5
      %v882 = vmul.f32 %v840, 0.5
      %v883 = vmul.f32 %v778, 0.5
      %v884 = vmul.f32 %v843, 0.5
      %v885 = vmul.f32 %v781, 0.5
      %v886 = vmul.f32 %v846, 0.5
      %v887 = vmul.f32 %v784, 0.5
      %v888 = vmul.f32 %v849, 0.5
      %v889 = vmul.f32 %v787, 0.5
      %v890 = vmul.f32 %v852, 0.5
      %v891 = vmul.f32 %v790, 0.5
      %v892 = vmul.f32 %v855, 0.5
      %v893 = vmul.f32 %v793, 0.5
      %v894 = vmul.f32 %v858, 0.5
      %v895 = vmul.f32 %v796, 0.5
      %v896 = vmul.f32 %v861, 0.5
      %v897 = vmul.f32 %v799, 0.5
      %v898 = vmul.f32 %v864, 0.5
      %v899 = vmul.f32 %v802, 0.5
      %v900 = vmul.f32 %v867, 0.5
      %v901 = vmul.f32 %v757, 0.044715
      %v902 = vmul.f32 %v822, 0.044715
      %v903 = vmul.f32 %v760, 0.044715
      %v904 = vmul.f32 %v825, 0.044715
      %v905 = vmul.f32 %v763, 0.044715
      %v906 = vmul.f32 %v828, 0.044715
      %v907 = vmul.f32 %v766, 0.044715
      %v908 = vmul.f32 %v831, 0.044715
      %v909 = vmul.f32 %v769, 0.044715
      %v910 = vmul.f32 %v834, 0.044715
      %v911 = vmul.f32 %v772, 0.044715
      %v912 = vmul.f32 %v837, 0.044715
      %v913 = vmul.f32 %v775, 0.044715
      %v914 = vmul.f32 %v840, 0.044715
      %v915 = vmul.f32 %v778, 0.044715
      %v916 = vmul.f32 %v843, 0.044715
      %v917 = vmul.f32 %v781, 0.044715
      %v918 = vmul.f32 %v846, 0.044715
      %v919 = vmul.f32 %v784, 0.044715
      %v920 = vmul.f32 %v849, 0.044715
      %v921 = vmul.f32 %v787, 0.044715
      %v922 = vmul.f32 %v852, 0.044715
      %v923 = vmul.f32 %v790, 0.044715
      %v924 = vmul.f32 %v855, 0.044715
      %v925 = vmul.f32 %v793, 0.044715
      %v926 = vmul.f32 %v858, 0.044715
      %v927 = vmul.f32 %v796, 0.044715
      %v928 = vmul.f32 %v861, 0.044715
      %v929 = vmul.f32 %v799, 0.044715
      %v930 = vmul.f32 %v864, 0.044715
      %v931 = vmul.f32 %v802, 0.044715
      %v932 = vmul.f32 %v867, 0.044715
      %v933 = vmul.f32 %v901, %v757
      %v934 = vmul.f32 %v902, %v822
      %v935 = vmul.f32 %v903, %v760
      %v936 = vmul.f32 %v904, %v825
      %v937 = vmul.f32 %v905, %v763
      %v938 = vmul.f32 %v906, %v828
      %v939 = vmul.f32 %v907, %v766
      %v940 = vmul.f32 %v908, %v831
      %v941 = vmul.f32 %v909, %v769
      %v942 = vmul.f32 %v910, %v834
      %v943 = vmul.f32 %v911, %v772
      %v944 = vmul.f32 %v912, %v837
      %v945 = vmul.f32 %v913, %v775
      %v946 = vmul.f32 %v914, %v840
      %v947 = vmul.f32 %v915, %v778
      %v948 = vmul.f32 %v916, %v843
      %v949 = vmul.f32 %v917, %v781
      %v950 = vmul.f32 %v918, %v846
      %v951 = vmul.f32 %v919, %v784
      %v952 = vmul.f32 %v920, %v849
      %v953 = vmul.f32 %v921, %v787
      %v954 = vmul.f32 %v922, %v852
      %v955 = vmul.f32 %v923, %v790
      %v956 = vmul.f32 %v924, %v855
      %v957 = vmul.f32 %v925, %v793
      %v958 = vmul.f32 %v926, %v858
      %v959 = vmul.f32 %v927, %v796
      %v960 = vmul.f32 %v928, %v861
      %v961 = vmul.f32 %v929, %v799
      %v962 = vmul.f32 %v930, %v864
      %v963 = vmul.f32 %v931, %v802
      %v964 = vmul.f32 %v932, %v867
      %v965 = vmul.f32 %v933, %v757
      %v966 = vmul.f32 %v934, %v822
      %v967 = vmul.f32 %v935, %v760
      %v968 = vmul.f32 %v936, %v825
      %v969 = vmul.f32 %v937, %v763
      %v970 = vmul.f32 %v938, %v828
      %v971 = vmul.f32 %v939, %v766
      %v972 = vmul.f32 %v940, %v831
      %v973 = vmul.f32 %v941, %v769
      %v974 = vmul.f32 %v942, %v834
      %v975 = vmul.f32 %v943, %v772
      %v976 = vmul.f32 %v944, %v837
      %v977 = vmul.f32 %v945, %v775
      %v978 = vmul.f32 %v946, %v840
      %v979 = vmul.f32 %v947, %v778
      %v980 = vmul.f32 %v948, %v843
      %v981 = vmul.f32 %v949, %v781
      %v982 = vmul.f32 %v950, %v846
      %v983 = vmul.f32 %v951, %v784
      %v984 = vmul.f32 %v952, %v849
      %v985 = vmul.f32 %v953, %v787
      %v986 = vmul.f32 %v954, %v852
      %v987 = vmul.f32 %v955, %v790
      %v988 = vmul.f32 %v956, %v855
      %v989 = vmul.f32 %v957, %v793
      %v990 = vmul.f32 %v958, %v858
      %v991 = vmul.f32 %v959, %v796
      %v992 = vmul.f32 %v960, %v861
      %v993 = vmul.f32 %v961, %v799
      %v994 = vmul.f32 %v962, %v864
      %v995 = vmul.f32 %v963, %v802
      %v996 = vmul.f32 %v964, %v867
      %v997 = vadd.f32 %v757, %v965
      %v998 = vadd.f32 %v822, %v966
      %v999 = vadd.f32 %v760, %v967
      %v1000 = vadd.f32 %v825, %v968
      %v1001 = vadd.f32 %v763, %v969
      %v1002 = vadd.f32 %v828, %v970
      %v1003 = vadd.f32 %v766, %v971
      %v1004 = vadd.f32 %v831, %v972
      %v1005 = vadd.f32 %v769, %v973
      %v1006 = vadd.f32 %v834, %v974
      %v1007 = vadd.f32 %v772, %v975
      %v1008 = vadd.f32 %v837, %v976
      %v1009 = vadd.f32 %v775, %v977
      %v1010 = vadd.f32 %v840, %v978
      %v1011 = vadd.f32 %v778, %v979
      %v1012 = vadd.f32 %v843, %v980
      %v1013 = vadd.f32 %v781, %v981
      %v1014 = vadd.f32 %v846, %v982
      %v1015 = vadd.f32 %v784, %v983
      %v1016 = vadd.f32 %v849, %v984
      %v1017 = vadd.f32 %v787, %v985
      %v1018 = vadd.f32 %v852, %v986
      %v1019 = vadd.f32 %v790, %v987
      %v1020 = vadd.f32 %v855, %v988
      %v1021 = vadd.f32 %v793, %v989
      %v1022 = vadd.f32 %v858, %v990
      %v1023 = vadd.f32 %v796, %v991
      %v1024 = vadd.f32 %v861, %v992
      %v1025 = vadd.f32 %v799, %v993
      %v1026 = vadd.f32 %v864, %v994
      %v1027 = vadd.f32 %v802, %v995
      %v1028 = vadd.f32 %v867, %v996
      %v1029 = vmul.f32 %v997, 0.7978846
      %v1030 = vmul.f32 %v998, 0.7978846
      %v1031 = vmul.f32 %v999, 0.7978846
      %v1032 = vmul.f32 %v1000, 0.7978846
      %v1033 = vmul.f32 %v1001, 0.7978846
      %v1034 = vmul.f32 %v1002, 0.7978846
      %v1035 = vmul.f32 %v1003, 0.7978846
      %v1036 = vmul.f32 %v1004, 0.7978846
      %v1037 = vmul.f32 %v1005, 0.7978846
      %v1038 = vmul.f32 %v1006, 0.7978846
      %v1039 = vmul.f32 %v1007, 0.7978846
      %v1040 = vmul.f32 %v1008, 0.7978846
      %v1041 = vmul.f32 %v1009, 0.7978846
      %v1042 = vmul.f32 %v1010, 0.7978846
      %v1043 = vmul.f32 %v1011, 0.7978846
      %v1044 = vmul.f32 %v1012, 0.7978846
      %v1045 = vmul.f32 %v1013, 0.7978846
      %v1046 = vmul.f32 %v1014, 0.7978846
      %v1047 = vmul.f32 %v1015, 0.7978846
      %v1048 = vmul.f32 %v1016, 0.7978846
      %v1049 = vmul.f32 %v1017, 0.7978846
      %v1050 = vmul.f32 %v1018, 0.7978846
      %v1051 = vmul.f32 %v1019, 0.7978846
      %v1052 = vmul.f32 %v1020, 0.7978846
      %v1053 = vmul.f32 %v1021, 0.7978846
      %v1054 = vmul.f32 %v1022, 0.7978846
      %v1055 = vmul.f32 %v1023, 0.7978846
      %v1056 = vmul.f32 %v1024, 0.7978846
      %v1057 = vmul.f32 %v1025, 0.7978846
      %v1058 = vmul.f32 %v1026, 0.7978846
      %v1059 = vmul.f32 %v1027, 0.7978846
      %v1060 = vmul.f32 %v1028, 0.7978846
      %v1061 = vtanh.pop %v1029
      %v1062 = vtanh.pop %v1030
      %v1063 = vtanh.pop %v1031
      %v1064 = vtanh.pop %v1032
      %v1065 = vtanh.pop %v1033
      %v1066 = vtanh.pop %v1034
      %v1067 = vtanh.pop %v1035
      %v1068 = vtanh.pop %v1036
      %v1069 = vtanh.pop %v1037
      %v1070 = vtanh.pop %v1038
      %v1071 = vtanh.pop %v1039
      %v1072 = vtanh.pop %v1040
      %v1073 = vtanh.pop %v1041
      %v1074 = vtanh.pop %v1042
      %v1075 = vtanh.pop %v1043
      %v1076 = vtanh.pop %v1044
      %v1077 = vtanh.pop %v1045
      %v1078 = vtanh.pop %v1046
      %v1079 = vtanh.pop %v1047
      %v1080 = vtanh.pop %v1048
      %v1081 = vtanh.pop %v1049
      %v1082 = vtanh.pop %v1050
      %v1083 = vtanh.pop %v1051
      %v1084 = vtanh.pop %v1052
      %v1085 = vtanh.pop %v1053
      %v1086 = vtanh.pop %v1054
      %v1087 = vtanh.pop %v1055
      %v1088 = vtanh.pop %v1056
      %v1089 = vtanh.pop %v1057
      %v1090 = vtanh.pop %v1058
      %v1091 = vtanh.pop %v1059
      %v1092 = vtanh.pop %v1060
      %v1093 = vadd.f32 %v1061, 1.0
      %v1094 = vadd.f32 %v1062, 1.0
      %v1095 = vadd.f32 %v1063, 1.0
      %v1096 = vadd.f32 %v1064, 1.0
      %v1097 = vadd.f32 %v1065, 1.0
      %v1098 = vadd.f32 %v1066, 1.0
      %v1099 = vadd.f32 %v1067, 1.0
      %v1100 = vadd.f32 %v1068, 1.0
      %v1101 = vadd.f32 %v1069, 1.0
      %v1102 = vadd.f32 %v1070, 1.0
      %v1103 = vadd.f32 %v1071, 1.0
      %v1104 = vadd.f32 %v1072, 1.0
      %v1105 = vadd.f32 %v1073, 1.0
      %v1106 = vadd.f32 %v1074, 1.0
      %v1107 = vadd.f32 %v1075, 1.0
      %v1108 = vadd.f32 %v1076, 1.0
      %v1109 = vadd.f32 %v1077, 1.0
      %v1110 = vadd.f32 %v1078, 1.0
      %v1111 = vadd.f32 %v1079, 1.0
      %v1112 = vadd.f32 %v1080, 1.0
      %v1113 = vadd.f32 %v1081, 1.0
      %v1114 = vadd.f32 %v1082, 1.0
      %v1115 = vadd.f32 %v1083, 1.0
      %v1116 = vadd.f32 %v1084, 1.0
      %v1117 = vadd.f32 %v1085, 1.0
      %v1118 = vadd.f32 %v1086, 1.0
      %v1119 = vadd.f32 %v1087, 1.0
      %v1120 = vadd.f32 %v1088, 1.0
      %v1121 = vadd.f32 %v1089, 1.0
      %v1122 = vadd.f32 %v1090, 1.0
      %v1123 = vadd.f32 %v1091, 1.0
      %v1124 = vadd.f32 %v1092, 1.0
      %v1125 = vmul.f32 %v869, %v1093
      %v1126 = vmul.f32 %v870, %v1094
      %v1127 = vmul.f32 %v871, %v1095
      %v1128 = vmul.f32 %v872, %v1096
      %v1129 = vmul.f32 %v873, %v1097
      %v1130 = vmul.f32 %v874, %v1098
      %v1131 = vmul.f32 %v875, %v1099
      %v1132 = vmul.f32 %v876, %v1100
      %v1133 = vmul.f32 %v877, %v1101
      %v1134 = vmul.f32 %v878, %v1102
      %v1135 = vmul.f32 %v879, %v1103
      %v1136 = vmul.f32 %v880, %v1104
      %v1137 = vmul.f32 %v881, %v1105
      %v1138 = vmul.f32 %v882, %v1106
      %v1139 = vmul.f32 %v883, %v1107
      %v1140 = vmul.f32 %v884, %v1108
      %v1141 = vmul.f32 %v885, %v1109
      %v1142 = vmul.f32 %v886, %v1110
      %v1143 = vmul.f32 %v887, %v1111
      %v1144 = vmul.f32 %v888, %v1112
      %v1145 = vmul.f32 %v889, %v1113
      %v1146 = vmul.f32 %v890, %v1114
      %v1147 = vmul.f32 %v891, %v1115
      %v1148 = vmul.f32 %v892, %v1116
      %v1149 = vmul.f32 %v893, %v1117
      %v1150 = vmul.f32 %v894, %v1118
      %v1151 = vmul.f32 %v895, %v1119
      %v1152 = vmul.f32 %v896, %v1120
      %v1153 = vmul.f32 %v897, %v1121
      %v1154 = vmul.f32 %v898, %v1122
      %v1155 = vmul.f32 %v899, %v1123
      %v1156 = vmul.f32 %v900, %v1124
      %v1157 = vld [vmem:[%s5] sm:$0xff]
      %v1158 = vld [vmem:[%s5 + $0x8] sm:$0xff]
      %v1159 = vld [vmem:[%s5 + $0x10] sm:$0xff]
      %v1160 = vld [vmem:[%s5 + $0x18] sm:$0xff]
      %v1161 = vld [vmem:[%s5 + $0x20] sm:$0xff]
      %v1162 = vld [vmem:[%s5 + $0x28] sm:$0xff]
      %v1163 = vld [vmem:[%s5 + $0x30] sm:$0xff]
      %v1164 = vld [vmem:[%s5 + $0x38] sm:$0xff]
      %v1165 = vld [vmem:[%s5 + $0x40] sm:$0xff]
      %v1166 = vld [vmem:[%s5 + $0x48] sm:$0xff]
      %v1167 = vld [vmem:[%s5 + $0x50] sm:$0xff]
      %v1168 = vld [vmem:[%s5 + $0x58] sm:$0xff]
      %v1169 = vld [vmem:[%s5 + $0x60] sm:$0xff]
      %v1170 = vld [vmem:[%s5 + $0x68] sm:$0xff]
      %v1171 = vld [vmem:[%s5 + $0x70] sm:$0xff]
      %v1172 = vld [vmem:[%s5 + $0x78] sm:$0xff]
      %v1173 = vld [vmem:[%s5 + $0x80] sm:$0xff]
      %v1174 = vld [vmem:[%s5 + $0x88] sm:$0xff]
      %v1175 = vld [vmem:[%s5 + $0x90] sm:$0xff]
      %v1176 = vld [vmem:[%s5 + $0x98] sm:$0xff]
      %v1177 = vld [vmem:[%s5 + $0xa0] sm:$0xff]
      %v1178 = vld [vmem:[%s5 + $0xa8] sm:$0xff]
      %v1179 = vld [vmem:[%s5 + $0xb0] sm:$0xff]
      %v1180 = vld [vmem:[%s5 + $0xb8] sm:$0xff]
      %v1181 = vld [vmem:[%s5 + $0xc0] sm:$0xff]
      %v1182 = vld [vmem:[%s5 + $0xc8] sm:$0xff]
      %v1183 = vld [vmem:[%s5 + $0xd0] sm:$0xff]
      %v1184 = vld [vmem:[%s5 + $0xd8] sm:$0xff]
      %v1185 = vld [vmem:[%s5 + $0xe0] sm:$0xff]
      %v1186 = vld [vmem:[%s5 + $0xe8] sm:$0xff]
      %v1187 = vld [vmem:[%s5 + $0xf0] sm:$0xff]
      %v1188 = vld [vmem:[%s5 + $0xf8] sm:$0xff]
      %v1189 = vld [vmem:[%s6] sm:$0x1]
      %v1191 = vperm.slane %v1189, 0
      %1193 = vmatpush.msra.mxu0 %v1172
      %1194 = vmatpush.msra.mxu0 %v1171
      %1195 = vmatpush.msra.mxu0 %v1170
      %1196 = vmatpush.msra.mxu0 %v1169
      %1197 = vmatpush.msra.mxu0 %v1168
      %1198 = vmatpush.msra.mxu0 %v1167
      %1199 = vmatpush.msra.mxu0 %v1166
      %1200 = vmatpush.msra.mxu0 %v1165
      %1201 = vmatpush.msra.mxu0 %v1164
      %1202 = vmatpush.msra.mxu0 %v1163
      %1203 = vmatpush.msra.mxu0 %v1162
      %1204 = vmatpush.msra.mxu0 %v1161
      %1205 = vmatpush.msra.mxu0 %v1160
      %1206 = vmatpush.msra.mxu0 %v1159
      %1207 = vmatpush.msra.mxu0 %v1158
      %1208 = vmatpush.msra.mxu0 %v1157
      %1209 = vmatmul.f32.gmra.mxu0 %v1125
      %v1210 = vpop.f32.mrf.mxu0
      %v1211 = vadd.f32 %v1191, %v1210
      %1212 = vmatmul.f32.gmra.mxu0 %v1127
      %v1213 = vpop.f32.mrf.mxu0
      %v1214 = vadd.f32 %v1191, %v1213
      %1215 = vmatmul.f32.gmra.mxu0 %v1129
      %v1216 = vpop.f32.mrf.mxu0
      %v1217 = vadd.f32 %v1191, %v1216
      %1218 = vmatmul.f32.gmra.mxu0 %v1131
      %v1219 = vpop.f32.mrf.mxu0
      %v1220 = vadd.f32 %v1191, %v1219
      %1221 = vmatmul.f32.gmra.mxu0 %v1133
      %v1222 = vpop.f32.mrf.mxu0
      %v1223 = vadd.f32 %v1191, %v1222
      %1224 = vmatmul.f32.gmra.mxu0 %v1135
      %v1225 = vpop.f32.mrf.mxu0
      %v1226 = vadd.f32 %v1191, %v1225
      %1227 = vmatmul.f32.gmra.mxu0 %v1137
      %v1228 = vpop.f32.mrf.mxu0
      %v1229 = vadd.f32 %v1191, %v1228
      %1230 = vmatmul.f32.gmra.mxu0 %v1139
      %v1231 = vpop.f32.mrf.mxu0
      %v1232 = vadd.f32 %v1191, %v1231
      %1233 = vmatmul.f32.gmra.mxu0 %v1141
      %v1234 = vpop.f32.mrf.mxu0
      %v1235 = vadd.f32 %v1191, %v1234
      %1236 = vmatmul.f32.gmra.mxu0 %v1143
      %v1237 = vpop.f32.mrf.mxu0
      %v1238 = vadd.f32 %v1191, %v1237
      %1239 = vmatmul.f32.gmra.mxu0 %v1145
      %v1240 = vpop.f32.mrf.mxu0
      %v1241 = vadd.f32 %v1191, %v1240
      %1242 = vmatmul.f32.gmra.mxu0 %v1147
      %v1243 = vpop.f32.mrf.mxu0
      %v1244 = vadd.f32 %v1191, %v1243
      %1245 = vmatmul.f32.gmra.mxu0 %v1149
      %v1246 = vpop.f32.mrf.mxu0
      %v1247 = vadd.f32 %v1191, %v1246
      %1248 = vmatmul.f32.gmra.mxu0 %v1151
      %v1249 = vpop.f32.mrf.mxu0
      %v1250 = vadd.f32 %v1191, %v1249
      %1251 = vmatmul.f32.gmra.mxu0 %v1153
      %v1252 = vpop.f32.mrf.mxu0
      %v1253 = vadd.f32 %v1191, %v1252
      %1254 = vmatmul.f32.gmra.mxu0 %v1155
      %v1255 = vpop.f32.mrf.mxu0
      %v1256 = vadd.f32 %v1191, %v1255
      %1257 = vdwg.mxu0
      %1258 = vmatpush.msra.mxu0 %v1188
      %1259 = vmatpush.msra.mxu0 %v1187
      %1260 = vmatpush.msra.mxu0 %v1186
      %1261 = vmatpush.msra.mxu0 %v1185
      %1262 = vmatpush.msra.mxu0 %v1184
      %1263 = vmatpush.msra.mxu0 %v1183
      %1264 = vmatpush.msra.mxu0 %v1182
      %1265 = vmatpush.msra.mxu0 %v1181
      %1266 = vmatpush.msra.mxu0 %v1180
      %1267 = vmatpush.msra.mxu0 %v1179
      %1268 = vmatpush.msra.mxu0 %v1178
      %1269 = vmatpush.msra.mxu0 %v1177
      %1270 = vmatpush.msra.mxu0 %v1176
      %1271 = vmatpush.msra.mxu0 %v1175
      %1272 = vmatpush.msra.mxu0 %v1174
      %1273 = vmatpush.msra.mxu0 %v1173
      %1274 = vmatmul.f32.gmra.mxu0 %v1126
      %v1275 = vpop.f32.mrf.mxu0
      %v1276 = vadd.f32 %v1211, %v1275
      %1277 = vmatmul.f32.gmra.mxu0 %v1128
      %v1278 = vpop.f32.mrf.mxu0
      %v1279 = vadd.f32 %v1214, %v1278
      %1280 = vmatmul.f32.gmra.mxu0 %v1130
      %v1281 = vpop.f32.mrf.mxu0
      %v1282 = vadd.f32 %v1217, %v1281
      %1283 = vmatmul.f32.gmra.mxu0 %v1132
      %v1284 = vpop.f32.mrf.mxu0
      %v1285 = vadd.f32 %v1220, %v1284
      %1286 = vmatmul.f32.gmra.mxu0 %v1134
      %v1287 = vpop.f32.mrf.mxu0
      %v1288 = vadd.f32 %v1223, %v1287
      %1289 = vmatmul.f32.gmra.mxu0 %v1136
      %v1290 = vpop.f32.mrf.mxu0
      %v1291 = vadd.f32 %v1226, %v1290
      %1292 = vmatmul.f32.gmra.mxu0 %v1138
      %v1293 = vpop.f32.mrf.mxu0
      %v1294 = vadd.f32 %v1229, %v1293
      %1295 = vmatmul.f32.gmra.mxu0 %v1140
      %v1296 = vpop.f32.mrf.mxu0
      %v1297 = vadd.f32 %v1232, %v1296
      %1298 = vmatmul.f32.gmra.mxu0 %v1142
      %v1299 = vpop.f32.mrf.mxu0
      %v1300 = vadd.f32 %v1235, %v1299
      %1301 = vmatmul.f32.gmra.mxu0 %v1144
      %v1302 = vpop.f32.mrf.mxu0
      %v1303 = vadd.f32 %v1238, %v1302
      %1304 = vmatmul.f32.gmra.mxu0 %v1146
      %v1305 = vpop.f32.mrf.mxu0
      %v1306 = vadd.f32 %v1241, %v1305
      %1307 = vmatmul.f32.gmra.mxu0 %v1148
      %v1308 = vpop.f32.mrf.mxu0
      %v1309 = vadd.f32 %v1244, %v1308
      %1310 = vmatmul.f32.gmra.mxu0 %v1150
      %v1311 = vpop.f32.mrf.mxu0
      %v1312 = vadd.f32 %v1247, %v1311
      %1313 = vmatmul.f32.gmra.mxu0 %v1152
      %v1314 = vpop.f32.mrf.mxu0
      %v1315 = vadd.f32 %v1250, %v1314
      %1316 = vmatmul.f32.gmra.mxu0 %v1154
      %v1317 = vpop.f32.mrf.mxu0
      %v1318 = vadd.f32 %v1253, %v1317
      %1319 = vmatmul.f32.gmra.mxu0 %v1156
      %v1320 = vpop.f32.mrf.mxu0
      %v1321 = vadd.f32 %v1256, %v1320
      %1322 = vdwg.mxu0
      %v1323 = vadd.f32 %v318, %v1276
      %v1324 = vadd.f32 %v319, %v1279
      %v1325 = vadd.f32 %v320, %v1282
      %v1326 = vadd.f32 %v321, %v1285
      %v1327 = vadd.f32 %v322, %v1288
      %v1328 = vadd.f32 %v323, %v1291
      %v1329 = vadd.f32 %v324, %v1294
      %v1330 = vadd.f32 %v325, %v1297
      %v1331 = vadd.f32 %v326, %v1300
      %v1332 = vadd.f32 %v327, %v1303
      %v1333 = vadd.f32 %v328, %v1306
      %v1334 = vadd.f32 %v329, %v1309
      %v1335 = vadd.f32 %v330, %v1312
      %v1336 = vadd.f32 %v331, %v1315
      %v1337 = vadd.f32 %v332, %v1318
      %v1338 = vadd.f32 %v333, %v1321
      %1339 = vst [vmem:[%s316] sm:$0xff] %v1323
      %1340 = vst [vmem:[%s316 + $0x8] sm:$0xff] %v1324
      %1341 = vst [vmem:[%s316 + $0x10] sm:$0xff] %v1325
      %1342 = vst [vmem:[%s316 + $0x18] sm:$0xff] %v1326
      %1343 = vst [vmem:[%s316 + $0x20] sm:$0xff] %v1327
      %1344 = vst [vmem:[%s316 + $0x28] sm:$0xff] %v1328
      %1345 = vst [vmem:[%s316 + $0x30] sm:$0xff] %v1329
      %1346 = vst [vmem:[%s316 + $0x38] sm:$0xff] %v1330
      %1347 = vst [vmem:[%s316 + $0x40] sm:$0xff] %v1331
      %1348 = vst [vmem:[%s316 + $0x48] sm:$0xff] %v1332
      %1349 = vst [vmem:[%s316 + $0x50] sm:$0xff] %v1333
      %1350 = vst [vmem:[%s316 + $0x58] sm:$0xff] %v1334
      %1351 = vst [vmem:[%s316 + $0x60] sm:$0xff] %v1335
      %1352 = vst [vmem:[%s316 + $0x68] sm:$0xff] %v1336
      %1353 = vst [vmem:[%s316 + $0x70] sm:$0xff] %v1337
      %1354 = vst [vmem:[%s316 + $0x78] sm:$0xff] %v1338
      %s1355 = smul.u32 16, %s23
      %p1356 = scmp.lt.s32.totalorder %s22, 1
      %s1357 = scalar_select %p1356, %s22, 1
      %p1358 = scmp.lt.s32.totalorder %s1355, 15
      %s1359 = scalar_select %p1358, %s1355, 15
      %s1360 = smul.addr %s1357, 16
      %s1361 = sadd.s32 %s1359, %s1360
      %s1362 = smul.addr %s1361, 8
      %s1363 = scalar_lea.vmem %s7, %s1362
      // Predicated region
      $region49: #{transformer_forward.5} parent=47 // pred_check
        %p1364 = pneg %p204
      $region50: #{transformer_forward.5} parent=47 // pred_check_branch
        %1366 = sbr.rel (%p1364) target = $region52
      $region51: #{transformer_forward.5} parent=47 // pred_region
        %s1367 = smul.u32 16, %s23
      $region52: #{transformer_forward.5} parent=47 // pred_fallthru
        _
    $region48: #{transformer_forward.5} parent=5 // pred_fallthru
      _
    %p1368 = scmp.le.s32.totalorder 2, %s13
    // Predicated region
    $region53: #{transformer_forward.5} parent=5 // pred_check
      %p1369 = pneg %p1368
    $region54: #{transformer_forward.5} parent=5 // pred_check_branch
      %1371 = sbr.rel (%p1369) target = $region56
    $region55: #{transformer_forward.5} parent=5 // pred_region
      %s1372 = ssub.s32 %s13, 2
      // Predicated region
      $region57: #{transformer_forward.5} parent=55 // pred_check
        %p1373 = pneg %p210
      $region58: #{transformer_forward.5} parent=55 // pred_check_branch
        %1375 = sbr.rel (%p1373) target = $region60
      $region59: #{transformer_forward.5} parent=55 // pred_region
        %s1376 = smul.u32 16, %s25
        %p1377 = scmp.lt.s32.totalorder %s24, 1
        %s1378 = scalar_select %p1377, %s24, 1
        %p1379 = scmp.lt.s32.totalorder %s1376, 15
        %s1380 = scalar_select %p1379, %s1376, 15
        %s1381 = smul.addr %s1378, 16
        %s1382 = sadd.s32 %s1380, %s1381
        %s1383 = smul.addr %s1382, 8
        %s1384 = scalar_lea.vmem %s7, %s1383
      $region60: #{transformer_forward.5} parent=55 // pred_fallthru
        _
    $region56: #{transformer_forward.5} parent=5 // pred_fallthru
      _
  $region6: #{transformer_forward.5} parent=0 // loop_footer
    %s17 = sadd.s32 1, %s13
  $region7: #{transformer_forward.5} parent=0 // loop_footer_branch
    %12 = sbr.rel target = $region3
  $region8: #{transformer_forward.5} parent=0 // loop_exit
    _

// kernel: transformer_forward.4
$region0: #{transformer_forward.4}
  #allocation0 [shape = 'u32[]', space=smem, size = 0x4, offset = 0x4, fixed_abs, tag = 'smem constant byte address 0x4 - core index']
  #allocation1 [shape = 'u32[72,128]{1,0:T(1,128)}', space=vmem, size = 0x9000, scoped, tag = 'internal scratch']
  %s0 = inlined_call_operand.vmem [shape: f32[2,128,128], index: 0, kind: input, shape index: {}, may-alias: {0,5}]
  %s1 = inlined_call_operand.hbm [shape: f32[1,128], index: 1, kind: input, shape index: {}]
  %s2 = inlined_call_operand.hbm [shape: f32[1,128], index: 2, kind: input, shape index: {}]
  %s3 = inlined_call_operand.hbm [shape: f32[128,768], index: 3, kind: input, shape index: {}]
  %s4 = inlined_call_operand.vmem [shape: f32[256,128], index: 4, kind: input, shape index: {}]
  %s5 = inlined_call_operand.vmem [shape: f32[2,128,128], index: 5, kind: output, shape index: {}, may-alias: {0,5}]
  %s6 = sld [smem:[#allocation0]]
  $region65: #{transformer_forward.4} parent=0
    _
  %s8 = ssub.s32 1, %s6
  %s9 = scalar_select 0, %s8, %s6
  $region1: #{transformer_forward.4} parent=0
    #allocation2 [shape = 'u8[512]{0}', space=vmem, size = 0x400, scoped, tag = 'input window, operand 1, single buffered']
    #allocation3 [shape = 's32[2]{0}', space=sflag, size = 0x8, scoped, tag = 'scoped memory for transformer_forward.4']
    #allocation4 [shape = 'u8[512]{0}', space=vmem, size = 0x400, scoped, tag = 'input window, operand 2, single buffered']
    #allocation5 [shape = 's32[1]{0}', space=sflag, size = 0x4, scoped, tag = 'scoped memory for transformer_forward.4']
    #allocation6 [shape = 'u8[393216]{0}', space=vmem, size = 0x60000, scoped, tag = 'input window, operand 3, single buffered']
    %10 = vsyncpa [#allocation3], 0
    %11 = vsyncpa [#allocation5], 0
    loop: start=0, step=1, limit=4
    $region2: #{transformer_forward.4} parent=1 // loop_pre_header
      _
    $region3: #{transformer_forward.4} parent=1 // loop_header
      %s13 = sphi 0, %s17
      %p14 = scmp.ge.s32.totalorder %s13, 4
      %s23 = sphi 0, %s25
      %s26 = sphi 0, %s23
      %s27 = sphi 0, %s26
      %s43 = sphi 0, %s27
      %s47 = sphi 0, %s47
      %s49 = sphi 0, %s47
      %s50 = sphi 0, %s49
      %s64 = sphi 0, %s50
      %s68 = sphi 0, %s68
      %s70 = sphi 0, %s68
      %s71 = sphi 0, %s70
      %s85 = sphi 0, %s71
      %s89 = sphi 0, %s89
      %s91 = sphi 0, %s89
      %s92 = sphi 0, %s91
      %s106 = sphi 0, %s92
      %s110 = sphi 0, %s110
      %s112 = sphi 0, %s110
      %s113 = sphi 0, %s112
      %s127 = sphi 0, %s113
      %s133 = sphi 0, %s135
      %s136 = sphi 0, %s133
      %s137 = sphi 0, %s136
      %s153 = sphi 0, %s137
    $region4: #{transformer_forward.4} parent=1 // loop_header_branch
      %16 = sbr.rel (%p14) target = $region8
    $region5: #{transformer_forward.4} parent=1 // loop_body
      %s18 = ssub.s32 %s13, 1
      %s19 = ssub.s32 %s13, 2
      %s20 = sadd.s32 %s13, 1
      %s21 = ssub.s32 %s13, %s20
      %p22 = scmp.eq.s32.totalorder %s21, 0
      %s24 = sadd.s32 %s23, 1
      %s25 = scalar_select %p22, %s23, %s24
      %p28 = pneg %p22
      %p29 = scmp.eq.s32.totalorder %s13, 1
      %p30 = por %p28, %p29
      %p31 = scmp.ne.s32.totalorder %s23, %s26
      %p32 = scmp.eq.s32.totalorder %s13, 0
      %p33 = por %p31, %p32
      %p34 = scmp.ne.s32.totalorder %s23, %s26
      %p35 = scmp.eq.s32.totalorder %s18, 1
      %p36 = por %p34, %p35
      %p37 = scmp.ne.s32.totalorder %s26, %s27
      %p38 = scmp.eq.s32.totalorder %s18, 0
      %p39 = por %p37, %p38
      %p40 = scmp.ne.s32.totalorder %s26, %s27
      %p41 = scmp.eq.s32.totalorder %s19, 1
      %p42 = por %p40, %p41
      %p44 = scmp.ne.s32.totalorder %s27, %s43
      %p45 = scmp.eq.s32.totalorder %s19, 0
      %p46 = por %p44, %p45
      %s48 = sadd.s32 %s47, 1
      %p51 = scmp.eq.s32.totalorder %s13, 1
      %p52 = scmp.ne.s32.totalorder %s47, %s49
      %p53 = scmp.eq.s32.totalorder %s13, 0
      %p54 = por %p52, %p53
      %p55 = scmp.ne.s32.totalorder %s47, %s49
      %p56 = scmp.eq.s32.totalorder %s18, 1
      %p57 = por %p55, %p56
      %p58 = scmp.ne.s32.totalorder %s49, %s50
      %p59 = scmp.eq.s32.totalorder %s18, 0
      %p60 = por %p58, %p59
      %p61 = scmp.ne.s32.totalorder %s49, %s50
      %p62 = scmp.eq.s32.totalorder %s19, 1
      %p63 = por %p61, %p62
      %p65 = scmp.ne.s32.totalorder %s50, %s64
      %p66 = scmp.eq.s32.totalorder %s19, 0
      %p67 = por %p65, %p66
      %s69 = sadd.s32 %s68, 1
      %p72 = scmp.eq.s32.totalorder %s13, 1
      %p73 = scmp.ne.s32.totalorder %s68, %s70
      %p74 = scmp.eq.s32.totalorder %s13, 0
      %p75 = por %p73, %p74
      %p76 = scmp.ne.s32.totalorder %s68, %s70
      %p77 = scmp.eq.s32.totalorder %s18, 1
      %p78 = por %p76, %p77
      %p79 = scmp.ne.s32.totalorder %s70, %s71
      %p80 = scmp.eq.s32.totalorder %s18, 0
      %p81 = por %p79, %p80
      %p82 = scmp.ne.s32.totalorder %s70, %s71
      %p83 = scmp.eq.s32.totalorder %s19, 1
      %p84 = por %p82, %p83
      %p86 = scmp.ne.s32.totalorder %s71, %s85
      %p87 = scmp.eq.s32.totalorder %s19, 0
      %p88 = por %p86, %p87
      %s90 = sadd.s32 %s89, 1
      %p93 = scmp.eq.s32.totalorder %s13, 1
      %p94 = scmp.ne.s32.totalorder %s89, %s91
      %p95 = scmp.eq.s32.totalorder %s13, 0
      %p96 = por %p94, %p95
      %p97 = scmp.ne.s32.totalorder %s89, %s91
      %p98 = scmp.eq.s32.totalorder %s18, 1
      %p99 = por %p97, %p98
      %p100 = scmp.ne.s32.totalorder %s91, %s92
      %p101 = scmp.eq.s32.totalorder %s18, 0
      %p102 = por %p100, %p101
      %p103 = scmp.ne.s32.totalorder %s91, %s92
      %p104 = scmp.eq.s32.totalorder %s19, 1
      %p105 = por %p103, %p104
      %p107 = scmp.ne.s32.totalorder %s92, %s106
      %p108 = scmp.eq.s32.totalorder %s19, 0
      %p109 = por %p107, %p108
      %s111 = sadd.s32 %s110, 1
      %p114 = scmp.eq.s32.totalorder %s13, 1
      %p115 = scmp.ne.s32.totalorder %s110, %s112
      %p116 = scmp.eq.s32.totalorder %s13, 0
      %p117 = por %p115, %p116
      %p118 = scmp.ne.s32.totalorder %s110, %s112
      %p119 = scmp.eq.s32.totalorder %s18, 1
      %p120 = por %p118, %p119
      %p121 = scmp.ne.s32.totalorder %s112, %s113
      %p122 = scmp.eq.s32.totalorder %s18, 0
      %p123 = por %p121, %p122
      %p124 = scmp.ne.s32.totalorder %s112, %s113
      %p125 = scmp.eq.s32.totalorder %s19, 1
      %p126 = por %p124, %p125
      %p128 = scmp.ne.s32.totalorder %s113, %s127
      %p129 = scmp.eq.s32.totalorder %s19, 0
      %p130 = por %p128, %p129
      %s131 = ssub.s32 %s13, %s20
      %p132 = scmp.eq.s32.totalorder %s131, 0
      %s134 = sadd.s32 %s133, 1
      %s135 = scalar_select %p132, %s133, %s134
      %p138 = pneg %p132
      %p139 = scmp.eq.s32.totalorder %s13, 1
      %p140 = por %p138, %p139
      %p141 = scmp.ne.s32.totalorder %s133, %s136
      %p142 = scmp.eq.s32.totalorder %s13, 0
      %p143 = por %p141, %p142
      %p144 = scmp.ne.s32.totalorder %s133, %s136
      %p145 = scmp.eq.s32.totalorder %s18, 1
      %p146 = por %p144, %p145
      %p147 = scmp.ne.s32.totalorder %s136, %s137
      %p148 = scmp.eq.s32.totalorder %s18, 0
      %p149 = por %p147, %p148
      %p150 = scmp.ne.s32.totalorder %s136, %s137
      %p151 = scmp.eq.s32.totalorder %s19, 1
      %p152 = por %p150, %p151
      %p154 = scmp.ne.s32.totalorder %s137, %s153
      %p155 = scmp.eq.s32.totalorder %s19, 0
      %p156 = por %p154, %p155
      %p157 = scmp.le.s32.totalorder 1, %s13
      %p158 = scmp.lt.s32.totalorder %s13, 3
      %p159 = pnand %p157, %p158
      %p160 = pneg %p159
      // Predicated region
      $region9: #{transformer_forward.4} parent=5 // pred_check
        _
      $region10: #{transformer_forward.4} parent=5 // pred_check_branch
        %162 = sbr.rel (%p159) target = $region12
      $region11: #{transformer_forward.4} parent=5 // pred_region
        %s163 = ssub.s32 %s13, 1
        // Predicated region
        $region13: #{transformer_forward.4} parent=11 // pred_check
          %p164 = pneg %p60
        $region14: #{transformer_forward.4} parent=11 // pred_check_branch
          %166 = sbr.rel (%p164) target = $region16
        $region15: #{transformer_forward.4} parent=11 // pred_region
          %168 = vsyncadd [#allocation3], 0
          %s170 = sshll.u32 %s1, 4
          %s171 = int_to_ptr.hbm [resolvable:$true] %s170
          %s172 = sshll.u32 [#allocation2], 4
          %s173 = int_to_ptr.vmem [resolvable:$true] %s172
          %175 = dma.hbm_to_vmem [thread:$0]  %s171, 16, %s173, [#allocation3]
        $region16: #{transformer_forward.4} parent=11 // pred_fallthru
          _
        // Predicated region
        $region17: #{transformer_forward.4} parent=11 // pred_check
          %p176 = pneg %p81
        $region18: #{transformer_forward.4} parent=11 // pred_check_branch
          %178 = sbr.rel (%p176) target = $region20
        $region19: #{transformer_forward.4} parent=11 // pred_region
          %180 = vsyncadd [#allocation5], 0
          %s182 = sshll.u32 %s2, 4
          %s183 = int_to_ptr.hbm [resolvable:$true] %s182
          %s184 = sshll.u32 [#allocation4], 4
          %s185 = int_to_ptr.vmem [resolvable:$true] %s184
          %187 = dma.hbm_to_vmem [thread:$0]  %s183, 16, %s185, [#allocation5]
        $region20: #{transformer_forward.4} parent=11 // pred_fallthru
          _
        // Predicated region
        $region21: #{transformer_forward.4} parent=11 // pred_check
          %p188 = pneg %p102
        $region22: #{transformer_forward.4} parent=11 // pred_check_branch
          %190 = sbr.rel (%p188) target = $region24
        $region23: #{transformer_forward.4} parent=11 // pred_region
          %192 = vsyncadd [#allocation5], 0
          %s193 = sshll.u32 %s3, 4
          %s194 = int_to_ptr.hbm [resolvable:$true] %s193
          %s195 = sshll.u32 [#allocation6], 4
          %s196 = int_to_ptr.vmem [resolvable:$true] %s195
          %201 = dma.hbm_to_vmem [thread:$0]  %s194, 12288, %s196, [#allocation5], 768, 768, 48
        $region24: #{transformer_forward.4} parent=11 // pred_fallthru
          _
        // Predicated region
        $region25: #{transformer_forward.4} parent=11 // pred_check
          %p202 = pneg %p123
        $region26: #{transformer_forward.4} parent=11 // pred_check_branch
          %204 = sbr.rel (%p202) target = $region28
        $region27: #{transformer_forward.4} parent=11 // pred_region
          _
        $region28: #{transformer_forward.4} parent=11 // pred_fallthru
          _
      $region12: #{transformer_forward.4} parent=5 // pred_fallthru
        _
      %p205 = scmp.lt.s32.totalorder %s13, 2
      // Predicated region
      $region29: #{transformer_forward.4} parent=5 // pred_check
        %p206 = pneg %p205
      $region30: #{transformer_forward.4} parent=5 // pred_check_branch
        %208 = sbr.rel (%p206) target = $region32
      $region31: #{transformer_forward.4} parent=5 // pred_region
        // Predicated region
        $region33: #{transformer_forward.4} parent=31 // pred_check
          %p209 = pneg %p33
        $region34: #{transformer_forward.4} parent=31 // pred_check_branch
          %211 = sbr.rel (%p209) target = $region36
        $region35: #{transformer_forward.4} parent=31 // pred_region
          %p212 = scmp.lt.s32.totalorder %s13, 1
          %s213 = scalar_select %p212, %s13, 1
          %s214 = smul.addr %s213, 16
          %s215 = smul.addr %s214, 8
          %s216 = scalar_lea.vmem %s0, %s215
        $region36: #{transformer_forward.4} parent=31 // pred_fallthru
          _
      $region32: #{transformer_forward.4} parent=5 // pred_fallthru
        _
      %p217 = scmp.le.s32.totalorder 1, %s13
      %p218 = scmp.lt.s32.totalorder %s13, 3
      %p219 = pnand %p217, %p218
      %p220 = pneg %p219
      // Predicated region
      $region37: #{transformer_forward.4} parent=5 // pred_check
        _
      $region38: #{transformer_forward.4} parent=5 // pred_check_branch
        %222 = sbr.rel (%p219) target = $region40
      $region39: #{transformer_forward.4} parent=5 // pred_region
        %s223 = ssub.s32 %s13, 1
        // Predicated region
        $region41: #{transformer_forward.4} parent=39 // pred_check
          %p224 = pneg %p60
        $region42: #{transformer_forward.4} parent=39 // pred_check_branch
          %226 = sbr.rel (%p224) target = $region44
        $region43: #{transformer_forward.4} parent=39 // pred_region
          %228 = dma.done [#allocation3], 16
        $region44: #{transformer_forward.4} parent=39 // pred_fallthru
          _
        // Predicated region
        $region45: #{transformer_forward.4} parent=39 // pred_check
          %p229 = pneg %p81
        $region46: #{transformer_forward.4} parent=39 // pred_check_branch
          %231 = sbr.rel (%p229) target = $region48
        $region47: #{transformer_forward.4} parent=39 // pred_region
          %233 = dma.done [#allocation5], 16
        $region48: #{transformer_forward.4} parent=39 // pred_fallthru
          _
        // Predicated region
        $region49: #{transformer_forward.4} parent=39 // pred_check
          %p234 = pneg %p102
        $region50: #{transformer_forward.4} parent=39 // pred_check_branch
          %236 = sbr.rel (%p234) target = $region52
        $region51: #{transformer_forward.4} parent=39 // pred_region
          %238 = dma.done [#allocation5], 12288
        $region52: #{transformer_forward.4} parent=39 // pred_fallthru
          _
        %p239 = scmp.lt.s32.totalorder %s18, 1
        %s240 = scalar_select %p239, %s18, 1
        %s241 = smul.addr %s240, 16
        %s242 = smul.addr %s241, 8
        %s243 = scalar_lea.vmem %s0, %s242
        %p244 = pneg %p39
        %p245 = pneg %p36
        %p246 = pneg %p60
        %p247 = pneg %p57
        %p248 = pneg %p81
        %p249 = pneg %p78
        %p250 = pneg %p102
        %p251 = pneg %p99
        %p252 = pneg %p123
        %p253 = pneg %p120
        %p254 = pneg %p149
        %p255 = pneg %p146
        %p256 = scmp.lt.s32.totalorder %s18, 1
        %s257 = scalar_select %p256, %s18, 1
        %s258 = smul.addr %s257, 16
        %s259 = smul.addr %s258, 8
        %s260 = scalar_lea.vmem %s5, %s259
        %p261 = scmp.lt.s32.totalorder %s18, 1
        %s262 = scalar_select %p261, %s18, 1
        %s263 = smul.addr %s262, 16
        %s264 = smul.addr %s263, 8
        %s265 = scalar_lea.vmem %s0, %s264
        %p266 = scmp.lt.s32.totalorder %s18, 1
        %s267 = scalar_select %p266, %s18, 1
        %s268 = smul.addr %s267, 16
        %s269 = smul.addr %s268, 8
        %s270 = scalar_lea.vmem %s5, %s269
        %v271 = vld [vmem:[%s265] sm:$0xff]
        %v272 = vld [vmem:[%s265 + $0x8] sm:$0xff]
        %v273 = vld [vmem:[%s265 + $0x10] sm:$0xff]
        %v274 = vld [vmem:[%s265 + $0x18] sm:$0xff]
        %v275 = vld [vmem:[%s265 + $0x20] sm:$0xff]
        %v276 = vld [vmem:[%s265 + $0x28] sm:$0xff]
        %v277 = vld [vmem:[%s265 + $0x30] sm:$0xff]
        %v278 = vld [vmem:[%s265 + $0x38] sm:$0xff]
        %v279 = vld [vmem:[%s265 + $0x40] sm:$0xff]
        %v280 = vld [vmem:[%s265 + $0x48] sm:$0xff]
        %v281 = vld [vmem:[%s265 + $0x50] sm:$0xff]
        %v282 = vld [vmem:[%s265 + $0x58] sm:$0xff]
        %v283 = vld [vmem:[%s265 + $0x60] sm:$0xff]
        %v284 = vld [vmem:[%s265 + $0x68] sm:$0xff]
        %v285 = vld [vmem:[%s265 + $0x70] sm:$0xff]
        %v286 = vld [vmem:[%s265 + $0x78] sm:$0xff]
        %287 = vadd.xlane.f32.xlu0 %v271
        %v288 = vpop.xlane.xlu0 %287
        %289 = vadd.xlane.f32.xlu0 %v272
        %v290 = vpop.xlane.xlu0 %289
        %291 = vadd.xlane.f32.xlu0 %v273
        %v292 = vpop.xlane.xlu0 %291
        %293 = vadd.xlane.f32.xlu0 %v274
        %v294 = vpop.xlane.xlu0 %293
        %295 = vadd.xlane.f32.xlu0 %v275
        %v296 = vpop.xlane.xlu0 %295
        %297 = vadd.xlane.f32.xlu0 %v276
        %v298 = vpop.xlane.xlu0 %297
        %299 = vadd.xlane.f32.xlu0 %v277
        %v300 = vpop.xlane.xlu0 %299
        %301 = vadd.xlane.f32.xlu0 %v278
        %v302 = vpop.xlane.xlu0 %301
        %303 = vadd.xlane.f32.xlu0 %v279
        %v304 = vpop.xlane.xlu0 %303
        %305 = vadd.xlane.f32.xlu0 %v280
        %v306 = vpop.xlane.xlu0 %305
        %307 = vadd.xlane.f32.xlu0 %v281
        %v308 = vpop.xlane.xlu0 %307
        %309 = vadd.xlane.f32.xlu0 %v282
        %v310 = vpop.xlane.xlu0 %309
        %311 = vadd.xlane.f32.xlu0 %v283
        %v312 = vpop.xlane.xlu0 %311
        %313 = vadd.xlane.f32.xlu0 %v284
        %v314 = vpop.xlane.xlu0 %313
        %315 = vadd.xlane.f32.xlu0 %v285
        %v316 = vpop.xlane.xlu0 %315
        %317 = vadd.xlane.f32.xlu0 %v286
        %v318 = vpop.xlane.xlu0 %317
        %v319 = vrcp.pop 128.0
        %v320 = vmul.f32 128.0, %v319
        %v321 = vsub.f32 1.0, %v320
        %v322 = vmul.f32 %v319, %v321
        %v323 = vadd.f32 %v319, %v322
        %vm324 = vweird.f32 %v319
        %v325 = vsel %vm324, %v319, %v323
        %v326 = vmul.f32 %v288, %v325
        %v327 = vmul.f32 %v290, %v325
        %v328 = vmul.f32 %v292, %v325
        %v329 = vmul.f32 %v294, %v325
        %v330 = vmul.f32 %v296, %v325
        %v331 = vmul.f32 %v298, %v325
        %v332 = vmul.f32 %v300, %v325
        %v333 = vmul.f32 %v302, %v325
        %v334 = vmul.f32 %v304, %v325
        %v335 = vmul.f32 %v306, %v325
        %v336 = vmul.f32 %v308, %v325
        %v337 = vmul.f32 %v310, %v325
        %v338 = vmul.f32 %v312, %v325
        %v339 = vmul.f32 %v314, %v325
        %v340 = vmul.f32 %v316, %v325
        %v341 = vmul.f32 %v318, %v325
        %v342 = vsub.f32 %v271, %v326
        %v343 = vsub.f32 %v272, %v327
        %v344 = vsub.f32 %v273, %v328
        %v345 = vsub.f32 %v274, %v329
        %v346 = vsub.f32 %v275, %v330
        %v347 = vsub.f32 %v276, %v331
        %v348 = vsub.f32 %v277, %v332
        %v349 = vsub.f32 %v278, %v333
        %v350 = vsub.f32 %v279, %v334
        %v351 = vsub.f32 %v280, %v335
        %v352 = vsub.f32 %v281, %v336
        %v353 = vsub.f32 %v282, %v337
        %v354 = vsub.f32 %v283, %v338
        %v355 = vsub.f32 %v284, %v339
        %v356 = vsub.f32 %v285, %v340
        %v357 = vsub.f32 %v286, %v341
        %v358 = vmul.f32 %v342, %v342
        %v359 = vmul.f32 %v343, %v343
        %v360 = vmul.f32 %v344, %v344
        %v361 = vmul.f32 %v345, %v345
        %v362 = vmul.f32 %v346, %v346
        %v363 = vmul.f32 %v347, %v347
        %v364 = vmul.f32 %v348, %v348
        %v365 = vmul.f32 %v349, %v349
        %v366 = vmul.f32 %v350, %v350
        %v367 = vmul.f32 %v351, %v351
        %v368 = vmul.f32 %v352, %v352
        %v369 = vmul.f32 %v353, %v353
        %v370 = vmul.f32 %v354, %v354
        %v371 = vmul.f32 %v355, %v355
        %v372 = vmul.f32 %v356, %v356
        %v373 = vmul.f32 %v357, %v357
        %374 = vadd.xlane.f32.xlu0 %v358
        %v375 = vpop.xlane.xlu0 %374
        %376 = vadd.xlane.f32.xlu0 %v359
        %v377 = vpop.xlane.xlu0 %376
        %378 = vadd.xlane.f32.xlu0 %v360
        %v379 = vpop.xlane.xlu0 %378
        %380 = vadd.xlane.f32.xlu0 %v361
        %v381 = vpop.xlane.xlu0 %380
        %382 = vadd.xlane.f32.xlu0 %v362
        %v383 = vpop.xlane.xlu0 %382
        %384 = vadd.xlane.f32.xlu0 %v363
        %v385 = vpop.xlane.xlu0 %384
        %386 = vadd.xlane.f32.xlu0 %v364
        %v387 = vpop.xlane.xlu0 %386
        %388 = vadd.xlane.f32.xlu0 %v365
        %v389 = vpop.xlane.xlu0 %388
        %390 = vadd.xlane.f32.xlu0 %v366
        %v391 = vpop.xlane.xlu0 %390
        %392 = vadd.xlane.f32.xlu0 %v367
        %v393 = vpop.xlane.xlu0 %392
        %394 = vadd.xlane.f32.xlu0 %v368
        %v395 = vpop.xlane.xlu0 %394
        %396 = vadd.xlane.f32.xlu0 %v369
        %v397 = vpop.xlane.xlu0 %396
        %398 = vadd.xlane.f32.xlu0 %v370
        %v399 = vpop.xlane.xlu0 %398
        %400 = vadd.xlane.f32.xlu0 %v371
        %v401 = vpop.xlane.xlu0 %400
        %402 = vadd.xlane.f32.xlu0 %v372
        %v403 = vpop.xlane.xlu0 %402
        %404 = vadd.xlane.f32.xlu0 %v373
        %v405 = vpop.xlane.xlu0 %404
        %v406 = vmul.f32 %v375, %v325
        %v407 = vmul.f32 %v377, %v325
        %v408 = vmul.f32 %v379, %v325
        %v409 = vmul.f32 %v381, %v325
        %v410 = vmul.f32 %v383, %v325
        %v411 = vmul.f32 %v385, %v325
        %v412 = vmul.f32 %v387, %v325
        %v413 = vmul.f32 %v389, %v325
        %v414 = vmul.f32 %v391, %v325
        %v415 = vmul.f32 %v393, %v325
        %v416 = vmul.f32 %v395, %v325
        %v417 = vmul.f32 %v397, %v325
        %v418 = vmul.f32 %v399, %v325
        %v419 = vmul.f32 %v401, %v325
        %v420 = vmul.f32 %v403, %v325
        %v421 = vmul.f32 %v405, %v325
        %v422 = vadd.f32 %v406, 1e-05
        %v423 = vadd.f32 %v407, 1e-05
        %v424 = vadd.f32 %v408, 1e-05
        %v425 = vadd.f32 %v409, 1e-05
        %v426 = vadd.f32 %v410, 1e-05
        %v427 = vadd.f32 %v411, 1e-05
        %v428 = vadd.f32 %v412, 1e-05
        %v429 = vadd.f32 %v413, 1e-05
        %v430 = vadd.f32 %v414, 1e-05
        %v431 = vadd.f32 %v415, 1e-05
        %v432 = vadd.f32 %v416, 1e-05
        %v433 = vadd.f32 %v417, 1e-05
        %v434 = vadd.f32 %v418, 1e-05
        %v435 = vadd.f32 %v419, 1e-05
        %v436 = vadd.f32 %v420, 1e-05
        %v437 = vadd.f32 %v421, 1e-05
        %v438 = vrsqrt.pop %v422
        %v439 = vmul.f32 %v438, %v422
        %v440 = vmul.f32 %v439, %v438
        %v441 = vmul.f32 0.5, %v440
        %v442 = vsub.f32 1.5, %v441
        %v443 = vmul.f32 %v438, %v442
        %vm444 = vweird.f32 %v422
        %vm445 = vweird.f32 %v438
        %vm446 = vmor %vm444, %vm445
        %v447 = vsel %vm446, %v438, %v443
        %v448 = vrsqrt.pop %v423
        %v449 = vmul.f32 %v448, %v423
        %v450 = vmul.f32 %v449, %v448
        %v451 = vmul.f32 0.5, %v450
        %v452 = vsub.f32 1.5, %v451
        %v453 = vmul.f32 %v448, %v452
        %vm454 = vweird.f32 %v423
        %vm455 = vweird.f32 %v448
        %vm456 = vmor %vm454, %vm455
        %v457 = vsel %vm456, %v448, %v453
        %v458 = vrsqrt.pop %v424
        %v459 = vmul.f32 %v458, %v424
        %v460 = vmul.f32 %v459, %v458
        %v461 = vmul.f32 0.5, %v460
        %v462 = vsub.f32 1.5, %v461
        %v463 = vmul.f32 %v458, %v462
        %vm464 = vweird.f32 %v424
        %vm465 = vweird.f32 %v458
        %vm466 = vmor %vm464, %vm465
        %v467 = vsel %vm466, %v458, %v463
        %v468 = vrsqrt.pop %v425
        %v469 = vmul.f32 %v468, %v425
        %v470 = vmul.f32 %v469, %v468
        %v471 = vmul.f32 0.5, %v470
        %v472 = vsub.f32 1.5, %v471
        %v473 = vmul.f32 %v468, %v472
        %vm474 = vweird.f32 %v425
        %vm475 = vweird.f32 %v468
        %vm476 = vmor %vm474, %vm475
        %v477 = vsel %vm476, %v468, %v473
        %v478 = vrsqrt.pop %v426
        %v479 = vmul.f32 %v478, %v426
        %v480 = vmul.f32 %v479, %v478
        %v481 = vmul.f32 0.5, %v480
        %v482 = vsub.f32 1.5, %v481
        %v483 = vmul.f32 %v478, %v482
        %vm484 = vweird.f32 %v426
        %vm485 = vweird.f32 %v478
        %vm486 = vmor %vm484, %vm485
        %v487 = vsel %vm486, %v478, %v483
        %v488 = vrsqrt.pop %v427
        %v489 = vmul.f32 %v488, %v427
        %v490 = vmul.f32 %v489, %v488
        %v491 = vmul.f32 0.5, %v490
        %v492 = vsub.f32 1.5, %v491
        %v493 = vmul.f32 %v488, %v492
        %vm494 = vweird.f32 %v427
        %vm495 = vweird.f32 %v488
        %vm496 = vmor %vm494, %vm495
        %v497 = vsel %vm496, %v488, %v493
        %v498 = vrsqrt.pop %v428
        %v499 = vmul.f32 %v498, %v428
        %v500 = vmul.f32 %v499, %v498
        %v501 = vmul.f32 0.5, %v500
        %v502 = vsub.f32 1.5, %v501
        %v503 = vmul.f32 %v498, %v502
        %vm504 = vweird.f32 %v428
        %vm505 = vweird.f32 %v498
        %vm506 = vmor %vm504, %vm505
        %v507 = vsel %vm506, %v498, %v503
        %v508 = vrsqrt.pop %v429
        %v509 = vmul.f32 %v508, %v429
        %v510 = vmul.f32 %v509, %v508
        %v511 = vmul.f32 0.5, %v510
        %v512 = vsub.f32 1.5, %v511
        %v513 = vmul.f32 %v508, %v512
        %vm514 = vweird.f32 %v429
        %vm515 = vweird.f32 %v508
        %vm516 = vmor %vm514, %vm515
        %v517 = vsel %vm516, %v508, %v513
        %v518 = vrsqrt.pop %v430
        %v519 = vmul.f32 %v518, %v430
        %v520 = vmul.f32 %v519, %v518
        %v521 = vmul.f32 0.5, %v520
        %v522 = vsub.f32 1.5, %v521
        %v523 = vmul.f32 %v518, %v522
        %vm524 = vweird.f32 %v430
        %vm525 = vweird.f32 %v518
        %vm526 = vmor %vm524, %vm525
        %v527 = vsel %vm526, %v518, %v523
        %v528 = vrsqrt.pop %v431
        %v529 = vmul.f32 %v528, %v431
        %v530 = vmul.f32 %v529, %v528
        %v531 = vmul.f32 0.5, %v530
        %v532 = vsub.f32 1.5, %v531
        %v533 = vmul.f32 %v528, %v532
        %vm534 = vweird.f32 %v431
        %vm535 = vweird.f32 %v528
        %vm536 = vmor %vm534, %vm535
        %v537 = vsel %vm536, %v528, %v533
        %v538 = vrsqrt.pop %v432
        %v539 = vmul.f32 %v538, %v432
        %v540 = vmul.f32 %v539, %v538
        %v541 = vmul.f32 0.5, %v540
        %v542 = vsub.f32 1.5, %v541
        %v543 = vmul.f32 %v538, %v542
        %vm544 = vweird.f32 %v432
        %vm545 = vweird.f32 %v538
        %vm546 = vmor %vm544, %vm545
        %v547 = vsel %vm546, %v538, %v543
        %v548 = vrsqrt.pop %v433
        %v549 = vmul.f32 %v548, %v433
        %v550 = vmul.f32 %v549, %v548
        %v551 = vmul.f32 0.5, %v550
        %v552 = vsub.f32 1.5, %v551
        %v553 = vmul.f32 %v548, %v552
        %vm554 = vweird.f32 %v433
        %vm555 = vweird.f32 %v548
        %vm556 = vmor %vm554, %vm555
        %v557 = vsel %vm556, %v548, %v553
        %v558 = vrsqrt.pop %v434
        %v559 = vmul.f32 %v558, %v434
        %v560 = vmul.f32 %v559, %v558
        %v561 = vmul.f32 0.5, %v560
        %v562 = vsub.f32 1.5, %v561
        %v563 = vmul.f32 %v558, %v562
        %vm564 = vweird.f32 %v434
        %vm565 = vweird.f32 %v558
        %vm566 = vmor %vm564, %vm565
        %v567 = vsel %vm566, %v558, %v563
        %v568 = vrsqrt.pop %v435
        %v569 = vmul.f32 %v568, %v435
        %v570 = vmul.f32 %v569, %v568
        %v571 = vmul.f32 0.5, %v570
        %v572 = vsub.f32 1.5, %v571
        %v573 = vmul.f32 %v568, %v572
        %vm574 = vweird.f32 %v435
        %vm575 = vweird.f32 %v568
        %vm576 = vmor %vm574, %vm575
        %v577 = vsel %vm576, %v568, %v573
        %v578 = vrsqrt.pop %v436
        %v579 = vmul.f32 %v578, %v436
        %v580 = vmul.f32 %v579, %v578
        %v581 = vmul.f32 0.5, %v580
        %v582 = vsub.f32 1.5, %v581
        %v583 = vmul.f32 %v578, %v582
        %vm584 = vweird.f32 %v436
        %vm585 = vweird.f32 %v578
        %vm586 = vmor %vm584, %vm585
        %v587 = vsel %vm586, %v578, %v583
        %v588 = vrsqrt.pop %v437
        %v589 = vmul.f32 %v588, %v437
        %v590 = vmul.f32 %v589, %v588
        %v591 = vmul.f32 0.5, %v590
        %v592 = vsub.f32 1.5, %v591
        %v593 = vmul.f32 %v588, %v592
        %vm594 = vweird.f32 %v437
        %vm595 = vweird.f32 %v588
        %vm596 = vmor %vm594, %vm595
        %v597 = vsel %vm596, %v588, %v593
        %v598 = vmul.f32 %v342, %v447
        %v599 = vmul.f32 %v343, %v457
        %v600 = vmul.f32 %v344, %v467
        %v601 = vmul.f32 %v345, %v477
        %v602 = vmul.f32 %v346, %v487
        %v603 = vmul.f32 %v347, %v497
        %v604 = vmul.f32 %v348, %v507
        %v605 = vmul.f32 %v349, %v517
        %v606 = vmul.f32 %v350, %v527
        %v607 = vmul.f32 %v351, %v537
        %v608 = vmul.f32 %v352, %v547
        %v609 = vmul.f32 %v353, %v557
        %v610 = vmul.f32 %v354, %v567
        %v611 = vmul.f32 %v355, %v577
        %v612 = vmul.f32 %v356, %v587
        %v613 = vmul.f32 %v357, %v597
        %v614 = vld [vmem:[#allocation2] sm:$0x1]
        %v616 = vperm.slane %v614, 0
        %v618 = vmul.f32 %v598, %v616
        %v619 = vmul.f32 %v599, %v616
        %v620 = vmul.f32 %v600, %v616
        %v621 = vmul.f32 %v601, %v616
        %v622 = vmul.f32 %v602, %v616
        %v623 = vmul.f32 %v603, %v616
        %v624 = vmul.f32 %v604, %v616
        %v625 = vmul.f32 %v605, %v616
        %v626 = vmul.f32 %v606, %v616
        %v627 = vmul.f32 %v607, %v616
        %v628 = vmul.f32 %v608, %v616
        %v629 = vmul.f32 %v609, %v616
        %v630 = vmul.f32 %v610, %v616
        %v631 = vmul.f32 %v611, %v616
        %v632 = vmul.f32 %v612, %v616
        %v633 = vmul.f32 %v613, %v616
        %v634 = vld [vmem:[#allocation4] sm:$0x1]
        %v636 = vperm.slane %v634, 0
        %v638 = vadd.f32 %v618, %v636
        %v639 = vadd.f32 %v619, %v636
        %v640 = vadd.f32 %v620, %v636
        %v641 = vadd.f32 %v621, %v636
        %v642 = vadd.f32 %v622, %v636
        %v643 = vadd.f32 %v623, %v636
        %v644 = vadd.f32 %v624, %v636
        %v645 = vadd.f32 %v625, %v636
        %v646 = vadd.f32 %v626, %v636
        %v647 = vadd.f32 %v627, %v636
        %v648 = vadd.f32 %v628, %v636
        %v649 = vadd.f32 %v629, %v636
        %v650 = vadd.f32 %v630, %v636
        %v651 = vadd.f32 %v631, %v636
        %v652 = vadd.f32 %v632, %v636
        %v653 = vadd.f32 %v633, %v636
        %v654 = vld [vmem:[#allocation6] sm:$0xff]
        %v655 = vld [vmem:[#allocation6 + $0x8] sm:$0xff]
        %v656 = vld [vmem:[#allocation6 + $0x10] sm:$0xff]
        %v657 = vld [vmem:[#allocation6 + $0x18] sm:$0xff]
        %v658 = vld [vmem:[#allocation6 + $0x20] sm:$0xff]
        %v659 = vld [vmem:[#allocation6 + $0x28] sm:$0xff]
        %v660 = vld [vmem:[#allocation6 + $0x30] sm:$0xff]
        %v661 = vld [vmem:[#allocation6 + $0x38] sm:$0xff]
        %v662 = vld [vmem:[#allocation6 + $0x40] sm:$0xff]
        %v663 = vld [vmem:[#allocation6 + $0x48] sm:$0xff]
        %v664 = vld [vmem:[#allocation6 + $0x50] sm:$0xff]
        %v665 = vld [vmem:[#allocation6 + $0x58] sm:$0xff]
        %v666 = vld [vmem:[#allocation6 + $0x60] sm:$0xff]
        %v667 = vld [vmem:[#allocation6 + $0x68] sm:$0xff]
        %v668 = vld [vmem:[#allocation6 + $0x70] sm:$0xff]
        %v669 = vld [vmem:[#allocation6 + $0x78] sm:$0xff]
        %v670 = vld [vmem:[#allocation6 + $0x80] sm:$0xff]
        %v671 = vld [vmem:[#allocation6 + $0x88] sm:$0xff]
        %v672 = vld [vmem:[#allocation6 + $0x90] sm:$0xff]
        %v673 = vld [vmem:[#allocation6 + $0x98] sm:$0xff]
        %v674 = vld [vmem:[#allocation6 + $0xa0] sm:$0xff]
        %v675 = vld [vmem:[#allocation6 + $0xa8] sm:$0xff]
        %v676 = vld [vmem:[#allocation6 + $0xb0] sm:$0xff]
        %v677 = vld [vmem:[#allocation6 + $0xb8] sm:$0xff]
        %v678 = vld [vmem:[#allocation6 + $0xc0] sm:$0xff]
        %v679 = vld [vmem:[#allocation6 + $0xc8] sm:$0xff]
        %v680 = vld [vmem:[#allocation6 + $0xd0] sm:$0xff]
        %v681 = vld [vmem:[#allocation6 + $0xd8] sm:$0xff]
        %v682 = vld [vmem:[#allocation6 + $0xe0] sm:$0xff]
        %v683 = vld [vmem:[#allocation6 + $0xe8] sm:$0xff]
        %v684 = vld [vmem:[#allocation6 + $0xf0] sm:$0xff]
        %v685 = vld [vmem:[#allocation6 + $0xf8] sm:$0xff]
        %v686 = vld [vmem:[#allocation6 + $0x100] sm:$0xff]
        %v687 = vld [vmem:[#allocation6 + $0x108] sm:$0xff]
        %v688 = vld [vmem:[#allocation6 + $0x110] sm:$0xff]
        %v689 = vld [vmem:[#allocation6 + $0x118] sm:$0xff]
        %v690 = vld [vmem:[#allocation6 + $0x120] sm:$0xff]
        %v691 = vld [vmem:[#allocation6 + $0x128] sm:$0xff]
        %v692 = vld [vmem:[#allocation6 + $0x130] sm:$0xff]
        %v693 = vld [vmem:[#allocation6 + $0x138] sm:$0xff]
        %v694 = vld [vmem:[#allocation6 + $0x140] sm:$0xff]
        %v695 = vld [vmem:[#allocation6 + $0x148] sm:$0xff]
        %v696 = vld [vmem:[#allocation6 + $0x150] sm:$0xff]
        %v697 = vld [vmem:[#allocation6 + $0x158] sm:$0xff]
        %v698 = vld [vmem:[#allocation6 + $0x160] sm:$0xff]
        %v699 = vld [vmem:[#allocation6 + $0x168] sm:$0xff]
        %v700 = vld [vmem:[#allocation6 + $0x170] sm:$0xff]
        %v701 = vld [vmem:[#allocation6 + $0x178] sm:$0xff]
        %v702 = vld [vmem:[#allocation6 + $0x180] sm:$0xff]
        %v703 = vld [vmem:[#allocation6 + $0x188] sm:$0xff]
        %v704 = vld [vmem:[#allocation6 + $0x190] sm:$0xff]
        %v705 = vld [vmem:[#allocation6 + $0x198] sm:$0xff]
        %v706 = vld [vmem:[#allocation6 + $0x1a0] sm:$0xff]
        %v707 = vld [vmem:[#allocation6 + $0x1a8] sm:$0xff]
        %v708 = vld [vmem:[#allocation6 + $0x1b0] sm:$0xff]
        %v709 = vld [vmem:[#allocation6 + $0x1b8] sm:$0xff]
        %v710 = vld [vmem:[#allocation6 + $0x1c0] sm:$0xff]
        %v711 = vld [vmem:[#allocation6 + $0x1c8] sm:$0xff]
        %v712 = vld [vmem:[#allocation6 + $0x1d0] sm:$0xff]
        %v713 = vld [vmem:[#allocation6 + $0x1d8] sm:$0xff]
        %v714 = vld [vmem:[#allocation6 + $0x1e0] sm:$0xff]
        %v715 = vld [vmem:[#allocation6 + $0x1e8] sm:$0xff]
        %v716 = vld [vmem:[#allocation6 + $0x1f0] sm:$0xff]
        %v717 = vld [vmem:[#allocation6 + $0x1f8] sm:$0xff]
        %v718 = vld [vmem:[#allocation6 + $0x200] sm:$0xff]
        %v719 = vld [vmem:[#allocation6 + $0x208] sm:$0xff]
        %v720 = vld [vmem:[#allocation6 + $0x210] sm:$0xff]
        %v721 = vld [vmem:[#allocation6 + $0x218] sm:$0xff]
        %v722 = vld [vmem:[#allocation6 + $0x220] sm:$0xff]
        %v723 = vld [vmem:[#allocation6 + $0x228] sm:$0xff]
        %v724 = vld [vmem:[#allocation6 + $0x230] sm:$0xff]
        %v725 = vld [vmem:[#allocation6 + $0x238] sm:$0xff]
        %v726 = vld [vmem:[#allocation6 + $0x240] sm:$0xff]
        %v727 = vld [vmem:[#allocation6 + $0x248] sm:$0xff]
        %v728 = vld [vmem:[#allocation6 + $0x250] sm:$0xff]
        %v729 = vld [vmem:[#allocation6 + $0x258] sm:$0xff]
        %v730 = vld [vmem:[#allocation6 + $0x260] sm:$0xff]
        %v731 = vld [vmem:[#allocation6 + $0x268] sm:$0xff]
        %v732 = vld [vmem:[#allocation6 + $0x270] sm:$0xff]
        %v733 = vld [vmem:[#allocation6 + $0x278] sm:$0xff]
        %v734 = vld [vmem:[#allocation6 + $0x280] sm:$0xff]
        %v735 = vld [vmem:[#allocation6 + $0x288] sm:$0xff]
        %v736 = vld [vmem:[#allocation6 + $0x290] sm:$0xff]
        %v737 = vld [vmem:[#allocation6 + $0x298] sm:$0xff]
        %v738 = vld [vmem:[#allocation6 + $0x2a0] sm:$0xff]
        %v739 = vld [vmem:[#allocation6 + $0x2a8] sm:$0xff]
        %v740 = vld [vmem:[#allocation6 + $0x2b0] sm:$0xff]
        %v741 = vld [vmem:[#allocation6 + $0x2b8] sm:$0xff]
        %v742 = vld [vmem:[#allocation6 + $0x2c0] sm:$0xff]
        %v743 = vld [vmem:[#allocation6 + $0x2c8] sm:$0xff]
        %v744 = vld [vmem:[#allocation6 + $0x2d0] sm:$0xff]
        %v745 = vld [vmem:[#allocation6 + $0x2d8] sm:$0xff]
        %v746 = vld [vmem:[#allocation6 + $0x2e0] sm:$0xff]
        %v747 = vld [vmem:[#allocation6 + $0x2e8] sm:$0xff]
        %v748 = vld [vmem:[#allocation6 + $0x2f0] sm:$0xff]
        %v749 = vld [vmem:[#allocation6 + $0x2f8] sm:$0xff]
        %750 = vmatpush.msra.mxu0 %v744
        %751 = vmatpush.msra.mxu0 %v738
        %752 = vmatpush.msra.mxu0 %v732
        %753 = vmatpush.msra.mxu0 %v726
        %754 = vmatpush.msra.mxu0 %v720
        %755 = vmatpush.msra.mxu0 %v714
        %756 = vmatpush.msra.mxu0 %v708
        %757 = vmatpush.msra.mxu0 %v702
        %758 = vmatpush.msra.mxu0 %v696
        %759 = vmatpush.msra.mxu0 %v690
        %760 = vmatpush.msra.mxu0 %v684
        %761 = vmatpush.msra.mxu0 %v678
        %762 = vmatpush.msra.mxu0 %v672
        %763 = vmatpush.msra.mxu0 %v666
        %764 = vmatpush.msra.mxu0 %v660
        %765 = vmatpush.msra.mxu0 %v654
        %766 = vmatmul.f32.gmra.mxu0 %v638
        %v767 = vpop.f32.mrf.mxu0
        %v768 = vadd.f32 0.0, %v767
        %769 = vmatmul.f32.gmra.mxu0 %v639
        %v770 = vpop.f32.mrf.mxu0
        %v771 = vadd.f32 0.0, %v770
        %772 = vmatmul.f32.gmra.mxu0 %v640
        %v773 = vpop.f32.mrf.mxu0
        %v774 = vadd.f32 0.0, %v773
        %775 = vmatmul.f32.gmra.mxu0 %v641
        %v776 = vpop.f32.mrf.mxu0
        %v777 = vadd.f32 0.0, %v776
        %778 = vmatmul.f32.gmra.mxu0 %v642
        %v779 = vpop.f32.mrf.mxu0
        %v780 = vadd.f32 0.0, %v779
        %781 = vmatmul.f32.gmra.mxu0 %v643
        %v782 = vpop.f32.mrf.mxu0
        %v783 = vadd.f32 0.0, %v782
        %784 = vmatmul.f32.gmra.mxu0 %v644
        %v785 = vpop.f32.mrf.mxu0
        %v786 = vadd.f32 0.0, %v785
        %787 = vmatmul.f32.gmra.mxu0 %v645
        %v788 = vpop.f32.mrf.mxu0
        %v789 = vadd.f32 0.0, %v788
        %790 = vmatmul.f32.gmra.mxu0 %v646
        %v791 = vpop.f32.mrf.mxu0
        %v792 = vadd.f32 0.0, %v791
        %793 = vmatmul.f32.gmra.mxu0 %v647
        %v794 = vpop.f32.mrf.mxu0
        %v795 = vadd.f32 0.0, %v794
        %796 = vmatmul.f32.gmra.mxu0 %v648
        %v797 = vpop.f32.mrf.mxu0
        %v798 = vadd.f32 0.0, %v797
        %799 = vmatmul.f32.gmra.mxu0 %v649
        %v800 = vpop.f32.mrf.mxu0
        %v801 = vadd.f32 0.0, %v800
        %802 = vmatmul.f32.gmra.mxu0 %v650
        %v803 = vpop.f32.mrf.mxu0
        %v804 = vadd.f32 0.0, %v803
        %805 = vmatmul.f32.gmra.mxu0 %v651
        %v806 = vpop.f32.mrf.mxu0
        %v807 = vadd.f32 0.0, %v806
        %808 = vmatmul.f32.gmra.mxu0 %v652
        %v809 = vpop.f32.mrf.mxu0
        %v810 = vadd.f32 0.0, %v809
        %811 = vmatmul.f32.gmra.mxu0 %v653
        %v812 = vpop.f32.mrf.mxu0
        %v813 = vadd.f32 0.0, %v812
        %814 = vdwg.mxu0
        %815 = vmatpush.msra.mxu0 %v745
        %816 = vmatpush.msra.mxu0 %v739
        %817 = vmatpush.msra.mxu0 %v733
        %818 = vmatpush.msra.mxu0 %v727
        %819 = vmatpush.msra.mxu0 %v721
        %820 = vmatpush.msra.mxu0 %v715
        %821 = vmatpush.msra.mxu0 %v709
        %822 = vmatpush.msra.mxu0 %v703
        %823 = vmatpush.msra.mxu0 %v697
        %824 = vmatpush.msra.mxu0 %v691
        %825 = vmatpush.msra.mxu0 %v685
        %826 = vmatpush.msra.mxu0 %v679
        %827 = vmatpush.msra.mxu0 %v673
        %828 = vmatpush.msra.mxu0 %v667
        %829 = vmatpush.msra.mxu0 %v661
        %830 = vmatpush.msra.mxu0 %v655
        %831 = vmatmul.f32.gmra.mxu0 %v638
        %v832 = vpop.f32.mrf.mxu0
        %v833 = vadd.f32 0.0, %v832
        %834 = vmatmul.f32.gmra.mxu0 %v639
        %v835 = vpop.f32.mrf.mxu0
        %v836 = vadd.f32 0.0, %v835
        %837 = vmatmul.f32.gmra.mxu0 %v640
        %v838 = vpop.f32.mrf.mxu0
        %v839 = vadd.f32 0.0, %v838
        %840 = vmatmul.f32.gmra.mxu0 %v641
        %v841 = vpop.f32.mrf.mxu0
        %v842 = vadd.f32 0.0, %v841
        %843 = vmatmul.f32.gmra.mxu0 %v642
        %v844 = vpop.f32.mrf.mxu0
        %v845 = vadd.f32 0.0, %v844
        %846 = vmatmul.f32.gmra.mxu0 %v643
        %v847 = vpop.f32.mrf.mxu0
        %v848 = vadd.f32 0.0, %v847
        %849 = vmatmul.f32.gmra.mxu0 %v644
        %v850 = vpop.f32.mrf.mxu0
        %v851 = vadd.f32 0.0, %v850
        %852 = vmatmul.f32.gmra.mxu0 %v645
        %v853 = vpop.f32.mrf.mxu0
        %v854 = vadd.f32 0.0, %v853
        %855 = vmatmul.f32.gmra.mxu0 %v646
        %v856 = vpop.f32.mrf.mxu0
        %v857 = vadd.f32 0.0, %v856
        %858 = vmatmul.f32.gmra.mxu0 %v647
        %v859 = vpop.f32.mrf.mxu0
        %v860 = vadd.f32 0.0, %v859
        %861 = vmatmul.f32.gmra.mxu0 %v648
        %v862 = vpop.f32.mrf.mxu0
        %v863 = vadd.f32 0.0, %v862
        %864 = vmatmul.f32.gmra.mxu0 %v649
        %v865 = vpop.f32.mrf.mxu0
        %v866 = vadd.f32 0.0, %v865
        %867 = vmatmul.f32.gmra.mxu0 %v650
        %v868 = vpop.f32.mrf.mxu0
        %v869 = vadd.f32 0.0, %v868
        %870 = vmatmul.f32.gmra.mxu0 %v651
        %v871 = vpop.f32.mrf.mxu0
        %v872 = vadd.f32 0.0, %v871
        %873 = vmatmul.f32.gmra.mxu0 %v652
        %v874 = vpop.f32.mrf.mxu0
        %v875 = vadd.f32 0.0, %v874
        %876 = vmatmul.f32.gmra.mxu0 %v653
        %v877 = vpop.f32.mrf.mxu0
        %v878 = vadd.f32 0.0, %v877
        %879 = vdwg.mxu0
        %880 = vmatpush.msra.mxu0 %v746
        %881 = vmatpush.msra.mxu0 %v740
        %882 = vmatpush.msra.mxu0 %v734
        %883 = vmatpush.msra.mxu0 %v728
        %884 = vmatpush.msra.mxu0 %v722
        %885 = vmatpush.msra.mxu0 %v716
        %886 = vmatpush.msra.mxu0 %v710
        %887 = vmatpush.msra.mxu0 %v704
        %888 = vmatpush.msra.mxu0 %v698
        %889 = vmatpush.msra.mxu0 %v692
        %890 = vmatpush.msra.mxu0 %v686
        %891 = vmatpush.msra.mxu0 %v680
        %892 = vmatpush.msra.mxu0 %v674
        %893 = vmatpush.msra.mxu0 %v668
        %894 = vmatpush.msra.mxu0 %v662
        %895 = vmatpush.msra.mxu0 %v656
        %896 = vmatmul.f32.gmra.mxu0 %v638
        %v897 = vpop.f32.mrf.mxu0
        %v898 = vadd.f32 0.0, %v897
        %899 = vmatmul.f32.gmra.mxu0 %v639
        %v900 = vpop.f32.mrf.mxu0
        %v901 = vadd.f32 0.0, %v900
        %902 = vmatmul.f32.gmra.mxu0 %v640
        %v903 = vpop.f32.mrf.mxu0
        %v904 = vadd.f32 0.0, %v903
        %905 = vmatmul.f32.gmra.mxu0 %v641
        %v906 = vpop.f32.mrf.mxu0
        %v907 = vadd.f32 0.0, %v906
        %908 = vmatmul.f32.gmra.mxu0 %v642
        %v909 = vpop.f32.mrf.mxu0
        %v910 = vadd.f32 0.0, %v909
        %911 = vmatmul.f32.gmra.mxu0 %v643
        %v912 = vpop.f32.mrf.mxu0
        %v913 = vadd.f32 0.0, %v912
        %914 = vmatmul.f32.gmra.mxu0 %v644
        %v915 = vpop.f32.mrf.mxu0
        %v916 = vadd.f32 0.0, %v915
        %917 = vmatmul.f32.gmra.mxu0 %v645
        %v918 = vpop.f32.mrf.mxu0
        %v919 = vadd.f32 0.0, %v918
        %920 = vmatmul.f32.gmra.mxu0 %v646
        %v921 = vpop.f32.mrf.mxu0
        %v922 = vadd.f32 0.0, %v921
        %923 = vmatmul.f32.gmra.mxu0 %v647
        %v924 = vpop.f32.mrf.mxu0
        %v925 = vadd.f32 0.0, %v924
        %926 = vmatmul.f32.gmra.mxu0 %v648
        %v927 = vpop.f32.mrf.mxu0
        %v928 = vadd.f32 0.0, %v927
        %929 = vmatmul.f32.gmra.mxu0 %v649
        %v930 = vpop.f32.mrf.mxu0
        %v931 = vadd.f32 0.0, %v930
        %932 = vmatmul.f32.gmra.mxu0 %v650
        %v933 = vpop.f32.mrf.mxu0
        %v934 = vadd.f32 0.0, %v933
        %935 = vmatmul.f32.gmra.mxu0 %v651
        %v936 = vpop.f32.mrf.mxu0
        %v937 = vadd.f32 0.0, %v936
        %938 = vmatmul.f32.gmra.mxu0 %v652
        %v939 = vpop.f32.mrf.mxu0
        %v940 = vadd.f32 0.0, %v939
        %941 = vmatmul.f32.gmra.mxu0 %v653
        %v942 = vpop.f32.mrf.mxu0
        %v943 = vadd.f32 0.0, %v942
        %944 = vdwg.mxu0
        %945 = vmatpush.msra.mxu0 %v747
        %946 = vmatpush.msra.mxu0 %v741
        %947 = vmatpush.msra.mxu0 %v735
        %948 = vmatpush.msra.mxu0 %v729
        %949 = vmatpush.msra.mxu0 %v723
        %950 = vmatpush.msra.mxu0 %v717
        %951 = vmatpush.msra.mxu0 %v711
        %952 = vmatpush.msra.mxu0 %v705
        %953 = vmatpush.msra.mxu0 %v699
        %954 = vmatpush.msra.mxu0 %v693
        %955 = vmatpush.msra.mxu0 %v687
        %956 = vmatpush.msra.mxu0 %v681
        %957 = vmatpush.msra.mxu0 %v675
        %958 = vmatpush.msra.mxu0 %v669
        %959 = vmatpush.msra.mxu0 %v663
        %960 = vmatpush.msra.mxu0 %v657
        %961 = vmatmul.f32.gmra.mxu0 %v638
        %v962 = vpop.f32.mrf.mxu0
        %v963 = vadd.f32 0.0, %v962
        %964 = vmatmul.f32.gmra.mxu0 %v639
        %v965 = vpop.f32.mrf.mxu0
        %v966 = vadd.f32 0.0, %v965
        %967 = vmatmul.f32.gmra.mxu0 %v640
        %v968 = vpop.f32.mrf.mxu0
        %v969 = vadd.f32 0.0, %v968
        %970 = vmatmul.f32.gmra.mxu0 %v641
        %v971 = vpop.f32.mrf.mxu0
        %v972 = vadd.f32 0.0, %v971
        %973 = vmatmul.f32.gmra.mxu0 %v642
        %v974 = vpop.f32.mrf.mxu0
        %v975 = vadd.f32 0.0, %v974
        %976 = vmatmul.f32.gmra.mxu0 %v643
        %v977 = vpop.f32.mrf.mxu0
        %v978 = vadd.f32 0.0, %v977
        %979 = vmatmul.f32.gmra.mxu0 %v644
        %v980 = vpop.f32.mrf.mxu0
        %v981 = vadd.f32 0.0, %v980
        %982 = vmatmul.f32.gmra.mxu0 %v645
        %v983 = vpop.f32.mrf.mxu0
        %v984 = vadd.f32 0.0, %v983
        %985 = vmatmul.f32.gmra.mxu0 %v646
        %v986 = vpop.f32.mrf.mxu0
        %v987 = vadd.f32 0.0, %v986
        %988 = vmatmul.f32.gmra.mxu0 %v647
        %v989 = vpop.f32.mrf.mxu0
        %v990 = vadd.f32 0.0, %v989
        %991 = vmatmul.f32.gmra.mxu0 %v648
        %v992 = vpop.f32.mrf.mxu0
        %v993 = vadd.f32 0.0, %v992
        %994 = vmatmul.f32.gmra.mxu0 %v649
        %v995 = vpop.f32.mrf.mxu0
        %v996 = vadd.f32 0.0, %v995
        %997 = vmatmul.f32.gmra.mxu0 %v650
        %v998 = vpop.f32.mrf.mxu0
        %v999 = vadd.f32 0.0, %v998
        %1000 = vmatmul.f32.gmra.mxu0 %v651
        %v1001 = vpop.f32.mrf.mxu0
        %v1002 = vadd.f32 0.0, %v1001
        %1003 = vmatmul.f32.gmra.mxu0 %v652
        %v1004 = vpop.f32.mrf.mxu0
        %v1005 = vadd.f32 0.0, %v1004
        %1006 = vmatmul.f32.gmra.mxu0 %v653
        %v1007 = vpop.f32.mrf.mxu0
        %v1008 = vadd.f32 0.0, %v1007
        %1009 = vdwg.mxu0
        %1010 = vmatpush.msra.mxu0 %v748
        %1011 = vmatpush.msra.mxu0 %v742
        %1012 = vmatpush.msra.mxu0 %v736
        %1013 = vmatpush.msra.mxu0 %v730
        %1014 = vmatpush.msra.mxu0 %v724
        %1015 = vmatpush.msra.mxu0 %v718
        %1016 = vmatpush.msra.mxu0 %v712
        %1017 = vmatpush.msra.mxu0 %v706
        %1018 = vmatpush.msra.mxu0 %v700
        %1019 = vmatpush.msra.mxu0 %v694
        %1020 = vmatpush.msra.mxu0 %v688
        %1021 = vmatpush.msra.mxu0 %v682
        %1022 = vmatpush.msra.mxu0 %v676
        %1023 = vmatpush.msra.mxu0 %v670
        %1024 = vmatpush.msra.mxu0 %v664
        %1025 = vmatpush.msra.mxu0 %v658
        %1026 = vmatmul.f32.gmra.mxu0 %v638
        %v1027 = vpop.f32.mrf.mxu0
        %v1028 = vadd.f32 0.0, %v1027
        %1029 = vmatmul.f32.gmra.mxu0 %v639
        %v1030 = vpop.f32.mrf.mxu0
        %v1031 = vadd.f32 0.0, %v1030
        %1032 = vmatmul.f32.gmra.mxu0 %v640
        %v1033 = vpop.f32.mrf.mxu0
        %v1034 = vadd.f32 0.0, %v1033
        %1035 = vmatmul.f32.gmra.mxu0 %v641
        %v1036 = vpop.f32.mrf.mxu0
        %v1037 = vadd.f32 0.0, %v1036
        %1038 = vmatmul.f32.gmra.mxu0 %v642
        %v1039 = vpop.f32.mrf.mxu0
        %v1040 = vadd.f32 0.0, %v1039
        %1041 = vmatmul.f32.gmra.mxu0 %v643
        %v1042 = vpop.f32.mrf.mxu0
        %v1043 = vadd.f32 0.0, %v1042
        %1044 = vmatmul.f32.gmra.mxu0 %v644
        %v1045 = vpop.f32.mrf.mxu0
        %v1046 = vadd.f32 0.0, %v1045
        %1047 = vmatmul.f32.gmra.mxu0 %v645
        %v1048 = vpop.f32.mrf.mxu0
        %v1049 = vadd.f32 0.0, %v1048
        %1050 = vmatmul.f32.gmra.mxu0 %v646
        %v1051 = vpop.f32.mrf.mxu0
        %v1052 = vadd.f32 0.0, %v1051
        %1053 = vmatmul.f32.gmra.mxu0 %v647
        %v1054 = vpop.f32.mrf.mxu0
        %v1055 = vadd.f32 0.0, %v1054
        %1056 = vmatmul.f32.gmra.mxu0 %v648
        %v1057 = vpop.f32.mrf.mxu0
        %v1058 = vadd.f32 0.0, %v1057
        %1059 = vmatmul.f32.gmra.mxu0 %v649
        %v1060 = vpop.f32.mrf.mxu0
        %v1061 = vadd.f32 0.0, %v1060
        %1062 = vmatmul.f32.gmra.mxu0 %v650
        %v1063 = vpop.f32.mrf.mxu0
        %v1064 = vadd.f32 0.0, %v1063
        %1065 = vmatmul.f32.gmra.mxu0 %v651
        %v1066 = vpop.f32.mrf.mxu0
        %v1067 = vadd.f32 0.0, %v1066
        %1068 = vmatmul.f32.gmra.mxu0 %v652
        %v1069 = vpop.f32.mrf.mxu0
        %v1070 = vadd.f32 0.0, %v1069
        %1071 = vmatmul.f32.gmra.mxu0 %v653
        %v1072 = vpop.f32.mrf.mxu0
        %v1073 = vadd.f32 0.0, %v1072
        %1074 = vdwg.mxu0
        %1075 = vmatpush.msra.mxu0 %v749
        %1076 = vmatpush.msra.mxu0 %v743
        %1077 = vmatpush.msra.mxu0 %v737
        %1078 = vmatpush.msra.mxu0 %v731
        %1079 = vmatpush.msra.mxu0 %v725
        %1080 = vmatpush.msra.mxu0 %v719
        %1081 = vmatpush.msra.mxu0 %v713
        %1082 = vmatpush.msra.mxu0 %v707
        %1083 = vmatpush.msra.mxu0 %v701
        %1084 = vmatpush.msra.mxu0 %v695
        %1085 = vmatpush.msra.mxu0 %v689
        %1086 = vmatpush.msra.mxu0 %v683
        %1087 = vmatpush.msra.mxu0 %v677
        %1088 = vmatpush.msra.mxu0 %v671
        %1089 = vmatpush.msra.mxu0 %v665
        %1090 = vmatpush.msra.mxu0 %v659
        %1091 = vmatmul.f32.gmra.mxu0 %v638
        %v1092 = vpop.f32.mrf.mxu0
        %v1093 = vadd.f32 0.0, %v1092
        %1094 = vmatmul.f32.gmra.mxu0 %v639
        %v1095 = vpop.f32.mrf.mxu0
        %v1096 = vadd.f32 0.0, %v1095
        %1097 = vmatmul.f32.gmra.mxu0 %v640
        %v1098 = vpop.f32.mrf.mxu0
        %v1099 = vadd.f32 0.0, %v1098
        %1100 = vmatmul.f32.gmra.mxu0 %v641
        %v1101 = vpop.f32.mrf.mxu0
        %v1102 = vadd.f32 0.0, %v1101
        %1103 = vmatmul.f32.gmra.mxu0 %v642
        %v1104 = vpop.f32.mrf.mxu0
        %v1105 = vadd.f32 0.0, %v1104
        %1106 = vmatmul.f32.gmra.mxu0 %v643
        %v1107 = vpop.f32.mrf.mxu0
        %v1108 = vadd.f32 0.0, %v1107
        %1109 = vmatmul.f32.gmra.mxu0 %v644
        %v1110 = vpop.f32.mrf.mxu0
        %v1111 = vadd.f32 0.0, %v1110
        %1112 = vmatmul.f32.gmra.mxu0 %v645
        %v1113 = vpop.f32.mrf.mxu0
        %v1114 = vadd.f32 0.0, %v1113
        %1115 = vmatmul.f32.gmra.mxu0 %v646
        %v1116 = vpop.f32.mrf.mxu0
        %v1117 = vadd.f32 0.0, %v1116
        %1118 = vmatmul.f32.gmra.mxu0 %v647
        %v1119 = vpop.f32.mrf.mxu0
        %v1120 = vadd.f32 0.0, %v1119
        %1121 = vmatmul.f32.gmra.mxu0 %v648
        %v1122 = vpop.f32.mrf.mxu0
        %v1123 = vadd.f32 0.0, %v1122
        %1124 = vmatmul.f32.gmra.mxu0 %v649
        %v1125 = vpop.f32.mrf.mxu0
        %v1126 = vadd.f32 0.0, %v1125
        %1127 = vmatmul.f32.gmra.mxu0 %v650
        %v1128 = vpop.f32.mrf.mxu0
        %v1129 = vadd.f32 0.0, %v1128
        %1130 = vmatmul.f32.gmra.mxu0 %v651
        %v1131 = vpop.f32.mrf.mxu0
        %v1132 = vadd.f32 0.0, %v1131
        %1133 = vmatmul.f32.gmra.mxu0 %v652
        %v1134 = vpop.f32.mrf.mxu0
        %v1135 = vadd.f32 0.0, %v1134
        %1136 = vmatmul.f32.gmra.mxu0 %v653
        %v1137 = vpop.f32.mrf.mxu0
        %v1138 = vadd.f32 0.0, %v1137
        %1139 = vdwg.mxu0
        %v1140 = vld [vmem:[%s4] sm:$0xff]
        %v1141 = vld [vmem:[%s4 + $0x8] sm:$0xff]
        %v1142 = vld [vmem:[%s4 + $0x10] sm:$0xff]
        %v1143 = vld [vmem:[%s4 + $0x18] sm:$0xff]
        %v1144 = vld [vmem:[%s4 + $0x20] sm:$0xff]
        %v1145 = vld [vmem:[%s4 + $0x28] sm:$0xff]
        %v1146 = vld [vmem:[%s4 + $0x30] sm:$0xff]
        %v1147 = vld [vmem:[%s4 + $0x38] sm:$0xff]
        %v1148 = vld [vmem:[%s4 + $0x40] sm:$0xff]
        %v1149 = vld [vmem:[%s4 + $0x48] sm:$0xff]
        %v1150 = vld [vmem:[%s4 + $0x50] sm:$0xff]
        %v1151 = vld [vmem:[%s4 + $0x58] sm:$0xff]
        %v1152 = vld [vmem:[%s4 + $0x60] sm:$0xff]
        %v1153 = vld [vmem:[%s4 + $0x68] sm:$0xff]
        %v1154 = vld [vmem:[%s4 + $0x70] sm:$0xff]
        %v1155 = vld [vmem:[%s4 + $0x78] sm:$0xff]
        %v1156 = vld [vmem:[%s4 + $0x80] sm:$0xff]
        %v1157 = vld [vmem:[%s4 + $0x88] sm:$0xff]
        %v1158 = vld [vmem:[%s4 + $0x90] sm:$0xff]
        %v1159 = vld [vmem:[%s4 + $0x98] sm:$0xff]
        %v1160 = vld [vmem:[%s4 + $0xa0] sm:$0xff]
        %v1161 = vld [vmem:[%s4 + $0xa8] sm:$0xff]
        %v1162 = vld [vmem:[%s4 + $0xb0] sm:$0xff]
        %v1163 = vld [vmem:[%s4 + $0xb8] sm:$0xff]
        %v1164 = vld [vmem:[%s4 + $0xc0] sm:$0xff]
        %v1165 = vld [vmem:[%s4 + $0xc8] sm:$0xff]
        %v1166 = vld [vmem:[%s4 + $0xd0] sm:$0xff]
        %v1167 = vld [vmem:[%s4 + $0xd8] sm:$0xff]
        %v1168 = vld [vmem:[%s4 + $0xe0] sm:$0xff]
        %v1169 = vld [vmem:[%s4 + $0xe8] sm:$0xff]
        %v1170 = vld [vmem:[%s4 + $0xf0] sm:$0xff]
        %v1171 = vld [vmem:[%s4 + $0xf8] sm:$0xff]
        %1172 = vmatpush.xpose.msra.mxu0 %v943
        %1173 = vmatpush.xpose.msra.mxu0 %v940
        %1174 = vmatpush.xpose.msra.mxu0 %v937
        %1175 = vmatpush.xpose.msra.mxu0 %v934
        %1176 = vmatpush.xpose.msra.mxu0 %v931
        %1177 = vmatpush.xpose.msra.mxu0 %v928
        %1178 = vmatpush.xpose.msra.mxu0 %v925
        %1179 = vmatpush.xpose.msra.mxu0 %v922
        %1180 = vmatpush.xpose.msra.mxu0 %v919
        %1181 = vmatpush.xpose.msra.mxu0 %v916
        %1182 = vmatpush.xpose.msra.mxu0 %v913
        %1183 = vmatpush.xpose.msra.mxu0 %v910
        %1184 = vmatpush.xpose.msra.mxu0 %v907
        %1185 = vmatpush.xpose.msra.mxu0 %v904
        %1186 = vmatpush.xpose.msra.mxu0 %v901
        %1187 = vmatpush.xpose.msra.mxu0 %v898
        %1188 = vmatmul.f32.gmra.mxu0 %v768
        %v1189 = vpop.f32.mrf.mxu0
        %v1190 = vadd.f32 0.0, %v1189
        %1191 = vmatmul.f32.gmra.mxu0 %v771
        %v1192 = vpop.f32.mrf.mxu0
        %v1193 = vadd.f32 0.0, %v1192
        %1194 = vmatmul.f32.gmra.mxu0 %v774
        %v1195 = vpop.f32.mrf.mxu0
        %v1196 = vadd.f32 0.0, %v1195
        %1197 = vmatmul.f32.gmra.mxu0 %v777
        %v1198 = vpop.f32.mrf.mxu0
        %v1199 = vadd.f32 0.0, %v1198
        %1200 = vmatmul.f32.gmra.mxu0 %v780
        %v1201 = vpop.f32.mrf.mxu0
        %v1202 = vadd.f32 0.0, %v1201
        %1203 = vmatmul.f32.gmra.mxu0 %v783
        %v1204 = vpop.f32.mrf.mxu0
        %v1205 = vadd.f32 0.0, %v1204
        %1206 = vmatmul.f32.gmra.mxu0 %v786
        %v1207 = vpop.f32.mrf.mxu0
        %v1208 = vadd.f32 0.0, %v1207
        %1209 = vmatmul.f32.gmra.mxu0 %v789
        %v1210 = vpop.f32.mrf.mxu0
        %v1211 = vadd.f32 0.0, %v1210
        %1212 = vmatmul.f32.gmra.mxu0 %v792
        %v1213 = vpop.f32.mrf.mxu0
        %v1214 = vadd.f32 0.0, %v1213
        %1215 = vmatmul.f32.gmra.mxu0 %v795
        %v1216 = vpop.f32.mrf.mxu0
        %v1217 = vadd.f32 0.0, %v1216
        %1218 = vmatmul.f32.gmra.mxu0 %v798
        %v1219 = vpop.f32.mrf.mxu0
        %v1220 = vadd.f32 0.0, %v1219
        %1221 = vmatmul.f32.gmra.mxu0 %v801
        %v1222 = vpop.f32.mrf.mxu0
        %v1223 = vadd.f32 0.0, %v1222
        %1224 = vmatmul.f32.gmra.mxu0 %v804
        %v1225 = vpop.f32.mrf.mxu0
        %v1226 = vadd.f32 0.0, %v1225
        %1227 = vmatmul.f32.gmra.mxu0 %v807
        %v1228 = vpop.f32.mrf.mxu0
        %v1229 = vadd.f32 0.0, %v1228
        %1230 = vmatmul.f32.gmra.mxu0 %v810
        %v1231 = vpop.f32.mrf.mxu0
        %v1232 = vadd.f32 0.0, %v1231
        %1233 = vmatmul.f32.gmra.mxu0 %v813
        %v1234 = vpop.f32.mrf.mxu0
        %v1235 = vadd.f32 0.0, %v1234
        %1236 = vdwg.mxu0
        %v1237 = vmul.f32 %v1190, 0.088388346
        %v1238 = vmul.f32 %v1193, 0.088388346
        %v1239 = vmul.f32 %v1196, 0.088388346
        %v1240 = vmul.f32 %v1199, 0.088388346
        %v1241 = vmul.f32 %v1202, 0.088388346
        %v1242 = vmul.f32 %v1205, 0.088388346
        %v1243 = vmul.f32 %v1208, 0.088388346
        %v1244 = vmul.f32 %v1211, 0.088388346
        %v1245 = vmul.f32 %v1214, 0.088388346
        %v1246 = vmul.f32 %v1217, 0.088388346
        %v1247 = vmul.f32 %v1220, 0.088388346
        %v1248 = vmul.f32 %v1223, 0.088388346
        %v1249 = vmul.f32 %v1226, 0.088388346
        %v1250 = vmul.f32 %v1229, 0.088388346
        %v1251 = vmul.f32 %v1232, 0.088388346
        %v1252 = vmul.f32 %v1235, 0.088388346
        %1253 = vmax.xlane.f32.xlu0 %v1237
        %v1254 = vpop.xlane.xlu0 %1253
        %1255 = vmax.xlane.f32.xlu0 %v1238
        %v1256 = vpop.xlane.xlu0 %1255
        %1257 = vmax.xlane.f32.xlu0 %v1239
        %v1258 = vpop.xlane.xlu0 %1257
        %1259 = vmax.xlane.f32.xlu0 %v1240
        %v1260 = vpop.xlane.xlu0 %1259
        %1261 = vmax.xlane.f32.xlu0 %v1241
        %v1262 = vpop.xlane.xlu0 %1261
        %1263 = vmax.xlane.f32.xlu0 %v1242
        %v1264 = vpop.xlane.xlu0 %1263
        %1265 = vmax.xlane.f32.xlu0 %v1243
        %v1266 = vpop.xlane.xlu0 %1265
        %1267 = vmax.xlane.f32.xlu0 %v1244
        %v1268 = vpop.xlane.xlu0 %1267
        %1269 = vmax.xlane.f32.xlu0 %v1245
        %v1270 = vpop.xlane.xlu0 %1269
        %1271 = vmax.xlane.f32.xlu0 %v1246
        %v1272 = vpop.xlane.xlu0 %1271
        %1273 = vmax.xlane.f32.xlu0 %v1247
        %v1274 = vpop.xlane.xlu0 %1273
        %1275 = vmax.xlane.f32.xlu0 %v1248
        %v1276 = vpop.xlane.xlu0 %1275
        %1277 = vmax.xlane.f32.xlu0 %v1249
        %v1278 = vpop.xlane.xlu0 %1277
        %1279 = vmax.xlane.f32.xlu0 %v1250
        %v1280 = vpop.xlane.xlu0 %1279
        %1281 = vmax.xlane.f32.xlu0 %v1251
        %v1282 = vpop.xlane.xlu0 %1281
        %1283 = vmax.xlane.f32.xlu0 %v1252
        %v1284 = vpop.xlane.xlu0 %1283
        %v1285 = vsub.f32 %v1237, %v1254
        %v1286 = vsub.f32 %v1238, %v1256
        %v1287 = vsub.f32 %v1239, %v1258
        %v1288 = vsub.f32 %v1240, %v1260
        %v1289 = vsub.f32 %v1241, %v1262
        %v1290 = vsub.f32 %v1242, %v1264
        %v1291 = vsub.f32 %v1243, %v1266
        %v1292 = vsub.f32 %v1244, %v1268
        %v1293 = vsub.f32 %v1245, %v1270
        %v1294 = vsub.f32 %v1246, %v1272
        %v1295 = vsub.f32 %v1247, %v1274
        %v1296 = vsub.f32 %v1248, %v1276
        %v1297 = vsub.f32 %v1249, %v1278
        %v1298 = vsub.f32 %v1250, %v1280
        %v1299 = vsub.f32 %v1251, %v1282
        %v1300 = vsub.f32 %v1252, %v1284
        %v1301 = vmul.f32 %v1285, 1.442695
        %v1302 = vpow.pop %v1301
        %v1303 = vmul.f32 %v1286, 1.442695
        %v1304 = vpow.pop %v1303
        %v1305 = vmul.f32 %v1287, 1.442695
        %v1306 = vpow.pop %v1305
        %v1307 = vmul.f32 %v1288, 1.442695
        %v1308 = vpow.pop %v1307
        %v1309 = vmul.f32 %v1289, 1.442695
        %v1310 = vpow.pop %v1309
        %v1311 = vmul.f32 %v1290, 1.442695
        %v1312 = vpow.pop %v1311
        %v1313 = vmul.f32 %v1291, 1.442695
        %v1314 = vpow.pop %v1313
        %v1315 = vmul.f32 %v1292, 1.442695
        %v1316 = vpow.pop %v1315
        %v1317 = vmul.f32 %v1293, 1.442695
        %v1318 = vpow.pop %v1317
        %v1319 = vmul.f32 %v1294, 1.442695
        %v1320 = vpow.pop %v1319
        %v1321 = vmul.f32 %v1295, 1.442695
        %v1322 = vpow.pop %v1321
        %v1323 = vmul.f32 %v1296, 1.442695
        %v1324 = vpow.pop %v1323
        %v1325 = vmul.f32 %v1297, 1.442695
        %v1326 = vpow.pop %v1325
        %v1327 = vmul.f32 %v1298, 1.442695
        %v1328 = vpow.pop %v1327
        %v1329 = vmul.f32 %v1299, 1.442695
        %v1330 = vpow.pop %v1329
        %v1331 = vmul.f32 %v1300, 1.442695
        %v1332 = vpow.pop %v1331
        %1333 = vadd.xlane.f32.xlu0 %v1302
        %v1334 = vpop.xlane.xlu0 %1333
        %1335 = vadd.xlane.f32.xlu0 %v1304
        %v1336 = vpop.xlane.xlu0 %1335
        %1337 = vadd.xlane.f32.xlu0 %v1306
        %v1338 = vpop.xlane.xlu0 %1337
        %1339 = vadd.xlane.f32.xlu0 %v1308
        %v1340 = vpop.xlane.xlu0 %1339
        %1341 = vadd.xlane.f32.xlu0 %v1310
        %v1342 = vpop.xlane.xlu0 %1341
        %1343 = vadd.xlane.f32.xlu0 %v1312
        %v1344 = vpop.xlane.xlu0 %1343
        %1345 = vadd.xlane.f32.xlu0 %v1314
        %v1346 = vpop.xlane.xlu0 %1345
        %1347 = vadd.xlane.f32.xlu0 %v1316
        %v1348 = vpop.xlane.xlu0 %1347
        %1349 = vadd.xlane.f32.xlu0 %v1318
        %v1350 = vpop.xlane.xlu0 %1349
        %1351 = vadd.xlane.f32.xlu0 %v1320
        %v1352 = vpop.xlane.xlu0 %1351
        %1353 = vadd.xlane.f32.xlu0 %v1322
        %v1354 = vpop.xlane.xlu0 %1353
        %1355 = vadd.xlane.f32.xlu0 %v1324
        %v1356 = vpop.xlane.xlu0 %1355
        %1357 = vadd.xlane.f32.xlu0 %v1326
        %v1358 = vpop.xlane.xlu0 %1357
        %1359 = vadd.xlane.f32.xlu0 %v1328
        %v1360 = vpop.xlane.xlu0 %1359
        %1361 = vadd.xlane.f32.xlu0 %v1330
        %v1362 = vpop.xlane.xlu0 %1361
        %1363 = vadd.xlane.f32.xlu0 %v1332
        %v1364 = vpop.xlane.xlu0 %1363
        %v1365 = vrcp.pop %v1334
        %v1366 = vmul.f32 %v1334, %v1365
        %v1367 = vsub.f32 1.0, %v1366
        %v1368 = vmul.f32 %v1365, %v1367
        %v1369 = vadd.f32 %v1365, %v1368
        %vm1370 = vweird.f32 %v1334
        %vm1371 = vweird.f32 %v1365
        %vm1372 = vmor %vm1370, %vm1371
        %v1373 = vsel %vm1372, %v1365, %v1369
        %v1374 = vand.u32 2147483647, %v1334
        %vm1375 = vcmp.eq.f32.partialorder %v1374, 8.507059e+37
        %v1376 = vand.u32 %v1334, 2147483648
        %v1377 = vor.u32 1.1754944e-38, %v1376
        %v1378 = vsel %vm1375, %v1377, %v1373
        %v1379 = vmul.f32 %v1302, %v1378
        %v1380 = vrcp.pop %v1336
        %v1381 = vmul.f32 %v1336, %v1380
        %v1382 = vsub.f32 1.0, %v1381
        %v1383 = vmul.f32 %v1380, %v1382
        %v1384 = vadd.f32 %v1380, %v1383
        %vm1385 = vweird.f32 %v1336
        %vm1386 = vweird.f32 %v1380
        %vm1387 = vmor %vm1385, %vm1386
        %v1388 = vsel %vm1387, %v1380, %v1384
        %v1389 = vand.u32 2147483647, %v1336
        %vm1390 = vcmp.eq.f32.partialorder %v1389, 8.507059e+37
        %v1391 = vand.u32 %v1336, 2147483648
        %v1392 = vor.u32 1.1754944e-38, %v1391
        %v1393 = vsel %vm1390, %v1392, %v1388
        %v1394 = vmul.f32 %v1304, %v1393
        %v1395 = vrcp.pop %v1338
        %v1396 = vmul.f32 %v1338, %v1395
        %v1397 = vsub.f32 1.0, %v1396
        %v1398 = vmul.f32 %v1395, %v1397
        %v1399 = vadd.f32 %v1395, %v1398
        %vm1400 = vweird.f32 %v1338
        %vm1401 = vweird.f32 %v1395
        %vm1402 = vmor %vm1400, %vm1401
        %v1403 = vsel %vm1402, %v1395, %v1399
        %v1404 = vand.u32 2147483647, %v1338
        %vm1405 = vcmp.eq.f32.partialorder %v1404, 8.507059e+37
        %v1406 = vand.u32 %v1338, 2147483648
        %v1407 = vor.u32 1.1754944e-38, %v1406
        %v1408 = vsel %vm1405, %v1407, %v1403
        %v1409 = vmul.f32 %v1306, %v1408
        %v1410 = vrcp.pop %v1340
        %v1411 = vmul.f32 %v1340, %v1410
        %v1412 = vsub.f32 1.0, %v1411
        %v1413 = vmul.f32 %v1410, %v1412
        %v1414 = vadd.f32 %v1410, %v1413
        %vm1415 = vweird.f32 %v1340
        %vm1416 = vweird.f32 %v1410
        %vm1417 = vmor %vm1415, %vm1416
        %v1418 = vsel %vm1417, %v1410, %v1414
        %v1419 = vand.u32 2147483647, %v1340
        %vm1420 = vcmp.eq.f32.partialorder %v1419, 8.507059e+37
        %v1421 = vand.u32 %v1340, 2147483648
        %v1422 = vor.u32 1.1754944e-38, %v1421
        %v1423 = vsel %vm1420, %v1422, %v1418
        %v1424 = vmul.f32 %v1308, %v1423
        %v1425 = vrcp.pop %v1342
        %v1426 = vmul.f32 %v1342, %v1425
        %v1427 = vsub.f32 1.0, %v1426
        %v1428 = vmul.f32 %v1425, %v1427
        %v1429 = vadd.f32 %v1425, %v1428
        %vm1430 = vweird.f32 %v1342
        %vm1431 = vweird.f32 %v1425
        %vm1432 = vmor %vm1430, %vm1431
        %v1433 = vsel %vm1432, %v1425, %v1429
        %v1434 = vand.u32 2147483647, %v1342
        %vm1435 = vcmp.eq.f32.partialorder %v1434, 8.507059e+37
        %v1436 = vand.u32 %v1342, 2147483648
        %v1437 = vor.u32 1.1754944e-38, %v1436
        %v1438 = vsel %vm1435, %v1437, %v1433
        %v1439 = vmul.f32 %v1310, %v1438
        %v1440 = vrcp.pop %v1344
        %v1441 = vmul.f32 %v1344, %v1440
        %v1442 = vsub.f32 1.0, %v1441
        %v1443 = vmul.f32 %v1440, %v1442
        %v1444 = vadd.f32 %v1440, %v1443
        %vm1445 = vweird.f32 %v1344
        %vm1446 = vweird.f32 %v1440
        %vm1447 = vmor %vm1445, %vm1446
        %v1448 = vsel %vm1447, %v1440, %v1444
        %v1449 = vand.u32 2147483647, %v1344
        %vm1450 = vcmp.eq.f32.partialorder %v1449, 8.507059e+37
        %v1451 = vand.u32 %v1344, 2147483648
        %v1452 = vor.u32 1.1754944e-38, %v1451
        %v1453 = vsel %vm1450, %v1452, %v1448
        %v1454 = vmul.f32 %v1312, %v1453
        %v1455 = vrcp.pop %v1346
        %v1456 = vmul.f32 %v1346, %v1455
        %v1457 = vsub.f32 1.0, %v1456
        %v1458 = vmul.f32 %v1455, %v1457
        %v1459 = vadd.f32 %v1455, %v1458
        %vm1460 = vweird.f32 %v1346
        %vm1461 = vweird.f32 %v1455
        %vm1462 = vmor %vm1460, %vm1461
        %v1463 = vsel %vm1462, %v1455, %v1459
        %v1464 = vand.u32 2147483647, %v1346
        %vm1465 = vcmp.eq.f32.partialorder %v1464, 8.507059e+37
        %v1466 = vand.u32 %v1346, 2147483648
        %v1467 = vor.u32 1.1754944e-38, %v1466
        %v1468 = vsel %vm1465, %v1467, %v1463
        %v1469 = vmul.f32 %v1314, %v1468
        %v1470 = vrcp.pop %v1348
        %v1471 = vmul.f32 %v1348, %v1470
        %v1472 = vsub.f32 1.0, %v1471
        %v1473 = vmul.f32 %v1470, %v1472
        %v1474 = vadd.f32 %v1470, %v1473
        %vm1475 = vweird.f32 %v1348
        %vm1476 = vweird.f32 %v1470
        %vm1477 = vmor %vm1475, %vm1476
        %v1478 = vsel %vm1477, %v1470, %v1474
        %v1479 = vand.u32 2147483647, %v1348
        %vm1480 = vcmp.eq.f32.partialorder %v1479, 8.507059e+37
        %v1481 = vand.u32 %v1348, 2147483648
        %v1482 = vor.u32 1.1754944e-38, %v1481
        %v1483 = vsel %vm1480, %v1482, %v1478
        %v1484 = vmul.f32 %v1316, %v1483
        %v1485 = vrcp.pop %v1350
        %v1486 = vmul.f32 %v1350, %v1485
        %v1487 = vsub.f32 1.0, %v1486
        %v1488 = vmul.f32 %v1485, %v1487
        %v1489 = vadd.f32 %v1485, %v1488
        %vm1490 = vweird.f32 %v1350
        %vm1491 = vweird.f32 %v1485
        %vm1492 = vmor %vm1490, %vm1491
        %v1493 = vsel %vm1492, %v1485, %v1489
        %v1494 = vand.u32 2147483647, %v1350
        %vm1495 = vcmp.eq.f32.partialorder %v1494, 8.507059e+37
        %v1496 = vand.u32 %v1350, 2147483648
        %v1497 = vor.u32 1.1754944e-38, %v1496
        %v1498 = vsel %vm1495, %v1497, %v1493
        %v1499 = vmul.f32 %v1318, %v1498
        %v1500 = vrcp.pop %v1352
        %v1501 = vmul.f32 %v1352, %v1500
        %v1502 = vsub.f32 1.0, %v1501
        %v1503 = vmul.f32 %v1500, %v1502
        %v1504 = vadd.f32 %v1500, %v1503
        %vm1505 = vweird.f32 %v1352
        %vm1506 = vweird.f32 %v1500
        %vm1507 = vmor %vm1505, %vm1506
        %v1508 = vsel %vm1507, %v1500, %v1504
        %v1509 = vand.u32 2147483647, %v1352
        %vm1510 = vcmp.eq.f32.partialorder %v1509, 8.507059e+37
        %v1511 = vand.u32 %v1352, 2147483648
        %v1512 = vor.u32 1.1754944e-38, %v1511
        %v1513 = vsel %vm1510, %v1512, %v1508
        %v1514 = vmul.f32 %v1320, %v1513
        %v1515 = vrcp.pop %v1354
        %v1516 = vmul.f32 %v1354, %v1515
        %v1517 = vsub.f32 1.0, %v1516
        %v1518 = vmul.f32 %v1515, %v1517
        %v1519 = vadd.f32 %v1515, %v1518
        %vm1520 = vweird.f32 %v1354
        %vm1521 = vweird.f32 %v1515
        %vm1522 = vmor %vm1520, %vm1521
        %v1523 = vsel %vm1522, %v1515, %v1519
        %v1524 = vand.u32 2147483647, %v1354
        %vm1525 = vcmp.eq.f32.partialorder %v1524, 8.507059e+37
        %v1526 = vand.u32 %v1354, 2147483648
        %v1527 = vor.u32 1.1754944e-38, %v1526
        %v1528 = vsel %vm1525, %v1527, %v1523
        %v1529 = vmul.f32 %v1322, %v1528
        %v1530 = vrcp.pop %v1356
        %v1531 = vmul.f32 %v1356, %v1530
        %v1532 = vsub.f32 1.0, %v1531
        %v1533 = vmul.f32 %v1530, %v1532
        %v1534 = vadd.f32 %v1530, %v1533
        %vm1535 = vweird.f32 %v1356
        %vm1536 = vweird.f32 %v1530
        %vm1537 = vmor %vm1535, %vm1536
        %v1538 = vsel %vm1537, %v1530, %v1534
        %v1539 = vand.u32 2147483647, %v1356
        %vm1540 = vcmp.eq.f32.partialorder %v1539, 8.507059e+37
        %v1541 = vand.u32 %v1356, 2147483648
        %v1542 = vor.u32 1.1754944e-38, %v1541
        %v1543 = vsel %vm1540, %v1542, %v1538
        %v1544 = vmul.f32 %v1324, %v1543
        %v1545 = vrcp.pop %v1358
        %v1546 = vmul.f32 %v1358, %v1545
        %v1547 = vsub.f32 1.0, %v1546
        %v1548 = vmul.f32 %v1545, %v1547
        %v1549 = vadd.f32 %v1545, %v1548
        %vm1550 = vweird.f32 %v1358
        %vm1551 = vweird.f32 %v1545
        %vm1552 = vmor %vm1550, %vm1551
        %v1553 = vsel %vm1552, %v1545, %v1549
        %v1554 = vand.u32 2147483647, %v1358
        %vm1555 = vcmp.eq.f32.partialorder %v1554, 8.507059e+37
        %v1556 = vand.u32 %v1358, 2147483648
        %v1557 = vor.u32 1.1754944e-38, %v1556
        %v1558 = vsel %vm1555, %v1557, %v1553
        %v1559 = vmul.f32 %v1326, %v1558
        %v1560 = vrcp.pop %v1360
        %v1561 = vmul.f32 %v1360, %v1560
        %v1562 = vsub.f32 1.0, %v1561
        %v1563 = vmul.f32 %v1560, %v1562
        %v1564 = vadd.f32 %v1560, %v1563
        %vm1565 = vweird.f32 %v1360
        %vm1566 = vweird.f32 %v1560
        %vm1567 = vmor %vm1565, %vm1566
        %v1568 = vsel %vm1567, %v1560, %v1564
        %v1569 = vand.u32 2147483647, %v1360
        %vm1570 = vcmp.eq.f32.partialorder %v1569, 8.507059e+37
        %v1571 = vand.u32 %v1360, 2147483648
        %v1572 = vor.u32 1.1754944e-38, %v1571
        %v1573 = vsel %vm1570, %v1572, %v1568
        %v1574 = vmul.f32 %v1328, %v1573
        %v1575 = vrcp.pop %v1362
        %v1576 = vmul.f32 %v1362, %v1575
        %v1577 = vsub.f32 1.0, %v1576
        %v1578 = vmul.f32 %v1575, %v1577
        %v1579 = vadd.f32 %v1575, %v1578
        %vm1580 = vweird.f32 %v1362
        %vm1581 = vweird.f32 %v1575
        %vm1582 = vmor %vm1580, %vm1581
        %v1583 = vsel %vm1582, %v1575, %v1579
        %v1584 = vand.u32 2147483647, %v1362
        %vm1585 = vcmp.eq.f32.partialorder %v1584, 8.507059e+37
        %v1586 = vand.u32 %v1362, 2147483648
        %v1587 = vor.u32 1.1754944e-38, %v1586
        %v1588 = vsel %vm1585, %v1587, %v1583
        %v1589 = vmul.f32 %v1330, %v1588
        %v1590 = vrcp.pop %v1364
        %v1591 = vmul.f32 %v1364, %v1590
        %v1592 = vsub.f32 1.0, %v1591
        %v1593 = vmul.f32 %v1590, %v1592
        %v1594 = vadd.f32 %v1590, %v1593
        %vm1595 = vweird.f32 %v1364
        %vm1596 = vweird.f32 %v1590
        %vm1597 = vmor %vm1595, %vm1596
        %v1598 = vsel %vm1597, %v1590, %v1594
        %v1599 = vand.u32 2147483647, %v1364
        %vm1600 = vcmp.eq.f32.partialorder %v1599, 8.507059e+37
        %v1601 = vand.u32 %v1364, 2147483648
        %v1602 = vor.u32 1.1754944e-38, %v1601
        %v1603 = vsel %vm1600, %v1602, %v1598
        %v1604 = vmul.f32 %v1332, %v1603
        %1605 = vmatpush.msra.mxu0 %v1073
        %1606 = vmatpush.msra.mxu0 %v1070
        %1607 = vmatpush.msra.mxu0 %v1067
        %1608 = vmatpush.msra.mxu0 %v1064
        %1609 = vmatpush.msra.mxu0 %v1061
        %1610 = vmatpush.msra.mxu0 %v1058
        %1611 = vmatpush.msra.mxu0 %v1055
        %1612 = vmatpush.msra.mxu0 %v1052
        %1613 = vmatpush.msra.mxu0 %v1049
        %1614 = vmatpush.msra.mxu0 %v1046
        %1615 = vmatpush.msra.mxu0 %v1043
        %1616 = vmatpush.msra.mxu0 %v1040
        %1617 = vmatpush.msra.mxu0 %v1037
        %1618 = vmatpush.msra.mxu0 %v1034
        %1619 = vmatpush.msra.mxu0 %v1031
        %1620 = vmatpush.msra.mxu0 %v1028
        %1621 = vmatmul.f32.gmra.mxu0 %v1379
        %v1622 = vpop.f32.mrf.mxu0
        %v1623 = vadd.f32 0.0, %v1622
        %1624 = vmatmul.f32.gmra.mxu0 %v1394
        %v1625 = vpop.f32.mrf.mxu0
        %v1626 = vadd.f32 0.0, %v1625
        %1627 = vmatmul.f32.gmra.mxu0 %v1409
        %v1628 = vpop.f32.mrf.mxu0
        %v1629 = vadd.f32 0.0, %v1628
        %1630 = vmatmul.f32.gmra.mxu0 %v1424
        %v1631 = vpop.f32.mrf.mxu0
        %v1632 = vadd.f32 0.0, %v1631
        %1633 = vmatmul.f32.gmra.mxu0 %v1439
        %v1634 = vpop.f32.mrf.mxu0
        %v1635 = vadd.f32 0.0, %v1634
        %1636 = vmatmul.f32.gmra.mxu0 %v1454
        %v1637 = vpop.f32.mrf.mxu0
        %v1638 = vadd.f32 0.0, %v1637
        %1639 = vmatmul.f32.gmra.mxu0 %v1469
        %v1640 = vpop.f32.mrf.mxu0
        %v1641 = vadd.f32 0.0, %v1640
        %1642 = vmatmul.f32.gmra.mxu0 %v1484
        %v1643 = vpop.f32.mrf.mxu0
        %v1644 = vadd.f32 0.0, %v1643
        %1645 = vmatmul.f32.gmra.mxu0 %v1499
        %v1646 = vpop.f32.mrf.mxu0
        %v1647 = vadd.f32 0.0, %v1646
        %1648 = vmatmul.f32.gmra.mxu0 %v1514
        %v1649 = vpop.f32.mrf.mxu0
        %v1650 = vadd.f32 0.0, %v1649
        %1651 = vmatmul.f32.gmra.mxu0 %v1529
        %v1652 = vpop.f32.mrf.mxu0
        %v1653 = vadd.f32 0.0, %v1652
        %1654 = vmatmul.f32.gmra.mxu0 %v1544
        %v1655 = vpop.f32.mrf.mxu0
        %v1656 = vadd.f32 0.0, %v1655
        %1657 = vmatmul.f32.gmra.mxu0 %v1559
        %v1658 = vpop.f32.mrf.mxu0
        %v1659 = vadd.f32 0.0, %v1658
        %1660 = vmatmul.f32.gmra.mxu0 %v1574
        %v1661 = vpop.f32.mrf.mxu0
        %v1662 = vadd.f32 0.0, %v1661
        %1663 = vmatmul.f32.gmra.mxu0 %v1589
        %v1664 = vpop.f32.mrf.mxu0
        %v1665 = vadd.f32 0.0, %v1664
        %1666 = vmatmul.f32.gmra.mxu0 %v1604
        %v1667 = vpop.f32.mrf.mxu0
        %v1668 = vadd.f32 0.0, %v1667
        %1669 = vdwg.mxu0
        %1670 = vmatpush.xpose.msra.mxu0 %v1008
        %1671 = vmatpush.xpose.msra.mxu0 %v1005
        %1672 = vmatpush.xpose.msra.mxu0 %v1002
        %1673 = vmatpush.xpose.msra.mxu0 %v999
        %1674 = vmatpush.xpose.msra.mxu0 %v996
        %1675 = vmatpush.xpose.msra.mxu0 %v993
        %1676 = vmatpush.xpose.msra.mxu0 %v990
        %1677 = vmatpush.xpose.msra.mxu0 %v987
        %1678 = vmatpush.xpose.msra.mxu0 %v984
        %1679 = vmatpush.xpose.msra.mxu0 %v981
        %1680 = vmatpush.xpose.msra.mxu0 %v978
        %1681 = vmatpush.xpose.msra.mxu0 %v975
        %1682 = vmatpush.xpose.msra.mxu0 %v972
        %1683 = vmatpush.xpose.msra.mxu0 %v969
        %1684 = vmatpush.xpose.msra.mxu0 %v966
        %1685 = vmatpush.xpose.msra.mxu0 %v963
        %1686 = vmatmul.f32.gmra.mxu0 %v833
        %v1687 = vpop.f32.mrf.mxu0
        %v1688 = vadd.f32 0.0, %v1687
        %1689 = vmatmul.f32.gmra.mxu0 %v836
        %v1690 = vpop.f32.mrf.mxu0
        %v1691 = vadd.f32 0.0, %v1690
        %1692 = vmatmul.f32.gmra.mxu0 %v839
        %v1693 = vpop.f32.mrf.mxu0
        %v1694 = vadd.f32 0.0, %v1693
        %1695 = vmatmul.f32.gmra.mxu0 %v842
        %v1696 = vpop.f32.mrf.mxu0
        %v1697 = vadd.f32 0.0, %v1696
        %1698 = vmatmul.f32.gmra.mxu0 %v845
        %v1699 = vpop.f32.mrf.mxu0
        %v1700 = vadd.f32 0.0, %v1699
        %1701 = vmatmul.f32.gmra.mxu0 %v848
        %v1702 = vpop.f32.mrf.mxu0
        %v1703 = vadd.f32 0.0, %v1702
        %1704 = vmatmul.f32.gmra.mxu0 %v851
        %v1705 = vpop.f32.mrf.mxu0
        %v1706 = vadd.f32 0.0, %v1705
        %1707 = vmatmul.f32.gmra.mxu0 %v854
        %v1708 = vpop.f32.mrf.mxu0
        %v1709 = vadd.f32 0.0, %v1708
        %1710 = vmatmul.f32.gmra.mxu0 %v857
        %v1711 = vpop.f32.mrf.mxu0
        %v1712 = vadd.f32 0.0, %v1711
        %1713 = vmatmul.f32.gmra.mxu0 %v860
        %v1714 = vpop.f32.mrf.mxu0
        %v1715 = vadd.f32 0.0, %v1714
        %1716 = vmatmul.f32.gmra.mxu0 %v863
        %v1717 = vpop.f32.mrf.mxu0
        %v1718 = vadd.f32 0.0, %v1717
        %1719 = vmatmul.f32.gmra.mxu0 %v866
        %v1720 = vpop.f32.mrf.mxu0
        %v1721 = vadd.f32 0.0, %v1720
        %1722 = vmatmul.f32.gmra.mxu0 %v869
        %v1723 = vpop.f32.mrf.mxu0
        %v1724 = vadd.f32 0.0, %v1723
        %1725 = vmatmul.f32.gmra.mxu0 %v872
        %v1726 = vpop.f32.mrf.mxu0
        %v1727 = vadd.f32 0.0, %v1726
        %1728 = vmatmul.f32.gmra.mxu0 %v875
        %v1729 = vpop.f32.mrf.mxu0
        %v1730 = vadd.f32 0.0, %v1729
        %1731 = vmatmul.f32.gmra.mxu0 %v878
        %v1732 = vpop.f32.mrf.mxu0
        %v1733 = vadd.f32 0.0, %v1732
        %1734 = vdwg.mxu0
        %v1735 = vmul.f32 %v1688, 0.088388346
        %v1736 = vmul.f32 %v1691, 0.088388346
        %v1737 = vmul.f32 %v1694, 0.088388346
        %v1738 = vmul.f32 %v1697, 0.088388346
        %v1739 = vmul.f32 %v1700, 0.088388346
        %v1740 = vmul.f32 %v1703, 0.088388346
        %v1741 = vmul.f32 %v1706, 0.088388346
        %v1742 = vmul.f32 %v1709, 0.088388346
        %v1743 = vmul.f32 %v1712, 0.088388346
        %v1744 = vmul.f32 %v1715, 0.088388346
        %v1745 = vmul.f32 %v1718, 0.088388346
        %v1746 = vmul.f32 %v1721, 0.088388346
        %v1747 = vmul.f32 %v1724, 0.088388346
        %v1748 = vmul.f32 %v1727, 0.088388346
        %v1749 = vmul.f32 %v1730, 0.088388346
        %v1750 = vmul.f32 %v1733, 0.088388346
        %1751 = vmax.xlane.f32.xlu0 %v1735
        %v1752 = vpop.xlane.xlu0 %1751
        %1753 = vmax.xlane.f32.xlu0 %v1736
        %v1754 = vpop.xlane.xlu0 %1753
        %1755 = vmax.xlane.f32.xlu0 %v1737
        %v1756 = vpop.xlane.xlu0 %1755
        %1757 = vmax.xlane.f32.xlu0 %v1738
        %v1758 = vpop.xlane.xlu0 %1757
        %1759 = vmax.xlane.f32.xlu0 %v1739
        %v1760 = vpop.xlane.xlu0 %1759
        %1761 = vmax.xlane.f32.xlu0 %v1740
        %v1762 = vpop.xlane.xlu0 %1761
        %1763 = vmax.xlane.f32.xlu0 %v1741
        %v1764 = vpop.xlane.xlu0 %1763
        %1765 = vmax.xlane.f32.xlu0 %v1742
        %v1766 = vpop.xlane.xlu0 %1765
        %1767 = vmax.xlane.f32.xlu0 %v1743
        %v1768 = vpop.xlane.xlu0 %1767
        %1769 = vmax.xlane.f32.xlu0 %v1744
        %v1770 = vpop.xlane.xlu0 %1769
        %1771 = vmax.xlane.f32.xlu0 %v1745
        %v1772 = vpop.xlane.xlu0 %1771
        %1773 = vmax.xlane.f32.xlu0 %v1746
        %v1774 = vpop.xlane.xlu0 %1773
        %1775 = vmax.xlane.f32.xlu0 %v1747
        %v1776 = vpop.xlane.xlu0 %1775
        %1777 = vmax.xlane.f32.xlu0 %v1748
        %v1778 = vpop.xlane.xlu0 %1777
        %1779 = vmax.xlane.f32.xlu0 %v1749
        %v1780 = vpop.xlane.xlu0 %1779
        %1781 = vmax.xlane.f32.xlu0 %v1750
        %v1782 = vpop.xlane.xlu0 %1781
        %v1783 = vsub.f32 %v1735, %v1752
        %v1784 = vsub.f32 %v1736, %v1754
        %v1785 = vsub.f32 %v1737, %v1756
        %v1786 = vsub.f32 %v1738, %v1758
        %v1787 = vsub.f32 %v1739, %v1760
        %v1788 = vsub.f32 %v1740, %v1762
        %v1789 = vsub.f32 %v1741, %v1764
        %v1790 = vsub.f32 %v1742, %v1766
        %v1791 = vsub.f32 %v1743, %v1768
        %v1792 = vsub.f32 %v1744, %v1770
        %v1793 = vsub.f32 %v1745, %v1772
        %v1794 = vsub.f32 %v1746, %v1774
        %v1795 = vsub.f32 %v1747, %v1776
        %v1796 = vsub.f32 %v1748, %v1778
        %v1797 = vsub.f32 %v1749, %v1780
        %v1798 = vsub.f32 %v1750, %v1782
        %v1799 = vmul.f32 %v1783, 1.442695
        %v1800 = vpow.pop %v1799
        %v1801 = vmul.f32 %v1784, 1.442695
        %v1802 = vpow.pop %v1801
        %v1803 = vmul.f32 %v1785, 1.442695
        %v1804 = vpow.pop %v1803
        %v1805 = vmul.f32 %v1786, 1.442695
        %v1806 = vpow.pop %v1805
        %v1807 = vmul.f32 %v1787, 1.442695
        %v1808 = vpow.pop %v1807
        %v1809 = vmul.f32 %v1788, 1.442695
        %v1810 = vpow.pop %v1809
        %v1811 = vmul.f32 %v1789, 1.442695
        %v1812 = vpow.pop %v1811
        %v1813 = vmul.f32 %v1790, 1.442695
        %v1814 = vpow.pop %v1813
        %v1815 = vmul.f32 %v1791, 1.442695
        %v1816 = vpow.pop %v1815
        %v1817 = vmul.f32 %v1792, 1.442695
        %v1818 = vpow.pop %v1817
        %v1819 = vmul.f32 %v1793, 1.442695
        %v1820 = vpow.pop %v1819
        %v1821 = vmul.f32 %v1794, 1.442695
        %v1822 = vpow.pop %v1821
        %v1823 = vmul.f32 %v1795, 1.442695
        %v1824 = vpow.pop %v1823
        %v1825 = vmul.f32 %v1796, 1.442695
        %v1826 = vpow.pop %v1825
        %v1827 = vmul.f32 %v1797, 1.442695
        %v1828 = vpow.pop %v1827
        %v1829 = vmul.f32 %v1798, 1.442695
        %v1830 = vpow.pop %v1829
        %1831 = vadd.xlane.f32.xlu0 %v1800
        %v1832 = vpop.xlane.xlu0 %1831
        %1833 = vadd.xlane.f32.xlu0 %v1802
        %v1834 = vpop.xlane.xlu0 %1833
        %1835 = vadd.xlane.f32.xlu0 %v1804
        %v1836 = vpop.xlane.xlu0 %1835
        %1837 = vadd.xlane.f32.xlu0 %v1806
        %v1838 = vpop.xlane.xlu0 %1837
        %1839 = vadd.xlane.f32.xlu0 %v1808
        %v1840 = vpop.xlane.xlu0 %1839
        %1841 = vadd.xlane.f32.xlu0 %v1810
        %v1842 = vpop.xlane.xlu0 %1841
        %1843 = vadd.xlane.f32.xlu0 %v1812
        %v1844 = vpop.xlane.xlu0 %1843
        %1845 = vadd.xlane.f32.xlu0 %v1814
        %v1846 = vpop.xlane.xlu0 %1845
        %1847 = vadd.xlane.f32.xlu0 %v1816
        %v1848 = vpop.xlane.xlu0 %1847
        %1849 = vadd.xlane.f32.xlu0 %v1818
        %v1850 = vpop.xlane.xlu0 %1849
        %1851 = vadd.xlane.f32.xlu0 %v1820
        %v1852 = vpop.xlane.xlu0 %1851
        %1853 = vadd.xlane.f32.xlu0 %v1822
        %v1854 = vpop.xlane.xlu0 %1853
        %1855 = vadd.xlane.f32.xlu0 %v1824
        %v1856 = vpop.xlane.xlu0 %1855
        %1857 = vadd.xlane.f32.xlu0 %v1826
        %v1858 = vpop.xlane.xlu0 %1857
        %1859 = vadd.xlane.f32.xlu0 %v1828
        %v1860 = vpop.xlane.xlu0 %1859
        %1861 = vadd.xlane.f32.xlu0 %v1830
        %v1862 = vpop.xlane.xlu0 %1861
        %v1863 = vrcp.pop %v1832
        %v1864 = vmul.f32 %v1832, %v1863
        %v1865 = vsub.f32 1.0, %v1864
        %v1866 = vmul.f32 %v1863, %v1865
        %v1867 = vadd.f32 %v1863, %v1866
        %vm1868 = vweird.f32 %v1832
        %vm1869 = vweird.f32 %v1863
        %vm1870 = vmor %vm1868, %vm1869
        %v1871 = vsel %vm1870, %v1863, %v1867
        %v1872 = vand.u32 2147483647, %v1832
        %vm1873 = vcmp.eq.f32.partialorder %v1872, 8.507059e+37
        %v1874 = vand.u32 %v1832, 2147483648
        %v1875 = vor.u32 1.1754944e-38, %v1874
        %v1876 = vsel %vm1873, %v1875, %v1871
        %v1877 = vmul.f32 %v1800, %v1876
        %v1878 = vrcp.pop %v1834
        %v1879 = vmul.f32 %v1834, %v1878
        %v1880 = vsub.f32 1.0, %v1879
        %v1881 = vmul.f32 %v1878, %v1880
        %v1882 = vadd.f32 %v1878, %v1881
        %vm1883 = vweird.f32 %v1834
        %vm1884 = vweird.f32 %v1878
        %vm1885 = vmor %vm1883, %vm1884
        %v1886 = vsel %vm1885, %v1878, %v1882
        %v1887 = vand.u32 2147483647, %v1834
        %vm1888 = vcmp.eq.f32.partialorder %v1887, 8.507059e+37
        %v1889 = vand.u32 %v1834, 2147483648
        %v1890 = vor.u32 1.1754944e-38, %v1889
        %v1891 = vsel %vm1888, %v1890, %v1886
        %v1892 = vmul.f32 %v1802, %v1891
        %v1893 = vrcp.pop %v1836
        %v1894 = vmul.f32 %v1836, %v1893
        %v1895 = vsub.f32 1.0, %v1894
        %v1896 = vmul.f32 %v1893, %v1895
        %v1897 = vadd.f32 %v1893, %v1896
        %vm1898 = vweird.f32 %v1836
        %vm1899 = vweird.f32 %v1893
        %vm1900 = vmor %vm1898, %vm1899
        %v1901 = vsel %vm1900, %v1893, %v1897
        %v1902 = vand.u32 2147483647, %v1836
        %vm1903 = vcmp.eq.f32.partialorder %v1902, 8.507059e+37
        %v1904 = vand.u32 %v1836, 2147483648
        %v1905 = vor.u32 1.1754944e-38, %v1904
        %v1906 = vsel %vm1903, %v1905, %v1901
        %v1907 = vmul.f32 %v1804, %v1906
        %v1908 = vrcp.pop %v1838
        %v1909 = vmul.f32 %v1838, %v1908
        %v1910 = vsub.f32 1.0, %v1909
        %v1911 = vmul.f32 %v1908, %v1910
        %v1912 = vadd.f32 %v1908, %v1911
        %vm1913 = vweird.f32 %v1838
        %vm1914 = vweird.f32 %v1908
        %vm1915 = vmor %vm1913, %vm1914
        %v1916 = vsel %vm1915, %v1908, %v1912
        %v1917 = vand.u32 2147483647, %v1838
        %vm1918 = vcmp.eq.f32.partialorder %v1917, 8.507059e+37
        %v1919 = vand.u32 %v1838, 2147483648
        %v1920 = vor.u32 1.1754944e-38, %v1919
        %v1921 = vsel %vm1918, %v1920, %v1916
        %v1922 = vmul.f32 %v1806, %v1921
        %v1923 = vrcp.pop %v1840
        %v1924 = vmul.f32 %v1840, %v1923
        %v1925 = vsub.f32 1.0, %v1924
        %v1926 = vmul.f32 %v1923, %v1925
        %v1927 = vadd.f32 %v1923, %v1926
        %vm1928 = vweird.f32 %v1840
        %vm1929 = vweird.f32 %v1923
        %vm1930 = vmor %vm1928, %vm1929
        %v1931 = vsel %vm1930, %v1923, %v1927
        %v1932 = vand.u32 2147483647, %v1840
        %vm1933 = vcmp.eq.f32.partialorder %v1932, 8.507059e+37
        %v1934 = vand.u32 %v1840, 2147483648
        %v1935 = vor.u32 1.1754944e-38, %v1934
        %v1936 = vsel %vm1933, %v1935, %v1931
        %v1937 = vmul.f32 %v1808, %v1936
        %v1938 = vrcp.pop %v1842
        %v1939 = vmul.f32 %v1842, %v1938
        %v1940 = vsub.f32 1.0, %v1939
        %v1941 = vmul.f32 %v1938, %v1940
        %v1942 = vadd.f32 %v1938, %v1941
        %vm1943 = vweird.f32 %v1842
        %vm1944 = vweird.f32 %v1938
        %vm1945 = vmor %vm1943, %vm1944
        %v1946 = vsel %vm1945, %v1938, %v1942
        %v1947 = vand.u32 2147483647, %v1842
        %vm1948 = vcmp.eq.f32.partialorder %v1947, 8.507059e+37
        %v1949 = vand.u32 %v1842, 2147483648
        %v1950 = vor.u32 1.1754944e-38, %v1949
        %v1951 = vsel %vm1948, %v1950, %v1946
        %v1952 = vmul.f32 %v1810, %v1951
        %v1953 = vrcp.pop %v1844
        %v1954 = vmul.f32 %v1844, %v1953
        %v1955 = vsub.f32 1.0, %v1954
        %v1956 = vmul.f32 %v1953, %v1955
        %v1957 = vadd.f32 %v1953, %v1956
        %vm1958 = vweird.f32 %v1844
        %vm1959 = vweird.f32 %v1953
        %vm1960 = vmor %vm1958, %vm1959
        %v1961 = vsel %vm1960, %v1953, %v1957
        %v1962 = vand.u32 2147483647, %v1844
        %vm1963 = vcmp.eq.f32.partialorder %v1962, 8.507059e+37
        %v1964 = vand.u32 %v1844, 2147483648
        %v1965 = vor.u32 1.1754944e-38, %v1964
        %v1966 = vsel %vm1963, %v1965, %v1961
        %v1967 = vmul.f32 %v1812, %v1966
        %v1968 = vrcp.pop %v1846
        %v1969 = vmul.f32 %v1846, %v1968
        %v1970 = vsub.f32 1.0, %v1969
        %v1971 = vmul.f32 %v1968, %v1970
        %v1972 = vadd.f32 %v1968, %v1971
        %vm1973 = vweird.f32 %v1846
        %vm1974 = vweird.f32 %v1968
        %vm1975 = vmor %vm1973, %vm1974
        %v1976 = vsel %vm1975, %v1968, %v1972
        %v1977 = vand.u32 2147483647, %v1846
        %vm1978 = vcmp.eq.f32.partialorder %v1977, 8.507059e+37
        %v1979 = vand.u32 %v1846, 2147483648
        %v1980 = vor.u32 1.1754944e-38, %v1979
        %v1981 = vsel %vm1978, %v1980, %v1976
        %v1982 = vmul.f32 %v1814, %v1981
        %v1983 = vrcp.pop %v1848
        %v1984 = vmul.f32 %v1848, %v1983
        %v1985 = vsub.f32 1.0, %v1984
        %v1986 = vmul.f32 %v1983, %v1985
        %v1987 = vadd.f32 %v1983, %v1986
        %vm1988 = vweird.f32 %v1848
        %vm1989 = vweird.f32 %v1983
        %vm1990 = vmor %vm1988, %vm1989
        %v1991 = vsel %vm1990, %v1983, %v1987
        %v1992 = vand.u32 2147483647, %v1848
        %vm1993 = vcmp.eq.f32.partialorder %v1992, 8.507059e+37
        %v1994 = vand.u32 %v1848, 2147483648
        %v1995 = vor.u32 1.1754944e-38, %v1994
        %v1996 = vsel %vm1993, %v1995, %v1991
        %v1997 = vmul.f32 %v1816, %v1996
        %v1998 = vrcp.pop %v1850
        %v1999 = vmul.f32 %v1850, %v1998
        %v2000 = vsub.f32 1.0, %v1999
        %v2001 = vmul.f32 %v1998, %v2000
        %v2002 = vadd.f32 %v1998, %v2001
        %vm2003 = vweird.f32 %v1850
        %vm2004 = vweird.f32 %v1998
        %vm2005 = vmor %vm2003, %vm2004
        %v2006 = vsel %vm2005, %v1998, %v2002
        %v2007 = vand.u32 2147483647, %v1850
        %vm2008 = vcmp.eq.f32.partialorder %v2007, 8.507059e+37
        %v2009 = vand.u32 %v1850, 2147483648
        %v2010 = vor.u32 1.1754944e-38, %v2009
        %v2011 = vsel %vm2008, %v2010, %v2006
        %v2012 = vmul.f32 %v1818, %v2011
        %v2013 = vrcp.pop %v1852
        %v2014 = vmul.f32 %v1852, %v2013
        %v2015 = vsub.f32 1.0, %v2014
        %v2016 = vmul.f32 %v2013, %v2015
        %v2017 = vadd.f32 %v2013, %v2016
        %vm2018 = vweird.f32 %v1852
        %vm2019 = vweird.f32 %v2013
        %vm2020 = vmor %vm2018, %vm2019
        %v2021 = vsel %vm2020, %v2013, %v2017
        %v2022 = vand.u32 2147483647, %v1852
        %vm2023 = vcmp.eq.f32.partialorder %v2022, 8.507059e+37
        %v2024 = vand.u32 %v1852, 2147483648
        %v2025 = vor.u32 1.1754944e-38, %v2024
        %v2026 = vsel %vm2023, %v2025, %v2021
        %v2027 = vmul.f32 %v1820, %v2026
        %v2028 = vrcp.pop %v1854
        %v2029 = vmul.f32 %v1854, %v2028
        %v2030 = vsub.f32 1.0, %v2029
        %v2031 = vmul.f32 %v2028, %v2030
        %v2032 = vadd.f32 %v2028, %v2031
        %vm2033 = vweird.f32 %v1854
        %vm2034 = vweird.f32 %v2028
        %vm2035 = vmor %vm2033, %vm2034
        %v2036 = vsel %vm2035, %v2028, %v2032
        %v2037 = vand.u32 2147483647, %v1854
        %vm2038 = vcmp.eq.f32.partialorder %v2037, 8.507059e+37
        %v2039 = vand.u32 %v1854, 2147483648
        %v2040 = vor.u32 1.1754944e-38, %v2039
        %v2041 = vsel %vm2038, %v2040, %v2036
        %v2042 = vmul.f32 %v1822, %v2041
        %v2043 = vrcp.pop %v1856
        %v2044 = vmul.f32 %v1856, %v2043
        %v2045 = vsub.f32 1.0, %v2044
        %v2046 = vmul.f32 %v2043, %v2045
        %v2047 = vadd.f32 %v2043, %v2046
        %vm2048 = vweird.f32 %v1856
        %vm2049 = vweird.f32 %v2043
        %vm2050 = vmor %vm2048, %vm2049
        %v2051 = vsel %vm2050, %v2043, %v2047
        %v2052 = vand.u32 2147483647, %v1856
        %vm2053 = vcmp.eq.f32.partialorder %v2052, 8.507059e+37
        %v2054 = vand.u32 %v1856, 2147483648
        %v2055 = vor.u32 1.1754944e-38, %v2054
        %v2056 = vsel %vm2053, %v2055, %v2051
        %v2057 = vmul.f32 %v1824, %v2056
        %v2058 = vrcp.pop %v1858
        %v2059 = vmul.f32 %v1858, %v2058
        %v2060 = vsub.f32 1.0, %v2059
        %v2061 = vmul.f32 %v2058, %v2060
        %v2062 = vadd.f32 %v2058, %v2061
        %vm2063 = vweird.f32 %v1858
        %vm2064 = vweird.f32 %v2058
        %vm2065 = vmor %vm2063, %vm2064
        %v2066 = vsel %vm2065, %v2058, %v2062
        %v2067 = vand.u32 2147483647, %v1858
        %vm2068 = vcmp.eq.f32.partialorder %v2067, 8.507059e+37
        %v2069 = vand.u32 %v1858, 2147483648
        %v2070 = vor.u32 1.1754944e-38, %v2069
        %v2071 = vsel %vm2068, %v2070, %v2066
        %v2072 = vmul.f32 %v1826, %v2071
        %v2073 = vrcp.pop %v1860
        %v2074 = vmul.f32 %v1860, %v2073
        %v2075 = vsub.f32 1.0, %v2074
        %v2076 = vmul.f32 %v2073, %v2075
        %v2077 = vadd.f32 %v2073, %v2076
        %vm2078 = vweird.f32 %v1860
        %vm2079 = vweird.f32 %v2073
        %vm2080 = vmor %vm2078, %vm2079
        %v2081 = vsel %vm2080, %v2073, %v2077
        %v2082 = vand.u32 2147483647, %v1860
        %vm2083 = vcmp.eq.f32.partialorder %v2082, 8.507059e+37
        %v2084 = vand.u32 %v1860, 2147483648
        %v2085 = vor.u32 1.1754944e-38, %v2084
        %v2086 = vsel %vm2083, %v2085, %v2081
        %v2087 = vmul.f32 %v1828, %v2086
        %v2088 = vrcp.pop %v1862
        %v2089 = vmul.f32 %v1862, %v2088
        %v2090 = vsub.f32 1.0, %v2089
        %v2091 = vmul.f32 %v2088, %v2090
        %v2092 = vadd.f32 %v2088, %v2091
        %vm2093 = vweird.f32 %v1862
        %vm2094 = vweird.f32 %v2088
        %vm2095 = vmor %vm2093, %vm2094
        %v2096 = vsel %vm2095, %v2088, %v2092
        %v2097 = vand.u32 2147483647, %v1862
        %vm2098 = vcmp.eq.f32.partialorder %v2097, 8.507059e+37
        %v2099 = vand.u32 %v1862, 2147483648
        %v2100 = vor.u32 1.1754944e-38, %v2099
        %v2101 = vsel %vm2098, %v2100, %v2096
        %v2102 = vmul.f32 %v1830, %v2101
        %2103 = vmatpush.msra.mxu0 %v1138
        %2104 = vmatpush.msra.mxu0 %v1135
        %2105 = vmatpush.msra.mxu0 %v1132
        %2106 = vmatpush.msra.mxu0 %v1129
        %2107 = vmatpush.msra.mxu0 %v1126
        %2108 = vmatpush.msra.mxu0 %v1123
        %2109 = vmatpush.msra.mxu0 %v1120
        %2110 = vmatpush.msra.mxu0 %v1117
        %2111 = vmatpush.msra.mxu0 %v1114
        %2112 = vmatpush.msra.mxu0 %v1111
        %2113 = vmatpush.msra.mxu0 %v1108
        %2114 = vmatpush.msra.mxu0 %v1105
        %2115 = vmatpush.msra.mxu0 %v1102
        %2116 = vmatpush.msra.mxu0 %v1099
        %2117 = vmatpush.msra.mxu0 %v1096
        %2118 = vmatpush.msra.mxu0 %v1093
        %2119 = vmatmul.f32.gmra.mxu0 %v1877
        %v2120 = vpop.f32.mrf.mxu0
        %v2121 = vadd.f32 0.0, %v2120
        %2122 = vmatmul.f32.gmra.mxu0 %v1892
        %v2123 = vpop.f32.mrf.mxu0
        %v2124 = vadd.f32 0.0, %v2123
        %2125 = vmatmul.f32.gmra.mxu0 %v1907
        %v2126 = vpop.f32.mrf.mxu0
        %v2127 = vadd.f32 0.0, %v2126
        %2128 = vmatmul.f32.gmra.mxu0 %v1922
        %v2129 = vpop.f32.mrf.mxu0
        %v2130 = vadd.f32 0.0, %v2129
        %2131 = vmatmul.f32.gmra.mxu0 %v1937
        %v2132 = vpop.f32.mrf.mxu0
        %v2133 = vadd.f32 0.0, %v2132
        %2134 = vmatmul.f32.gmra.mxu0 %v1952
        %v2135 = vpop.f32.mrf.mxu0
        %v2136 = vadd.f32 0.0, %v2135
        %2137 = vmatmul.f32.gmra.mxu0 %v1967
        %v2138 = vpop.f32.mrf.mxu0
        %v2139 = vadd.f32 0.0, %v2138
        %2140 = vmatmul.f32.gmra.mxu0 %v1982
        %v2141 = vpop.f32.mrf.mxu0
        %v2142 = vadd.f32 0.0, %v2141
        %2143 = vmatmul.f32.gmra.mxu0 %v1997
        %v2144 = vpop.f32.mrf.mxu0
        %v2145 = vadd.f32 0.0, %v2144
        %2146 = vmatmul.f32.gmra.mxu0 %v2012
        %v2147 = vpop.f32.mrf.mxu0
        %v2148 = vadd.f32 0.0, %v2147
        %2149 = vmatmul.f32.gmra.mxu0 %v2027
        %v2150 = vpop.f32.mrf.mxu0
        %v2151 = vadd.f32 0.0, %v2150
        %2152 = vmatmul.f32.gmra.mxu0 %v2042
        %v2153 = vpop.f32.mrf.mxu0
        %v2154 = vadd.f32 0.0, %v2153
        %2155 = vmatmul.f32.gmra.mxu0 %v2057
        %v2156 = vpop.f32.mrf.mxu0
        %v2157 = vadd.f32 0.0, %v2156
        %2158 = vmatmul.f32.gmra.mxu0 %v2072
        %v2159 = vpop.f32.mrf.mxu0
        %v2160 = vadd.f32 0.0, %v2159
        %2161 = vmatmul.f32.gmra.mxu0 %v2087
        %v2162 = vpop.f32.mrf.mxu0
        %v2163 = vadd.f32 0.0, %v2162
        %2164 = vmatmul.f32.gmra.mxu0 %v2102
        %v2165 = vpop.f32.mrf.mxu0
        %v2166 = vadd.f32 0.0, %v2165
        %2167 = vdwg.mxu0
        %2168 = vmatpush.msra.mxu0 %v1171
        %2169 = vmatpush.msra.mxu0 %v1170
        %2170 = vmatpush.msra.mxu0 %v1169
        %2171 = vmatpush.msra.mxu0 %v1168
        %2172 = vmatpush.msra.mxu0 %v1167
        %2173 = vmatpush.msra.mxu0 %v1166
        %2174 = vmatpush.msra.mxu0 %v1165
        %2175 = vmatpush.msra.mxu0 %v1164
        %2176 = vmatpush.msra.mxu0 %v1163
        %2177 = vmatpush.msra.mxu0 %v1162
        %2178 = vmatpush.msra.mxu0 %v1161
        %2179 = vmatpush.msra.mxu0 %v1160
        %2180 = vmatpush.msra.mxu0 %v1159
        %2181 = vmatpush.msra.mxu0 %v1158
        %2182 = vmatpush.msra.mxu0 %v1157
        %2183 = vmatpush.msra.mxu0 %v1156
        %2184 = vmatmul.f32.gmra.mxu0 %v2121
        %v2185 = vpop.f32.mrf.mxu0
        %v2186 = vadd.f32 0.0, %v2185
        %2187 = vmatmul.f32.gmra.mxu0 %v2124
        %v2188 = vpop.f32.mrf.mxu0
        %v2189 = vadd.f32 0.0, %v2188
        %2190 = vmatmul.f32.gmra.mxu0 %v2127
        %v2191 = vpop.f32.mrf.mxu0
        %v2192 = vadd.f32 0.0, %v2191
        %2193 = vmatmul.f32.gmra.mxu0 %v2130
        %v2194 = vpop.f32.mrf.mxu0
        %v2195 = vadd.f32 0.0, %v2194
        %2196 = vmatmul.f32.gmra.mxu0 %v2133
        %v2197 = vpop.f32.mrf.mxu0
        %v2198 = vadd.f32 0.0, %v2197
        %2199 = vmatmul.f32.gmra.mxu0 %v2136
        %v2200 = vpop.f32.mrf.mxu0
        %v2201 = vadd.f32 0.0, %v2200
        %2202 = vmatmul.f32.gmra.mxu0 %v2139
        %v2203 = vpop.f32.mrf.mxu0
        %v2204 = vadd.f32 0.0, %v2203
        %2205 = vmatmul.f32.gmra.mxu0 %v2142
        %v2206 = vpop.f32.mrf.mxu0
        %v2207 = vadd.f32 0.0, %v2206
        %2208 = vmatmul.f32.gmra.mxu0 %v2145
        %v2209 = vpop.f32.mrf.mxu0
        %v2210 = vadd.f32 0.0, %v2209
        %2211 = vmatmul.f32.gmra.mxu0 %v2148
        %v2212 = vpop.f32.mrf.mxu0
        %v2213 = vadd.f32 0.0, %v2212
        %2214 = vmatmul.f32.gmra.mxu0 %v2151
        %v2215 = vpop.f32.mrf.mxu0
        %v2216 = vadd.f32 0.0, %v2215
        %2217 = vmatmul.f32.gmra.mxu0 %v2154
        %v2218 = vpop.f32.mrf.mxu0
        %v2219 = vadd.f32 0.0, %v2218
        %2220 = vmatmul.f32.gmra.mxu0 %v2157
        %v2221 = vpop.f32.mrf.mxu0
        %v2222 = vadd.f32 0.0, %v2221
        %2223 = vmatmul.f32.gmra.mxu0 %v2160
        %v2224 = vpop.f32.mrf.mxu0
        %v2225 = vadd.f32 0.0, %v2224
        %2226 = vmatmul.f32.gmra.mxu0 %v2163
        %v2227 = vpop.f32.mrf.mxu0
        %v2228 = vadd.f32 0.0, %v2227
        %2229 = vmatmul.f32.gmra.mxu0 %v2166
        %v2230 = vpop.f32.mrf.mxu0
        %v2231 = vadd.f32 0.0, %v2230
        %2232 = vdwg.mxu0
        %2233 = vmatpush.msra.mxu0 %v1155
        %2234 = vmatpush.msra.mxu0 %v1154
        %2235 = vmatpush.msra.mxu0 %v1153
        %2236 = vmatpush.msra.mxu0 %v1152
        %2237 = vmatpush.msra.mxu0 %v1151
        %2238 = vmatpush.msra.mxu0 %v1150
        %2239 = vmatpush.msra.mxu0 %v1149
        %2240 = vmatpush.msra.mxu0 %v1148
        %2241 = vmatpush.msra.mxu0 %v1147
        %2242 = vmatpush.msra.mxu0 %v1146
        %2243 = vmatpush.msra.mxu0 %v1145
        %2244 = vmatpush.msra.mxu0 %v1144
        %2245 = vmatpush.msra.mxu0 %v1143
        %2246 = vmatpush.msra.mxu0 %v1142
        %2247 = vmatpush.msra.mxu0 %v1141
        %2248 = vmatpush.msra.mxu0 %v1140
        %2249 = vmatmul.f32.gmra.mxu0 %v1623
        %v2250 = vpop.f32.mrf.mxu0
        %v2251 = vadd.f32 %v2186, %v2250
        %2252 = vmatmul.f32.gmra.mxu0 %v1626
        %v2253 = vpop.f32.mrf.mxu0
        %v2254 = vadd.f32 %v2189, %v2253
        %2255 = vmatmul.f32.gmra.mxu0 %v1629
        %v2256 = vpop.f32.mrf.mxu0
        %v2257 = vadd.f32 %v2192, %v2256
        %2258 = vmatmul.f32.gmra.mxu0 %v1632
        %v2259 = vpop.f32.mrf.mxu0
        %v2260 = vadd.f32 %v2195, %v2259
        %2261 = vmatmul.f32.gmra.mxu0 %v1635
        %v2262 = vpop.f32.mrf.mxu0
        %v2263 = vadd.f32 %v2198, %v2262
        %2264 = vmatmul.f32.gmra.mxu0 %v1638
        %v2265 = vpop.f32.mrf.mxu0
        %v2266 = vadd.f32 %v2201, %v2265
        %2267 = vmatmul.f32.gmra.mxu0 %v1641
        %v2268 = vpop.f32.mrf.mxu0
        %v2269 = vadd.f32 %v2204, %v2268
        %2270 = vmatmul.f32.gmra.mxu0 %v1644
        %v2271 = vpop.f32.mrf.mxu0
        %v2272 = vadd.f32 %v2207, %v2271
        %2273 = vmatmul.f32.gmra.mxu0 %v1647
        %v2274 = vpop.f32.mrf.mxu0
        %v2275 = vadd.f32 %v2210, %v2274
        %2276 = vmatmul.f32.gmra.mxu0 %v1650
        %v2277 = vpop.f32.mrf.mxu0
        %v2278 = vadd.f32 %v2213, %v2277
        %2279 = vmatmul.f32.gmra.mxu0 %v1653
        %v2280 = vpop.f32.mrf.mxu0
        %v2281 = vadd.f32 %v2216, %v2280
        %2282 = vmatmul.f32.gmra.mxu0 %v1656
        %v2283 = vpop.f32.mrf.mxu0
        %v2284 = vadd.f32 %v2219, %v2283
        %2285 = vmatmul.f32.gmra.mxu0 %v1659
        %v2286 = vpop.f32.mrf.mxu0
        %v2287 = vadd.f32 %v2222, %v2286
        %2288 = vmatmul.f32.gmra.mxu0 %v1662
        %v2289 = vpop.f32.mrf.mxu0
        %v2290 = vadd.f32 %v2225, %v2289
        %2291 = vmatmul.f32.gmra.mxu0 %v1665
        %v2292 = vpop.f32.mrf.mxu0
        %v2293 = vadd.f32 %v2228, %v2292
        %2294 = vmatmul.f32.gmra.mxu0 %v1668
        %v2295 = vpop.f32.mrf.mxu0
        %v2296 = vadd.f32 %v2231, %v2295
        %2297 = vdwg.mxu0
        %v2298 = vadd.f32 %v271, %v2251
        %v2299 = vadd.f32 %v272, %v2254
        %v2300 = vadd.f32 %v273, %v2257
        %v2301 = vadd.f32 %v274, %v2260
        %v2302 = vadd.f32 %v275, %v2263
        %v2303 = vadd.f32 %v276, %v2266
        %v2304 = vadd.f32 %v277, %v2269
        %v2305 = vadd.f32 %v278, %v2272
        %v2306 = vadd.f32 %v279, %v2275
        %v2307 = vadd.f32 %v280, %v2278
        %v2308 = vadd.f32 %v281, %v2281
        %v2309 = vadd.f32 %v282, %v2284
        %v2310 = vadd.f32 %v283, %v2287
        %v2311 = vadd.f32 %v284, %v2290
        %v2312 = vadd.f32 %v285, %v2293
        %v2313 = vadd.f32 %v286, %v2296
        %2314 = vst [vmem:[%s270] sm:$0xff] %v2298
        %2315 = vst [vmem:[%s270 + $0x8] sm:$0xff] %v2299
        %2316 = vst [vmem:[%s270 + $0x10] sm:$0xff] %v2300
        %2317 = vst [vmem:[%s270 + $0x18] sm:$0xff] %v2301
        %2318 = vst [vmem:[%s270 + $0x20] sm:$0xff] %v2302
        %2319 = vst [vmem:[%s270 + $0x28] sm:$0xff] %v2303
        %2320 = vst [vmem:[%s270 + $0x30] sm:$0xff] %v2304
        %2321 = vst [vmem:[%s270 + $0x38] sm:$0xff] %v2305
        %2322 = vst [vmem:[%s270 + $0x40] sm:$0xff] %v2306
        %2323 = vst [vmem:[%s270 + $0x48] sm:$0xff] %v2307
        %2324 = vst [vmem:[%s270 + $0x50] sm:$0xff] %v2308
        %2325 = vst [vmem:[%s270 + $0x58] sm:$0xff] %v2309
        %2326 = vst [vmem:[%s270 + $0x60] sm:$0xff] %v2310
        %2327 = vst [vmem:[%s270 + $0x68] sm:$0xff] %v2311
        %2328 = vst [vmem:[%s270 + $0x70] sm:$0xff] %v2312
        %2329 = vst [vmem:[%s270 + $0x78] sm:$0xff] %v2313
        %p2330 = scmp.lt.s32.totalorder %s18, 1
        %s2331 = scalar_select %p2330, %s18, 1
        %s2332 = smul.addr %s2331, 16
        %s2333 = smul.addr %s2332, 8
        %s2334 = scalar_lea.vmem %s5, %s2333
        // Predicated region
        $region53: #{transformer_forward.4} parent=39 // pred_check
          %p2335 = pneg %p146
        $region54: #{transformer_forward.4} parent=39 // pred_check_branch
          %2337 = sbr.rel (%p2335) target = $region56
        $region55: #{transformer_forward.4} parent=39 // pred_region
          _
        $region56: #{transformer_forward.4} parent=39 // pred_fallthru
          _
      $region40: #{transformer_forward.4} parent=5 // pred_fallthru
        _
      %p2338 = scmp.le.s32.totalorder 2, %s13
      // Predicated region
      $region57: #{transformer_forward.4} parent=5 // pred_check
        %p2339 = pneg %p2338
      $region58: #{transformer_forward.4} parent=5 // pred_check_branch
        %2341 = sbr.rel (%p2339) target = $region60
      $region59: #{transformer_forward.4} parent=5 // pred_region
        %s2342 = ssub.s32 %s13, 2
        // Predicated region
        $region61: #{transformer_forward.4} parent=59 // pred_check
          %p2343 = pneg %p152
        $region62: #{transformer_forward.4} parent=59 // pred_check_branch
          %2345 = sbr.rel (%p2343) target = $region64
        $region63: #{transformer_forward.4} parent=59 // pred_region
          %p2346 = scmp.lt.s32.totalorder %s19, 1
          %s2347 = scalar_select %p2346, %s19, 1
          %s2348 = smul.addr %s2347, 16
          %s2349 = smul.addr %s2348, 8
          %s2350 = scalar_lea.vmem %s5, %s2349
        $region64: #{transformer_forward.4} parent=59 // pred_fallthru
          _
      $region60: #{transformer_forward.4} parent=5 // pred_fallthru
        _
    $region6: #{transformer_forward.4} parent=1 // loop_footer
      %s17 = sadd.s32 1, %s13
    $region7: #{transformer_forward.4} parent=1 // loop_footer_branch
      %12 = sbr.rel target = $region3
    $region8: #{transformer_forward.4} parent=1 // loop_exit
      _
    %2351 = vsyncpa [#allocation3], 1
    %s2352 = scalar_lea.sflag [#allocation3], 1
    %2353 = vsyncpa %s2352, 1
    %2354 = vsyncpa [#allocation5], 1

// kernel: transformer_forward.6
$region0: #{transformer_forward.6}
  #allocation0 [shape = 'u32[]', space=smem, size = 0x4, offset = 0x4, fixed_abs, tag = 'smem constant byte address 0x4 - core index']
  #allocation1 [shape = 'u32[72,128]{1,0:T(1,128)}', space=vmem, size = 0x9000, scoped, tag = 'internal scratch']
  %s0 = inlined_call_operand.vmem [shape: f32[2,128,128], index: 0, kind: input, shape index: {}, may-alias: {0,5}]
  %s1 = inlined_call_operand.vmem [shape: f32[1,128], index: 1, kind: input, shape index: {}]
  %s2 = inlined_call_operand.vmem [shape: f32[1,128], index: 2, kind: input, shape index: {}]
  %s3 = inlined_call_operand.vmem [shape: f32[128,768], index: 3, kind: input, shape index: {}]
  %s4 = inlined_call_operand.vmem [shape: f32[256,128], index: 4, kind: input, shape index: {}]
  %s5 = inlined_call_operand.vmem [shape: f32[2,128,128], index: 5, kind: output, shape index: {}, may-alias: {0,5}]
  %s6 = sld [smem:[#allocation0]]
  $region53: #{transformer_forward.6} parent=0
    _
  %s8 = ssub.s32 1, %s6
  %s9 = scalar_select 0, %s8, %s6
  loop: start=0, step=1, limit=4
  $region2: #{transformer_forward.6} parent=0 // loop_pre_header
    _
  $region3: #{transformer_forward.6} parent=0 // loop_header
    %s11 = sphi 0, %s15
    %p12 = scmp.ge.s32.totalorder %s11, 4
    %s21 = sphi 0, %s23
    %s24 = sphi 0, %s21
    %s25 = sphi 0, %s24
    %s41 = sphi 0, %s25
    %s45 = sphi 0, %s45
    %s47 = sphi 0, %s45
    %s48 = sphi 0, %s47
    %s62 = sphi 0, %s48
    %s66 = sphi 0, %s66
    %s68 = sphi 0, %s66
    %s69 = sphi 0, %s68
    %s83 = sphi 0, %s69
    %s87 = sphi 0, %s87
    %s89 = sphi 0, %s87
    %s90 = sphi 0, %s89
    %s104 = sphi 0, %s90
    %s108 = sphi 0, %s108
    %s110 = sphi 0, %s108
    %s111 = sphi 0, %s110
    %s125 = sphi 0, %s111
    %s131 = sphi 0, %s133
    %s134 = sphi 0, %s131
    %s135 = sphi 0, %s134
    %s151 = sphi 0, %s135
  $region4: #{transformer_forward.6} parent=0 // loop_header_branch
    %14 = sbr.rel (%p12) target = $region8
  $region5: #{transformer_forward.6} parent=0 // loop_body
    %s16 = ssub.s32 %s11, 1
    %s17 = ssub.s32 %s11, 2
    %s18 = sadd.s32 %s11, 1
    %s19 = ssub.s32 %s11, %s18
    %p20 = scmp.eq.s32.totalorder %s19, 0
    %s22 = sadd.s32 %s21, 1
    %s23 = scalar_select %p20, %s21, %s22
    %p26 = pneg %p20
    %p27 = scmp.eq.s32.totalorder %s11, 1
    %p28 = por %p26, %p27
    %p29 = scmp.ne.s32.totalorder %s21, %s24
    %p30 = scmp.eq.s32.totalorder %s11, 0
    %p31 = por %p29, %p30
    %p32 = scmp.ne.s32.totalorder %s21, %s24
    %p33 = scmp.eq.s32.totalorder %s16, 1
    %p34 = por %p32, %p33
    %p35 = scmp.ne.s32.totalorder %s24, %s25
    %p36 = scmp.eq.s32.totalorder %s16, 0
    %p37 = por %p35, %p36
    %p38 = scmp.ne.s32.totalorder %s24, %s25
    %p39 = scmp.eq.s32.totalorder %s17, 1
    %p40 = por %p38, %p39
    %p42 = scmp.ne.s32.totalorder %s25, %s41
    %p43 = scmp.eq.s32.totalorder %s17, 0
    %p44 = por %p42, %p43
    %s46 = sadd.s32 %s45, 1
    %p49 = scmp.eq.s32.totalorder %s11, 1
    %p50 = scmp.ne.s32.totalorder %s45, %s47
    %p51 = scmp.eq.s32.totalorder %s11, 0
    %p52 = por %p50, %p51
    %p53 = scmp.ne.s32.totalorder %s45, %s47
    %p54 = scmp.eq.s32.totalorder %s16, 1
    %p55 = por %p53, %p54
    %p56 = scmp.ne.s32.totalorder %s47, %s48
    %p57 = scmp.eq.s32.totalorder %s16, 0
    %p58 = por %p56, %p57
    %p59 = scmp.ne.s32.totalorder %s47, %s48
    %p60 = scmp.eq.s32.totalorder %s17, 1
    %p61 = por %p59, %p60
    %p63 = scmp.ne.s32.totalorder %s48, %s62
    %p64 = scmp.eq.s32.totalorder %s17, 0
    %p65 = por %p63, %p64
    %s67 = sadd.s32 %s66, 1
    %p70 = scmp.eq.s32.totalorder %s11, 1
    %p71 = scmp.ne.s32.totalorder %s66, %s68
    %p72 = scmp.eq.s32.totalorder %s11, 0
    %p73 = por %p71, %p72
    %p74 = scmp.ne.s32.totalorder %s66, %s68
    %p75 = scmp.eq.s32.totalorder %s16, 1
    %p76 = por %p74, %p75
    %p77 = scmp.ne.s32.totalorder %s68, %s69
    %p78 = scmp.eq.s32.totalorder %s16, 0
    %p79 = por %p77, %p78
    %p80 = scmp.ne.s32.totalorder %s68, %s69
    %p81 = scmp.eq.s32.totalorder %s17, 1
    %p82 = por %p80, %p81
    %p84 = scmp.ne.s32.totalorder %s69, %s83
    %p85 = scmp.eq.s32.totalorder %s17, 0
    %p86 = por %p84, %p85
    %s88 = sadd.s32 %s87, 1
    %p91 = scmp.eq.s32.totalorder %s11, 1
    %p92 = scmp.ne.s32.totalorder %s87, %s89
    %p93 = scmp.eq.s32.totalorder %s11, 0
    %p94 = por %p92, %p93
    %p95 = scmp.ne.s32.totalorder %s87, %s89
    %p96 = scmp.eq.s32.totalorder %s16, 1
    %p97 = por %p95, %p96
    %p98 = scmp.ne.s32.totalorder %s89, %s90
    %p99 = scmp.eq.s32.totalorder %s16, 0
    %p100 = por %p98, %p99
    %p101 = scmp.ne.s32.totalorder %s89, %s90
    %p102 = scmp.eq.s32.totalorder %s17, 1
    %p103 = por %p101, %p102
    %p105 = scmp.ne.s32.totalorder %s90, %s104
    %p106 = scmp.eq.s32.totalorder %s17, 0
    %p107 = por %p105, %p106
    %s109 = sadd.s32 %s108, 1
    %p112 = scmp.eq.s32.totalorder %s11, 1
    %p113 = scmp.ne.s32.totalorder %s108, %s110
    %p114 = scmp.eq.s32.totalorder %s11, 0
    %p115 = por %p113, %p114
    %p116 = scmp.ne.s32.totalorder %s108, %s110
    %p117 = scmp.eq.s32.totalorder %s16, 1
    %p118 = por %p116, %p117
    %p119 = scmp.ne.s32.totalorder %s110, %s111
    %p120 = scmp.eq.s32.totalorder %s16, 0
    %p121 = por %p119, %p120
    %p122 = scmp.ne.s32.totalorder %s110, %s111
    %p123 = scmp.eq.s32.totalorder %s17, 1
    %p124 = por %p122, %p123
    %p126 = scmp.ne.s32.totalorder %s111, %s125
    %p127 = scmp.eq.s32.totalorder %s17, 0
    %p128 = por %p126, %p127
    %s129 = ssub.s32 %s11, %s18
    %p130 = scmp.eq.s32.totalorder %s129, 0
    %s132 = sadd.s32 %s131, 1
    %s133 = scalar_select %p130, %s131, %s132
    %p136 = pneg %p130
    %p137 = scmp.eq.s32.totalorder %s11, 1
    %p138 = por %p136, %p137
    %p139 = scmp.ne.s32.totalorder %s131, %s134
    %p140 = scmp.eq.s32.totalorder %s11, 0
    %p141 = por %p139, %p140
    %p142 = scmp.ne.s32.totalorder %s131, %s134
    %p143 = scmp.eq.s32.totalorder %s16, 1
    %p144 = por %p142, %p143
    %p145 = scmp.ne.s32.totalorder %s134, %s135
    %p146 = scmp.eq.s32.totalorder %s16, 0
    %p147 = por %p145, %p146
    %p148 = scmp.ne.s32.totalorder %s134, %s135
    %p149 = scmp.eq.s32.totalorder %s17, 1
    %p150 = por %p148, %p149
    %p152 = scmp.ne.s32.totalorder %s135, %s151
    %p153 = scmp.eq.s32.totalorder %s17, 0
    %p154 = por %p152, %p153
    %p155 = scmp.le.s32.totalorder 1, %s11
    %p156 = scmp.lt.s32.totalorder %s11, 3
    %p157 = pnand %p155, %p156
    %p158 = pneg %p157
    // Predicated region
    $region9: #{transformer_forward.6} parent=5 // pred_check
      _
    $region10: #{transformer_forward.6} parent=5 // pred_check_branch
      %160 = sbr.rel (%p157) target = $region12
    $region11: #{transformer_forward.6} parent=5 // pred_region
      %s161 = ssub.s32 %s11, 1
      // Predicated region
      $region13: #{transformer_forward.6} parent=11 // pred_check
        %p162 = pneg %p58
      $region14: #{transformer_forward.6} parent=11 // pred_check_branch
        %164 = sbr.rel (%p162) target = $region16
      $region15: #{transformer_forward.6} parent=11 // pred_region
        _
      $region16: #{transformer_forward.6} parent=11 // pred_fallthru
        _
      // Predicated region
      $region17: #{transformer_forward.6} parent=11 // pred_check
        %p165 = pneg %p79
      $region18: #{transformer_forward.6} parent=11 // pred_check_branch
        %167 = sbr.rel (%p165) target = $region20
      $region19: #{transformer_forward.6} parent=11 // pred_region
        _
      $region20: #{transformer_forward.6} parent=11 // pred_fallthru
        _
      // Predicated region
      $region21: #{transformer_forward.6} parent=11 // pred_check
        %p168 = pneg %p100
      $region22: #{transformer_forward.6} parent=11 // pred_check_branch
        %170 = sbr.rel (%p168) target = $region24
      $region23: #{transformer_forward.6} parent=11 // pred_region
        _
      $region24: #{transformer_forward.6} parent=11 // pred_fallthru
        _
      // Predicated region
      $region25: #{transformer_forward.6} parent=11 // pred_check
        %p171 = pneg %p121
      $region26: #{transformer_forward.6} parent=11 // pred_check_branch
        %173 = sbr.rel (%p171) target = $region28
      $region27: #{transformer_forward.6} parent=11 // pred_region
        _
      $region28: #{transformer_forward.6} parent=11 // pred_fallthru
        _
    $region12: #{transformer_forward.6} parent=5 // pred_fallthru
      _
    %p174 = scmp.lt.s32.totalorder %s11, 2
    // Predicated region
    $region29: #{transformer_forward.6} parent=5 // pred_check
      %p175 = pneg %p174
    $region30: #{transformer_forward.6} parent=5 // pred_check_branch
      %177 = sbr.rel (%p175) target = $region32
    $region31: #{transformer_forward.6} parent=5 // pred_region
      // Predicated region
      $region33: #{transformer_forward.6} parent=31 // pred_check
        %p178 = pneg %p31
      $region34: #{transformer_forward.6} parent=31 // pred_check_branch
        %180 = sbr.rel (%p178) target = $region36
      $region35: #{transformer_forward.6} parent=31 // pred_region
        %p181 = scmp.lt.s32.totalorder %s11, 1
        %s182 = scalar_select %p181, %s11, 1
        %s183 = smul.addr %s182, 16
        %s184 = smul.addr %s183, 8
        %s185 = scalar_lea.vmem %s0, %s184
      $region36: #{transformer_forward.6} parent=31 // pred_fallthru
        _
    $region32: #{transformer_forward.6} parent=5 // pred_fallthru
      _
    %p186 = scmp.le.s32.totalorder 1, %s11
    %p187 = scmp.lt.s32.totalorder %s11, 3
    %p188 = pnand %p186, %p187
    %p189 = pneg %p188
    // Predicated region
    $region37: #{transformer_forward.6} parent=5 // pred_check
      _
    $region38: #{transformer_forward.6} parent=5 // pred_check_branch
      %191 = sbr.rel (%p188) target = $region40
    $region39: #{transformer_forward.6} parent=5 // pred_region
      %s192 = ssub.s32 %s11, 1
      %p193 = scmp.lt.s32.totalorder %s16, 1
      %s194 = scalar_select %p193, %s16, 1
      %s195 = smul.addr %s194, 16
      %s196 = smul.addr %s195, 8
      %s197 = scalar_lea.vmem %s0, %s196
      %p198 = pneg %p37
      %p199 = pneg %p34
      %p200 = pneg %p58
      %p201 = pneg %p55
      %p202 = pneg %p79
      %p203 = pneg %p76
      %p204 = pneg %p100
      %p205 = pneg %p97
      %p206 = pneg %p121
      %p207 = pneg %p118
      %p208 = pneg %p147
      %p209 = pneg %p144
      %p210 = scmp.lt.s32.totalorder %s16, 1
      %s211 = scalar_select %p210, %s16, 1
      %s212 = smul.addr %s211, 16
      %s213 = smul.addr %s212, 8
      %s214 = scalar_lea.vmem %s5, %s213
      %p215 = scmp.lt.s32.totalorder %s16, 1
      %s216 = scalar_select %p215, %s16, 1
      %s217 = smul.addr %s216, 16
      %s218 = smul.addr %s217, 8
      %s219 = scalar_lea.vmem %s0, %s218
      %p220 = scmp.lt.s32.totalorder %s16, 1
      %s221 = scalar_select %p220, %s16, 1
      %s222 = smul.addr %s221, 16
      %s223 = smul.addr %s222, 8
      %s224 = scalar_lea.vmem %s5, %s223
      %v225 = vld [vmem:[%s219] sm:$0xff]
      %v226 = vld [vmem:[%s219 + $0x8] sm:$0xff]
      %v227 = vld [vmem:[%s219 + $0x10] sm:$0xff]
      %v228 = vld [vmem:[%s219 + $0x18] sm:$0xff]
      %v229 = vld [vmem:[%s219 + $0x20] sm:$0xff]
      %v230 = vld [vmem:[%s219 + $0x28] sm:$0xff]
      %v231 = vld [vmem:[%s219 + $0x30] sm:$0xff]
      %v232 = vld [vmem:[%s219 + $0x38] sm:$0xff]
      %v233 = vld [vmem:[%s219 + $0x40] sm:$0xff]
      %v234 = vld [vmem:[%s219 + $0x48] sm:$0xff]
      %v235 = vld [vmem:[%s219 + $0x50] sm:$0xff]
      %v236 = vld [vmem:[%s219 + $0x58] sm:$0xff]
      %v237 = vld [vmem:[%s219 + $0x60] sm:$0xff]
      %v238 = vld [vmem:[%s219 + $0x68] sm:$0xff]
      %v239 = vld [vmem:[%s219 + $0x70] sm:$0xff]
      %v240 = vld [vmem:[%s219 + $0x78] sm:$0xff]
      %241 = vadd.xlane.f32.xlu0 %v225
      %v242 = vpop.xlane.xlu0 %241
      %243 = vadd.xlane.f32.xlu0 %v226
      %v244 = vpop.xlane.xlu0 %243
      %245 = vadd.xlane.f32.xlu0 %v227
      %v246 = vpop.xlane.xlu0 %245
      %247 = vadd.xlane.f32.xlu0 %v228
      %v248 = vpop.xlane.xlu0 %247
      %249 = vadd.xlane.f32.xlu0 %v229
      %v250 = vpop.xlane.xlu0 %249
      %251 = vadd.xlane.f32.xlu0 %v230
      %v252 = vpop.xlane.xlu0 %251
      %253 = vadd.xlane.f32.xlu0 %v231
      %v254 = vpop.xlane.xlu0 %253
      %255 = vadd.xlane.f32.xlu0 %v232
      %v256 = vpop.xlane.xlu0 %255
      %257 = vadd.xlane.f32.xlu0 %v233
      %v258 = vpop.xlane.xlu0 %257
      %259 = vadd.xlane.f32.xlu0 %v234
      %v260 = vpop.xlane.xlu0 %259
      %261 = vadd.xlane.f32.xlu0 %v235
      %v262 = vpop.xlane.xlu0 %261
      %263 = vadd.xlane.f32.xlu0 %v236
      %v264 = vpop.xlane.xlu0 %263
      %265 = vadd.xlane.f32.xlu0 %v237
      %v266 = vpop.xlane.xlu0 %265
      %267 = vadd.xlane.f32.xlu0 %v238
      %v268 = vpop.xlane.xlu0 %267
      %269 = vadd.xlane.f32.xlu0 %v239
      %v270 = vpop.xlane.xlu0 %269
      %271 = vadd.xlane.f32.xlu0 %v240
      %v272 = vpop.xlane.xlu0 %271
      %v273 = vrcp.pop 128.0
      %v274 = vmul.f32 128.0, %v273
      %v275 = vsub.f32 1.0, %v274
      %v276 = vmul.f32 %v273, %v275
      %v277 = vadd.f32 %v273, %v276
      %vm278 = vweird.f32 %v273
      %v279 = vsel %vm278, %v273, %v277
      %v280 = vmul.f32 %v242, %v279
      %v281 = vmul.f32 %v244, %v279
      %v282 = vmul.f32 %v246, %v279
      %v283 = vmul.f32 %v248, %v279
      %v284 = vmul.f32 %v250, %v279
      %v285 = vmul.f32 %v252, %v279
      %v286 = vmul.f32 %v254, %v279
      %v287 = vmul.f32 %v256, %v279
      %v288 = vmul.f32 %v258, %v279
      %v289 = vmul.f32 %v260, %v279
      %v290 = vmul.f32 %v262, %v279
      %v291 = vmul.f32 %v264, %v279
      %v292 = vmul.f32 %v266, %v279
      %v293 = vmul.f32 %v268, %v279
      %v294 = vmul.f32 %v270, %v279
      %v295 = vmul.f32 %v272, %v279
      %v296 = vsub.f32 %v225, %v280
      %v297 = vsub.f32 %v226, %v281
      %v298 = vsub.f32 %v227, %v282
      %v299 = vsub.f32 %v228, %v283
      %v300 = vsub.f32 %v229, %v284
      %v301 = vsub.f32 %v230, %v285
      %v302 = vsub.f32 %v231, %v286
      %v303 = vsub.f32 %v232, %v287
      %v304 = vsub.f32 %v233, %v288
      %v305 = vsub.f32 %v234, %v289
      %v306 = vsub.f32 %v235, %v290
      %v307 = vsub.f32 %v236, %v291
      %v308 = vsub.f32 %v237, %v292
      %v309 = vsub.f32 %v238, %v293
      %v310 = vsub.f32 %v239, %v294
      %v311 = vsub.f32 %v240, %v295
      %v312 = vmul.f32 %v296, %v296
      %v313 = vmul.f32 %v297, %v297
      %v314 = vmul.f32 %v298, %v298
      %v315 = vmul.f32 %v299, %v299
      %v316 = vmul.f32 %v300, %v300
      %v317 = vmul.f32 %v301, %v301
      %v318 = vmul.f32 %v302, %v302
      %v319 = vmul.f32 %v303, %v303
      %v320 = vmul.f32 %v304, %v304
      %v321 = vmul.f32 %v305, %v305
      %v322 = vmul.f32 %v306, %v306
      %v323 = vmul.f32 %v307, %v307
      %v324 = vmul.f32 %v308, %v308
      %v325 = vmul.f32 %v309, %v309
      %v326 = vmul.f32 %v310, %v310
      %v327 = vmul.f32 %v311, %v311
      %328 = vadd.xlane.f32.xlu0 %v312
      %v329 = vpop.xlane.xlu0 %328
      %330 = vadd.xlane.f32.xlu0 %v313
      %v331 = vpop.xlane.xlu0 %330
      %332 = vadd.xlane.f32.xlu0 %v314
      %v333 = vpop.xlane.xlu0 %332
      %334 = vadd.xlane.f32.xlu0 %v315
      %v335 = vpop.xlane.xlu0 %334
      %336 = vadd.xlane.f32.xlu0 %v316
      %v337 = vpop.xlane.xlu0 %336
      %338 = vadd.xlane.f32.xlu0 %v317
      %v339 = vpop.xlane.xlu0 %338
      %340 = vadd.xlane.f32.xlu0 %v318
      %v341 = vpop.xlane.xlu0 %340
      %342 = vadd.xlane.f32.xlu0 %v319
      %v343 = vpop.xlane.xlu0 %342
      %344 = vadd.xlane.f32.xlu0 %v320
      %v345 = vpop.xlane.xlu0 %344
      %346 = vadd.xlane.f32.xlu0 %v321
      %v347 = vpop.xlane.xlu0 %346
      %348 = vadd.xlane.f32.xlu0 %v322
      %v349 = vpop.xlane.xlu0 %348
      %350 = vadd.xlane.f32.xlu0 %v323
      %v351 = vpop.xlane.xlu0 %350
      %352 = vadd.xlane.f32.xlu0 %v324
      %v353 = vpop.xlane.xlu0 %352
      %354 = vadd.xlane.f32.xlu0 %v325
      %v355 = vpop.xlane.xlu0 %354
      %356 = vadd.xlane.f32.xlu0 %v326
      %v357 = vpop.xlane.xlu0 %356
      %358 = vadd.xlane.f32.xlu0 %v327
      %v359 = vpop.xlane.xlu0 %358
      %v360 = vmul.f32 %v329, %v279
      %v361 = vmul.f32 %v331, %v279
      %v362 = vmul.f32 %v333, %v279
      %v363 = vmul.f32 %v335, %v279
      %v364 = vmul.f32 %v337, %v279
      %v365 = vmul.f32 %v339, %v279
      %v366 = vmul.f32 %v341, %v279
      %v367 = vmul.f32 %v343, %v279
      %v368 = vmul.f32 %v345, %v279
      %v369 = vmul.f32 %v347, %v279
      %v370 = vmul.f32 %v349, %v279
      %v371 = vmul.f32 %v351, %v279
      %v372 = vmul.f32 %v353, %v279
      %v373 = vmul.f32 %v355, %v279
      %v374 = vmul.f32 %v357, %v279
      %v375 = vmul.f32 %v359, %v279
      %v376 = vadd.f32 %v360, 1e-05
      %v377 = vadd.f32 %v361, 1e-05
      %v378 = vadd.f32 %v362, 1e-05
      %v379 = vadd.f32 %v363, 1e-05
      %v380 = vadd.f32 %v364, 1e-05
      %v381 = vadd.f32 %v365, 1e-05
      %v382 = vadd.f32 %v366, 1e-05
      %v383 = vadd.f32 %v367, 1e-05
      %v384 = vadd.f32 %v368, 1e-05
      %v385 = vadd.f32 %v369, 1e-05
      %v386 = vadd.f32 %v370, 1e-05
      %v387 = vadd.f32 %v371, 1e-05
      %v388 = vadd.f32 %v372, 1e-05
      %v389 = vadd.f32 %v373, 1e-05
      %v390 = vadd.f32 %v374, 1e-05
      %v391 = vadd.f32 %v375, 1e-05
      %v392 = vrsqrt.pop %v376
      %v393 = vmul.f32 %v392, %v376
      %v394 = vmul.f32 %v393, %v392
      %v395 = vmul.f32 0.5, %v394
      %v396 = vsub.f32 1.5, %v395
      %v397 = vmul.f32 %v392, %v396
      %vm398 = vweird.f32 %v376
      %vm399 = vweird.f32 %v392
      %vm400 = vmor %vm398, %vm399
      %v401 = vsel %vm400, %v392, %v397
      %v402 = vrsqrt.pop %v377
      %v403 = vmul.f32 %v402, %v377
      %v404 = vmul.f32 %v403, %v402
      %v405 = vmul.f32 0.5, %v404
      %v406 = vsub.f32 1.5, %v405
      %v407 = vmul.f32 %v402, %v406
      %vm408 = vweird.f32 %v377
      %vm409 = vweird.f32 %v402
      %vm410 = vmor %vm408, %vm409
      %v411 = vsel %vm410, %v402, %v407
      %v412 = vrsqrt.pop %v378
      %v413 = vmul.f32 %v412, %v378
      %v414 = vmul.f32 %v413, %v412
      %v415 = vmul.f32 0.5, %v414
      %v416 = vsub.f32 1.5, %v415
      %v417 = vmul.f32 %v412, %v416
      %vm418 = vweird.f32 %v378
      %vm419 = vweird.f32 %v412
      %vm420 = vmor %vm418, %vm419
      %v421 = vsel %vm420, %v412, %v417
      %v422 = vrsqrt.pop %v379
      %v423 = vmul.f32 %v422, %v379
      %v424 = vmul.f32 %v423, %v422
      %v425 = vmul.f32 0.5, %v424
      %v426 = vsub.f32 1.5, %v425
      %v427 = vmul.f32 %v422, %v426
      %vm428 = vweird.f32 %v379
      %vm429 = vweird.f32 %v422
      %vm430 = vmor %vm428, %vm429
      %v431 = vsel %vm430, %v422, %v427
      %v432 = vrsqrt.pop %v380
      %v433 = vmul.f32 %v432, %v380
      %v434 = vmul.f32 %v433, %v432
      %v435 = vmul.f32 0.5, %v434
      %v436 = vsub.f32 1.5, %v435
      %v437 = vmul.f32 %v432, %v436
      %vm438 = vweird.f32 %v380
      %vm439 = vweird.f32 %v432
      %vm440 = vmor %vm438, %vm439
      %v441 = vsel %vm440, %v432, %v437
      %v442 = vrsqrt.pop %v381
      %v443 = vmul.f32 %v442, %v381
      %v444 = vmul.f32 %v443, %v442
      %v445 = vmul.f32 0.5, %v444
      %v446 = vsub.f32 1.5, %v445
      %v447 = vmul.f32 %v442, %v446
      %vm448 = vweird.f32 %v381
      %vm449 = vweird.f32 %v442
      %vm450 = vmor %vm448, %vm449
      %v451 = vsel %vm450, %v442, %v447
      %v452 = vrsqrt.pop %v382
      %v453 = vmul.f32 %v452, %v382
      %v454 = vmul.f32 %v453, %v452
      %v455 = vmul.f32 0.5, %v454
      %v456 = vsub.f32 1.5, %v455
      %v457 = vmul.f32 %v452, %v456
      %vm458 = vweird.f32 %v382
      %vm459 = vweird.f32 %v452
      %vm460 = vmor %vm458, %vm459
      %v461 = vsel %vm460, %v452, %v457
      %v462 = vrsqrt.pop %v383
      %v463 = vmul.f32 %v462, %v383
      %v464 = vmul.f32 %v463, %v462
      %v465 = vmul.f32 0.5, %v464
      %v466 = vsub.f32 1.5, %v465
      %v467 = vmul.f32 %v462, %v466
      %vm468 = vweird.f32 %v383
      %vm469 = vweird.f32 %v462
      %vm470 = vmor %vm468, %vm469
      %v471 = vsel %vm470, %v462, %v467
      %v472 = vrsqrt.pop %v384
      %v473 = vmul.f32 %v472, %v384
      %v474 = vmul.f32 %v473, %v472
      %v475 = vmul.f32 0.5, %v474
      %v476 = vsub.f32 1.5, %v475
      %v477 = vmul.f32 %v472, %v476
      %vm478 = vweird.f32 %v384
      %vm479 = vweird.f32 %v472
      %vm480 = vmor %vm478, %vm479
      %v481 = vsel %vm480, %v472, %v477
      %v482 = vrsqrt.pop %v385
      %v483 = vmul.f32 %v482, %v385
      %v484 = vmul.f32 %v483, %v482
      %v485 = vmul.f32 0.5, %v484
      %v486 = vsub.f32 1.5, %v485
      %v487 = vmul.f32 %v482, %v486
      %vm488 = vweird.f32 %v385
      %vm489 = vweird.f32 %v482
      %vm490 = vmor %vm488, %vm489
      %v491 = vsel %vm490, %v482, %v487
      %v492 = vrsqrt.pop %v386
      %v493 = vmul.f32 %v492, %v386
      %v494 = vmul.f32 %v493, %v492
      %v495 = vmul.f32 0.5, %v494
      %v496 = vsub.f32 1.5, %v495
      %v497 = vmul.f32 %v492, %v496
      %vm498 = vweird.f32 %v386
      %vm499 = vweird.f32 %v492
      %vm500 = vmor %vm498, %vm499
      %v501 = vsel %vm500, %v492, %v497
      %v502 = vrsqrt.pop %v387
      %v503 = vmul.f32 %v502, %v387
      %v504 = vmul.f32 %v503, %v502
      %v505 = vmul.f32 0.5, %v504
      %v506 = vsub.f32 1.5, %v505
      %v507 = vmul.f32 %v502, %v506
      %vm508 = vweird.f32 %v387
      %vm509 = vweird.f32 %v502
      %vm510 = vmor %vm508, %vm509
      %v511 = vsel %vm510, %v502, %v507
      %v512 = vrsqrt.pop %v388
      %v513 = vmul.f32 %v512, %v388
      %v514 = vmul.f32 %v513, %v512
      %v515 = vmul.f32 0.5, %v514
      %v516 = vsub.f32 1.5, %v515
      %v517 = vmul.f32 %v512, %v516
      %vm518 = vweird.f32 %v388
      %vm519 = vweird.f32 %v512
      %vm520 = vmor %vm518, %vm519
      %v521 = vsel %vm520, %v512, %v517
      %v522 = vrsqrt.pop %v389
      %v523 = vmul.f32 %v522, %v389
      %v524 = vmul.f32 %v523, %v522
      %v525 = vmul.f32 0.5, %v524
      %v526 = vsub.f32 1.5, %v525
      %v527 = vmul.f32 %v522, %v526
      %vm528 = vweird.f32 %v389
      %vm529 = vweird.f32 %v522
      %vm530 = vmor %vm528, %vm529
      %v531 = vsel %vm530, %v522, %v527
      %v532 = vrsqrt.pop %v390
      %v533 = vmul.f32 %v532, %v390
      %v534 = vmul.f32 %v533, %v532
      %v535 = vmul.f32 0.5, %v534
      %v536 = vsub.f32 1.5, %v535
      %v537 = vmul.f32 %v532, %v536
      %vm538 = vweird.f32 %v390
      %vm539 = vweird.f32 %v532
      %vm540 = vmor %vm538, %vm539
      %v541 = vsel %vm540, %v532, %v537
      %v542 = vrsqrt.pop %v391
      %v543 = vmul.f32 %v542, %v391
      %v544 = vmul.f32 %v543, %v542
      %v545 = vmul.f32 0.5, %v544
      %v546 = vsub.f32 1.5, %v545
      %v547 = vmul.f32 %v542, %v546
      %vm548 = vweird.f32 %v391
      %vm549 = vweird.f32 %v542
      %vm550 = vmor %vm548, %vm549
      %v551 = vsel %vm550, %v542, %v547
      %v552 = vmul.f32 %v296, %v401
      %v553 = vmul.f32 %v297, %v411
      %v554 = vmul.f32 %v298, %v421
      %v555 = vmul.f32 %v299, %v431
      %v556 = vmul.f32 %v300, %v441
      %v557 = vmul.f32 %v301, %v451
      %v558 = vmul.f32 %v302, %v461
      %v559 = vmul.f32 %v303, %v471
      %v560 = vmul.f32 %v304, %v481
      %v561 = vmul.f32 %v305, %v491
      %v562 = vmul.f32 %v306, %v501
      %v563 = vmul.f32 %v307, %v511
      %v564 = vmul.f32 %v308, %v521
      %v565 = vmul.f32 %v309, %v531
      %v566 = vmul.f32 %v310, %v541
      %v567 = vmul.f32 %v311, %v551
      %v568 = vld [vmem:[%s1] sm:$0x1]
      %v570 = vperm.slane %v568, 0
      %v572 = vmul.f32 %v552, %v570
      %v573 = vmul.f32 %v553, %v570
      %v574 = vmul.f32 %v554, %v570
      %v575 = vmul.f32 %v555, %v570
      %v576 = vmul.f32 %v556, %v570
      %v577 = vmul.f32 %v557, %v570
      %v578 = vmul.f32 %v558, %v570
      %v579 = vmul.f32 %v559, %v570
      %v580 = vmul.f32 %v560, %v570
      %v581 = vmul.f32 %v561, %v570
      %v582 = vmul.f32 %v562, %v570
      %v583 = vmul.f32 %v563, %v570
      %v584 = vmul.f32 %v564, %v570
      %v585 = vmul.f32 %v565, %v570
      %v586 = vmul.f32 %v566, %v570
      %v587 = vmul.f32 %v567, %v570
      %v588 = vld [vmem:[%s2] sm:$0x1]
      %v590 = vperm.slane %v588, 0
      %v592 = vadd.f32 %v572, %v590
      %v593 = vadd.f32 %v573, %v590
      %v594 = vadd.f32 %v574, %v590
      %v595 = vadd.f32 %v575, %v590
      %v596 = vadd.f32 %v576, %v590
      %v597 = vadd.f32 %v577, %v590
      %v598 = vadd.f32 %v578, %v590
      %v599 = vadd.f32 %v579, %v590
      %v600 = vadd.f32 %v580, %v590
      %v601 = vadd.f32 %v581, %v590
      %v602 = vadd.f32 %v582, %v590
      %v603 = vadd.f32 %v583, %v590
      %v604 = vadd.f32 %v584, %v590
      %v605 = vadd.f32 %v585, %v590
      %v606 = vadd.f32 %v586, %v590
      %v607 = vadd.f32 %v587, %v590
      %v608 = vld [vmem:[%s3] sm:$0xff]
      %v609 = vld [vmem:[%s3 + $0x8] sm:$0xff]
      %v610 = vld [vmem:[%s3 + $0x10] sm:$0xff]
      %v611 = vld [vmem:[%s3 + $0x18] sm:$0xff]
      %v612 = vld [vmem:[%s3 + $0x20] sm:$0xff]
      %v613 = vld [vmem:[%s3 + $0x28] sm:$0xff]
      %v614 = vld [vmem:[%s3 + $0x30] sm:$0xff]
      %v615 = vld [vmem:[%s3 + $0x38] sm:$0xff]
      %v616 = vld [vmem:[%s3 + $0x40] sm:$0xff]
      %v617 = vld [vmem:[%s3 + $0x48] sm:$0xff]
      %v618 = vld [vmem:[%s3 + $0x50] sm:$0xff]
      %v619 = vld [vmem:[%s3 + $0x58] sm:$0xff]
      %v620 = vld [vmem:[%s3 + $0x60] sm:$0xff]
      %v621 = vld [vmem:[%s3 + $0x68] sm:$0xff]
      %v622 = vld [vmem:[%s3 + $0x70] sm:$0xff]
      %v623 = vld [vmem:[%s3 + $0x78] sm:$0xff]
      %v624 = vld [vmem:[%s3 + $0x80] sm:$0xff]
      %v625 = vld [vmem:[%s3 + $0x88] sm:$0xff]
      %v626 = vld [vmem:[%s3 + $0x90] sm:$0xff]
      %v627 = vld [vmem:[%s3 + $0x98] sm:$0xff]
      %v628 = vld [vmem:[%s3 + $0xa0] sm:$0xff]
      %v629 = vld [vmem:[%s3 + $0xa8] sm:$0xff]
      %v630 = vld [vmem:[%s3 + $0xb0] sm:$0xff]
      %v631 = vld [vmem:[%s3 + $0xb8] sm:$0xff]
      %v632 = vld [vmem:[%s3 + $0xc0] sm:$0xff]
      %v633 = vld [vmem:[%s3 + $0xc8] sm:$0xff]
      %v634 = vld [vmem:[%s3 + $0xd0] sm:$0xff]
      %v635 = vld [vmem:[%s3 + $0xd8] sm:$0xff]
      %v636 = vld [vmem:[%s3 + $0xe0] sm:$0xff]
      %v637 = vld [vmem:[%s3 + $0xe8] sm:$0xff]
      %v638 = vld [vmem:[%s3 + $0xf0] sm:$0xff]
      %v639 = vld [vmem:[%s3 + $0xf8] sm:$0xff]
      %v640 = vld [vmem:[%s3 + $0x100] sm:$0xff]
      %v641 = vld [vmem:[%s3 + $0x108] sm:$0xff]
      %v642 = vld [vmem:[%s3 + $0x110] sm:$0xff]
      %v643 = vld [vmem:[%s3 + $0x118] sm:$0xff]
      %v644 = vld [vmem:[%s3 + $0x120] sm:$0xff]
      %v645 = vld [vmem:[%s3 + $0x128] sm:$0xff]
      %v646 = vld [vmem:[%s3 + $0x130] sm:$0xff]
      %v647 = vld [vmem:[%s3 + $0x138] sm:$0xff]
      %v648 = vld [vmem:[%s3 + $0x140] sm:$0xff]
      %v649 = vld [vmem:[%s3 + $0x148] sm:$0xff]
      %v650 = vld [vmem:[%s3 + $0x150] sm:$0xff]
      %v651 = vld [vmem:[%s3 + $0x158] sm:$0xff]
      %v652 = vld [vmem:[%s3 + $0x160] sm:$0xff]
      %v653 = vld [vmem:[%s3 + $0x168] sm:$0xff]
      %v654 = vld [vmem:[%s3 + $0x170] sm:$0xff]
      %v655 = vld [vmem:[%s3 + $0x178] sm:$0xff]
      %v656 = vld [vmem:[%s3 + $0x180] sm:$0xff]
      %v657 = vld [vmem:[%s3 + $0x188] sm:$0xff]
      %v658 = vld [vmem:[%s3 + $0x190] sm:$0xff]
      %v659 = vld [vmem:[%s3 + $0x198] sm:$0xff]
      %v660 = vld [vmem:[%s3 + $0x1a0] sm:$0xff]
      %v661 = vld [vmem:[%s3 + $0x1a8] sm:$0xff]
      %v662 = vld [vmem:[%s3 + $0x1b0] sm:$0xff]
      %v663 = vld [vmem:[%s3 + $0x1b8] sm:$0xff]
      %v664 = vld [vmem:[%s3 + $0x1c0] sm:$0xff]
      %v665 = vld [vmem:[%s3 + $0x1c8] sm:$0xff]
      %v666 = vld [vmem:[%s3 + $0x1d0] sm:$0xff]
      %v667 = vld [vmem:[%s3 + $0x1d8] sm:$0xff]
      %v668 = vld [vmem:[%s3 + $0x1e0] sm:$0xff]
      %v669 = vld [vmem:[%s3 + $0x1e8] sm:$0xff]
      %v670 = vld [vmem:[%s3 + $0x1f0] sm:$0xff]
      %v671 = vld [vmem:[%s3 + $0x1f8] sm:$0xff]
      %v672 = vld [vmem:[%s3 + $0x200] sm:$0xff]
      %v673 = vld [vmem:[%s3 + $0x208] sm:$0xff]
      %v674 = vld [vmem:[%s3 + $0x210] sm:$0xff]
      %v675 = vld [vmem:[%s3 + $0x218] sm:$0xff]
      %v676 = vld [vmem:[%s3 + $0x220] sm:$0xff]
      %v677 = vld [vmem:[%s3 + $0x228] sm:$0xff]
      %v678 = vld [vmem:[%s3 + $0x230] sm:$0xff]
      %v679 = vld [vmem:[%s3 + $0x238] sm:$0xff]
      %v680 = vld [vmem:[%s3 + $0x240] sm:$0xff]
      %v681 = vld [vmem:[%s3 + $0x248] sm:$0xff]
      %v682 = vld [vmem:[%s3 + $0x250] sm:$0xff]
      %v683 = vld [vmem:[%s3 + $0x258] sm:$0xff]
      %v684 = vld [vmem:[%s3 + $0x260] sm:$0xff]
      %v685 = vld [vmem:[%s3 + $0x268] sm:$0xff]
      %v686 = vld [vmem:[%s3 + $0x270] sm:$0xff]
      %v687 = vld [vmem:[%s3 + $0x278] sm:$0xff]
      %v688 = vld [vmem:[%s3 + $0x280] sm:$0xff]
      %v689 = vld [vmem:[%s3 + $0x288] sm:$0xff]
      %v690 = vld [vmem:[%s3 + $0x290] sm:$0xff]
      %v691 = vld [vmem:[%s3 + $0x298] sm:$0xff]
      %v692 = vld [vmem:[%s3 + $0x2a0] sm:$0xff]
      %v693 = vld [vmem:[%s3 + $0x2a8] sm:$0xff]
      %v694 = vld [vmem:[%s3 + $0x2b0] sm:$0xff]
      %v695 = vld [vmem:[%s3 + $0x2b8] sm:$0xff]
      %v696 = vld [vmem:[%s3 + $0x2c0] sm:$0xff]
      %v697 = vld [vmem:[%s3 + $0x2c8] sm:$0xff]
      %v698 = vld [vmem:[%s3 + $0x2d0] sm:$0xff]
      %v699 = vld [vmem:[%s3 + $0x2d8] sm:$0xff]
      %v700 = vld [vmem:[%s3 + $0x2e0] sm:$0xff]
      %v701 = vld [vmem:[%s3 + $0x2e8] sm:$0xff]
      %v702 = vld [vmem:[%s3 + $0x2f0] sm:$0xff]
      %v703 = vld [vmem:[%s3 + $0x2f8] sm:$0xff]
      %704 = vmatpush.msra.mxu0 %v698
      %705 = vmatpush.msra.mxu0 %v692
      %706 = vmatpush.msra.mxu0 %v686
      %707 = vmatpush.msra.mxu0 %v680
      %708 = vmatpush.msra.mxu0 %v674
      %709 = vmatpush.msra.mxu0 %v668
      %710 = vmatpush.msra.mxu0 %v662
      %711 = vmatpush.msra.mxu0 %v656
      %712 = vmatpush.msra.mxu0 %v650
      %713 = vmatpush.msra.mxu0 %v644
      %714 = vmatpush.msra.mxu0 %v638
      %715 = vmatpush.msra.mxu0 %v632
      %716 = vmatpush.msra.mxu0 %v626
      %717 = vmatpush.msra.mxu0 %v620
      %718 = vmatpush.msra.mxu0 %v614
      %719 = vmatpush.msra.mxu0 %v608
      %720 = vmatmul.f32.gmra.mxu0 %v592
      %v721 = vpop.f32.mrf.mxu0
      %v722 = vadd.f32 0.0, %v721
      %723 = vmatmul.f32.gmra.mxu0 %v593
      %v724 = vpop.f32.mrf.mxu0
      %v725 = vadd.f32 0.0, %v724
      %726 = vmatmul.f32.gmra.mxu0 %v594
      %v727 = vpop.f32.mrf.mxu0
      %v728 = vadd.f32 0.0, %v727
      %729 = vmatmul.f32.gmra.mxu0 %v595
      %v730 = vpop.f32.mrf.mxu0
      %v731 = vadd.f32 0.0, %v730
      %732 = vmatmul.f32.gmra.mxu0 %v596
      %v733 = vpop.f32.mrf.mxu0
      %v734 = vadd.f32 0.0, %v733
      %735 = vmatmul.f32.gmra.mxu0 %v597
      %v736 = vpop.f32.mrf.mxu0
      %v737 = vadd.f32 0.0, %v736
      %738 = vmatmul.f32.gmra.mxu0 %v598
      %v739 = vpop.f32.mrf.mxu0
      %v740 = vadd.f32 0.0, %v739
      %741 = vmatmul.f32.gmra.mxu0 %v599
      %v742 = vpop.f32.mrf.mxu0
      %v743 = vadd.f32 0.0, %v742
      %744 = vmatmul.f32.gmra.mxu0 %v600
      %v745 = vpop.f32.mrf.mxu0
      %v746 = vadd.f32 0.0, %v745
      %747 = vmatmul.f32.gmra.mxu0 %v601
      %v748 = vpop.f32.mrf.mxu0
      %v749 = vadd.f32 0.0, %v748
      %750 = vmatmul.f32.gmra.mxu0 %v602
      %v751 = vpop.f32.mrf.mxu0
      %v752 = vadd.f32 0.0, %v751
      %753 = vmatmul.f32.gmra.mxu0 %v603
      %v754 = vpop.f32.mrf.mxu0
      %v755 = vadd.f32 0.0, %v754
      %756 = vmatmul.f32.gmra.mxu0 %v604
      %v757 = vpop.f32.mrf.mxu0
      %v758 = vadd.f32 0.0, %v757
      %759 = vmatmul.f32.gmra.mxu0 %v605
      %v760 = vpop.f32.mrf.mxu0
      %v761 = vadd.f32 0.0, %v760
      %762 = vmatmul.f32.gmra.mxu0 %v606
      %v763 = vpop.f32.mrf.mxu0
      %v764 = vadd.f32 0.0, %v763
      %765 = vmatmul.f32.gmra.mxu0 %v607
      %v766 = vpop.f32.mrf.mxu0
      %v767 = vadd.f32 0.0, %v766
      %768 = vdwg.mxu0
      %769 = vmatpush.msra.mxu0 %v699
      %770 = vmatpush.msra.mxu0 %v693
      %771 = vmatpush.msra.mxu0 %v687
      %772 = vmatpush.msra.mxu0 %v681
      %773 = vmatpush.msra.mxu0 %v675
      %774 = vmatpush.msra.mxu0 %v669
      %775 = vmatpush.msra.mxu0 %v663
      %776 = vmatpush.msra.mxu0 %v657
      %777 = vmatpush.msra.mxu0 %v651
      %778 = vmatpush.msra.mxu0 %v645
      %779 = vmatpush.msra.mxu0 %v639
      %780 = vmatpush.msra.mxu0 %v633
      %781 = vmatpush.msra.mxu0 %v627
      %782 = vmatpush.msra.mxu0 %v621
      %783 = vmatpush.msra.mxu0 %v615
      %784 = vmatpush.msra.mxu0 %v609
      %785 = vmatmul.f32.gmra.mxu0 %v592
      %v786 = vpop.f32.mrf.mxu0
      %v787 = vadd.f32 0.0, %v786
      %788 = vmatmul.f32.gmra.mxu0 %v593
      %v789 = vpop.f32.mrf.mxu0
      %v790 = vadd.f32 0.0, %v789
      %791 = vmatmul.f32.gmra.mxu0 %v594
      %v792 = vpop.f32.mrf.mxu0
      %v793 = vadd.f32 0.0, %v792
      %794 = vmatmul.f32.gmra.mxu0 %v595
      %v795 = vpop.f32.mrf.mxu0
      %v796 = vadd.f32 0.0, %v795
      %797 = vmatmul.f32.gmra.mxu0 %v596
      %v798 = vpop.f32.mrf.mxu0
      %v799 = vadd.f32 0.0, %v798
      %800 = vmatmul.f32.gmra.mxu0 %v597
      %v801 = vpop.f32.mrf.mxu0
      %v802 = vadd.f32 0.0, %v801
      %803 = vmatmul.f32.gmra.mxu0 %v598
      %v804 = vpop.f32.mrf.mxu0
      %v805 = vadd.f32 0.0, %v804
      %806 = vmatmul.f32.gmra.mxu0 %v599
      %v807 = vpop.f32.mrf.mxu0
      %v808 = vadd.f32 0.0, %v807
      %809 = vmatmul.f32.gmra.mxu0 %v600
      %v810 = vpop.f32.mrf.mxu0
      %v811 = vadd.f32 0.0, %v810
      %812 = vmatmul.f32.gmra.mxu0 %v601
      %v813 = vpop.f32.mrf.mxu0
      %v814 = vadd.f32 0.0, %v813
      %815 = vmatmul.f32.gmra.mxu0 %v602
      %v816 = vpop.f32.mrf.mxu0
      %v817 = vadd.f32 0.0, %v816
      %818 = vmatmul.f32.gmra.mxu0 %v603
      %v819 = vpop.f32.mrf.mxu0
      %v820 = vadd.f32 0.0, %v819
      %821 = vmatmul.f32.gmra.mxu0 %v604
      %v822 = vpop.f32.mrf.mxu0
      %v823 = vadd.f32 0.0, %v822
      %824 = vmatmul.f32.gmra.mxu0 %v605
      %v825 = vpop.f32.mrf.mxu0
      %v826 = vadd.f32 0.0, %v825
      %827 = vmatmul.f32.gmra.mxu0 %v606
      %v828 = vpop.f32.mrf.mxu0
      %v829 = vadd.f32 0.0, %v828
      %830 = vmatmul.f32.gmra.mxu0 %v607
      %v831 = vpop.f32.mrf.mxu0
      %v832 = vadd.f32 0.0, %v831
      %833 = vdwg.mxu0
      %834 = vmatpush.msra.mxu0 %v700
      %835 = vmatpush.msra.mxu0 %v694
      %836 = vmatpush.msra.mxu0 %v688
      %837 = vmatpush.msra.mxu0 %v682
      %838 = vmatpush.msra.mxu0 %v676
      %839 = vmatpush.msra.mxu0 %v670
      %840 = vmatpush.msra.mxu0 %v664
      %841 = vmatpush.msra.mxu0 %v658
      %842 = vmatpush.msra.mxu0 %v652
      %843 = vmatpush.msra.mxu0 %v646
      %844 = vmatpush.msra.mxu0 %v640
      %845 = vmatpush.msra.mxu0 %v634
      %846 = vmatpush.msra.mxu0 %v628
      %847 = vmatpush.msra.mxu0 %v622
      %848 = vmatpush.msra.mxu0 %v616
      %849 = vmatpush.msra.mxu0 %v610
      %850 = vmatmul.f32.gmra.mxu0 %v592
      %v851 = vpop.f32.mrf.mxu0
      %v852 = vadd.f32 0.0, %v851
      %853 = vmatmul.f32.gmra.mxu0 %v593
      %v854 = vpop.f32.mrf.mxu0
      %v855 = vadd.f32 0.0, %v854
      %856 = vmatmul.f32.gmra.mxu0 %v594
      %v857 = vpop.f32.mrf.mxu0
      %v858 = vadd.f32 0.0, %v857
      %859 = vmatmul.f32.gmra.mxu0 %v595
      %v860 = vpop.f32.mrf.mxu0
      %v861 = vadd.f32 0.0, %v860
      %862 = vmatmul.f32.gmra.mxu0 %v596
      %v863 = vpop.f32.mrf.mxu0
      %v864 = vadd.f32 0.0, %v863
      %865 = vmatmul.f32.gmra.mxu0 %v597
      %v866 = vpop.f32.mrf.mxu0
      %v867 = vadd.f32 0.0, %v866
      %868 = vmatmul.f32.gmra.mxu0 %v598
      %v869 = vpop.f32.mrf.mxu0
      %v870 = vadd.f32 0.0, %v869
      %871 = vmatmul.f32.gmra.mxu0 %v599
      %v872 = vpop.f32.mrf.mxu0
      %v873 = vadd.f32 0.0, %v872
      %874 = vmatmul.f32.gmra.mxu0 %v600
      %v875 = vpop.f32.mrf.mxu0
      %v876 = vadd.f32 0.0, %v875
      %877 = vmatmul.f32.gmra.mxu0 %v601
      %v878 = vpop.f32.mrf.mxu0
      %v879 = vadd.f32 0.0, %v878
      %880 = vmatmul.f32.gmra.mxu0 %v602
      %v881 = vpop.f32.mrf.mxu0
      %v882 = vadd.f32 0.0, %v881
      %883 = vmatmul.f32.gmra.mxu0 %v603
      %v884 = vpop.f32.mrf.mxu0
      %v885 = vadd.f32 0.0, %v884
      %886 = vmatmul.f32.gmra.mxu0 %v604
      %v887 = vpop.f32.mrf.mxu0
      %v888 = vadd.f32 0.0, %v887
      %889 = vmatmul.f32.gmra.mxu0 %v605
      %v890 = vpop.f32.mrf.mxu0
      %v891 = vadd.f32 0.0, %v890
      %892 = vmatmul.f32.gmra.mxu0 %v606
      %v893 = vpop.f32.mrf.mxu0
      %v894 = vadd.f32 0.0, %v893
      %895 = vmatmul.f32.gmra.mxu0 %v607
      %v896 = vpop.f32.mrf.mxu0
      %v897 = vadd.f32 0.0, %v896
      %898 = vdwg.mxu0
      %899 = vmatpush.msra.mxu0 %v701
      %900 = vmatpush.msra.mxu0 %v695
      %901 = vmatpush.msra.mxu0 %v689
      %902 = vmatpush.msra.mxu0 %v683
      %903 = vmatpush.msra.mxu0 %v677
      %904 = vmatpush.msra.mxu0 %v671
      %905 = vmatpush.msra.mxu0 %v665
      %906 = vmatpush.msra.mxu0 %v659
      %907 = vmatpush.msra.mxu0 %v653
      %908 = vmatpush.msra.mxu0 %v647
      %909 = vmatpush.msra.mxu0 %v641
      %910 = vmatpush.msra.mxu0 %v635
      %911 = vmatpush.msra.mxu0 %v629
      %912 = vmatpush.msra.mxu0 %v623
      %913 = vmatpush.msra.mxu0 %v617
      %914 = vmatpush.msra.mxu0 %v611
      %915 = vmatmul.f32.gmra.mxu0 %v592
      %v916 = vpop.f32.mrf.mxu0
      %v917 = vadd.f32 0.0, %v916
      %918 = vmatmul.f32.gmra.mxu0 %v593
      %v919 = vpop.f32.mrf.mxu0
      %v920 = vadd.f32 0.0, %v919
      %921 = vmatmul.f32.gmra.mxu0 %v594
      %v922 = vpop.f32.mrf.mxu0
      %v923 = vadd.f32 0.0, %v922
      %924 = vmatmul.f32.gmra.mxu0 %v595
      %v925 = vpop.f32.mrf.mxu0
      %v926 = vadd.f32 0.0, %v925
      %927 = vmatmul.f32.gmra.mxu0 %v596
      %v928 = vpop.f32.mrf.mxu0
      %v929 = vadd.f32 0.0, %v928
      %930 = vmatmul.f32.gmra.mxu0 %v597
      %v931 = vpop.f32.mrf.mxu0
      %v932 = vadd.f32 0.0, %v931
      %933 = vmatmul.f32.gmra.mxu0 %v598
      %v934 = vpop.f32.mrf.mxu0
      %v935 = vadd.f32 0.0, %v934
      %936 = vmatmul.f32.gmra.mxu0 %v599
      %v937 = vpop.f32.mrf.mxu0
      %v938 = vadd.f32 0.0, %v937
      %939 = vmatmul.f32.gmra.mxu0 %v600
      %v940 = vpop.f32.mrf.mxu0
      %v941 = vadd.f32 0.0, %v940
      %942 = vmatmul.f32.gmra.mxu0 %v601
      %v943 = vpop.f32.mrf.mxu0
      %v944 = vadd.f32 0.0, %v943
      %945 = vmatmul.f32.gmra.mxu0 %v602
      %v946 = vpop.f32.mrf.mxu0
      %v947 = vadd.f32 0.0, %v946
      %948 = vmatmul.f32.gmra.mxu0 %v603
      %v949 = vpop.f32.mrf.mxu0
      %v950 = vadd.f32 0.0, %v949
      %951 = vmatmul.f32.gmra.mxu0 %v604
      %v952 = vpop.f32.mrf.mxu0
      %v953 = vadd.f32 0.0, %v952
      %954 = vmatmul.f32.gmra.mxu0 %v605
      %v955 = vpop.f32.mrf.mxu0
      %v956 = vadd.f32 0.0, %v955
      %957 = vmatmul.f32.gmra.mxu0 %v606
      %v958 = vpop.f32.mrf.mxu0
      %v959 = vadd.f32 0.0, %v958
      %960 = vmatmul.f32.gmra.mxu0 %v607
      %v961 = vpop.f32.mrf.mxu0
      %v962 = vadd.f32 0.0, %v961
      %963 = vdwg.mxu0
      %964 = vmatpush.msra.mxu0 %v702
      %965 = vmatpush.msra.mxu0 %v696
      %966 = vmatpush.msra.mxu0 %v690
      %967 = vmatpush.msra.mxu0 %v684
      %968 = vmatpush.msra.mxu0 %v678
      %969 = vmatpush.msra.mxu0 %v672
      %970 = vmatpush.msra.mxu0 %v666
      %971 = vmatpush.msra.mxu0 %v660
      %972 = vmatpush.msra.mxu0 %v654
      %973 = vmatpush.msra.mxu0 %v648
      %974 = vmatpush.msra.mxu0 %v642
      %975 = vmatpush.msra.mxu0 %v636
      %976 = vmatpush.msra.mxu0 %v630
      %977 = vmatpush.msra.mxu0 %v624
      %978 = vmatpush.msra.mxu0 %v618
      %979 = vmatpush.msra.mxu0 %v612
      %980 = vmatmul.f32.gmra.mxu0 %v592
      %v981 = vpop.f32.mrf.mxu0
      %v982 = vadd.f32 0.0, %v981
      %983 = vmatmul.f32.gmra.mxu0 %v593
      %v984 = vpop.f32.mrf.mxu0
      %v985 = vadd.f32 0.0, %v984
      %986 = vmatmul.f32.gmra.mxu0 %v594
      %v987 = vpop.f32.mrf.mxu0
      %v988 = vadd.f32 0.0, %v987
      %989 = vmatmul.f32.gmra.mxu0 %v595
      %v990 = vpop.f32.mrf.mxu0
      %v991 = vadd.f32 0.0, %v990
      %992 = vmatmul.f32.gmra.mxu0 %v596
      %v993 = vpop.f32.mrf.mxu0
      %v994 = vadd.f32 0.0, %v993
      %995 = vmatmul.f32.gmra.mxu0 %v597
      %v996 = vpop.f32.mrf.mxu0
      %v997 = vadd.f32 0.0, %v996
      %998 = vmatmul.f32.gmra.mxu0 %v598
      %v999 = vpop.f32.mrf.mxu0
      %v1000 = vadd.f32 0.0, %v999
      %1001 = vmatmul.f32.gmra.mxu0 %v599
      %v1002 = vpop.f32.mrf.mxu0
      %v1003 = vadd.f32 0.0, %v1002
      %1004 = vmatmul.f32.gmra.mxu0 %v600
      %v1005 = vpop.f32.mrf.mxu0
      %v1006 = vadd.f32 0.0, %v1005
      %1007 = vmatmul.f32.gmra.mxu0 %v601
      %v1008 = vpop.f32.mrf.mxu0
      %v1009 = vadd.f32 0.0, %v1008
      %1010 = vmatmul.f32.gmra.mxu0 %v602
      %v1011 = vpop.f32.mrf.mxu0
      %v1012 = vadd.f32 0.0, %v1011
      %1013 = vmatmul.f32.gmra.mxu0 %v603
      %v1014 = vpop.f32.mrf.mxu0
      %v1015 = vadd.f32 0.0, %v1014
      %1016 = vmatmul.f32.gmra.mxu0 %v604
      %v1017 = vpop.f32.mrf.mxu0
      %v1018 = vadd.f32 0.0, %v1017
      %1019 = vmatmul.f32.gmra.mxu0 %v605
      %v1020 = vpop.f32.mrf.mxu0
      %v1021 = vadd.f32 0.0, %v1020
      %1022 = vmatmul.f32.gmra.mxu0 %v606
      %v1023 = vpop.f32.mrf.mxu0
      %v1024 = vadd.f32 0.0, %v1023
      %1025 = vmatmul.f32.gmra.mxu0 %v607
      %v1026 = vpop.f32.mrf.mxu0
      %v1027 = vadd.f32 0.0, %v1026
      %1028 = vdwg.mxu0
      %1029 = vmatpush.msra.mxu0 %v703
      %1030 = vmatpush.msra.mxu0 %v697
      %1031 = vmatpush.msra.mxu0 %v691
      %1032 = vmatpush.msra.mxu0 %v685
      %1033 = vmatpush.msra.mxu0 %v679
      %1034 = vmatpush.msra.mxu0 %v673
      %1035 = vmatpush.msra.mxu0 %v667
      %1036 = vmatpush.msra.mxu0 %v661
      %1037 = vmatpush.msra.mxu0 %v655
      %1038 = vmatpush.msra.mxu0 %v649
      %1039 = vmatpush.msra.mxu0 %v643
      %1040 = vmatpush.msra.mxu0 %v637
      %1041 = vmatpush.msra.mxu0 %v631
      %1042 = vmatpush.msra.mxu0 %v625
      %1043 = vmatpush.msra.mxu0 %v619
      %1044 = vmatpush.msra.mxu0 %v613
      %1045 = vmatmul.f32.gmra.mxu0 %v592
      %v1046 = vpop.f32.mrf.mxu0
      %v1047 = vadd.f32 0.0, %v1046
      %1048 = vmatmul.f32.gmra.mxu0 %v593
      %v1049 = vpop.f32.mrf.mxu0
      %v1050 = vadd.f32 0.0, %v1049
      %1051 = vmatmul.f32.gmra.mxu0 %v594
      %v1052 = vpop.f32.mrf.mxu0
      %v1053 = vadd.f32 0.0, %v1052
      %1054 = vmatmul.f32.gmra.mxu0 %v595
      %v1055 = vpop.f32.mrf.mxu0
      %v1056 = vadd.f32 0.0, %v1055
      %1057 = vmatmul.f32.gmra.mxu0 %v596
      %v1058 = vpop.f32.mrf.mxu0
      %v1059 = vadd.f32 0.0, %v1058
      %1060 = vmatmul.f32.gmra.mxu0 %v597
      %v1061 = vpop.f32.mrf.mxu0
      %v1062 = vadd.f32 0.0, %v1061
      %1063 = vmatmul.f32.gmra.mxu0 %v598
      %v1064 = vpop.f32.mrf.mxu0
      %v1065 = vadd.f32 0.0, %v1064
      %1066 = vmatmul.f32.gmra.mxu0 %v599
      %v1067 = vpop.f32.mrf.mxu0
      %v1068 = vadd.f32 0.0, %v1067
      %1069 = vmatmul.f32.gmra.mxu0 %v600
      %v1070 = vpop.f32.mrf.mxu0
      %v1071 = vadd.f32 0.0, %v1070
      %1072 = vmatmul.f32.gmra.mxu0 %v601
      %v1073 = vpop.f32.mrf.mxu0
      %v1074 = vadd.f32 0.0, %v1073
      %1075 = vmatmul.f32.gmra.mxu0 %v602
      %v1076 = vpop.f32.mrf.mxu0
      %v1077 = vadd.f32 0.0, %v1076
      %1078 = vmatmul.f32.gmra.mxu0 %v603
      %v1079 = vpop.f32.mrf.mxu0
      %v1080 = vadd.f32 0.0, %v1079
      %1081 = vmatmul.f32.gmra.mxu0 %v604
      %v1082 = vpop.f32.mrf.mxu0
      %v1083 = vadd.f32 0.0, %v1082
      %1084 = vmatmul.f32.gmra.mxu0 %v605
      %v1085 = vpop.f32.mrf.mxu0
      %v1086 = vadd.f32 0.0, %v1085
      %1087 = vmatmul.f32.gmra.mxu0 %v606
      %v1088 = vpop.f32.mrf.mxu0
      %v1089 = vadd.f32 0.0, %v1088
      %1090 = vmatmul.f32.gmra.mxu0 %v607
      %v1091 = vpop.f32.mrf.mxu0
      %v1092 = vadd.f32 0.0, %v1091
      %1093 = vdwg.mxu0
      %v1094 = vld [vmem:[%s4] sm:$0xff]
      %v1095 = vld [vmem:[%s4 + $0x8] sm:$0xff]
      %v1096 = vld [vmem:[%s4 + $0x10] sm:$0xff]
      %v1097 = vld [vmem:[%s4 + $0x18] sm:$0xff]
      %v1098 = vld [vmem:[%s4 + $0x20] sm:$0xff]
      %v1099 = vld [vmem:[%s4 + $0x28] sm:$0xff]
      %v1100 = vld [vmem:[%s4 + $0x30] sm:$0xff]
      %v1101 = vld [vmem:[%s4 + $0x38] sm:$0xff]
      %v1102 = vld [vmem:[%s4 + $0x40] sm:$0xff]
      %v1103 = vld [vmem:[%s4 + $0x48] sm:$0xff]
      %v1104 = vld [vmem:[%s4 + $0x50] sm:$0xff]
      %v1105 = vld [vmem:[%s4 + $0x58] sm:$0xff]
      %v1106 = vld [vmem:[%s4 + $0x60] sm:$0xff]
      %v1107 = vld [vmem:[%s4 + $0x68] sm:$0xff]
      %v1108 = vld [vmem:[%s4 + $0x70] sm:$0xff]
      %v1109 = vld [vmem:[%s4 + $0x78] sm:$0xff]
      %v1110 = vld [vmem:[%s4 + $0x80] sm:$0xff]
      %v1111 = vld [vmem:[%s4 + $0x88] sm:$0xff]
      %v1112 = vld [vmem:[%s4 + $0x90] sm:$0xff]
      %v1113 = vld [vmem:[%s4 + $0x98] sm:$0xff]
      %v1114 = vld [vmem:[%s4 + $0xa0] sm:$0xff]
      %v1115 = vld [vmem:[%s4 + $0xa8] sm:$0xff]
      %v1116 = vld [vmem:[%s4 + $0xb0] sm:$0xff]
      %v1117 = vld [vmem:[%s4 + $0xb8] sm:$0xff]
      %v1118 = vld [vmem:[%s4 + $0xc0] sm:$0xff]
      %v1119 = vld [vmem:[%s4 + $0xc8] sm:$0xff]
      %v1120 = vld [vmem:[%s4 + $0xd0] sm:$0xff]
      %v1121 = vld [vmem:[%s4 + $0xd8] sm:$0xff]
      %v1122 = vld [vmem:[%s4 + $0xe0] sm:$0xff]
      %v1123 = vld [vmem:[%s4 + $0xe8] sm:$0xff]
      %v1124 = vld [vmem:[%s4 + $0xf0] sm:$0xff]
      %v1125 = vld [vmem:[%s4 + $0xf8] sm:$0xff]
      %1126 = vmatpush.xpose.msra.mxu0 %v897
      %1127 = vmatpush.xpose.msra.mxu0 %v894
      %1128 = vmatpush.xpose.msra.mxu0 %v891
      %1129 = vmatpush.xpose.msra.mxu0 %v888
      %1130 = vmatpush.xpose.msra.mxu0 %v885
      %1131 = vmatpush.xpose.msra.mxu0 %v882
      %1132 = vmatpush.xpose.msra.mxu0 %v879
      %1133 = vmatpush.xpose.msra.mxu0 %v876
      %1134 = vmatpush.xpose.msra.mxu0 %v873
      %1135 = vmatpush.xpose.msra.mxu0 %v870
      %1136 = vmatpush.xpose.msra.mxu0 %v867
      %1137 = vmatpush.xpose.msra.mxu0 %v864
      %1138 = vmatpush.xpose.msra.mxu0 %v861
      %1139 = vmatpush.xpose.msra.mxu0 %v858
      %1140 = vmatpush.xpose.msra.mxu0 %v855
      %1141 = vmatpush.xpose.msra.mxu0 %v852
      %1142 = vmatmul.f32.gmra.mxu0 %v722
      %v1143 = vpop.f32.mrf.mxu0
      %v1144 = vadd.f32 0.0, %v1143
      %1145 = vmatmul.f32.gmra.mxu0 %v725
      %v1146 = vpop.f32.mrf.mxu0
      %v1147 = vadd.f32 0.0, %v1146
      %1148 = vmatmul.f32.gmra.mxu0 %v728
      %v1149 = vpop.f32.mrf.mxu0
      %v1150 = vadd.f32 0.0, %v1149
      %1151 = vmatmul.f32.gmra.mxu0 %v731
      %v1152 = vpop.f32.mrf.mxu0
      %v1153 = vadd.f32 0.0, %v1152
      %1154 = vmatmul.f32.gmra.mxu0 %v734
      %v1155 = vpop.f32.mrf.mxu0
      %v1156 = vadd.f32 0.0, %v1155
      %1157 = vmatmul.f32.gmra.mxu0 %v737
      %v1158 = vpop.f32.mrf.mxu0
      %v1159 = vadd.f32 0.0, %v1158
      %1160 = vmatmul.f32.gmra.mxu0 %v740
      %v1161 = vpop.f32.mrf.mxu0
      %v1162 = vadd.f32 0.0, %v1161
      %1163 = vmatmul.f32.gmra.mxu0 %v743
      %v1164 = vpop.f32.mrf.mxu0
      %v1165 = vadd.f32 0.0, %v1164
      %1166 = vmatmul.f32.gmra.mxu0 %v746
      %v1167 = vpop.f32.mrf.mxu0
      %v1168 = vadd.f32 0.0, %v1167
      %1169 = vmatmul.f32.gmra.mxu0 %v749
      %v1170 = vpop.f32.mrf.mxu0
      %v1171 = vadd.f32 0.0, %v1170
      %1172 = vmatmul.f32.gmra.mxu0 %v752
      %v1173 = vpop.f32.mrf.mxu0
      %v1174 = vadd.f32 0.0, %v1173
      %1175 = vmatmul.f32.gmra.mxu0 %v755
      %v1176 = vpop.f32.mrf.mxu0
      %v1177 = vadd.f32 0.0, %v1176
      %1178 = vmatmul.f32.gmra.mxu0 %v758
      %v1179 = vpop.f32.mrf.mxu0
      %v1180 = vadd.f32 0.0, %v1179
      %1181 = vmatmul.f32.gmra.mxu0 %v761
      %v1182 = vpop.f32.mrf.mxu0
      %v1183 = vadd.f32 0.0, %v1182
      %1184 = vmatmul.f32.gmra.mxu0 %v764
      %v1185 = vpop.f32.mrf.mxu0
      %v1186 = vadd.f32 0.0, %v1185
      %1187 = vmatmul.f32.gmra.mxu0 %v767
      %v1188 = vpop.f32.mrf.mxu0
      %v1189 = vadd.f32 0.0, %v1188
      %1190 = vdwg.mxu0
      %v1191 = vmul.f32 %v1144, 0.088388346
      %v1192 = vmul.f32 %v1147, 0.088388346
      %v1193 = vmul.f32 %v1150, 0.088388346
      %v1194 = vmul.f32 %v1153, 0.088388346
      %v1195 = vmul.f32 %v1156, 0.088388346
      %v1196 = vmul.f32 %v1159, 0.088388346
      %v1197 = vmul.f32 %v1162, 0.088388346
      %v1198 = vmul.f32 %v1165, 0.088388346
      %v1199 = vmul.f32 %v1168, 0.088388346
      %v1200 = vmul.f32 %v1171, 0.088388346
      %v1201 = vmul.f32 %v1174, 0.088388346
      %v1202 = vmul.f32 %v1177, 0.088388346
      %v1203 = vmul.f32 %v1180, 0.088388346
      %v1204 = vmul.f32 %v1183, 0.088388346
      %v1205 = vmul.f32 %v1186, 0.088388346
      %v1206 = vmul.f32 %v1189, 0.088388346
      %1207 = vmax.xlane.f32.xlu0 %v1191
      %v1208 = vpop.xlane.xlu0 %1207
      %1209 = vmax.xlane.f32.xlu0 %v1192
      %v1210 = vpop.xlane.xlu0 %1209
      %1211 = vmax.xlane.f32.xlu0 %v1193
      %v1212 = vpop.xlane.xlu0 %1211
      %1213 = vmax.xlane.f32.xlu0 %v1194
      %v1214 = vpop.xlane.xlu0 %1213
      %1215 = vmax.xlane.f32.xlu0 %v1195
      %v1216 = vpop.xlane.xlu0 %1215
      %1217 = vmax.xlane.f32.xlu0 %v1196
      %v1218 = vpop.xlane.xlu0 %1217
      %1219 = vmax.xlane.f32.xlu0 %v1197
      %v1220 = vpop.xlane.xlu0 %1219
      %1221 = vmax.xlane.f32.xlu0 %v1198
      %v1222 = vpop.xlane.xlu0 %1221
      %1223 = vmax.xlane.f32.xlu0 %v1199
      %v1224 = vpop.xlane.xlu0 %1223
      %1225 = vmax.xlane.f32.xlu0 %v1200
      %v1226 = vpop.xlane.xlu0 %1225
      %1227 = vmax.xlane.f32.xlu0 %v1201
      %v1228 = vpop.xlane.xlu0 %1227
      %1229 = vmax.xlane.f32.xlu0 %v1202
      %v1230 = vpop.xlane.xlu0 %1229
      %1231 = vmax.xlane.f32.xlu0 %v1203
      %v1232 = vpop.xlane.xlu0 %1231
      %1233 = vmax.xlane.f32.xlu0 %v1204
      %v1234 = vpop.xlane.xlu0 %1233
      %1235 = vmax.xlane.f32.xlu0 %v1205
      %v1236 = vpop.xlane.xlu0 %1235
      %1237 = vmax.xlane.f32.xlu0 %v1206
      %v1238 = vpop.xlane.xlu0 %1237
      %v1239 = vsub.f32 %v1191, %v1208
      %v1240 = vsub.f32 %v1192, %v1210
      %v1241 = vsub.f32 %v1193, %v1212
      %v1242 = vsub.f32 %v1194, %v1214
      %v1243 = vsub.f32 %v1195, %v1216
      %v1244 = vsub.f32 %v1196, %v1218
      %v1245 = vsub.f32 %v1197, %v1220
      %v1246 = vsub.f32 %v1198, %v1222
      %v1247 = vsub.f32 %v1199, %v1224
      %v1248 = vsub.f32 %v1200, %v1226
      %v1249 = vsub.f32 %v1201, %v1228
      %v1250 = vsub.f32 %v1202, %v1230
      %v1251 = vsub.f32 %v1203, %v1232
      %v1252 = vsub.f32 %v1204, %v1234
      %v1253 = vsub.f32 %v1205, %v1236
      %v1254 = vsub.f32 %v1206, %v1238
      %v1255 = vmul.f32 %v1239, 1.442695
      %v1256 = vpow.pop %v1255
      %v1257 = vmul.f32 %v1240, 1.442695
      %v1258 = vpow.pop %v1257
      %v1259 = vmul.f32 %v1241, 1.442695
      %v1260 = vpow.pop %v1259
      %v1261 = vmul.f32 %v1242, 1.442695
      %v1262 = vpow.pop %v1261
      %v1263 = vmul.f32 %v1243, 1.442695
      %v1264 = vpow.pop %v1263
      %v1265 = vmul.f32 %v1244, 1.442695
      %v1266 = vpow.pop %v1265
      %v1267 = vmul.f32 %v1245, 1.442695
      %v1268 = vpow.pop %v1267
      %v1269 = vmul.f32 %v1246, 1.442695
      %v1270 = vpow.pop %v1269
      %v1271 = vmul.f32 %v1247, 1.442695
      %v1272 = vpow.pop %v1271
      %v1273 = vmul.f32 %v1248, 1.442695
      %v1274 = vpow.pop %v1273
      %v1275 = vmul.f32 %v1249, 1.442695
      %v1276 = vpow.pop %v1275
      %v1277 = vmul.f32 %v1250, 1.442695
      %v1278 = vpow.pop %v1277
      %v1279 = vmul.f32 %v1251, 1.442695
      %v1280 = vpow.pop %v1279
      %v1281 = vmul.f32 %v1252, 1.442695
      %v1282 = vpow.pop %v1281
      %v1283 = vmul.f32 %v1253, 1.442695
      %v1284 = vpow.pop %v1283
      %v1285 = vmul.f32 %v1254, 1.442695
      %v1286 = vpow.pop %v1285
      %1287 = vadd.xlane.f32.xlu0 %v1256
      %v1288 = vpop.xlane.xlu0 %1287
      %1289 = vadd.xlane.f32.xlu0 %v1258
      %v1290 = vpop.xlane.xlu0 %1289
      %1291 = vadd.xlane.f32.xlu0 %v1260
      %v1292 = vpop.xlane.xlu0 %1291
      %1293 = vadd.xlane.f32.xlu0 %v1262
      %v1294 = vpop.xlane.xlu0 %1293
      %1295 = vadd.xlane.f32.xlu0 %v1264
      %v1296 = vpop.xlane.xlu0 %1295
      %1297 = vadd.xlane.f32.xlu0 %v1266
      %v1298 = vpop.xlane.xlu0 %1297
      %1299 = vadd.xlane.f32.xlu0 %v1268
      %v1300 = vpop.xlane.xlu0 %1299
      %1301 = vadd.xlane.f32.xlu0 %v1270
      %v1302 = vpop.xlane.xlu0 %1301
      %1303 = vadd.xlane.f32.xlu0 %v1272
      %v1304 = vpop.xlane.xlu0 %1303
      %1305 = vadd.xlane.f32.xlu0 %v1274
      %v1306 = vpop.xlane.xlu0 %1305
      %1307 = vadd.xlane.f32.xlu0 %v1276
      %v1308 = vpop.xlane.xlu0 %1307
      %1309 = vadd.xlane.f32.xlu0 %v1278
      %v1310 = vpop.xlane.xlu0 %1309
      %1311 = vadd.xlane.f32.xlu0 %v1280
      %v1312 = vpop.xlane.xlu0 %1311
      %1313 = vadd.xlane.f32.xlu0 %v1282
      %v1314 = vpop.xlane.xlu0 %1313
      %1315 = vadd.xlane.f32.xlu0 %v1284
      %v1316 = vpop.xlane.xlu0 %1315
      %1317 = vadd.xlane.f32.xlu0 %v1286
      %v1318 = vpop.xlane.xlu0 %1317
      %v1319 = vrcp.pop %v1288
      %v1320 = vmul.f32 %v1288, %v1319
      %v1321 = vsub.f32 1.0, %v1320
      %v1322 = vmul.f32 %v1319, %v1321
      %v1323 = vadd.f32 %v1319, %v1322
      %vm1324 = vweird.f32 %v1288
      %vm1325 = vweird.f32 %v1319
      %vm1326 = vmor %vm1324, %vm1325
      %v1327 = vsel %vm1326, %v1319, %v1323
      %v1328 = vand.u32 2147483647, %v1288
      %vm1329 = vcmp.eq.f32.partialorder %v1328, 8.507059e+37
      %v1330 = vand.u32 %v1288, 2147483648
      %v1331 = vor.u32 1.1754944e-38, %v1330
      %v1332 = vsel %vm1329, %v1331, %v1327
      %v1333 = vmul.f32 %v1256, %v1332
      %v1334 = vrcp.pop %v1290
      %v1335 = vmul.f32 %v1290, %v1334
      %v1336 = vsub.f32 1.0, %v1335
      %v1337 = vmul.f32 %v1334, %v1336
      %v1338 = vadd.f32 %v1334, %v1337
      %vm1339 = vweird.f32 %v1290
      %vm1340 = vweird.f32 %v1334
      %vm1341 = vmor %vm1339, %vm1340
      %v1342 = vsel %vm1341, %v1334, %v1338
      %v1343 = vand.u32 2147483647, %v1290
      %vm1344 = vcmp.eq.f32.partialorder %v1343, 8.507059e+37
      %v1345 = vand.u32 %v1290, 2147483648
      %v1346 = vor.u32 1.1754944e-38, %v1345
      %v1347 = vsel %vm1344, %v1346, %v1342
      %v1348 = vmul.f32 %v1258, %v1347
      %v1349 = vrcp.pop %v1292
      %v1350 = vmul.f32 %v1292, %v1349
      %v1351 = vsub.f32 1.0, %v1350
      %v1352 = vmul.f32 %v1349, %v1351
      %v1353 = vadd.f32 %v1349, %v1352
      %vm1354 = vweird.f32 %v1292
      %vm1355 = vweird.f32 %v1349
      %vm1356 = vmor %vm1354, %vm1355
      %v1357 = vsel %vm1356, %v1349, %v1353
      %v1358 = vand.u32 2147483647, %v1292
      %vm1359 = vcmp.eq.f32.partialorder %v1358, 8.507059e+37
      %v1360 = vand.u32 %v1292, 2147483648
      %v1361 = vor.u32 1.1754944e-38, %v1360
      %v1362 = vsel %vm1359, %v1361, %v1357
      %v1363 = vmul.f32 %v1260, %v1362
      %v1364 = vrcp.pop %v1294
      %v1365 = vmul.f32 %v1294, %v1364
      %v1366 = vsub.f32 1.0, %v1365
      %v1367 = vmul.f32 %v1364, %v1366
      %v1368 = vadd.f32 %v1364, %v1367
      %vm1369 = vweird.f32 %v1294
      %vm1370 = vweird.f32 %v1364
      %vm1371 = vmor %vm1369, %vm1370
      %v1372 = vsel %vm1371, %v1364, %v1368
      %v1373 = vand.u32 2147483647, %v1294
      %vm1374 = vcmp.eq.f32.partialorder %v1373, 8.507059e+37
      %v1375 = vand.u32 %v1294, 2147483648
      %v1376 = vor.u32 1.1754944e-38, %v1375
      %v1377 = vsel %vm1374, %v1376, %v1372
      %v1378 = vmul.f32 %v1262, %v1377
      %v1379 = vrcp.pop %v1296
      %v1380 = vmul.f32 %v1296, %v1379
      %v1381 = vsub.f32 1.0, %v1380
      %v1382 = vmul.f32 %v1379, %v1381
      %v1383 = vadd.f32 %v1379, %v1382
      %vm1384 = vweird.f32 %v1296
      %vm1385 = vweird.f32 %v1379
      %vm1386 = vmor %vm1384, %vm1385
      %v1387 = vsel %vm1386, %v1379, %v1383
      %v1388 = vand.u32 2147483647, %v1296
      %vm1389 = vcmp.eq.f32.partialorder %v1388, 8.507059e+37
      %v1390 = vand.u32 %v1296, 2147483648
      %v1391 = vor.u32 1.1754944e-38, %v1390
      %v1392 = vsel %vm1389, %v1391, %v1387
      %v1393 = vmul.f32 %v1264, %v1392
      %v1394 = vrcp.pop %v1298
      %v1395 = vmul.f32 %v1298, %v1394
      %v1396 = vsub.f32 1.0, %v1395
      %v1397 = vmul.f32 %v1394, %v1396
      %v1398 = vadd.f32 %v1394, %v1397
      %vm1399 = vweird.f32 %v1298
      %vm1400 = vweird.f32 %v1394
      %vm1401 = vmor %vm1399, %vm1400
      %v1402 = vsel %vm1401, %v1394, %v1398
      %v1403 = vand.u32 2147483647, %v1298
      %vm1404 = vcmp.eq.f32.partialorder %v1403, 8.507059e+37
      %v1405 = vand.u32 %v1298, 2147483648
      %v1406 = vor.u32 1.1754944e-38, %v1405
      %v1407 = vsel %vm1404, %v1406, %v1402
      %v1408 = vmul.f32 %v1266, %v1407
      %v1409 = vrcp.pop %v1300
      %v1410 = vmul.f32 %v1300, %v1409
      %v1411 = vsub.f32 1.0, %v1410
      %v1412 = vmul.f32 %v1409, %v1411
      %v1413 = vadd.f32 %v1409, %v1412
      %vm1414 = vweird.f32 %v1300
      %vm1415 = vweird.f32 %v1409
      %vm1416 = vmor %vm1414, %vm1415
      %v1417 = vsel %vm1416, %v1409, %v1413
      %v1418 = vand.u32 2147483647, %v1300
      %vm1419 = vcmp.eq.f32.partialorder %v1418, 8.507059e+37
      %v1420 = vand.u32 %v1300, 2147483648
      %v1421 = vor.u32 1.1754944e-38, %v1420
      %v1422 = vsel %vm1419, %v1421, %v1417
      %v1423 = vmul.f32 %v1268, %v1422
      %v1424 = vrcp.pop %v1302
      %v1425 = vmul.f32 %v1302, %v1424
      %v1426 = vsub.f32 1.0, %v1425
      %v1427 = vmul.f32 %v1424, %v1426
      %v1428 = vadd.f32 %v1424, %v1427
      %vm1429 = vweird.f32 %v1302
      %vm1430 = vweird.f32 %v1424
      %vm1431 = vmor %vm1429, %vm1430
      %v1432 = vsel %vm1431, %v1424, %v1428
      %v1433 = vand.u32 2147483647, %v1302
      %vm1434 = vcmp.eq.f32.partialorder %v1433, 8.507059e+37
      %v1435 = vand.u32 %v1302, 2147483648
      %v1436 = vor.u32 1.1754944e-38, %v1435
      %v1437 = vsel %vm1434, %v1436, %v1432
      %v1438 = vmul.f32 %v1270, %v1437
      %v1439 = vrcp.pop %v1304
      %v1440 = vmul.f32 %v1304, %v1439
      %v1441 = vsub.f32 1.0, %v1440
      %v1442 = vmul.f32 %v1439, %v1441
      %v1443 = vadd.f32 %v1439, %v1442
      %vm1444 = vweird.f32 %v1304
      %vm1445 = vweird.f32 %v1439
      %vm1446 = vmor %vm1444, %vm1445
      %v1447 = vsel %vm1446, %v1439, %v1443
      %v1448 = vand.u32 2147483647, %v1304
      %vm1449 = vcmp.eq.f32.partialorder %v1448, 8.507059e+37
      %v1450 = vand.u32 %v1304, 2147483648
      %v1451 = vor.u32 1.1754944e-38, %v1450
      %v1452 = vsel %vm1449, %v1451, %v1447
      %v1453 = vmul.f32 %v1272, %v1452
      %v1454 = vrcp.pop %v1306
      %v1455 = vmul.f32 %v1306, %v1454
      %v1456 = vsub.f32 1.0, %v1455
      %v1457 = vmul.f32 %v1454, %v1456
      %v1458 = vadd.f32 %v1454, %v1457
      %vm1459 = vweird.f32 %v1306
      %vm1460 = vweird.f32 %v1454
      %vm1461 = vmor %vm1459, %vm1460
      %v1462 = vsel %vm1461, %v1454, %v1458
      %v1463 = vand.u32 2147483647, %v1306
      %vm1464 = vcmp.eq.f32.partialorder %v1463, 8.507059e+37
      %v1465 = vand.u32 %v1306, 2147483648
      %v1466 = vor.u32 1.1754944e-38, %v1465
      %v1467 = vsel %vm1464, %v1466, %v1462
      %v1468 = vmul.f32 %v1274, %v1467
      %v1469 = vrcp.pop %v1308
      %v1470 = vmul.f32 %v1308, %v1469
      %v1471 = vsub.f32 1.0, %v1470
      %v1472 = vmul.f32 %v1469, %v1471
      %v1473 = vadd.f32 %v1469, %v1472
      %vm1474 = vweird.f32 %v1308
      %vm1475 = vweird.f32 %v1469
      %vm1476 = vmor %vm1474, %vm1475
      %v1477 = vsel %vm1476, %v1469, %v1473
      %v1478 = vand.u32 2147483647, %v1308
      %vm1479 = vcmp.eq.f32.partialorder %v1478, 8.507059e+37
      %v1480 = vand.u32 %v1308, 2147483648
      %v1481 = vor.u32 1.1754944e-38, %v1480
      %v1482 = vsel %vm1479, %v1481, %v1477
      %v1483 = vmul.f32 %v1276, %v1482
      %v1484 = vrcp.pop %v1310
      %v1485 = vmul.f32 %v1310, %v1484
      %v1486 = vsub.f32 1.0, %v1485
      %v1487 = vmul.f32 %v1484, %v1486
      %v1488 = vadd.f32 %v1484, %v1487
      %vm1489 = vweird.f32 %v1310
      %vm1490 = vweird.f32 %v1484
      %vm1491 = vmor %vm1489, %vm1490
      %v1492 = vsel %vm1491, %v1484, %v1488
      %v1493 = vand.u32 2147483647, %v1310
      %vm1494 = vcmp.eq.f32.partialorder %v1493, 8.507059e+37
      %v1495 = vand.u32 %v1310, 2147483648
      %v1496 = vor.u32 1.1754944e-38, %v1495
      %v1497 = vsel %vm1494, %v1496, %v1492
      %v1498 = vmul.f32 %v1278, %v1497
      %v1499 = vrcp.pop %v1312
      %v1500 = vmul.f32 %v1312, %v1499
      %v1501 = vsub.f32 1.0, %v1500
      %v1502 = vmul.f32 %v1499, %v1501
      %v1503 = vadd.f32 %v1499, %v1502
      %vm1504 = vweird.f32 %v1312
      %vm1505 = vweird.f32 %v1499
      %vm1506 = vmor %vm1504, %vm1505
      %v1507 = vsel %vm1506, %v1499, %v1503
      %v1508 = vand.u32 2147483647, %v1312
      %vm1509 = vcmp.eq.f32.partialorder %v1508, 8.507059e+37
      %v1510 = vand.u32 %v1312, 2147483648
      %v1511 = vor.u32 1.1754944e-38, %v1510
      %v1512 = vsel %vm1509, %v1511, %v1507
      %v1513 = vmul.f32 %v1280, %v1512
      %v1514 = vrcp.pop %v1314
      %v1515 = vmul.f32 %v1314, %v1514
      %v1516 = vsub.f32 1.0, %v1515
      %v1517 = vmul.f32 %v1514, %v1516
      %v1518 = vadd.f32 %v1514, %v1517
      %vm1519 = vweird.f32 %v1314
      %vm1520 = vweird.f32 %v1514
      %vm1521 = vmor %vm1519, %vm1520
      %v1522 = vsel %vm1521, %v1514, %v1518
      %v1523 = vand.u32 2147483647, %v1314
      %vm1524 = vcmp.eq.f32.partialorder %v1523, 8.507059e+37
      %v1525 = vand.u32 %v1314, 2147483648
      %v1526 = vor.u32 1.1754944e-38, %v1525
      %v1527 = vsel %vm1524, %v1526, %v1522
      %v1528 = vmul.f32 %v1282, %v1527
      %v1529 = vrcp.pop %v1316
      %v1530 = vmul.f32 %v1316, %v1529
      %v1531 = vsub.f32 1.0, %v1530
      %v1532 = vmul.f32 %v1529, %v1531
      %v1533 = vadd.f32 %v1529, %v1532
      %vm1534 = vweird.f32 %v1316
      %vm1535 = vweird.f32 %v1529
      %vm1536 = vmor %vm1534, %vm1535
      %v1537 = vsel %vm1536, %v1529, %v1533
      %v1538 = vand.u32 2147483647, %v1316
      %vm1539 = vcmp.eq.f32.partialorder %v1538, 8.507059e+37
      %v1540 = vand.u32 %v1316, 2147483648
      %v1541 = vor.u32 1.1754944e-38, %v1540
      %v1542 = vsel %vm1539, %v1541, %v1537
      %v1543 = vmul.f32 %v1284, %v1542
      %v1544 = vrcp.pop %v1318
      %v1545 = vmul.f32 %v1318, %v1544
      %v1546 = vsub.f32 1.0, %v1545
      %v1547 = vmul.f32 %v1544, %v1546
      %v1548 = vadd.f32 %v1544, %v1547
      %vm1549 = vweird.f32 %v1318
      %vm1550 = vweird.f32 %v1544
      %vm1551 = vmor %vm1549, %vm1550
      %v1552 = vsel %vm1551, %v1544, %v1548
      %v1553 = vand.u32 2147483647, %v1318
      %vm1554 = vcmp.eq.f32.partialorder %v1553, 8.507059e+37
      %v1555 = vand.u32 %v1318, 2147483648
      %v1556 = vor.u32 1.1754944e-38, %v1555
      %v1557 = vsel %vm1554, %v1556, %v1552
      %v1558 = vmul.f32 %v1286, %v1557
      %1559 = vmatpush.msra.mxu0 %v1027
      %1560 = vmatpush.msra.mxu0 %v1024
      %1561 = vmatpush.msra.mxu0 %v1021
      %1562 = vmatpush.msra.mxu0 %v1018
      %1563 = vmatpush.msra.mxu0 %v1015
      %1564 = vmatpush.msra.mxu0 %v1012
      %1565 = vmatpush.msra.mxu0 %v1009
      %1566 = vmatpush.msra.mxu0 %v1006
      %1567 = vmatpush.msra.mxu0 %v1003
      %1568 = vmatpush.msra.mxu0 %v1000
      %1569 = vmatpush.msra.mxu0 %v997
      %1570 = vmatpush.msra.mxu0 %v994
      %1571 = vmatpush.msra.mxu0 %v991
      %1572 = vmatpush.msra.mxu0 %v988
      %1573 = vmatpush.msra.mxu0 %v985
      %1574 = vmatpush.msra.mxu0 %v982
      %1575 = vmatmul.f32.gmra.mxu0 %v1333
      %v1576 = vpop.f32.mrf.mxu0
      %v1577 = vadd.f32 0.0, %v1576
      %1578 = vmatmul.f32.gmra.mxu0 %v1348
      %v1579 = vpop.f32.mrf.mxu0
      %v1580 = vadd.f32 0.0, %v1579
      %1581 = vmatmul.f32.gmra.mxu0 %v1363
      %v1582 = vpop.f32.mrf.mxu0
      %v1583 = vadd.f32 0.0, %v1582
      %1584 = vmatmul.f32.gmra.mxu0 %v1378
      %v1585 = vpop.f32.mrf.mxu0
      %v1586 = vadd.f32 0.0, %v1585
      %1587 = vmatmul.f32.gmra.mxu0 %v1393
      %v1588 = vpop.f32.mrf.mxu0
      %v1589 = vadd.f32 0.0, %v1588
      %1590 = vmatmul.f32.gmra.mxu0 %v1408
      %v1591 = vpop.f32.mrf.mxu0
      %v1592 = vadd.f32 0.0, %v1591
      %1593 = vmatmul.f32.gmra.mxu0 %v1423
      %v1594 = vpop.f32.mrf.mxu0
      %v1595 = vadd.f32 0.0, %v1594
      %1596 = vmatmul.f32.gmra.mxu0 %v1438
      %v1597 = vpop.f32.mrf.mxu0
      %v1598 = vadd.f32 0.0, %v1597
      %1599 = vmatmul.f32.gmra.mxu0 %v1453
      %v1600 = vpop.f32.mrf.mxu0
      %v1601 = vadd.f32 0.0, %v1600
      %1602 = vmatmul.f32.gmra.mxu0 %v1468
      %v1603 = vpop.f32.mrf.mxu0
      %v1604 = vadd.f32 0.0, %v1603
      %1605 = vmatmul.f32.gmra.mxu0 %v1483
      %v1606 = vpop.f32.mrf.mxu0
      %v1607 = vadd.f32 0.0, %v1606
      %1608 = vmatmul.f32.gmra.mxu0 %v1498
      %v1609 = vpop.f32.mrf.mxu0
      %v1610 = vadd.f32 0.0, %v1609
      %1611 = vmatmul.f32.gmra.mxu0 %v1513
      %v1612 = vpop.f32.mrf.mxu0
      %v1613 = vadd.f32 0.0, %v1612
      %1614 = vmatmul.f32.gmra.mxu0 %v1528
      %v1615 = vpop.f32.mrf.mxu0
      %v1616 = vadd.f32 0.0, %v1615
      %1617 = vmatmul.f32.gmra.mxu0 %v1543
      %v1618 = vpop.f32.mrf.mxu0
      %v1619 = vadd.f32 0.0, %v1618
      %1620 = vmatmul.f32.gmra.mxu0 %v1558
      %v1621 = vpop.f32.mrf.mxu0
      %v1622 = vadd.f32 0.0, %v1621
      %1623 = vdwg.mxu0
      %1624 = vmatpush.xpose.msra.mxu0 %v962
      %1625 = vmatpush.xpose.msra.mxu0 %v959
      %1626 = vmatpush.xpose.msra.mxu0 %v956
      %1627 = vmatpush.xpose.msra.mxu0 %v953
      %1628 = vmatpush.xpose.msra.mxu0 %v950
      %1629 = vmatpush.xpose.msra.mxu0 %v947
      %1630 = vmatpush.xpose.msra.mxu0 %v944
      %1631 = vmatpush.xpose.msra.mxu0 %v941
      %1632 = vmatpush.xpose.msra.mxu0 %v938
      %1633 = vmatpush.xpose.msra.mxu0 %v935
      %1634 = vmatpush.xpose.msra.mxu0 %v932
      %1635 = vmatpush.xpose.msra.mxu0 %v929
      %1636 = vmatpush.xpose.msra.mxu0 %v926
      %1637 = vmatpush.xpose.msra.mxu0 %v923
      %1638 = vmatpush.xpose.msra.mxu0 %v920
      %1639 = vmatpush.xpose.msra.mxu0 %v917
      %1640 = vmatmul.f32.gmra.mxu0 %v787
      %v1641 = vpop.f32.mrf.mxu0
      %v1642 = vadd.f32 0.0, %v1641
      %1643 = vmatmul.f32.gmra.mxu0 %v790
      %v1644 = vpop.f32.mrf.mxu0
      %v1645 = vadd.f32 0.0, %v1644
      %1646 = vmatmul.f32.gmra.mxu0 %v793
      %v1647 = vpop.f32.mrf.mxu0
      %v1648 = vadd.f32 0.0, %v1647
      %1649 = vmatmul.f32.gmra.mxu0 %v796
      %v1650 = vpop.f32.mrf.mxu0
      %v1651 = vadd.f32 0.0, %v1650
      %1652 = vmatmul.f32.gmra.mxu0 %v799
      %v1653 = vpop.f32.mrf.mxu0
      %v1654 = vadd.f32 0.0, %v1653
      %1655 = vmatmul.f32.gmra.mxu0 %v802
      %v1656 = vpop.f32.mrf.mxu0
      %v1657 = vadd.f32 0.0, %v1656
      %1658 = vmatmul.f32.gmra.mxu0 %v805
      %v1659 = vpop.f32.mrf.mxu0
      %v1660 = vadd.f32 0.0, %v1659
      %1661 = vmatmul.f32.gmra.mxu0 %v808
      %v1662 = vpop.f32.mrf.mxu0
      %v1663 = vadd.f32 0.0, %v1662
      %1664 = vmatmul.f32.gmra.mxu0 %v811
      %v1665 = vpop.f32.mrf.mxu0
      %v1666 = vadd.f32 0.0, %v1665
      %1667 = vmatmul.f32.gmra.mxu0 %v814
      %v1668 = vpop.f32.mrf.mxu0
      %v1669 = vadd.f32 0.0, %v1668
      %1670 = vmatmul.f32.gmra.mxu0 %v817
      %v1671 = vpop.f32.mrf.mxu0
      %v1672 = vadd.f32 0.0, %v1671
      %1673 = vmatmul.f32.gmra.mxu0 %v820
      %v1674 = vpop.f32.mrf.mxu0
      %v1675 = vadd.f32 0.0, %v1674
      %1676 = vmatmul.f32.gmra.mxu0 %v823
      %v1677 = vpop.f32.mrf.mxu0
      %v1678 = vadd.f32 0.0, %v1677
      %1679 = vmatmul.f32.gmra.mxu0 %v826
      %v1680 = vpop.f32.mrf.mxu0
      %v1681 = vadd.f32 0.0, %v1680
      %1682 = vmatmul.f32.gmra.mxu0 %v829
      %v1683 = vpop.f32.mrf.mxu0
      %v1684 = vadd.f32 0.0, %v1683
      %1685 = vmatmul.f32.gmra.mxu0 %v832
      %v1686 = vpop.f32.mrf.mxu0
      %v1687 = vadd.f32 0.0, %v1686
      %1688 = vdwg.mxu0
      %v1689 = vmul.f32 %v1642, 0.088388346
      %v1690 = vmul.f32 %v1645, 0.088388346
      %v1691 = vmul.f32 %v1648, 0.088388346
      %v1692 = vmul.f32 %v1651, 0.088388346
      %v1693 = vmul.f32 %v1654, 0.088388346
      %v1694 = vmul.f32 %v1657, 0.088388346
      %v1695 = vmul.f32 %v1660, 0.088388346
      %v1696 = vmul.f32 %v1663, 0.088388346
      %v1697 = vmul.f32 %v1666, 0.088388346
      %v1698 = vmul.f32 %v1669, 0.088388346
      %v1699 = vmul.f32 %v1672, 0.088388346
      %v1700 = vmul.f32 %v1675, 0.088388346
      %v1701 = vmul.f32 %v1678, 0.088388346
      %v1702 = vmul.f32 %v1681, 0.088388346
      %v1703 = vmul.f32 %v1684, 0.088388346
      %v1704 = vmul.f32 %v1687, 0.088388346
      %1705 = vmax.xlane.f32.xlu0 %v1689
      %v1706 = vpop.xlane.xlu0 %1705
      %1707 = vmax.xlane.f32.xlu0 %v1690
      %v1708 = vpop.xlane.xlu0 %1707
      %1709 = vmax.xlane.f32.xlu0 %v1691
      %v1710 = vpop.xlane.xlu0 %1709
      %1711 = vmax.xlane.f32.xlu0 %v1692
      %v1712 = vpop.xlane.xlu0 %1711
      %1713 = vmax.xlane.f32.xlu0 %v1693
      %v1714 = vpop.xlane.xlu0 %1713
      %1715 = vmax.xlane.f32.xlu0 %v1694
      %v1716 = vpop.xlane.xlu0 %1715
      %1717 = vmax.xlane.f32.xlu0 %v1695
      %v1718 = vpop.xlane.xlu0 %1717
      %1719 = vmax.xlane.f32.xlu0 %v1696
      %v1720 = vpop.xlane.xlu0 %1719
      %1721 = vmax.xlane.f32.xlu0 %v1697
      %v1722 = vpop.xlane.xlu0 %1721
      %1723 = vmax.xlane.f32.xlu0 %v1698
      %v1724 = vpop.xlane.xlu0 %1723
      %1725 = vmax.xlane.f32.xlu0 %v1699
      %v1726 = vpop.xlane.xlu0 %1725
      %1727 = vmax.xlane.f32.xlu0 %v1700
      %v1728 = vpop.xlane.xlu0 %1727
      %1729 = vmax.xlane.f32.xlu0 %v1701
      %v1730 = vpop.xlane.xlu0 %1729
      %1731 = vmax.xlane.f32.xlu0 %v1702
      %v1732 = vpop.xlane.xlu0 %1731
      %1733 = vmax.xlane.f32.xlu0 %v1703
      %v1734 = vpop.xlane.xlu0 %1733
      %1735 = vmax.xlane.f32.xlu0 %v1704
      %v1736 = vpop.xlane.xlu0 %1735
      %v1737 = vsub.f32 %v1689, %v1706
      %v1738 = vsub.f32 %v1690, %v1708
      %v1739 = vsub.f32 %v1691, %v1710
      %v1740 = vsub.f32 %v1692, %v1712
      %v1741 = vsub.f32 %v1693, %v1714
      %v1742 = vsub.f32 %v1694, %v1716
      %v1743 = vsub.f32 %v1695, %v1718
      %v1744 = vsub.f32 %v1696, %v1720
      %v1745 = vsub.f32 %v1697, %v1722
      %v1746 = vsub.f32 %v1698, %v1724
      %v1747 = vsub.f32 %v1699, %v1726
      %v1748 = vsub.f32 %v1700, %v1728
      %v1749 = vsub.f32 %v1701, %v1730
      %v1750 = vsub.f32 %v1702, %v1732
      %v1751 = vsub.f32 %v1703, %v1734
      %v1752 = vsub.f32 %v1704, %v1736
      %v1753 = vmul.f32 %v1737, 1.442695
      %v1754 = vpow.pop %v1753
      %v1755 = vmul.f32 %v1738, 1.442695
      %v1756 = vpow.pop %v1755
      %v1757 = vmul.f32 %v1739, 1.442695
      %v1758 = vpow.pop %v1757
      %v1759 = vmul.f32 %v1740, 1.442695
      %v1760 = vpow.pop %v1759
      %v1761 = vmul.f32 %v1741, 1.442695
      %v1762 = vpow.pop %v1761
      %v1763 = vmul.f32 %v1742, 1.442695
      %v1764 = vpow.pop %v1763
      %v1765 = vmul.f32 %v1743, 1.442695
      %v1766 = vpow.pop %v1765
      %v1767 = vmul.f32 %v1744, 1.442695
      %v1768 = vpow.pop %v1767
      %v1769 = vmul.f32 %v1745, 1.442695
      %v1770 = vpow.pop %v1769
      %v1771 = vmul.f32 %v1746, 1.442695
      %v1772 = vpow.pop %v1771
      %v1773 = vmul.f32 %v1747, 1.442695
      %v1774 = vpow.pop %v1773
      %v1775 = vmul.f32 %v1748, 1.442695
      %v1776 = vpow.pop %v1775
      %v1777 = vmul.f32 %v1749, 1.442695
      %v1778 = vpow.pop %v1777
      %v1779 = vmul.f32 %v1750, 1.442695
      %v1780 = vpow.pop %v1779
      %v1781 = vmul.f32 %v1751, 1.442695
      %v1782 = vpow.pop %v1781
      %v1783 = vmul.f32 %v1752, 1.442695
      %v1784 = vpow.pop %v1783
      %1785 = vadd.xlane.f32.xlu0 %v1754
      %v1786 = vpop.xlane.xlu0 %1785
      %1787 = vadd.xlane.f32.xlu0 %v1756
      %v1788 = vpop.xlane.xlu0 %1787
      %1789 = vadd.xlane.f32.xlu0 %v1758
      %v1790 = vpop.xlane.xlu0 %1789
      %1791 = vadd.xlane.f32.xlu0 %v1760
      %v1792 = vpop.xlane.xlu0 %1791
      %1793 = vadd.xlane.f32.xlu0 %v1762
      %v1794 = vpop.xlane.xlu0 %1793
      %1795 = vadd.xlane.f32.xlu0 %v1764
      %v1796 = vpop.xlane.xlu0 %1795
      %1797 = vadd.xlane.f32.xlu0 %v1766
      %v1798 = vpop.xlane.xlu0 %1797
      %1799 = vadd.xlane.f32.xlu0 %v1768
      %v1800 = vpop.xlane.xlu0 %1799
      %1801 = vadd.xlane.f32.xlu0 %v1770
      %v1802 = vpop.xlane.xlu0 %1801
      %1803 = vadd.xlane.f32.xlu0 %v1772
      %v1804 = vpop.xlane.xlu0 %1803
      %1805 = vadd.xlane.f32.xlu0 %v1774
      %v1806 = vpop.xlane.xlu0 %1805
      %1807 = vadd.xlane.f32.xlu0 %v1776
      %v1808 = vpop.xlane.xlu0 %1807
      %1809 = vadd.xlane.f32.xlu0 %v1778
      %v1810 = vpop.xlane.xlu0 %1809
      %1811 = vadd.xlane.f32.xlu0 %v1780
      %v1812 = vpop.xlane.xlu0 %1811
      %1813 = vadd.xlane.f32.xlu0 %v1782
      %v1814 = vpop.xlane.xlu0 %1813
      %1815 = vadd.xlane.f32.xlu0 %v1784
      %v1816 = vpop.xlane.xlu0 %1815
      %v1817 = vrcp.pop %v1786
      %v1818 = vmul.f32 %v1786, %v1817
      %v1819 = vsub.f32 1.0, %v1818
      %v1820 = vmul.f32 %v1817, %v1819
      %v1821 = vadd.f32 %v1817, %v1820
      %vm1822 = vweird.f32 %v1786
      %vm1823 = vweird.f32 %v1817
      %vm1824 = vmor %vm1822, %vm1823
      %v1825 = vsel %vm1824, %v1817, %v1821
      %v1826 = vand.u32 2147483647, %v1786
      %vm1827 = vcmp.eq.f32.partialorder %v1826, 8.507059e+37
      %v1828 = vand.u32 %v1786, 2147483648
      %v1829 = vor.u32 1.1754944e-38, %v1828
      %v1830 = vsel %vm1827, %v1829, %v1825
      %v1831 = vmul.f32 %v1754, %v1830
      %v1832 = vrcp.pop %v1788
      %v1833 = vmul.f32 %v1788, %v1832
      %v1834 = vsub.f32 1.0, %v1833
      %v1835 = vmul.f32 %v1832, %v1834
      %v1836 = vadd.f32 %v1832, %v1835
      %vm1837 = vweird.f32 %v1788
      %vm1838 = vweird.f32 %v1832
      %vm1839 = vmor %vm1837, %vm1838
      %v1840 = vsel %vm1839, %v1832, %v1836
      %v1841 = vand.u32 2147483647, %v1788
      %vm1842 = vcmp.eq.f32.partialorder %v1841, 8.507059e+37
      %v1843 = vand.u32 %v1788, 2147483648
      %v1844 = vor.u32 1.1754944e-38, %v1843
      %v1845 = vsel %vm1842, %v1844, %v1840
      %v1846 = vmul.f32 %v1756, %v1845
      %v1847 = vrcp.pop %v1790
      %v1848 = vmul.f32 %v1790, %v1847
      %v1849 = vsub.f32 1.0, %v1848
      %v1850 = vmul.f32 %v1847, %v1849
      %v1851 = vadd.f32 %v1847, %v1850
      %vm1852 = vweird.f32 %v1790
      %vm1853 = vweird.f32 %v1847
      %vm1854 = vmor %vm1852, %vm1853
      %v1855 = vsel %vm1854, %v1847, %v1851
      %v1856 = vand.u32 2147483647, %v1790
      %vm1857 = vcmp.eq.f32.partialorder %v1856, 8.507059e+37
      %v1858 = vand.u32 %v1790, 2147483648
      %v1859 = vor.u32 1.1754944e-38, %v1858
      %v1860 = vsel %vm1857, %v1859, %v1855
      %v1861 = vmul.f32 %v1758, %v1860
      %v1862 = vrcp.pop %v1792
      %v1863 = vmul.f32 %v1792, %v1862
      %v1864 = vsub.f32 1.0, %v1863
      %v1865 = vmul.f32 %v1862, %v1864
      %v1866 = vadd.f32 %v1862, %v1865
      %vm1867 = vweird.f32 %v1792
      %vm1868 = vweird.f32 %v1862
      %vm1869 = vmor %vm1867, %vm1868
      %v1870 = vsel %vm1869, %v1862, %v1866
      %v1871 = vand.u32 2147483647, %v1792
      %vm1872 = vcmp.eq.f32.partialorder %v1871, 8.507059e+37
      %v1873 = vand.u32 %v1792, 2147483648
      %v1874 = vor.u32 1.1754944e-38, %v1873
      %v1875 = vsel %vm1872, %v1874, %v1870
      %v1876 = vmul.f32 %v1760, %v1875
      %v1877 = vrcp.pop %v1794
      %v1878 = vmul.f32 %v1794, %v1877
      %v1879 = vsub.f32 1.0, %v1878
      %v1880 = vmul.f32 %v1877, %v1879
      %v1881 = vadd.f32 %v1877, %v1880
      %vm1882 = vweird.f32 %v1794
      %vm1883 = vweird.f32 %v1877
      %vm1884 = vmor %vm1882, %vm1883
      %v1885 = vsel %vm1884, %v1877, %v1881
      %v1886 = vand.u32 2147483647, %v1794
      %vm1887 = vcmp.eq.f32.partialorder %v1886, 8.507059e+37
      %v1888 = vand.u32 %v1794, 2147483648
      %v1889 = vor.u32 1.1754944e-38, %v1888
      %v1890 = vsel %vm1887, %v1889, %v1885
      %v1891 = vmul.f32 %v1762, %v1890
      %v1892 = vrcp.pop %v1796
      %v1893 = vmul.f32 %v1796, %v1892
      %v1894 = vsub.f32 1.0, %v1893
      %v1895 = vmul.f32 %v1892, %v1894
      %v1896 = vadd.f32 %v1892, %v1895
      %vm1897 = vweird.f32 %v1796
      %vm1898 = vweird.f32 %v1892
      %vm1899 = vmor %vm1897, %vm1898
      %v1900 = vsel %vm1899, %v1892, %v1896
      %v1901 = vand.u32 2147483647, %v1796
      %vm1902 = vcmp.eq.f32.partialorder %v1901, 8.507059e+37
      %v1903 = vand.u32 %v1796, 2147483648
      %v1904 = vor.u32 1.1754944e-38, %v1903
      %v1905 = vsel %vm1902, %v1904, %v1900
      %v1906 = vmul.f32 %v1764, %v1905
      %v1907 = vrcp.pop %v1798
      %v1908 = vmul.f32 %v1798, %v1907
      %v1909 = vsub.f32 1.0, %v1908
      %v1910 = vmul.f32 %v1907, %v1909
      %v1911 = vadd.f32 %v1907, %v1910
      %vm1912 = vweird.f32 %v1798
      %vm1913 = vweird.f32 %v1907
      %vm1914 = vmor %vm1912, %vm1913
      %v1915 = vsel %vm1914, %v1907, %v1911
      %v1916 = vand.u32 2147483647, %v1798
      %vm1917 = vcmp.eq.f32.partialorder %v1916, 8.507059e+37
      %v1918 = vand.u32 %v1798, 2147483648
      %v1919 = vor.u32 1.1754944e-38, %v1918
      %v1920 = vsel %vm1917, %v1919, %v1915
      %v1921 = vmul.f32 %v1766, %v1920
      %v1922 = vrcp.pop %v1800
      %v1923 = vmul.f32 %v1800, %v1922
      %v1924 = vsub.f32 1.0, %v1923
      %v1925 = vmul.f32 %v1922, %v1924
      %v1926 = vadd.f32 %v1922, %v1925
      %vm1927 = vweird.f32 %v1800
      %vm1928 = vweird.f32 %v1922
      %vm1929 = vmor %vm1927, %vm1928
      %v1930 = vsel %vm1929, %v1922, %v1926
      %v1931 = vand.u32 2147483647, %v1800
      %vm1932 = vcmp.eq.f32.partialorder %v1931, 8.507059e+37
      %v1933 = vand.u32 %v1800, 2147483648
      %v1934 = vor.u32 1.1754944e-38, %v1933
      %v1935 = vsel %vm1932, %v1934, %v1930
      %v1936 = vmul.f32 %v1768, %v1935
      %v1937 = vrcp.pop %v1802
      %v1938 = vmul.f32 %v1802, %v1937
      %v1939 = vsub.f32 1.0, %v1938
      %v1940 = vmul.f32 %v1937, %v1939
      %v1941 = vadd.f32 %v1937, %v1940
      %vm1942 = vweird.f32 %v1802
      %vm1943 = vweird.f32 %v1937
      %vm1944 = vmor %vm1942, %vm1943
      %v1945 = vsel %vm1944, %v1937, %v1941
      %v1946 = vand.u32 2147483647, %v1802
      %vm1947 = vcmp.eq.f32.partialorder %v1946, 8.507059e+37
      %v1948 = vand.u32 %v1802, 2147483648
      %v1949 = vor.u32 1.1754944e-38, %v1948
      %v1950 = vsel %vm1947, %v1949, %v1945
      %v1951 = vmul.f32 %v1770, %v1950
      %v1952 = vrcp.pop %v1804
      %v1953 = vmul.f32 %v1804, %v1952
      %v1954 = vsub.f32 1.0, %v1953
      %v1955 = vmul.f32 %v1952, %v1954
      %v1956 = vadd.f32 %v1952, %v1955
      %vm1957 = vweird.f32 %v1804
      %vm1958 = vweird.f32 %v1952
      %vm1959 = vmor %vm1957, %vm1958
      %v1960 = vsel %vm1959, %v1952, %v1956
      %v1961 = vand.u32 2147483647, %v1804
      %vm1962 = vcmp.eq.f32.partialorder %v1961, 8.507059e+37
      %v1963 = vand.u32 %v1804, 2147483648
      %v1964 = vor.u32 1.1754944e-38, %v1963
      %v1965 = vsel %vm1962, %v1964, %v1960
      %v1966 = vmul.f32 %v1772, %v1965
      %v1967 = vrcp.pop %v1806
      %v1968 = vmul.f32 %v1806, %v1967
      %v1969 = vsub.f32 1.0, %v1968
      %v1970 = vmul.f32 %v1967, %v1969
      %v1971 = vadd.f32 %v1967, %v1970
      %vm1972 = vweird.f32 %v1806
      %vm1973 = vweird.f32 %v1967
      %vm1974 = vmor %vm1972, %vm1973
      %v1975 = vsel %vm1974, %v1967, %v1971
      %v1976 = vand.u32 2147483647, %v1806
      %vm1977 = vcmp.eq.f32.partialorder %v1976, 8.507059e+37
      %v1978 = vand.u32 %v1806, 2147483648
      %v1979 = vor.u32 1.1754944e-38, %v1978
      %v1980 = vsel %vm1977, %v1979, %v1975
      %v1981 = vmul.f32 %v1774, %v1980
      %v1982 = vrcp.pop %v1808
      %v1983 = vmul.f32 %v1808, %v1982
      %v1984 = vsub.f32 1.0, %v1983
      %v1985 = vmul.f32 %v1982, %v1984
      %v1986 = vadd.f32 %v1982, %v1985
      %vm1987 = vweird.f32 %v1808
      %vm1988 = vweird.f32 %v1982
      %vm1989 = vmor %vm1987, %vm1988
      %v1990 = vsel %vm1989, %v1982, %v1986
      %v1991 = vand.u32 2147483647, %v1808
      %vm1992 = vcmp.eq.f32.partialorder %v1991, 8.507059e+37
      %v1993 = vand.u32 %v1808, 2147483648
      %v1994 = vor.u32 1.1754944e-38, %v1993
      %v1995 = vsel %vm1992, %v1994, %v1990
      %v1996 = vmul.f32 %v1776, %v1995
      %v1997 = vrcp.pop %v1810
      %v1998 = vmul.f32 %v1810, %v1997
      %v1999 = vsub.f32 1.0, %v1998
      %v2000 = vmul.f32 %v1997, %v1999
      %v2001 = vadd.f32 %v1997, %v2000
      %vm2002 = vweird.f32 %v1810
      %vm2003 = vweird.f32 %v1997
      %vm2004 = vmor %vm2002, %vm2003
      %v2005 = vsel %vm2004, %v1997, %v2001
      %v2006 = vand.u32 2147483647, %v1810
      %vm2007 = vcmp.eq.f32.partialorder %v2006, 8.507059e+37
      %v2008 = vand.u32 %v1810, 2147483648
      %v2009 = vor.u32 1.1754944e-38, %v2008
      %v2010 = vsel %vm2007, %v2009, %v2005
      %v2011 = vmul.f32 %v1778, %v2010
      %v2012 = vrcp.pop %v1812
      %v2013 = vmul.f32 %v1812, %v2012
      %v2014 = vsub.f32 1.0, %v2013
      %v2015 = vmul.f32 %v2012, %v2014
      %v2016 = vadd.f32 %v2012, %v2015
      %vm2017 = vweird.f32 %v1812
      %vm2018 = vweird.f32 %v2012
      %vm2019 = vmor %vm2017, %vm2018
      %v2020 = vsel %vm2019, %v2012, %v2016
      %v2021 = vand.u32 2147483647, %v1812
      %vm2022 = vcmp.eq.f32.partialorder %v2021, 8.507059e+37
      %v2023 = vand.u32 %v1812, 2147483648
      %v2024 = vor.u32 1.1754944e-38, %v2023
      %v2025 = vsel %vm2022, %v2024, %v2020
      %v2026 = vmul.f32 %v1780, %v2025
      %v2027 = vrcp.pop %v1814
      %v2028 = vmul.f32 %v1814, %v2027
      %v2029 = vsub.f32 1.0, %v2028
      %v2030 = vmul.f32 %v2027, %v2029
      %v2031 = vadd.f32 %v2027, %v2030
      %vm2032 = vweird.f32 %v1814
      %vm2033 = vweird.f32 %v2027
      %vm2034 = vmor %vm2032, %vm2033
      %v2035 = vsel %vm2034, %v2027, %v2031
      %v2036 = vand.u32 2147483647, %v1814
      %vm2037 = vcmp.eq.f32.partialorder %v2036, 8.507059e+37
      %v2038 = vand.u32 %v1814, 2147483648
      %v2039 = vor.u32 1.1754944e-38, %v2038
      %v2040 = vsel %vm2037, %v2039, %v2035
      %v2041 = vmul.f32 %v1782, %v2040
      %v2042 = vrcp.pop %v1816
      %v2043 = vmul.f32 %v1816, %v2042
      %v2044 = vsub.f32 1.0, %v2043
      %v2045 = vmul.f32 %v2042, %v2044
      %v2046 = vadd.f32 %v2042, %v2045
      %vm2047 = vweird.f32 %v1816
      %vm2048 = vweird.f32 %v2042
      %vm2049 = vmor %vm2047, %vm2048
      %v2050 = vsel %vm2049, %v2042, %v2046
      %v2051 = vand.u32 2147483647, %v1816
      %vm2052 = vcmp.eq.f32.partialorder %v2051, 8.507059e+37
      %v2053 = vand.u32 %v1816, 2147483648
      %v2054 = vor.u32 1.1754944e-38, %v2053
      %v2055 = vsel %vm2052, %v2054, %v2050
      %v2056 = vmul.f32 %v1784, %v2055
      %2057 = vmatpush.msra.mxu0 %v1092
      %2058 = vmatpush.msra.mxu0 %v1089
      %2059 = vmatpush.msra.mxu0 %v1086
      %2060 = vmatpush.msra.mxu0 %v1083
      %2061 = vmatpush.msra.mxu0 %v1080
      %2062 = vmatpush.msra.mxu0 %v1077
      %2063 = vmatpush.msra.mxu0 %v1074
      %2064 = vmatpush.msra.mxu0 %v1071
      %2065 = vmatpush.msra.mxu0 %v1068
      %2066 = vmatpush.msra.mxu0 %v1065
      %2067 = vmatpush.msra.mxu0 %v1062
      %2068 = vmatpush.msra.mxu0 %v1059
      %2069 = vmatpush.msra.mxu0 %v1056
      %2070 = vmatpush.msra.mxu0 %v1053
      %2071 = vmatpush.msra.mxu0 %v1050
      %2072 = vmatpush.msra.mxu0 %v1047
      %2073 = vmatmul.f32.gmra.mxu0 %v1831
      %v2074 = vpop.f32.mrf.mxu0
      %v2075 = vadd.f32 0.0, %v2074
      %2076 = vmatmul.f32.gmra.mxu0 %v1846
      %v2077 = vpop.f32.mrf.mxu0
      %v2078 = vadd.f32 0.0, %v2077
      %2079 = vmatmul.f32.gmra.mxu0 %v1861
      %v2080 = vpop.f32.mrf.mxu0
      %v2081 = vadd.f32 0.0, %v2080
      %2082 = vmatmul.f32.gmra.mxu0 %v1876
      %v2083 = vpop.f32.mrf.mxu0
      %v2084 = vadd.f32 0.0, %v2083
      %2085 = vmatmul.f32.gmra.mxu0 %v1891
      %v2086 = vpop.f32.mrf.mxu0
      %v2087 = vadd.f32 0.0, %v2086
      %2088 = vmatmul.f32.gmra.mxu0 %v1906
      %v2089 = vpop.f32.mrf.mxu0
      %v2090 = vadd.f32 0.0, %v2089
      %2091 = vmatmul.f32.gmra.mxu0 %v1921
      %v2092 = vpop.f32.mrf.mxu0
      %v2093 = vadd.f32 0.0, %v2092
      %2094 = vmatmul.f32.gmra.mxu0 %v1936
      %v2095 = vpop.f32.mrf.mxu0
      %v2096 = vadd.f32 0.0, %v2095
      %2097 = vmatmul.f32.gmra.mxu0 %v1951
      %v2098 = vpop.f32.mrf.mxu0
      %v2099 = vadd.f32 0.0, %v2098
      %2100 = vmatmul.f32.gmra.mxu0 %v1966
      %v2101 = vpop.f32.mrf.mxu0
      %v2102 = vadd.f32 0.0, %v2101
      %2103 = vmatmul.f32.gmra.mxu0 %v1981
      %v2104 = vpop.f32.mrf.mxu0
      %v2105 = vadd.f32 0.0, %v2104
      %2106 = vmatmul.f32.gmra.mxu0 %v1996
      %v2107 = vpop.f32.mrf.mxu0
      %v2108 = vadd.f32 0.0, %v2107
      %2109 = vmatmul.f32.gmra.mxu0 %v2011
      %v2110 = vpop.f32.mrf.mxu0
      %v2111 = vadd.f32 0.0, %v2110
      %2112 = vmatmul.f32.gmra.mxu0 %v2026
      %v2113 = vpop.f32.mrf.mxu0
      %v2114 = vadd.f32 0.0, %v2113
      %2115 = vmatmul.f32.gmra.mxu0 %v2041
      %v2116 = vpop.f32.mrf.mxu0
      %v2117 = vadd.f32 0.0, %v2116
      %2118 = vmatmul.f32.gmra.mxu0 %v2056
      %v2119 = vpop.f32.mrf.mxu0
      %v2120 = vadd.f32 0.0, %v2119
      %2121 = vdwg.mxu0
      %2122 = vmatpush.msra.mxu0 %v1125
      %2123 = vmatpush.msra.mxu0 %v1124
      %2124 = vmatpush.msra.mxu0 %v1123
      %2125 = vmatpush.msra.mxu0 %v1122
      %2126 = vmatpush.msra.mxu0 %v1121
      %2127 = vmatpush.msra.mxu0 %v1120
      %2128 = vmatpush.msra.mxu0 %v1119
      %2129 = vmatpush.msra.mxu0 %v1118
      %2130 = vmatpush.msra.mxu0 %v1117
      %2131 = vmatpush.msra.mxu0 %v1116
      %2132 = vmatpush.msra.mxu0 %v1115
      %2133 = vmatpush.msra.mxu0 %v1114
      %2134 = vmatpush.msra.mxu0 %v1113
      %2135 = vmatpush.msra.mxu0 %v1112
      %2136 = vmatpush.msra.mxu0 %v1111
      %2137 = vmatpush.msra.mxu0 %v1110
      %2138 = vmatmul.f32.gmra.mxu0 %v2075
      %v2139 = vpop.f32.mrf.mxu0
      %v2140 = vadd.f32 0.0, %v2139
      %2141 = vmatmul.f32.gmra.mxu0 %v2078
      %v2142 = vpop.f32.mrf.mxu0
      %v2143 = vadd.f32 0.0, %v2142
      %2144 = vmatmul.f32.gmra.mxu0 %v2081
      %v2145 = vpop.f32.mrf.mxu0
      %v2146 = vadd.f32 0.0, %v2145
      %2147 = vmatmul.f32.gmra.mxu0 %v2084
      %v2148 = vpop.f32.mrf.mxu0
      %v2149 = vadd.f32 0.0, %v2148
      %2150 = vmatmul.f32.gmra.mxu0 %v2087
      %v2151 = vpop.f32.mrf.mxu0
      %v2152 = vadd.f32 0.0, %v2151
      %2153 = vmatmul.f32.gmra.mxu0 %v2090
      %v2154 = vpop.f32.mrf.mxu0
      %v2155 = vadd.f32 0.0, %v2154
      %2156 = vmatmul.f32.gmra.mxu0 %v2093
      %v2157 = vpop.f32.mrf.mxu0
      %v2158 = vadd.f32 0.0, %v2157
      %2159 = vmatmul.f32.gmra.mxu0 %v2096
      %v2160 = vpop.f32.mrf.mxu0
      %v2161 = vadd.f32 0.0, %v2160
      %2162 = vmatmul.f32.gmra.mxu0 %v2099
      %v2163 = vpop.f32.mrf.mxu0
      %v2164 = vadd.f32 0.0, %v2163
      %2165 = vmatmul.f32.gmra.mxu0 %v2102
      %v2166 = vpop.f32.mrf.mxu0
      %v2167 = vadd.f32 0.0, %v2166
      %2168 = vmatmul.f32.gmra.mxu0 %v2105
      %v2169 = vpop.f32.mrf.mxu0
      %v2170 = vadd.f32 0.0, %v2169
      %2171 = vmatmul.f32.gmra.mxu0 %v2108
      %v2172 = vpop.f32.mrf.mxu0
      %v2173 = vadd.f32 0.0, %v2172
      %2174 = vmatmul.f32.gmra.mxu0 %v2111
      %v2175 = vpop.f32.mrf.mxu0
      %v2176 = vadd.f32 0.0, %v2175
      %2177 = vmatmul.f32.gmra.mxu0 %v2114
      %v2178 = vpop.f32.mrf.mxu0
      %v2179 = vadd.f32 0.0, %v2178
      %2180 = vmatmul.f32.gmra.mxu0 %v2117
      %v2181 = vpop.f32.mrf.mxu0
      %v2182 = vadd.f32 0.0, %v2181
      %2183 = vmatmul.f32.gmra.mxu0 %v2120
      %v2184 = vpop.f32.mrf.mxu0
      %v2185 = vadd.f32 0.0, %v2184
      %2186 = vdwg.mxu0
      %2187 = vmatpush.msra.mxu0 %v1109
      %2188 = vmatpush.msra.mxu0 %v1108
      %2189 = vmatpush.msra.mxu0 %v1107
      %2190 = vmatpush.msra.mxu0 %v1106
      %2191 = vmatpush.msra.mxu0 %v1105
      %2192 = vmatpush.msra.mxu0 %v1104
      %2193 = vmatpush.msra.mxu0 %v1103
      %2194 = vmatpush.msra.mxu0 %v1102
      %2195 = vmatpush.msra.mxu0 %v1101
      %2196 = vmatpush.msra.mxu0 %v1100
      %2197 = vmatpush.msra.mxu0 %v1099
      %2198 = vmatpush.msra.mxu0 %v1098
      %2199 = vmatpush.msra.mxu0 %v1097
      %2200 = vmatpush.msra.mxu0 %v1096
      %2201 = vmatpush.msra.mxu0 %v1095
      %2202 = vmatpush.msra.mxu0 %v1094
      %2203 = vmatmul.f32.gmra.mxu0 %v1577
      %v2204 = vpop.f32.mrf.mxu0
      %v2205 = vadd.f32 %v2140, %v2204
      %2206 = vmatmul.f32.gmra.mxu0 %v1580
      %v2207 = vpop.f32.mrf.mxu0
      %v2208 = vadd.f32 %v2143, %v2207
      %2209 = vmatmul.f32.gmra.mxu0 %v1583
      %v2210 = vpop.f32.mrf.mxu0
      %v2211 = vadd.f32 %v2146, %v2210
      %2212 = vmatmul.f32.gmra.mxu0 %v1586
      %v2213 = vpop.f32.mrf.mxu0
      %v2214 = vadd.f32 %v2149, %v2213
      %2215 = vmatmul.f32.gmra.mxu0 %v1589
      %v2216 = vpop.f32.mrf.mxu0
      %v2217 = vadd.f32 %v2152, %v2216
      %2218 = vmatmul.f32.gmra.mxu0 %v1592
      %v2219 = vpop.f32.mrf.mxu0
      %v2220 = vadd.f32 %v2155, %v2219
      %2221 = vmatmul.f32.gmra.mxu0 %v1595
      %v2222 = vpop.f32.mrf.mxu0
      %v2223 = vadd.f32 %v2158, %v2222
      %2224 = vmatmul.f32.gmra.mxu0 %v1598
      %v2225 = vpop.f32.mrf.mxu0
      %v2226 = vadd.f32 %v2161, %v2225
      %2227 = vmatmul.f32.gmra.mxu0 %v1601
      %v2228 = vpop.f32.mrf.mxu0
      %v2229 = vadd.f32 %v2164, %v2228
      %2230 = vmatmul.f32.gmra.mxu0 %v1604
      %v2231 = vpop.f32.mrf.mxu0
      %v2232 = vadd.f32 %v2167, %v2231
      %2233 = vmatmul.f32.gmra.mxu0 %v1607
      %v2234 = vpop.f32.mrf.mxu0
      %v2235 = vadd.f32 %v2170, %v2234
      %2236 = vmatmul.f32.gmra.mxu0 %v1610
      %v2237 = vpop.f32.mrf.mxu0
      %v2238 = vadd.f32 %v2173, %v2237
      %2239 = vmatmul.f32.gmra.mxu0 %v1613
      %v2240 = vpop.f32.mrf.mxu0
      %v2241 = vadd.f32 %v2176, %v2240
      %2242 = vmatmul.f32.gmra.mxu0 %v1616
      %v2243 = vpop.f32.mrf.mxu0
      %v2244 = vadd.f32 %v2179, %v2243
      %2245 = vmatmul.f32.gmra.mxu0 %v1619
      %v2246 = vpop.f32.mrf.mxu0
      %v2247 = vadd.f32 %v2182, %v2246
      %2248 = vmatmul.f32.gmra.mxu0 %v1622
      %v2249 = vpop.f32.mrf.mxu0
      %v2250 = vadd.f32 %v2185, %v2249
      %2251 = vdwg.mxu0
      %v2252 = vadd.f32 %v225, %v2205
      %v2253 = vadd.f32 %v226, %v2208
      %v2254 = vadd.f32 %v227, %v2211
      %v2255 = vadd.f32 %v228, %v2214
      %v2256 = vadd.f32 %v229, %v2217
      %v2257 = vadd.f32 %v230, %v2220
      %v2258 = vadd.f32 %v231, %v2223
      %v2259 = vadd.f32 %v232, %v2226
      %v2260 = vadd.f32 %v233, %v2229
      %v2261 = vadd.f32 %v234, %v2232
      %v2262 = vadd.f32 %v235, %v2235
      %v2263 = vadd.f32 %v236, %v2238
      %v2264 = vadd.f32 %v237, %v2241
      %v2265 = vadd.f32 %v238, %v2244
      %v2266 = vadd.f32 %v239, %v2247
      %v2267 = vadd.f32 %v240, %v2250
      %2268 = vst [vmem:[%s224] sm:$0xff] %v2252
      %2269 = vst [vmem:[%s224 + $0x8] sm:$0xff] %v2253
      %2270 = vst [vmem:[%s224 + $0x10] sm:$0xff] %v2254
      %2271 = vst [vmem:[%s224 + $0x18] sm:$0xff] %v2255
      %2272 = vst [vmem:[%s224 + $0x20] sm:$0xff] %v2256
      %2273 = vst [vmem:[%s224 + $0x28] sm:$0xff] %v2257
      %2274 = vst [vmem:[%s224 + $0x30] sm:$0xff] %v2258
      %2275 = vst [vmem:[%s224 + $0x38] sm:$0xff] %v2259
      %2276 = vst [vmem:[%s224 + $0x40] sm:$0xff] %v2260
      %2277 = vst [vmem:[%s224 + $0x48] sm:$0xff] %v2261
      %2278 = vst [vmem:[%s224 + $0x50] sm:$0xff] %v2262
      %2279 = vst [vmem:[%s224 + $0x58] sm:$0xff] %v2263
      %2280 = vst [vmem:[%s224 + $0x60] sm:$0xff] %v2264
      %2281 = vst [vmem:[%s224 + $0x68] sm:$0xff] %v2265
      %2282 = vst [vmem:[%s224 + $0x70] sm:$0xff] %v2266
      %2283 = vst [vmem:[%s224 + $0x78] sm:$0xff] %v2267
      %p2284 = scmp.lt.s32.totalorder %s16, 1
      %s2285 = scalar_select %p2284, %s16, 1
      %s2286 = smul.addr %s2285, 16
      %s2287 = smul.addr %s2286, 8
      %s2288 = scalar_lea.vmem %s5, %s2287
      // Predicated region
      $region41: #{transformer_forward.6} parent=39 // pred_check
        %p2289 = pneg %p144
      $region42: #{transformer_forward.6} parent=39 // pred_check_branch
        %2291 = sbr.rel (%p2289) target = $region44
      $region43: #{transformer_forward.6} parent=39 // pred_region
        _
      $region44: #{transformer_forward.6} parent=39 // pred_fallthru
        _
    $region40: #{transformer_forward.6} parent=5 // pred_fallthru
      _
    %p2292 = scmp.le.s32.totalorder 2, %s11
    // Predicated region
    $region45: #{transformer_forward.6} parent=5 // pred_check
      %p2293 = pneg %p2292
    $region46: #{transformer_forward.6} parent=5 // pred_check_branch
      %2295 = sbr.rel (%p2293) target = $region48
    $region47: #{transformer_forward.6} parent=5 // pred_region
      %s2296 = ssub.s32 %s11, 2
      // Predicated region
      $region49: #{transformer_forward.6} parent=47 // pred_check
        %p2297 = pneg %p150
      $region50: #{transformer_forward.6} parent=47 // pred_check_branch
        %2299 = sbr.rel (%p2297) target = $region52
      $region51: #{transformer_forward.6} parent=47 // pred_region
        %p2300 = scmp.lt.s32.totalorder %s17, 1
        %s2301 = scalar_select %p2300, %s17, 1
        %s2302 = smul.addr %s2301, 16
        %s2303 = smul.addr %s2302, 8
        %s2304 = scalar_lea.vmem %s5, %s2303
      $region52: #{transformer_forward.6} parent=47 // pred_fallthru
        _
    $region48: #{transformer_forward.6} parent=5 // pred_fallthru
      _
  $region6: #{transformer_forward.6} parent=0 // loop_footer
    %s15 = sadd.s32 1, %s11
  $region7: #{transformer_forward.6} parent=0 // loop_footer_branch
    %10 = sbr.rel target = $region3
  $region8: #{transformer_forward.6} parent=0 // loop_exit
    _

</llo_original>
